<compile_context>
chip_gen: v7x
topology: tpu7x:2x2x1
jax: 0.10.0
libtpu: 0.0.40
codegen_flags: <defaults>
</compile_context>

<pallas_src>
import jax
import jax.numpy as jnp
from jax.experimental import pallas as pl
from jax.experimental.pallas import tpu as pltpu

N_INPUT = 100
N_HIDDEN = 400
N_OUTPUT = 4
BN_EPS = 1e-5

# Padded (lane-aligned) sizes used inside the kernel.
P_IN = 128
P_HID = 512
P_OUT = 128
SHIFT_W = 3 * P_HID + P_OUT  # packed shift vector width (13 * 128 lanes)


def mlp_kernel(x_ref, w1_ref, w2_ref, w3_ref, w4_ref, sh_ref, o_ref):
    # Whole forward pass for one batch tile: bf16 MXU matmuls with f32
    # accumulation, fused shift + ReLU epilogues on the VPU.
    # TODO(synk): at tile_b >= 256 / large B, splitting the tile in two and
    # software-pipelining matmul(layer k, sub1) against the add+ReLU epilogue
    # of sub0 would overlap MXU/VPU; skipped while the kernel is DMA-bound.
    x = x_ref[...]  # bf16 (tile_b, P_IN)

    t1 = sh_ref[:, 0:P_HID]
    t2 = sh_ref[:, P_HID:2 * P_HID]
    t3 = sh_ref[:, 2 * P_HID:3 * P_HID]
    b4 = sh_ref[:, 3 * P_HID:3 * P_HID + P_OUT]

    h = jnp.dot(x, w1_ref[...], preferred_element_type=jnp.float32)
    h = jnp.maximum(h + t1, 0.0).astype(jnp.bfloat16)

    h = jnp.dot(h, w2_ref[...], preferred_element_type=jnp.float32)
    h = jnp.maximum(h + t2, 0.0).astype(jnp.bfloat16)

    h = jnp.dot(h, w3_ref[...], preferred_element_type=jnp.float32)
    h = jnp.maximum(h + t3, 0.0).astype(jnp.bfloat16)

    out = jnp.dot(h, w4_ref[...], preferred_element_type=jnp.float32)
    o_ref[...] = (out + b4).astype(o_ref.dtype)  # bf16 lane-dense store


def fold_bn_into_weight(w, bias, gamma, beta, rmean, rvar, eps=BN_EPS):
    """Fold BatchNorm1d (eval) into the preceding Linear: scale into W columns,
    shift kept as a per-feature add."""
    scale = gamma / jnp.sqrt(rvar + eps)
    w_folded = w * scale[None, :]
    shift = (bias - rmean) * scale + beta
    return w_folded, shift


def _pad2(a, rows, cols):
    return jnp.pad(a, ((0, rows - a.shape[0]), (0, cols - a.shape[1])))


def _pad_vec(v, n):
    return jnp.pad(v, (0, n - v.shape[0]))


def _num_tensorcores():
    # v7x has 2 TensorCores per chip; v5e/v6e have 1.
    try:
        kind = jax.devices()[0].device_kind.lower()
    except Exception:
        return 1
    return 2 if "v7" in kind else 1


def _pick_tile_b(B, max_tile=512):
    """ceil(B / n_cores) rounded up to 128, capped; keeps >=2 grid steps on
    v7x (both TCs busy) while using one big step on v5e/v6e."""
    n_par = _num_tensorcores() if B > 128 else 1
    tile = -(-B // n_par)                      # cdiv
    tile = ((tile + 127) // 128) * 128          # round up to vreg sublane*16
    return int(max(128, min(tile, max_tile)))


def _build_call(tile_b, num_tiles, Bp, single_buffer_weights):
    if single_buffer_weights:
        def resident(shape):
            return pl.BlockSpec(shape, lambda i: (0, 0),
                                pipeline_mode=pl.Buffered(1))
    else:
        def resident(shape):
            return pl.BlockSpec(shape, lambda i: (0, 0))

    in_specs = [
        pl.BlockSpec((tile_b, P_IN), lambda i: (i, 0)),   # x tile (streams)
        resident((P_IN, P_HID)),                          # w1
        resident((P_HID, P_HID)),                         # w2
        resident((P_HID, P_HID)),                         # w3
        resident((P_HID, P_OUT)),                         # w4
        resident((1, SHIFT_W)),                           # packed t1|t2|t3|b4
    ]
    out_spec = pl.BlockSpec((tile_b, P_OUT), lambda i: (i, 0))

    return pl.pallas_call(
        mlp_kernel,
        out_shape=jax.ShapeDtypeStruct((Bp, P_OUT), jnp.bfloat16),
        grid_spec=pltpu.PrefetchScalarGridSpec(
            num_scalar_prefetch=0,
            grid=(num_tiles,),
            in_specs=in_specs,
            out_specs=out_spec,
        ),
        compiler_params=pltpu.CompilerParams(
            dimension_semantics=("parallel",)),
    )


def dnn_forward(x, params, *, tile_b=None):
    """x: (B, N_INPUT) float32. Returns (B, N_OUTPUT) float32."""
    B = x.shape[0]
    if tile_b is None:
        tile_b = _pick_tile_b(B)
    num_tiles = pl.cdiv(B, tile_b)
    Bp = num_tiles * tile_b

    # Zero-pad batch (ragged tail) and features (100 -> 128); cast to bf16.
    xp = jnp.pad(x, ((0, Bp - B), (0, P_IN - x.shape[1]))).astype(jnp.bfloat16)

    try:
        out_padded = _build_call(tile_b, num_tiles, Bp, True)(xp, *params)
    except Exception:
        # Older Pallas without pipeline_mode support: default double-buffering.
        out_padded = _build_call(tile_b, num_tiles, Bp, False)(xp, *params)

    return out_padded[:B, :N_OUTPUT].astype(jnp.float32)


def make_params(key):
    """Deterministic synthetic parameters matching the PyTorch module shapes.

    Returns (kernel_params, raw_params). kernel_params are BN-folded,
    zero-padded to lane-aligned sizes, weights in bf16, shifts packed into a
    single f32 row; raw_params are the original f32 tensors for the reference.
    """
    keys = jax.random.split(key, 8)

    def linear(kw, kb, fan_in, fan_out):
        bound = 1.0 / jnp.sqrt(fan_in)
        w = jax.random.uniform(kw, (fan_in, fan_out), jnp.float32, -bound, bound)
        b = jax.random.uniform(kb, (fan_out,), jnp.float32, -bound, bound)
        return w, b

    w1, b1 = linear(keys[0], keys[1], N_INPUT, N_HIDDEN)
    w2, b2 = linear(keys[2], keys[3], N_HIDDEN, N_HIDDEN)
    w3, b3 = linear(keys[4], keys[5], N_HIDDEN, N_HIDDEN)
    w4, b4 = linear(keys[6], keys[7], N_HIDDEN, N_OUTPUT)

    # BatchNorm1d default init / running stats (eval mode).
    gamma = jnp.ones((N_HIDDEN,), jnp.float32)
    beta = jnp.zeros((N_HIDDEN,), jnp.float32)
    rmean = jnp.zeros((N_HIDDEN,), jnp.float32)
    rvar = jnp.ones((N_HIDDEN,), jnp.float32)

    w1f, t1 = fold_bn_into_weight(w1, b1, gamma, beta, rmean, rvar)
    w2f, t2 = fold_bn_into_weight(w2, b2, gamma, beta, rmean, rvar)
    w3f, t3 = fold_bn_into_weight(w3, b3, gamma, beta, rmean, rvar)

    # Zero-pad to lane-aligned shapes. Padded hidden columns get weight=0 and
    # shift=0, so after ReLU they stay exactly 0 and the padded rows of the
    # next weight (also 0) contribute nothing -> numerics unchanged.
    shifts = jnp.concatenate([
        _pad_vec(t1, P_HID), _pad_vec(t2, P_HID),
        _pad_vec(t3, P_HID), _pad_vec(b4, P_OUT),
    ]).reshape(1, SHIFT_W).astype(jnp.float32)

    kernel_params = (
        _pad2(w1f, P_IN, P_HID).astype(jnp.bfloat16),
        _pad2(w2f, P_HID, P_HID).astype(jnp.bfloat16),
        _pad2(w3f, P_HID, P_HID).astype(jnp.bfloat16),
        _pad2(w4, P_HID, P_OUT).astype(jnp.bfloat16),
        shifts,
    )
    raw = (w1, b1, w2, b2, w3, b3, w4, b4, gamma, beta, rmean, rvar)
    return kernel_params, raw


def reference_forward(x, raw):
    # Plain-JAX f32 reference replicating PyTorch eval-mode forward.
    w1, b1, w2, b2, w3, b3, w4, b4, gamma, beta, rmean, rvar = raw

    def bn(h):
        return (h - rmean) / jnp.sqrt(rvar + BN_EPS) * gamma + beta

    h = jnp.maximum(bn(x @ w1 + b1), 0.0)
    h = jnp.maximum(bn(h @ w2 + b2), 0.0)
    h = jnp.maximum(bn(h @ w3 + b3), 0.0)
    return h @ w4 + b4


if __name__ == "__main__":
    # TODO(synk): dropout layers are identity in eval mode; training-mode
    # dropout (pltpu.prng_random_bits masking) is intentionally not implemented.
    key = jax.random.PRNGKey(0)
    kx, kp = jax.random.split(key)

    # Non-multiple-of-tile batch exercises the padded/ragged path; the tile_b
    # heuristic yields 2x128 tiles on v7x (both TCs) and 1x256 on v5e/v6e.
    B = 200
    x = jax.random.normal(kx, (B, N_INPUT), jnp.float32)
    params, raw = make_params(kp)

    out = dnn_forward(x, params)
    out = jax.block_until_ready(out)

    ref = reference_forward(x, raw)
    assert out.shape == (B, N_OUTPUT)
    # bf16 weights/activations/output (f32 accumulate) vs f32 ref: relaxed tol.
    assert jnp.allclose(out, ref, atol=2e-2, rtol=2e-2)

    print("KERNEL_OK")
</pallas_src>

<mosaic_0001>
module attributes {stable_mosaic.version = 11 : i64} {
  func.func @mlp_kernel(%arg0: i32, %arg1: memref<256x128xbf16, #tpu.memory_space<vmem>>, %arg2: memref<128x512xbf16, #tpu.memory_space<vmem>>, %arg3: memref<512x512xbf16, #tpu.memory_space<vmem>>, %arg4: memref<512x512xbf16, #tpu.memory_space<vmem>>, %arg5: memref<512x128xbf16, #tpu.memory_space<vmem>>, %arg6: memref<1x1664xf32, #tpu.memory_space<vmem>>, %arg7: memref<256x128xbf16, #tpu.memory_space<vmem>>) attributes {dimension_semantics = [#tpu.dimension_semantics<parallel>], iteration_bounds = array<i64: 1>, scalar_prefetch = 0 : i64, scratch_operands = 0 : i64, tpu.core_type = #tpu.core_type<tc>, window_params = [{transform_indices = @transform_0, window_bounds = array<i64: 256, 128>}, {pipeline_mode = #tpu.pipeline_mode<synchronous>, transform_indices = @transform_1, window_bounds = array<i64: 128, 512>}, {pipeline_mode = #tpu.pipeline_mode<synchronous>, transform_indices = @transform_2, window_bounds = array<i64: 512, 512>}, {pipeline_mode = #tpu.pipeline_mode<synchronous>, transform_indices = @transform_3, window_bounds = array<i64: 512, 512>}, {pipeline_mode = #tpu.pipeline_mode<synchronous>, transform_indices = @transform_4, window_bounds = array<i64: 512, 128>}, {pipeline_mode = #tpu.pipeline_mode<synchronous>, transform_indices = @transform_5, window_bounds = array<i64: 1, 1664>}, {transform_indices = @transform_6, window_bounds = array<i64: 256, 128>}]} {
    %c0 = arith.constant 0 : index
    %c0_0 = arith.constant 0 : index
    %0 = vector.load %arg1[%c0, %c0_0] : memref<256x128xbf16, #tpu.memory_space<vmem>>, vector<256x128xbf16>
    %c0_1 = arith.constant 0 : index
    %c0_2 = arith.constant 0 : index
    %1 = vector.load %arg6[%c0_1, %c0_2] : memref<1x1664xf32, #tpu.memory_space<vmem>>, vector<1x512xf32>
    %c0_3 = arith.constant 0 : index
    %c512 = arith.constant 512 : index
    %2 = vector.load %arg6[%c0_3, %c512] : memref<1x1664xf32, #tpu.memory_space<vmem>>, vector<1x512xf32>
    %c0_4 = arith.constant 0 : index
    %c1024 = arith.constant 1024 : index
    %3 = vector.load %arg6[%c0_4, %c1024] : memref<1x1664xf32, #tpu.memory_space<vmem>>, vector<1x512xf32>
    %c0_5 = arith.constant 0 : index
    %c1536 = arith.constant 1536 : index
    %4 = vector.load %arg6[%c0_5, %c1536] : memref<1x1664xf32, #tpu.memory_space<vmem>>, vector<1x128xf32>
    %c0_6 = arith.constant 0 : index
    %c0_7 = arith.constant 0 : index
    %5 = vector.load %arg2[%c0_6, %c0_7] : memref<128x512xbf16, #tpu.memory_space<vmem>>, vector<128x512xbf16>
    %cst = arith.constant dense<0.000000e+00> : vector<256x512xf32>
    %6 = tpu.matmul %0, %5, %cst {dimension_numbers = #tpu.dot_dimension_numbers<[1], [0], [0], [1], [0, 0, 1, 1], [], []>} : vector<256x128xbf16>, vector<128x512xbf16>, vector<256x512xf32> -> vector<256x512xf32>
    %7 = vector.broadcast %1 : vector<1x512xf32> to vector<256x512xf32>
    %8 = arith.addf %6, %7 : vector<256x512xf32>
    %cst_8 = arith.constant 0.000000e+00 : f32
    %9 = vector.broadcast %cst_8 : f32 to vector<256x512xf32>
    %10 = arith.maximumf %8, %9 : vector<256x512xf32>
    %11 = arith.truncf %10 : vector<256x512xf32> to vector<256x512xbf16>
    %c0_9 = arith.constant 0 : index
    %c0_10 = arith.constant 0 : index
    %12 = vector.load %arg3[%c0_9, %c0_10] : memref<512x512xbf16, #tpu.memory_space<vmem>>, vector<512x512xbf16>
    %cst_11 = arith.constant dense<0.000000e+00> : vector<256x512xf32>
    %13 = tpu.matmul %11, %12, %cst_11 {dimension_numbers = #tpu.dot_dimension_numbers<[1], [0], [0], [1], [0, 0, 1, 1], [], []>} : vector<256x512xbf16>, vector<512x512xbf16>, vector<256x512xf32> -> vector<256x512xf32>
    %14 = vector.broadcast %2 : vector<1x512xf32> to vector<256x512xf32>
    %15 = arith.addf %13, %14 : vector<256x512xf32>
    %cst_12 = arith.constant 0.000000e+00 : f32
    %16 = vector.broadcast %cst_12 : f32 to vector<256x512xf32>
    %17 = arith.maximumf %15, %16 : vector<256x512xf32>
    %18 = arith.truncf %17 : vector<256x512xf32> to vector<256x512xbf16>
    %c0_13 = arith.constant 0 : index
    %c0_14 = arith.constant 0 : index
    %19 = vector.load %arg4[%c0_13, %c0_14] : memref<512x512xbf16, #tpu.memory_space<vmem>>, vector<512x512xbf16>
    %cst_15 = arith.constant dense<0.000000e+00> : vector<256x512xf32>
    %20 = tpu.matmul %18, %19, %cst_15 {dimension_numbers = #tpu.dot_dimension_numbers<[1], [0], [0], [1], [0, 0, 1, 1], [], []>} : vector<256x512xbf16>, vector<512x512xbf16>, vector<256x512xf32> -> vector<256x512xf32>
    %21 = vector.broadcast %3 : vector<1x512xf32> to vector<256x512xf32>
    %22 = arith.addf %20, %21 : vector<256x512xf32>
    %cst_16 = arith.constant 0.000000e+00 : f32
    %23 = vector.broadcast %cst_16 : f32 to vector<256x512xf32>
    %24 = arith.maximumf %22, %23 : vector<256x512xf32>
    %25 = arith.truncf %24 : vector<256x512xf32> to vector<256x512xbf16>
    %c0_17 = arith.constant 0 : index
    %c0_18 = arith.constant 0 : index
    %26 = vector.load %arg5[%c0_17, %c0_18] : memref<512x128xbf16, #tpu.memory_space<vmem>>, vector<512x128xbf16>
    %cst_19 = arith.constant dense<0.000000e+00> : vector<256x128xf32>
    %27 = tpu.matmul %25, %26, %cst_19 {dimension_numbers = #tpu.dot_dimension_numbers<[1], [0], [0], [1], [0, 0, 1, 1], [], []>} : vector<256x512xbf16>, vector<512x128xbf16>, vector<256x128xf32> -> vector<256x128xf32>
    %28 = vector.broadcast %4 : vector<1x128xf32> to vector<256x128xf32>
    %29 = arith.addf %27, %28 : vector<256x128xf32>
    %30 = arith.truncf %29 : vector<256x128xf32> to vector<256x128xbf16>
    %c0_20 = arith.constant 0 : index
    %c0_21 = arith.constant 0 : index
    %31 = vector.load %arg7[%c0_20, %c0_21] : memref<256x128xbf16, #tpu.memory_space<vmem>>, vector<256x128xbf16>
    tpu.vector_store %arg7[%c0_20, %c0_21], %30 {strides = array<i32>} : memref<256x128xbf16, #tpu.memory_space<vmem>>, vector<256x128xbf16>,
    return
  }
  func.func @transform_0(%arg0: i32) -> (i32, i32) {
    %c0_i32 = arith.constant 0 : i32
    %c0_i32_0 = arith.constant 0 : i32
    return %arg0, %c0_i32 : i32, i32
  }
  func.func @transform_1(%arg0: i32) -> (i32, i32) {
    %c0_i32 = arith.constant 0 : i32
    %c0_i32_0 = arith.constant 0 : i32
    %c0_i32_1 = arith.constant 0 : i32
    return %c0_i32, %c0_i32_0 : i32, i32
  }
  func.func @transform_2(%arg0: i32) -> (i32, i32) {
    %c0_i32 = arith.constant 0 : i32
    %c0_i32_0 = arith.constant 0 : i32
    %c0_i32_1 = arith.constant 0 : i32
    return %c0_i32, %c0_i32_0 : i32, i32
  }
  func.func @transform_3(%arg0: i32) -> (i32, i32) {
    %c0_i32 = arith.constant 0 : i32
    %c0_i32_0 = arith.constant 0 : i32
    %c0_i32_1 = arith.constant 0 : i32
    return %c0_i32, %c0_i32_0 : i32, i32
  }
  func.func @transform_4(%arg0: i32) -> (i32, i32) {
    %c0_i32 = arith.constant 0 : i32
    %c0_i32_0 = arith.constant 0 : i32
    %c0_i32_1 = arith.constant 0 : i32
    return %c0_i32, %c0_i32_0 : i32, i32
  }
  func.func @transform_5(%arg0: i32) -> (i32, i32) {
    %c0_i32 = arith.constant 0 : i32
    %c0_i32_0 = arith.constant 0 : i32
    %c0_i32_1 = arith.constant 0 : i32
    return %c0_i32, %c0_i32_0 : i32, i32
  }
  func.func @transform_6(%arg0: i32) -> (i32, i32) {
    %c0_i32 = arith.constant 0 : i32
    %c0_i32_0 = arith.constant 0 : i32
    return %arg0, %c0_i32 : i32, i32
  }
}

module attributes {stable_mosaic.version = 11 : i64} {
  func.func @mlp_kernel(%arg0: i32, %arg1: memref<256x128xbf16, #tpu.memory_space<vmem>>, %arg2: memref<128x512xbf16, #tpu.memory_space<vmem>>, %arg3: memref<512x512xbf16, #tpu.memory_space<vmem>>, %arg4: memref<512x512xbf16, #tpu.memory_space<vmem>>, %arg5: memref<512x128xbf16, #tpu.memory_space<vmem>>, %arg6: memref<1x1664xf32, #tpu.memory_space<vmem>>, %arg7: memref<256x128xbf16, #tpu.memory_space<vmem>>) attributes {dimension_semantics = [#tpu.dimension_semantics<parallel>], iteration_bounds = array<i64: 1>, scalar_prefetch = 0 : i64, scratch_operands = 0 : i64, tpu.core_type = #tpu.core_type<tc>, window_params = [{transform_indices = @transform_0, window_bounds = array<i64: 256, 128>}, {pipeline_mode = #tpu.pipeline_mode<synchronous>, transform_indices = @transform_1, window_bounds = array<i64: 128, 512>}, {pipeline_mode = #tpu.pipeline_mode<synchronous>, transform_indices = @transform_2, window_bounds = array<i64: 512, 512>}, {pipeline_mode = #tpu.pipeline_mode<synchronous>, transform_indices = @transform_3, window_bounds = array<i64: 512, 512>}, {pipeline_mode = #tpu.pipeline_mode<synchronous>, transform_indices = @transform_4, window_bounds = array<i64: 512, 128>}, {pipeline_mode = #tpu.pipeline_mode<synchronous>, transform_indices = @transform_5, window_bounds = array<i64: 1, 1664>}, {transform_indices = @transform_6, window_bounds = array<i64: 256, 128>}]} {
    %c0 = arith.constant 0 : index
    %c0_0 = arith.constant 0 : index
    %0 = vector.load %arg1[%c0, %c0_0] : memref<256x128xbf16, #tpu.memory_space<vmem>>, vector<256x128xbf16>
    %c0_1 = arith.constant 0 : index
    %c0_2 = arith.constant 0 : index
    %1 = vector.load %arg6[%c0_1, %c0_2] : memref<1x1664xf32, #tpu.memory_space<vmem>>, vector<1x512xf32>
    %c0_3 = arith.constant 0 : index
    %c512 = arith.constant 512 : index
    %2 = vector.load %arg6[%c0_3, %c512] : memref<1x1664xf32, #tpu.memory_space<vmem>>, vector<1x512xf32>
    %c0_4 = arith.constant 0 : index
    %c1024 = arith.constant 1024 : index
    %3 = vector.load %arg6[%c0_4, %c1024] : memref<1x1664xf32, #tpu.memory_space<vmem>>, vector<1x512xf32>
    %c0_5 = arith.constant 0 : index
    %c1536 = arith.constant 1536 : index
    %4 = vector.load %arg6[%c0_5, %c1536] : memref<1x1664xf32, #tpu.memory_space<vmem>>, vector<1x128xf32>
    %c0_6 = arith.constant 0 : index
    %c0_7 = arith.constant 0 : index
    %5 = vector.load %arg2[%c0_6, %c0_7] : memref<128x512xbf16, #tpu.memory_space<vmem>>, vector<128x512xbf16>
    %cst = arith.constant dense<0.000000e+00> : vector<256x512xf32>
    %6 = tpu.matmul %0, %5, %cst {dimension_numbers = #tpu.dot_dimension_numbers<[1], [0], [0], [1], [0, 0, 1, 1], [], []>} : vector<256x128xbf16>, vector<128x512xbf16>, vector<256x512xf32> -> vector<256x512xf32>
    %7 = vector.broadcast %1 : vector<1x512xf32> to vector<256x512xf32>
    %8 = arith.addf %6, %7 : vector<256x512xf32>
    %cst_8 = arith.constant 0.000000e+00 : f32
    %9 = vector.broadcast %cst_8 : f32 to vector<256x512xf32>
    %10 = arith.maximumf %8, %9 : vector<256x512xf32>
    %11 = arith.truncf %10 : vector<256x512xf32> to vector<256x512xbf16>
    %c0_9 = arith.constant 0 : index
    %c0_10 = arith.constant 0 : index
    %12 = vector.load %arg3[%c0_9, %c0_10] : memref<512x512xbf16, #tpu.memory_space<vmem>>, vector<512x512xbf16>
    %cst_11 = arith.constant dense<0.000000e+00> : vector<256x512xf32>
    %13 = tpu.matmul %11, %12, %cst_11 {dimension_numbers = #tpu.dot_dimension_numbers<[1], [0], [0], [1], [0, 0, 1, 1], [], []>} : vector<256x512xbf16>, vector<512x512xbf16>, vector<256x512xf32> -> vector<256x512xf32>
    %14 = vector.broadcast %2 : vector<1x512xf32> to vector<256x512xf32>
    %15 = arith.addf %13, %14 : vector<256x512xf32>
    %cst_12 = arith.constant 0.000000e+00 : f32
    %16 = vector.broadcast %cst_12 : f32 to vector<256x512xf32>
    %17 = arith.maximumf %15, %16 : vector<256x512xf32>
    %18 = arith.truncf %17 : vector<256x512xf32> to vector<256x512xbf16>
    %c0_13 = arith.constant 0 : index
    %c0_14 = arith.constant 0 : index
    %19 = vector.load %arg4[%c0_13, %c0_14] : memref<512x512xbf16, #tpu.memory_space<vmem>>, vector<512x512xbf16>
    %cst_15 = arith.constant dense<0.000000e+00> : vector<256x512xf32>
    %20 = tpu.matmul %18, %19, %cst_15 {dimension_numbers = #tpu.dot_dimension_numbers<[1], [0], [0], [1], [0, 0, 1, 1], [], []>} : vector<256x512xbf16>, vector<512x512xbf16>, vector<256x512xf32> -> vector<256x512xf32>
    %21 = vector.broadcast %3 : vector<1x512xf32> to vector<256x512xf32>
    %22 = arith.addf %20, %21 : vector<256x512xf32>
    %cst_16 = arith.constant 0.000000e+00 : f32
    %23 = vector.broadcast %cst_16 : f32 to vector<256x512xf32>
    %24 = arith.maximumf %22, %23 : vector<256x512xf32>
    %25 = arith.truncf %24 : vector<256x512xf32> to vector<256x512xbf16>
    %c0_17 = arith.constant 0 : index
    %c0_18 = arith.constant 0 : index
    %26 = vector.load %arg5[%c0_17, %c0_18] : memref<512x128xbf16, #tpu.memory_space<vmem>>, vector<512x128xbf16>
    %cst_19 = arith.constant dense<0.000000e+00> : vector<256x128xf32>
    %27 = tpu.matmul %25, %26, %cst_19 {dimension_numbers = #tpu.dot_dimension_numbers<[1], [0], [0], [1], [0, 0, 1, 1], [], []>} : vector<256x512xbf16>, vector<512x128xbf16>, vector<256x128xf32> -> vector<256x128xf32>
    %28 = vector.broadcast %4 : vector<1x128xf32> to vector<256x128xf32>
    %29 = arith.addf %27, %28 : vector<256x128xf32>
    %30 = arith.truncf %29 : vector<256x128xf32> to vector<256x128xbf16>
    %c0_20 = arith.constant 0 : index
    %c0_21 = arith.constant 0 : index
    %31 = vector.load %arg7[%c0_20, %c0_21] : memref<256x128xbf16, #tpu.memory_space<vmem>>, vector<256x128xbf16>
    tpu.vector_store %arg7[%c0_20, %c0_21], %30 {strides = array<i32>} : memref<256x128xbf16, #tpu.memory_space<vmem>>, vector<256x128xbf16>,
    return
  }
  func.func @transform_0(%arg0: i32) -> (i32, i32) {
    %c0_i32 = arith.constant 0 : i32
    %c0_i32_0 = arith.constant 0 : i32
    return %arg0, %c0_i32 : i32, i32
  }
  func.func @transform_1(%arg0: i32) -> (i32, i32) {
    %c0_i32 = arith.constant 0 : i32
    %c0_i32_0 = arith.constant 0 : i32
    %c0_i32_1 = arith.constant 0 : i32
    return %c0_i32, %c0_i32_0 : i32, i32
  }
  func.func @transform_2(%arg0: i32) -> (i32, i32) {
    %c0_i32 = arith.constant 0 : i32
    %c0_i32_0 = arith.constant 0 : i32
    %c0_i32_1 = arith.constant 0 : i32
    return %c0_i32, %c0_i32_0 : i32, i32
  }
  func.func @transform_3(%arg0: i32) -> (i32, i32) {
    %c0_i32 = arith.constant 0 : i32
    %c0_i32_0 = arith.constant 0 : i32
    %c0_i32_1 = arith.constant 0 : i32
    return %c0_i32, %c0_i32_0 : i32, i32
  }
  func.func @transform_4(%arg0: i32) -> (i32, i32) {
    %c0_i32 = arith.constant 0 : i32
    %c0_i32_0 = arith.constant 0 : i32
    %c0_i32_1 = arith.constant 0 : i32
    return %c0_i32, %c0_i32_0 : i32, i32
  }
  func.func @transform_5(%arg0: i32) -> (i32, i32) {
    %c0_i32 = arith.constant 0 : i32
    %c0_i32_0 = arith.constant 0 : i32
    %c0_i32_1 = arith.constant 0 : i32
    return %c0_i32, %c0_i32_0 : i32, i32
  }
  func.func @transform_6(%arg0: i32) -> (i32, i32) {
    %c0_i32 = arith.constant 0 : i32
    %c0_i32_0 = arith.constant 0 : i32
    return %arg0, %c0_i32 : i32, i32
  }
}

</mosaic_0001>

<llo_original>
// kernel: tpu_custom_call.1
$region0: #{tpu_custom_call.1}
  #allocation0 [shape = 'u32[]', space=smem, size = 0x4, offset = 0x4, fixed_abs, tag = 'smem constant byte address 0x4 - core index']
  #allocation1 [shape = 'u32[144,128]{1,0:T(1,128)}', space=vmem, size = 0x12000, scoped, tag = 'internal scratch']
  %s0 = inlined_call_operand.hbm [shape: bf16[256,128], index: 0, kind: input, shape index: {}]
  %s1 = inlined_call_operand.hbm [shape: bf16[128,512], index: 1, kind: input, shape index: {}]
  %s2 = inlined_call_operand.hbm [shape: bf16[512,512], index: 2, kind: input, shape index: {}]
  %s3 = inlined_call_operand.hbm [shape: bf16[512,512], index: 3, kind: input, shape index: {}]
  %s4 = inlined_call_operand.hbm [shape: bf16[512,128], index: 4, kind: input, shape index: {}]
  %s5 = inlined_call_operand.vmem [shape: f32[1,1664], index: 5, kind: input, shape index: {}]
  %s6 = inlined_call_operand.hbm [shape: bf16[256,128], index: 6, kind: output, shape index: {}]
  %s7 = sld [smem:[#allocation0]]
  $region54: #{tpu_custom_call.1} parent=0
    _
  %s9 = ssub.s32 1, %s7
  %s10 = scalar_select 0, %s9, %s7
  $region1: #{tpu_custom_call.1} parent=0
    #allocation2 [shape = 'u8[65536]{0}', space=vmem, size = 0x10000, scoped, tag = 'input window, operand 0, single buffered']
    #allocation3 [shape = 's32[1]{0}', space=sflag, size = 0x4, scoped, tag = 'scoped memory for tpu_custom_call.1']
    #allocation4 [shape = 's32[1]{0}', space=sflag, size = 0x4, scoped, tag = 'scoped memory for tpu_custom_call.1']
    #allocation5 [shape = 'u8[131072]{0}', space=vmem, size = 0x20000, scoped, tag = 'input window, operand 1, single buffered']
    #allocation6 [shape = 's32[1]{0}', space=sflag, size = 0x4, scoped, tag = 'scoped memory for tpu_custom_call.1']
    #allocation7 [shape = 'u8[524288]{0}', space=vmem, size = 0x80000, scoped, tag = 'input window, operand 2, single buffered']
    #allocation8 [shape = 'u8[524288]{0}', space=vmem, size = 0x80000, scoped, tag = 'input window, operand 3, single buffered']
    #allocation9 [shape = 's32[1]{0}', space=sflag, size = 0x4, scoped, tag = 'scoped memory for tpu_custom_call.1']
    #allocation10 [shape = 'u8[131072]{0}', space=vmem, size = 0x20000, scoped, tag = 'input window, operand 4, single buffered']
    #allocation11 [shape = 'u8[65536]{0}', space=vmem, size = 0x10000, scoped, tag = 'output window, operand 0, single buffered']
    %11 = vsyncpa [#allocation3], 0
    %12 = vsyncpa [#allocation6], 0
    %13 = vsyncpa [#allocation9], 0
    %14 = vsyncpa [#allocation4], 0
    // Predicated region
    $region2: #{tpu_custom_call.1} parent=1 // pred_check
      _
    $region3: #{tpu_custom_call.1} parent=1 // pred_check_branch
      %16 = sbr.rel (0) target = $region5
    $region4: #{tpu_custom_call.1} parent=1 // pred_region
      %s18 = ssub.s32 2048, 2048
      %19 = vsyncadd [#allocation3], %s18
      %s20 = sshll.u32 [#allocation2], 4
      %s21 = int_to_ptr.vmem [resolvable:$true] %s20
      %26 = dma.hbm_to_vmem [thread:$0]  %s0, 2048, %s21, [#allocation3], 64, 64, 4
    $region5: #{tpu_custom_call.1} parent=1 // pred_fallthru
      _
    // Predicated region
    $region6: #{tpu_custom_call.1} parent=1 // pred_check
      _
    $region7: #{tpu_custom_call.1} parent=1 // pred_check_branch
      %28 = sbr.rel (0) target = $region9
    $region8: #{tpu_custom_call.1} parent=1 // pred_region
      %s30 = ssub.s32 4096, 4096
      %31 = vsyncadd [#allocation6], %s30
      %s32 = sshll.u32 [#allocation5], 4
      %s33 = int_to_ptr.vmem [resolvable:$true] %s32
      %38 = dma.hbm_to_vmem [thread:$0]  %s1, 4096, %s33, [#allocation6], 256, 256, 16
    $region9: #{tpu_custom_call.1} parent=1 // pred_fallthru
      _
    // Predicated region
    $region10: #{tpu_custom_call.1} parent=1 // pred_check
      _
    $region11: #{tpu_custom_call.1} parent=1 // pred_check_branch
      %40 = sbr.rel (0) target = $region13
    $region12: #{tpu_custom_call.1} parent=1 // pred_region
      %s42 = ssub.s32 16384, 16384
      %43 = vsyncadd [#allocation6], %s42
      %s44 = sshll.u32 [#allocation7], 4
      %s45 = int_to_ptr.vmem [resolvable:$true] %s44
      %50 = dma.hbm_to_vmem [thread:$0]  %s2, 16384, %s45, [#allocation6], 256, 256, 16
    $region13: #{tpu_custom_call.1} parent=1 // pred_fallthru
      _
    // Predicated region
    $region14: #{tpu_custom_call.1} parent=1 // pred_check
      _
    $region15: #{tpu_custom_call.1} parent=1 // pred_check_branch
      %52 = sbr.rel (0) target = $region17
    $region16: #{tpu_custom_call.1} parent=1 // pred_region
      %s54 = ssub.s32 16384, 16384
      %55 = vsyncadd [#allocation9], %s54
      %s56 = sshll.u32 [#allocation8], 4
      %s57 = int_to_ptr.vmem [resolvable:$true] %s56
      %62 = dma.hbm_to_vmem [thread:$0]  %s3, 16384, %s57, [#allocation9], 256, 256, 16
    $region17: #{tpu_custom_call.1} parent=1 // pred_fallthru
      _
    // Predicated region
    $region18: #{tpu_custom_call.1} parent=1 // pred_check
      _
    $region19: #{tpu_custom_call.1} parent=1 // pred_check_branch
      %64 = sbr.rel (0) target = $region21
    $region20: #{tpu_custom_call.1} parent=1 // pred_region
      %s66 = ssub.s32 4096, 4096
      %67 = vsyncadd [#allocation9], %s66
      %s68 = sshll.u32 [#allocation10], 4
      %s69 = int_to_ptr.vmem [resolvable:$true] %s68
      %74 = dma.hbm_to_vmem [thread:$0]  %s4, 4096, %s69, [#allocation9], 64, 64, 4
    $region21: #{tpu_custom_call.1} parent=1 // pred_fallthru
      _
    // Predicated region
    $region22: #{tpu_custom_call.1} parent=1 // pred_check
      _
    $region23: #{tpu_custom_call.1} parent=1 // pred_check_branch
      %76 = sbr.rel (0) target = $region25
    $region24: #{tpu_custom_call.1} parent=1 // pred_region
      _
    $region25: #{tpu_custom_call.1} parent=1 // pred_fallthru
      _
    // Predicated region
    $region26: #{tpu_custom_call.1} parent=1 // pred_check
      _
    $region27: #{tpu_custom_call.1} parent=1 // pred_check_branch
      %78 = sbr.rel (0) target = $region29
    $region28: #{tpu_custom_call.1} parent=1 // pred_region
      %79 = dma.done [#allocation3], 2048
    $region29: #{tpu_custom_call.1} parent=1 // pred_fallthru
      _
    // Predicated region
    $region30: #{tpu_custom_call.1} parent=1 // pred_check
      _
    $region31: #{tpu_custom_call.1} parent=1 // pred_check_branch
      %81 = sbr.rel (0) target = $region33
    $region32: #{tpu_custom_call.1} parent=1 // pred_region
      %82 = dma.done [#allocation6], 4096
    $region33: #{tpu_custom_call.1} parent=1 // pred_fallthru
      _
    // Predicated region
    $region34: #{tpu_custom_call.1} parent=1 // pred_check
      _
    $region35: #{tpu_custom_call.1} parent=1 // pred_check_branch
      %84 = sbr.rel (0) target = $region37
    $region36: #{tpu_custom_call.1} parent=1 // pred_region
      %85 = dma.done [#allocation6], 16384
    $region37: #{tpu_custom_call.1} parent=1 // pred_fallthru
      _
    // Predicated region
    $region38: #{tpu_custom_call.1} parent=1 // pred_check
      _
    $region39: #{tpu_custom_call.1} parent=1 // pred_check_branch
      %87 = sbr.rel (0) target = $region41
    $region40: #{tpu_custom_call.1} parent=1 // pred_region
      %88 = dma.done [#allocation9], 16384
    $region41: #{tpu_custom_call.1} parent=1 // pred_fallthru
      _
    // Predicated region
    $region42: #{tpu_custom_call.1} parent=1 // pred_check
      _
    $region43: #{tpu_custom_call.1} parent=1 // pred_check_branch
      %90 = sbr.rel (0) target = $region45
    $region44: #{tpu_custom_call.1} parent=1 // pred_region
      %91 = dma.done [#allocation9], 4096
    $region45: #{tpu_custom_call.1} parent=1 // pred_fallthru
      _
    %v93 = vld [vmem:[#allocation2] sm:$0xf]
    %v94 = vld [vmem:[#allocation2 + $0x4] sm:$0xf]
    %v95 = vld [vmem:[#allocation2 + $0x8] sm:$0xf]
    %v96 = vld [vmem:[#allocation2 + $0xc] sm:$0xf]
    %v97 = vld [vmem:[#allocation2 + $0x10] sm:$0xf]
    %v98 = vld [vmem:[#allocation2 + $0x14] sm:$0xf]
    %v99 = vld [vmem:[#allocation2 + $0x18] sm:$0xf]
    %v100 = vld [vmem:[#allocation2 + $0x1c] sm:$0xf]
    %v101 = vld [vmem:[#allocation2 + $0x20] sm:$0xf]
    %v102 = vld [vmem:[#allocation2 + $0x24] sm:$0xf]
    %v103 = vld [vmem:[#allocation2 + $0x28] sm:$0xf]
    %v104 = vld [vmem:[#allocation2 + $0x2c] sm:$0xf]
    %v105 = vld [vmem:[#allocation2 + $0x30] sm:$0xf]
    %v106 = vld [vmem:[#allocation2 + $0x34] sm:$0xf]
    %v107 = vld [vmem:[#allocation2 + $0x38] sm:$0xf]
    %v108 = vld [vmem:[#allocation2 + $0x3c] sm:$0xf]
    %v109 = vld [vmem:[#allocation2 + $0x40] sm:$0xf]
    %v110 = vld [vmem:[#allocation2 + $0x44] sm:$0xf]
    %v111 = vld [vmem:[#allocation2 + $0x48] sm:$0xf]
    %v112 = vld [vmem:[#allocation2 + $0x4c] sm:$0xf]
    %v113 = vld [vmem:[#allocation2 + $0x50] sm:$0xf]
    %v114 = vld [vmem:[#allocation2 + $0x54] sm:$0xf]
    %v115 = vld [vmem:[#allocation2 + $0x58] sm:$0xf]
    %v116 = vld [vmem:[#allocation2 + $0x5c] sm:$0xf]
    %v117 = vld [vmem:[#allocation2 + $0x60] sm:$0xf]
    %v118 = vld [vmem:[#allocation2 + $0x64] sm:$0xf]
    %v119 = vld [vmem:[#allocation2 + $0x68] sm:$0xf]
    %v120 = vld [vmem:[#allocation2 + $0x6c] sm:$0xf]
    %v121 = vld [vmem:[#allocation2 + $0x70] sm:$0xf]
    %v122 = vld [vmem:[#allocation2 + $0x74] sm:$0xf]
    %v123 = vld [vmem:[#allocation2 + $0x78] sm:$0xf]
    %v124 = vld [vmem:[#allocation2 + $0x7c] sm:$0xf]
    %v125 = vld [vmem:[%s5] sm:$0xf]
    %v126 = vld [vmem:[%s5 + $0x4] sm:$0xf]
    %v127 = vld [vmem:[%s5 + $0x8] sm:$0xf]
    %v128 = vld [vmem:[%s5 + $0xc] sm:$0x1]
    %v129 = vld [vmem:[#allocation5] sm:$0xff]
    %v130 = vld [vmem:[#allocation5 + $0x8] sm:$0xff]
    %v131 = vld [vmem:[#allocation5 + $0x10] sm:$0xff]
    %v132 = vld [vmem:[#allocation5 + $0x18] sm:$0xff]
    %v133 = vld [vmem:[#allocation5 + $0x20] sm:$0xff]
    %v134 = vld [vmem:[#allocation5 + $0x28] sm:$0xff]
    %v135 = vld [vmem:[#allocation5 + $0x30] sm:$0xff]
    %v136 = vld [vmem:[#allocation5 + $0x38] sm:$0xff]
    %v137 = vld [vmem:[#allocation5 + $0x40] sm:$0xff]
    %v138 = vld [vmem:[#allocation5 + $0x48] sm:$0xff]
    %v139 = vld [vmem:[#allocation5 + $0x50] sm:$0xff]
    %v140 = vld [vmem:[#allocation5 + $0x58] sm:$0xff]
    %v141 = vld [vmem:[#allocation5 + $0x60] sm:$0xff]
    %v142 = vld [vmem:[#allocation5 + $0x68] sm:$0xff]
    %v143 = vld [vmem:[#allocation5 + $0x70] sm:$0xff]
    %v144 = vld [vmem:[#allocation5 + $0x78] sm:$0xff]
    %v145 = vld [vmem:[#allocation5 + $0x80] sm:$0xff]
    %v146 = vld [vmem:[#allocation5 + $0x88] sm:$0xff]
    %v147 = vld [vmem:[#allocation5 + $0x90] sm:$0xff]
    %v148 = vld [vmem:[#allocation5 + $0x98] sm:$0xff]
    %v149 = vld [vmem:[#allocation5 + $0xa0] sm:$0xff]
    %v150 = vld [vmem:[#allocation5 + $0xa8] sm:$0xff]
    %v151 = vld [vmem:[#allocation5 + $0xb0] sm:$0xff]
    %v152 = vld [vmem:[#allocation5 + $0xb8] sm:$0xff]
    %v153 = vld [vmem:[#allocation5 + $0xc0] sm:$0xff]
    %v154 = vld [vmem:[#allocation5 + $0xc8] sm:$0xff]
    %v155 = vld [vmem:[#allocation5 + $0xd0] sm:$0xff]
    %v156 = vld [vmem:[#allocation5 + $0xd8] sm:$0xff]
    %v157 = vld [vmem:[#allocation5 + $0xe0] sm:$0xff]
    %v158 = vld [vmem:[#allocation5 + $0xe8] sm:$0xff]
    %v159 = vld [vmem:[#allocation5 + $0xf0] sm:$0xff]
    %v160 = vld [vmem:[#allocation5 + $0xf8] sm:$0xff]
    %v162 = vlaneseq
    %v163 = vshrl.u32 %v162, 7
    %v164 = vsub.s32 0, %v163
    %v165 = vrot.slane %v125, %v164
    %v166 = vlaneseq
    %v167 = vshrl.u32 %v166, 7
    %v168 = vsub.s32 1, %v167
    %v169 = vrot.slane %v125, %v168
    %v170 = vlaneseq
    %v171 = vshrl.u32 %v170, 7
    %v172 = vsub.s32 2, %v171
    %v173 = vrot.slane %v125, %v172
    %v174 = vlaneseq
    %v175 = vshrl.u32 %v174, 7
    %v176 = vsub.s32 3, %v175
    %v177 = vrot.slane %v125, %v176
    %v214 = vunpack.c.l.b16 %v93
    %v215 = vunpack.c.l.b16 %v94
    %v216 = vunpack.c.l.b16 %v95
    %v217 = vunpack.c.l.b16 %v96
    %v218 = vunpack.c.l.b16 %v97
    %v219 = vunpack.c.l.b16 %v98
    %v220 = vunpack.c.l.b16 %v99
    %v221 = vunpack.c.l.b16 %v100
    %v222 = vunpack.c.l.b16 %v101
    %v223 = vunpack.c.l.b16 %v102
    %v224 = vunpack.c.l.b16 %v103
    %v225 = vunpack.c.l.b16 %v104
    %v226 = vunpack.c.l.b16 %v105
    %v227 = vunpack.c.l.b16 %v106
    %v228 = vunpack.c.l.b16 %v107
    %v229 = vunpack.c.l.b16 %v108
    %v230 = vunpack.c.l.b16 %v109
    %v231 = vunpack.c.l.b16 %v110
    %v232 = vunpack.c.l.b16 %v111
    %v233 = vunpack.c.l.b16 %v112
    %v234 = vunpack.c.l.b16 %v113
    %v235 = vunpack.c.l.b16 %v114
    %v236 = vunpack.c.l.b16 %v115
    %v237 = vunpack.c.l.b16 %v116
    %v238 = vunpack.c.l.b16 %v117
    %v239 = vunpack.c.l.b16 %v118
    %v240 = vunpack.c.l.b16 %v119
    %v241 = vunpack.c.l.b16 %v120
    %v242 = vunpack.c.l.b16 %v121
    %v243 = vunpack.c.l.b16 %v122
    %v244 = vunpack.c.l.b16 %v123
    %v245 = vunpack.c.l.b16 %v124
    %v246 = vpack.c.b16 %v215, %v214
    %v247 = vpack.c.b16 %v217, %v216
    %v248 = vpack.c.b16 %v219, %v218
    %v249 = vpack.c.b16 %v221, %v220
    %v250 = vpack.c.b16 %v223, %v222
    %v251 = vpack.c.b16 %v225, %v224
    %v252 = vpack.c.b16 %v227, %v226
    %v253 = vpack.c.b16 %v229, %v228
    %v254 = vpack.c.b16 %v231, %v230
    %v255 = vpack.c.b16 %v233, %v232
    %v256 = vpack.c.b16 %v235, %v234
    %v257 = vpack.c.b16 %v237, %v236
    %v258 = vpack.c.b16 %v239, %v238
    %v259 = vpack.c.b16 %v241, %v240
    %v260 = vpack.c.b16 %v243, %v242
    %v261 = vpack.c.b16 %v245, %v244
    %v310 = vunpack.c.l.b16 %v129
    %v311 = vunpack.c.h.b16 %v129
    %v312 = vunpack.c.l.b16 %v130
    %v313 = vunpack.c.h.b16 %v130
    %v314 = vunpack.c.l.b16 %v131
    %v315 = vunpack.c.h.b16 %v131
    %v316 = vunpack.c.l.b16 %v132
    %v317 = vunpack.c.h.b16 %v132
    %v318 = vunpack.c.l.b16 %v133
    %v319 = vunpack.c.h.b16 %v133
    %v320 = vunpack.c.l.b16 %v134
    %v321 = vunpack.c.h.b16 %v134
    %v322 = vunpack.c.l.b16 %v135
    %v323 = vunpack.c.h.b16 %v135
    %v324 = vunpack.c.l.b16 %v136
    %v325 = vunpack.c.h.b16 %v136
    %v326 = vunpack.c.l.b16 %v137
    %v327 = vunpack.c.h.b16 %v137
    %v328 = vunpack.c.l.b16 %v138
    %v329 = vunpack.c.h.b16 %v138
    %v330 = vunpack.c.l.b16 %v139
    %v331 = vunpack.c.h.b16 %v139
    %v332 = vunpack.c.l.b16 %v140
    %v333 = vunpack.c.h.b16 %v140
    %v334 = vunpack.c.l.b16 %v141
    %v335 = vunpack.c.h.b16 %v141
    %v336 = vunpack.c.l.b16 %v142
    %v337 = vunpack.c.h.b16 %v142
    %v338 = vunpack.c.l.b16 %v143
    %v339 = vunpack.c.h.b16 %v143
    %v340 = vunpack.c.l.b16 %v144
    %v341 = vunpack.c.h.b16 %v144
    %v342 = vunpack.c.l.b16 %v145
    %v343 = vunpack.c.h.b16 %v145
    %v344 = vunpack.c.l.b16 %v146
    %v345 = vunpack.c.h.b16 %v146
    %v346 = vunpack.c.l.b16 %v147
    %v347 = vunpack.c.h.b16 %v147
    %v348 = vunpack.c.l.b16 %v148
    %v349 = vunpack.c.h.b16 %v148
    %v350 = vunpack.c.l.b16 %v149
    %v351 = vunpack.c.h.b16 %v149
    %v352 = vunpack.c.l.b16 %v150
    %v353 = vunpack.c.h.b16 %v150
    %v354 = vunpack.c.l.b16 %v151
    %v355 = vunpack.c.h.b16 %v151
    %v356 = vunpack.c.l.b16 %v152
    %v357 = vunpack.c.h.b16 %v152
    %v358 = vunpack.c.l.b16 %v153
    %v359 = vunpack.c.h.b16 %v153
    %v360 = vunpack.c.l.b16 %v154
    %v361 = vunpack.c.h.b16 %v154
    %v362 = vunpack.c.l.b16 %v155
    %v363 = vunpack.c.h.b16 %v155
    %v364 = vunpack.c.l.b16 %v156
    %v365 = vunpack.c.h.b16 %v156
    %v366 = vunpack.c.l.b16 %v157
    %v367 = vunpack.c.h.b16 %v157
    %v368 = vunpack.c.l.b16 %v158
    %v369 = vunpack.c.h.b16 %v158
    %v370 = vunpack.c.l.b16 %v159
    %v371 = vunpack.c.h.b16 %v159
    %v372 = vunpack.c.l.b16 %v160
    %v373 = vunpack.c.h.b16 %v160
    %v374 = vpack.c.b16 %v314, %v310
    %v375 = vpack.c.b16 %v315, %v311
    %v376 = vpack.c.b16 %v316, %v312
    %v377 = vpack.c.b16 %v317, %v313
    %v378 = vpack.c.b16 %v322, %v318
    %v379 = vpack.c.b16 %v323, %v319
    %v380 = vpack.c.b16 %v324, %v320
    %v381 = vpack.c.b16 %v325, %v321
    %v382 = vpack.c.b16 %v330, %v326
    %v383 = vpack.c.b16 %v331, %v327
    %v384 = vpack.c.b16 %v332, %v328
    %v385 = vpack.c.b16 %v333, %v329
    %v386 = vpack.c.b16 %v338, %v334
    %v387 = vpack.c.b16 %v339, %v335
    %v388 = vpack.c.b16 %v340, %v336
    %v389 = vpack.c.b16 %v341, %v337
    %v390 = vpack.c.b16 %v346, %v342
    %v391 = vpack.c.b16 %v347, %v343
    %v392 = vpack.c.b16 %v348, %v344
    %v393 = vpack.c.b16 %v349, %v345
    %v394 = vpack.c.b16 %v354, %v350
    %v395 = vpack.c.b16 %v355, %v351
    %v396 = vpack.c.b16 %v356, %v352
    %v397 = vpack.c.b16 %v357, %v353
    %v398 = vpack.c.b16 %v362, %v358
    %v399 = vpack.c.b16 %v363, %v359
    %v400 = vpack.c.b16 %v364, %v360
    %v401 = vpack.c.b16 %v365, %v361
    %v402 = vpack.c.b16 %v370, %v366
    %v403 = vpack.c.b16 %v371, %v367
    %v404 = vpack.c.b16 %v372, %v368
    %v405 = vpack.c.b16 %v373, %v369
    %438 = vmatprep.subr.bf16.mxu0 %v375
    %439 = vmatpush1.bf16.msra.mxu0 %v374
    %440 = vmatprep.subr.bf16.mxu0 %v379
    %441 = vmatpush1.bf16.msra.mxu0 %v378
    %442 = vmatprep.subr.bf16.mxu0 %v383
    %443 = vmatpush1.bf16.msra.mxu0 %v382
    %444 = vmatprep.subr.bf16.mxu0 %v387
    %445 = vmatpush1.bf16.msra.mxu0 %v386
    %446 = vmatprep.subr.bf16.mxu0 %v391
    %447 = vmatpush1.bf16.msra.mxu0 %v390
    %448 = vmatprep.subr.bf16.mxu0 %v395
    %449 = vmatpush1.bf16.msra.mxu0 %v394
    %450 = vmatprep.subr.bf16.mxu0 %v399
    %451 = vmatpush1.bf16.msra.mxu0 %v398
    %452 = vmatprep.subr.bf16.mxu0 %v403
    %453 = vmatpush1.bf16.msra.mxu0 %v402
    %454 = vmatprep.subr.bf16.mxu0 0
    %455 = vmatpush1.bf16.msra.mxu0 0
    %456 = vmatprep.subr.bf16.mxu0 0
    %457 = vmatpush1.bf16.msra.mxu0 0
    %458 = vmatprep.subr.bf16.mxu0 0
    %459 = vmatpush1.bf16.msra.mxu0 0
    %460 = vmatprep.subr.bf16.mxu0 0
    %461 = vmatpush1.bf16.msra.mxu0 0
    %462 = vmatprep.subr.bf16.mxu0 0
    %463 = vmatpush1.bf16.msra.mxu0 0
    %464 = vmatprep.subr.bf16.mxu0 0
    %465 = vmatpush1.bf16.msra.mxu0 0
    %466 = vmatprep.subr.bf16.mxu0 0
    %467 = vmatpush1.bf16.msra.mxu0 0
    %468 = vmatprep.subr.bf16.mxu0 0
    %469 = vmatpush1.bf16.msra.mxu0 0
    %470 = vmatprep.mubr.bf16.mxu0 0
    %471 = vmatmul.mubr.bf16.gmra.mrb[0].mxu0 %v246
    %v472 = vpop.f32.mrb[0].mxu0
    %v473 = vadd.f32 %v165, %v472
    %v474 = vpop.f32.mrb[0].mxu0
    %v475 = vadd.f32 %v169, %v474
    %v476 = vpop.f32.mrb[0].mxu0
    %v477 = vadd.f32 %v165, %v476
    %v478 = vpop.f32.mrb[0].mxu0
    %v479 = vadd.f32 %v169, %v478
    %480 = vmatprep.mubr.bf16.mxu0 0
    %481 = vmatmul.mubr.bf16.gmra.mrb[0].mxu0 %v247
    %v482 = vpop.f32.mrb[0].mxu0
    %v483 = vadd.f32 %v165, %v482
    %v484 = vpop.f32.mrb[0].mxu0
    %v485 = vadd.f32 %v169, %v484
    %v486 = vpop.f32.mrb[0].mxu0
    %v487 = vadd.f32 %v165, %v486
    %v488 = vpop.f32.mrb[0].mxu0
    %v489 = vadd.f32 %v169, %v488
    %490 = vmatprep.mubr.bf16.mxu0 0
    %491 = vmatmul.mubr.bf16.gmra.mrb[0].mxu0 %v248
    %v492 = vpop.f32.mrb[0].mxu0
    %v493 = vadd.f32 %v165, %v492
    %v494 = vpop.f32.mrb[0].mxu0
    %v495 = vadd.f32 %v169, %v494
    %v496 = vpop.f32.mrb[0].mxu0
    %v497 = vadd.f32 %v165, %v496
    %v498 = vpop.f32.mrb[0].mxu0
    %v499 = vadd.f32 %v169, %v498
    %500 = vmatprep.mubr.bf16.mxu0 0
    %501 = vmatmul.mubr.bf16.gmra.mrb[0].mxu0 %v249
    %v502 = vpop.f32.mrb[0].mxu0
    %v503 = vadd.f32 %v165, %v502
    %v504 = vpop.f32.mrb[0].mxu0
    %v505 = vadd.f32 %v169, %v504
    %v506 = vpop.f32.mrb[0].mxu0
    %v507 = vadd.f32 %v165, %v506
    %v508 = vpop.f32.mrb[0].mxu0
    %v509 = vadd.f32 %v169, %v508
    %510 = vmatprep.mubr.bf16.mxu0 0
    %511 = vmatmul.mubr.bf16.gmra.mrb[0].mxu0 %v250
    %v512 = vpop.f32.mrb[0].mxu0
    %v513 = vadd.f32 %v165, %v512
    %v514 = vpop.f32.mrb[0].mxu0
    %v515 = vadd.f32 %v169, %v514
    %v516 = vpop.f32.mrb[0].mxu0
    %v517 = vadd.f32 %v165, %v516
    %v518 = vpop.f32.mrb[0].mxu0
    %v519 = vadd.f32 %v169, %v518
    %520 = vmatprep.mubr.bf16.mxu0 0
    %521 = vmatmul.mubr.bf16.gmra.mrb[0].mxu0 %v251
    %v522 = vpop.f32.mrb[0].mxu0
    %v523 = vadd.f32 %v165, %v522
    %v524 = vpop.f32.mrb[0].mxu0
    %v525 = vadd.f32 %v169, %v524
    %v526 = vpop.f32.mrb[0].mxu0
    %v527 = vadd.f32 %v165, %v526
    %v528 = vpop.f32.mrb[0].mxu0
    %v529 = vadd.f32 %v169, %v528
    %530 = vmatprep.mubr.bf16.mxu0 0
    %531 = vmatmul.mubr.bf16.gmra.mrb[0].mxu0 %v252
    %v532 = vpop.f32.mrb[0].mxu0
    %v533 = vadd.f32 %v165, %v532
    %v534 = vpop.f32.mrb[0].mxu0
    %v535 = vadd.f32 %v169, %v534
    %v536 = vpop.f32.mrb[0].mxu0
    %v537 = vadd.f32 %v165, %v536
    %v538 = vpop.f32.mrb[0].mxu0
    %v539 = vadd.f32 %v169, %v538
    %540 = vmatprep.mubr.bf16.mxu0 0
    %541 = vmatmul.mubr.bf16.gmra.mrb[0].mxu0 %v253
    %v542 = vpop.f32.mrb[0].mxu0
    %v543 = vadd.f32 %v165, %v542
    %v544 = vpop.f32.mrb[0].mxu0
    %v545 = vadd.f32 %v169, %v544
    %v546 = vpop.f32.mrb[0].mxu0
    %v547 = vadd.f32 %v165, %v546
    %v548 = vpop.f32.mrb[0].mxu0
    %v549 = vadd.f32 %v169, %v548
    %550 = vmatprep.mubr.bf16.mxu0 0
    %551 = vmatmul.mubr.bf16.gmra.mrb[0].mxu0 %v254
    %v552 = vpop.f32.mrb[0].mxu0
    %v553 = vadd.f32 %v165, %v552
    %v554 = vpop.f32.mrb[0].mxu0
    %v555 = vadd.f32 %v169, %v554
    %v556 = vpop.f32.mrb[0].mxu0
    %v557 = vadd.f32 %v165, %v556
    %v558 = vpop.f32.mrb[0].mxu0
    %v559 = vadd.f32 %v169, %v558
    %560 = vmatprep.mubr.bf16.mxu0 0
    %561 = vmatmul.mubr.bf16.gmra.mrb[0].mxu0 %v255
    %v562 = vpop.f32.mrb[0].mxu0
    %v563 = vadd.f32 %v165, %v562
    %v564 = vpop.f32.mrb[0].mxu0
    %v565 = vadd.f32 %v169, %v564
    %v566 = vpop.f32.mrb[0].mxu0
    %v567 = vadd.f32 %v165, %v566
    %v568 = vpop.f32.mrb[0].mxu0
    %v569 = vadd.f32 %v169, %v568
    %570 = vmatprep.mubr.bf16.mxu0 0
    %571 = vmatmul.mubr.bf16.gmra.mrb[0].mxu0 %v256
    %v572 = vpop.f32.mrb[0].mxu0
    %v573 = vadd.f32 %v165, %v572
    %v574 = vpop.f32.mrb[0].mxu0
    %v575 = vadd.f32 %v169, %v574
    %v576 = vpop.f32.mrb[0].mxu0
    %v577 = vadd.f32 %v165, %v576
    %v578 = vpop.f32.mrb[0].mxu0
    %v579 = vadd.f32 %v169, %v578
    %580 = vmatprep.mubr.bf16.mxu0 0
    %581 = vmatmul.mubr.bf16.gmra.mrb[0].mxu0 %v257
    %v582 = vpop.f32.mrb[0].mxu0
    %v583 = vadd.f32 %v165, %v582
    %v584 = vpop.f32.mrb[0].mxu0
    %v585 = vadd.f32 %v169, %v584
    %v586 = vpop.f32.mrb[0].mxu0
    %v587 = vadd.f32 %v165, %v586
    %v588 = vpop.f32.mrb[0].mxu0
    %v589 = vadd.f32 %v169, %v588
    %590 = vmatprep.mubr.bf16.mxu0 0
    %591 = vmatmul.mubr.bf16.gmra.mrb[0].mxu0 %v258
    %v592 = vpop.f32.mrb[0].mxu0
    %v593 = vadd.f32 %v165, %v592
    %v594 = vpop.f32.mrb[0].mxu0
    %v595 = vadd.f32 %v169, %v594
    %v596 = vpop.f32.mrb[0].mxu0
    %v597 = vadd.f32 %v165, %v596
    %v598 = vpop.f32.mrb[0].mxu0
    %v599 = vadd.f32 %v169, %v598
    %600 = vmatprep.mubr.bf16.mxu0 0
    %601 = vmatmul.mubr.bf16.gmra.mrb[0].mxu0 %v259
    %v602 = vpop.f32.mrb[0].mxu0
    %v603 = vadd.f32 %v165, %v602
    %v604 = vpop.f32.mrb[0].mxu0
    %v605 = vadd.f32 %v169, %v604
    %v606 = vpop.f32.mrb[0].mxu0
    %v607 = vadd.f32 %v165, %v606
    %v608 = vpop.f32.mrb[0].mxu0
    %v609 = vadd.f32 %v169, %v608
    %610 = vmatprep.mubr.bf16.mxu0 0
    %611 = vmatmul.mubr.bf16.gmra.mrb[0].mxu0 %v260
    %v612 = vpop.f32.mrb[0].mxu0
    %v613 = vadd.f32 %v165, %v612
    %v614 = vpop.f32.mrb[0].mxu0
    %v615 = vadd.f32 %v169, %v614
    %v616 = vpop.f32.mrb[0].mxu0
    %v617 = vadd.f32 %v165, %v616
    %v618 = vpop.f32.mrb[0].mxu0
    %v619 = vadd.f32 %v169, %v618
    %620 = vmatprep.mubr.bf16.mxu0 0
    %621 = vmatmul.mubr.bf16.gmra.mrb[0].mxu0 %v261
    %v622 = vpop.f32.mrb[0].mxu0
    %v623 = vadd.f32 %v165, %v622
    %v624 = vpop.f32.mrb[0].mxu0
    %v625 = vadd.f32 %v169, %v624
    %v626 = vpop.f32.mrb[0].mxu0
    %v627 = vadd.f32 %v165, %v626
    %v628 = vpop.f32.mrb[0].mxu0
    %v629 = vadd.f32 %v169, %v628
    %630 = vdwg.mxu0
    %631 = vmatprep.subr.bf16.mxu0 %v377
    %632 = vmatpush1.bf16.msra.mxu0 %v376
    %633 = vmatprep.subr.bf16.mxu0 %v381
    %634 = vmatpush1.bf16.msra.mxu0 %v380
    %635 = vmatprep.subr.bf16.mxu0 %v385
    %636 = vmatpush1.bf16.msra.mxu0 %v384
    %637 = vmatprep.subr.bf16.mxu0 %v389
    %638 = vmatpush1.bf16.msra.mxu0 %v388
    %639 = vmatprep.subr.bf16.mxu0 %v393
    %640 = vmatpush1.bf16.msra.mxu0 %v392
    %641 = vmatprep.subr.bf16.mxu0 %v397
    %642 = vmatpush1.bf16.msra.mxu0 %v396
    %643 = vmatprep.subr.bf16.mxu0 %v401
    %644 = vmatpush1.bf16.msra.mxu0 %v400
    %645 = vmatprep.subr.bf16.mxu0 %v405
    %646 = vmatpush1.bf16.msra.mxu0 %v404
    %647 = vmatprep.subr.bf16.mxu0 0
    %648 = vmatpush1.bf16.msra.mxu0 0
    %649 = vmatprep.subr.bf16.mxu0 0
    %650 = vmatpush1.bf16.msra.mxu0 0
    %651 = vmatprep.subr.bf16.mxu0 0
    %652 = vmatpush1.bf16.msra.mxu0 0
    %653 = vmatprep.subr.bf16.mxu0 0
    %654 = vmatpush1.bf16.msra.mxu0 0
    %655 = vmatprep.subr.bf16.mxu0 0
    %656 = vmatpush1.bf16.msra.mxu0 0
    %657 = vmatprep.subr.bf16.mxu0 0
    %658 = vmatpush1.bf16.msra.mxu0 0
    %659 = vmatprep.subr.bf16.mxu0 0
    %660 = vmatpush1.bf16.msra.mxu0 0
    %661 = vmatprep.subr.bf16.mxu0 0
    %662 = vmatpush1.bf16.msra.mxu0 0
    %663 = vmatprep.mubr.bf16.mxu0 0
    %664 = vmatmul.mubr.bf16.gmra.mrb[0].mxu0 %v246
    %v665 = vpop.f32.mrb[0].mxu0
    %v666 = vadd.f32 %v173, %v665
    %v667 = vpop.f32.mrb[0].mxu0
    %v668 = vadd.f32 %v177, %v667
    %v669 = vpop.f32.mrb[0].mxu0
    %v670 = vadd.f32 %v173, %v669
    %v671 = vpop.f32.mrb[0].mxu0
    %v672 = vadd.f32 %v177, %v671
    %673 = vmatprep.mubr.bf16.mxu0 0
    %674 = vmatmul.mubr.bf16.gmra.mrb[0].mxu0 %v247
    %v675 = vpop.f32.mrb[0].mxu0
    %v676 = vadd.f32 %v173, %v675
    %v677 = vpop.f32.mrb[0].mxu0
    %v678 = vadd.f32 %v177, %v677
    %v679 = vpop.f32.mrb[0].mxu0
    %v680 = vadd.f32 %v173, %v679
    %v681 = vpop.f32.mrb[0].mxu0
    %v682 = vadd.f32 %v177, %v681
    %683 = vmatprep.mubr.bf16.mxu0 0
    %684 = vmatmul.mubr.bf16.gmra.mrb[0].mxu0 %v248
    %v685 = vpop.f32.mrb[0].mxu0
    %v686 = vadd.f32 %v173, %v685
    %v687 = vpop.f32.mrb[0].mxu0
    %v688 = vadd.f32 %v177, %v687
    %v689 = vpop.f32.mrb[0].mxu0
    %v690 = vadd.f32 %v173, %v689
    %v691 = vpop.f32.mrb[0].mxu0
    %v692 = vadd.f32 %v177, %v691
    %693 = vmatprep.mubr.bf16.mxu0 0
    %694 = vmatmul.mubr.bf16.gmra.mrb[0].mxu0 %v249
    %v695 = vpop.f32.mrb[0].mxu0
    %v696 = vadd.f32 %v173, %v695
    %v697 = vpop.f32.mrb[0].mxu0
    %v698 = vadd.f32 %v177, %v697
    %v699 = vpop.f32.mrb[0].mxu0
    %v700 = vadd.f32 %v173, %v699
    %v701 = vpop.f32.mrb[0].mxu0
    %v702 = vadd.f32 %v177, %v701
    %703 = vmatprep.mubr.bf16.mxu0 0
    %704 = vmatmul.mubr.bf16.gmra.mrb[0].mxu0 %v250
    %v705 = vpop.f32.mrb[0].mxu0
    %v706 = vadd.f32 %v173, %v705
    %v707 = vpop.f32.mrb[0].mxu0
    %v708 = vadd.f32 %v177, %v707
    %v709 = vpop.f32.mrb[0].mxu0
    %v710 = vadd.f32 %v173, %v709
    %v711 = vpop.f32.mrb[0].mxu0
    %v712 = vadd.f32 %v177, %v711
    %713 = vmatprep.mubr.bf16.mxu0 0
    %714 = vmatmul.mubr.bf16.gmra.mrb[0].mxu0 %v251
    %v715 = vpop.f32.mrb[0].mxu0
    %v716 = vadd.f32 %v173, %v715
    %v717 = vpop.f32.mrb[0].mxu0
    %v718 = vadd.f32 %v177, %v717
    %v719 = vpop.f32.mrb[0].mxu0
    %v720 = vadd.f32 %v173, %v719
    %v721 = vpop.f32.mrb[0].mxu0
    %v722 = vadd.f32 %v177, %v721
    %723 = vmatprep.mubr.bf16.mxu0 0
    %724 = vmatmul.mubr.bf16.gmra.mrb[0].mxu0 %v252
    %v725 = vpop.f32.mrb[0].mxu0
    %v726 = vadd.f32 %v173, %v725
    %v727 = vpop.f32.mrb[0].mxu0
    %v728 = vadd.f32 %v177, %v727
    %v729 = vpop.f32.mrb[0].mxu0
    %v730 = vadd.f32 %v173, %v729
    %v731 = vpop.f32.mrb[0].mxu0
    %v732 = vadd.f32 %v177, %v731
    %733 = vmatprep.mubr.bf16.mxu0 0
    %734 = vmatmul.mubr.bf16.gmra.mrb[0].mxu0 %v253
    %v735 = vpop.f32.mrb[0].mxu0
    %v736 = vadd.f32 %v173, %v735
    %v737 = vpop.f32.mrb[0].mxu0
    %v738 = vadd.f32 %v177, %v737
    %v739 = vpop.f32.mrb[0].mxu0
    %v740 = vadd.f32 %v173, %v739
    %v741 = vpop.f32.mrb[0].mxu0
    %v742 = vadd.f32 %v177, %v741
    %743 = vmatprep.mubr.bf16.mxu0 0
    %744 = vmatmul.mubr.bf16.gmra.mrb[0].mxu0 %v254
    %v745 = vpop.f32.mrb[0].mxu0
    %v746 = vadd.f32 %v173, %v745
    %v747 = vpop.f32.mrb[0].mxu0
    %v748 = vadd.f32 %v177, %v747
    %v749 = vpop.f32.mrb[0].mxu0
    %v750 = vadd.f32 %v173, %v749
    %v751 = vpop.f32.mrb[0].mxu0
    %v752 = vadd.f32 %v177, %v751
    %753 = vmatprep.mubr.bf16.mxu0 0
    %754 = vmatmul.mubr.bf16.gmra.mrb[0].mxu0 %v255
    %v755 = vpop.f32.mrb[0].mxu0
    %v756 = vadd.f32 %v173, %v755
    %v757 = vpop.f32.mrb[0].mxu0
    %v758 = vadd.f32 %v177, %v757
    %v759 = vpop.f32.mrb[0].mxu0
    %v760 = vadd.f32 %v173, %v759
    %v761 = vpop.f32.mrb[0].mxu0
    %v762 = vadd.f32 %v177, %v761
    %763 = vmatprep.mubr.bf16.mxu0 0
    %764 = vmatmul.mubr.bf16.gmra.mrb[0].mxu0 %v256
    %v765 = vpop.f32.mrb[0].mxu0
    %v766 = vadd.f32 %v173, %v765
    %v767 = vpop.f32.mrb[0].mxu0
    %v768 = vadd.f32 %v177, %v767
    %v769 = vpop.f32.mrb[0].mxu0
    %v770 = vadd.f32 %v173, %v769
    %v771 = vpop.f32.mrb[0].mxu0
    %v772 = vadd.f32 %v177, %v771
    %773 = vmatprep.mubr.bf16.mxu0 0
    %774 = vmatmul.mubr.bf16.gmra.mrb[0].mxu0 %v257
    %v775 = vpop.f32.mrb[0].mxu0
    %v776 = vadd.f32 %v173, %v775
    %v777 = vpop.f32.mrb[0].mxu0
    %v778 = vadd.f32 %v177, %v777
    %v779 = vpop.f32.mrb[0].mxu0
    %v780 = vadd.f32 %v173, %v779
    %v781 = vpop.f32.mrb[0].mxu0
    %v782 = vadd.f32 %v177, %v781
    %783 = vmatprep.mubr.bf16.mxu0 0
    %784 = vmatmul.mubr.bf16.gmra.mrb[0].mxu0 %v258
    %v785 = vpop.f32.mrb[0].mxu0
    %v786 = vadd.f32 %v173, %v785
    %v787 = vpop.f32.mrb[0].mxu0
    %v788 = vadd.f32 %v177, %v787
    %v789 = vpop.f32.mrb[0].mxu0
    %v790 = vadd.f32 %v173, %v789
    %v791 = vpop.f32.mrb[0].mxu0
    %v792 = vadd.f32 %v177, %v791
    %793 = vmatprep.mubr.bf16.mxu0 0
    %794 = vmatmul.mubr.bf16.gmra.mrb[0].mxu0 %v259
    %v795 = vpop.f32.mrb[0].mxu0
    %v796 = vadd.f32 %v173, %v795
    %v797 = vpop.f32.mrb[0].mxu0
    %v798 = vadd.f32 %v177, %v797
    %v799 = vpop.f32.mrb[0].mxu0
    %v800 = vadd.f32 %v173, %v799
    %v801 = vpop.f32.mrb[0].mxu0
    %v802 = vadd.f32 %v177, %v801
    %803 = vmatprep.mubr.bf16.mxu0 0
    %804 = vmatmul.mubr.bf16.gmra.mrb[0].mxu0 %v260
    %v805 = vpop.f32.mrb[0].mxu0
    %v806 = vadd.f32 %v173, %v805
    %v807 = vpop.f32.mrb[0].mxu0
    %v808 = vadd.f32 %v177, %v807
    %v809 = vpop.f32.mrb[0].mxu0
    %v810 = vadd.f32 %v173, %v809
    %v811 = vpop.f32.mrb[0].mxu0
    %v812 = vadd.f32 %v177, %v811
    %813 = vmatprep.mubr.bf16.mxu0 0
    %814 = vmatmul.mubr.bf16.gmra.mrb[0].mxu0 %v261
    %v815 = vpop.f32.mrb[0].mxu0
    %v816 = vadd.f32 %v173, %v815
    %v817 = vpop.f32.mrb[0].mxu0
    %v818 = vadd.f32 %v177, %v817
    %v819 = vpop.f32.mrb[0].mxu0
    %v820 = vadd.f32 %v173, %v819
    %v821 = vpop.f32.mrb[0].mxu0
    %v822 = vadd.f32 %v177, %v821
    %823 = vdwg.mxu0
    %v824 = vmax.f32 %v473, 0.0
    %v825 = vmax.f32 %v475, 0.0
    %v826 = vmax.f32 %v666, 0.0
    %v827 = vmax.f32 %v668, 0.0
    %v828 = vmax.f32 %v477, 0.0
    %v829 = vmax.f32 %v479, 0.0
    %v830 = vmax.f32 %v670, 0.0
    %v831 = vmax.f32 %v672, 0.0
    %v832 = vmax.f32 %v483, 0.0
    %v833 = vmax.f32 %v485, 0.0
    %v834 = vmax.f32 %v676, 0.0
    %v835 = vmax.f32 %v678, 0.0
    %v836 = vmax.f32 %v487, 0.0
    %v837 = vmax.f32 %v489, 0.0
    %v838 = vmax.f32 %v680, 0.0
    %v839 = vmax.f32 %v682, 0.0
    %v840 = vmax.f32 %v493, 0.0
    %v841 = vmax.f32 %v495, 0.0
    %v842 = vmax.f32 %v686, 0.0
    %v843 = vmax.f32 %v688, 0.0
    %v844 = vmax.f32 %v497, 0.0
    %v845 = vmax.f32 %v499, 0.0
    %v846 = vmax.f32 %v690, 0.0
    %v847 = vmax.f32 %v692, 0.0
    %v848 = vmax.f32 %v503, 0.0
    %v849 = vmax.f32 %v505, 0.0
    %v850 = vmax.f32 %v696, 0.0
    %v851 = vmax.f32 %v698, 0.0
    %v852 = vmax.f32 %v507, 0.0
    %v853 = vmax.f32 %v509, 0.0
    %v854 = vmax.f32 %v700, 0.0
    %v855 = vmax.f32 %v702, 0.0
    %v856 = vmax.f32 %v513, 0.0
    %v857 = vmax.f32 %v515, 0.0
    %v858 = vmax.f32 %v706, 0.0
    %v859 = vmax.f32 %v708, 0.0
    %v860 = vmax.f32 %v517, 0.0
    %v861 = vmax.f32 %v519, 0.0
    %v862 = vmax.f32 %v710, 0.0
    %v863 = vmax.f32 %v712, 0.0
    %v864 = vmax.f32 %v523, 0.0
    %v865 = vmax.f32 %v525, 0.0
    %v866 = vmax.f32 %v716, 0.0
    %v867 = vmax.f32 %v718, 0.0
    %v868 = vmax.f32 %v527, 0.0
    %v869 = vmax.f32 %v529, 0.0
    %v870 = vmax.f32 %v720, 0.0
    %v871 = vmax.f32 %v722, 0.0
    %v872 = vmax.f32 %v533, 0.0
    %v873 = vmax.f32 %v535, 0.0
    %v874 = vmax.f32 %v726, 0.0
    %v875 = vmax.f32 %v728, 0.0
    %v876 = vmax.f32 %v537, 0.0
    %v877 = vmax.f32 %v539, 0.0
    %v878 = vmax.f32 %v730, 0.0
    %v879 = vmax.f32 %v732, 0.0
    %v880 = vmax.f32 %v543, 0.0
    %v881 = vmax.f32 %v545, 0.0
    %v882 = vmax.f32 %v736, 0.0
    %v883 = vmax.f32 %v738, 0.0
    %v884 = vmax.f32 %v547, 0.0
    %v885 = vmax.f32 %v549, 0.0
    %v886 = vmax.f32 %v740, 0.0
    %v887 = vmax.f32 %v742, 0.0
    %v888 = vmax.f32 %v553, 0.0
    %v889 = vmax.f32 %v555, 0.0
    %v890 = vmax.f32 %v746, 0.0
    %v891 = vmax.f32 %v748, 0.0
    %v892 = vmax.f32 %v557, 0.0
    %v893 = vmax.f32 %v559, 0.0
    %v894 = vmax.f32 %v750, 0.0
    %v895 = vmax.f32 %v752, 0.0
    %v896 = vmax.f32 %v563, 0.0
    %v897 = vmax.f32 %v565, 0.0
    %v898 = vmax.f32 %v756, 0.0
    %v899 = vmax.f32 %v758, 0.0
    %v900 = vmax.f32 %v567, 0.0
    %v901 = vmax.f32 %v569, 0.0
    %v902 = vmax.f32 %v760, 0.0
    %v903 = vmax.f32 %v762, 0.0
    %v904 = vmax.f32 %v573, 0.0
    %v905 = vmax.f32 %v575, 0.0
    %v906 = vmax.f32 %v766, 0.0
    %v907 = vmax.f32 %v768, 0.0
    %v908 = vmax.f32 %v577, 0.0
    %v909 = vmax.f32 %v579, 0.0
    %v910 = vmax.f32 %v770, 0.0
    %v911 = vmax.f32 %v772, 0.0
    %v912 = vmax.f32 %v583, 0.0
    %v913 = vmax.f32 %v585, 0.0
    %v914 = vmax.f32 %v776, 0.0
    %v915 = vmax.f32 %v778, 0.0
    %v916 = vmax.f32 %v587, 0.0
    %v917 = vmax.f32 %v589, 0.0
    %v918 = vmax.f32 %v780, 0.0
    %v919 = vmax.f32 %v782, 0.0
    %v920 = vmax.f32 %v593, 0.0
    %v921 = vmax.f32 %v595, 0.0
    %v922 = vmax.f32 %v786, 0.0
    %v923 = vmax.f32 %v788, 0.0
    %v924 = vmax.f32 %v597, 0.0
    %v925 = vmax.f32 %v599, 0.0
    %v926 = vmax.f32 %v790, 0.0
    %v927 = vmax.f32 %v792, 0.0
    %v928 = vmax.f32 %v603, 0.0
    %v929 = vmax.f32 %v605, 0.0
    %v930 = vmax.f32 %v796, 0.0
    %v931 = vmax.f32 %v798, 0.0
    %v932 = vmax.f32 %v607, 0.0
    %v933 = vmax.f32 %v609, 0.0
    %v934 = vmax.f32 %v800, 0.0
    %v935 = vmax.f32 %v802, 0.0
    %v936 = vmax.f32 %v613, 0.0
    %v937 = vmax.f32 %v615, 0.0
    %v938 = vmax.f32 %v806, 0.0
    %v939 = vmax.f32 %v808, 0.0
    %v940 = vmax.f32 %v617, 0.0
    %v941 = vmax.f32 %v619, 0.0
    %v942 = vmax.f32 %v810, 0.0
    %v943 = vmax.f32 %v812, 0.0
    %v944 = vmax.f32 %v623, 0.0
    %v945 = vmax.f32 %v625, 0.0
    %v946 = vmax.f32 %v816, 0.0
    %v947 = vmax.f32 %v818, 0.0
    %v948 = vmax.f32 %v627, 0.0
    %v949 = vmax.f32 %v629, 0.0
    %v950 = vmax.f32 %v820, 0.0
    %v951 = vmax.f32 %v822, 0.0
    %v952 = vpack.c.bf16 %v828, %v824
    %v953 = vpack.c.bf16 %v829, %v825
    %v954 = vpack.c.bf16 %v830, %v826
    %v955 = vpack.c.bf16 %v831, %v827
    %v956 = vpack.c.bf16 %v836, %v832
    %v957 = vpack.c.bf16 %v837, %v833
    %v958 = vpack.c.bf16 %v838, %v834
    %v959 = vpack.c.bf16 %v839, %v835
    %v960 = vpack.c.bf16 %v844, %v840
    %v961 = vpack.c.bf16 %v845, %v841
    %v962 = vpack.c.bf16 %v846, %v842
    %v963 = vpack.c.bf16 %v847, %v843
    %v964 = vpack.c.bf16 %v852, %v848
    %v965 = vpack.c.bf16 %v853, %v849
    %v966 = vpack.c.bf16 %v854, %v850
    %v967 = vpack.c.bf16 %v855, %v851
    %v968 = vpack.c.bf16 %v860, %v856
    %v969 = vpack.c.bf16 %v861, %v857
    %v970 = vpack.c.bf16 %v862, %v858
    %v971 = vpack.c.bf16 %v863, %v859
    %v972 = vpack.c.bf16 %v868, %v864
    %v973 = vpack.c.bf16 %v869, %v865
    %v974 = vpack.c.bf16 %v870, %v866
    %v975 = vpack.c.bf16 %v871, %v867
    %v976 = vpack.c.bf16 %v876, %v872
    %v977 = vpack.c.bf16 %v877, %v873
    %v978 = vpack.c.bf16 %v878, %v874
    %v979 = vpack.c.bf16 %v879, %v875
    %v980 = vpack.c.bf16 %v884, %v880
    %v981 = vpack.c.bf16 %v885, %v881
    %v982 = vpack.c.bf16 %v886, %v882
    %v983 = vpack.c.bf16 %v887, %v883
    %v984 = vpack.c.bf16 %v892, %v888
    %v985 = vpack.c.bf16 %v893, %v889
    %v986 = vpack.c.bf16 %v894, %v890
    %v987 = vpack.c.bf16 %v895, %v891
    %v988 = vpack.c.bf16 %v900, %v896
    %v989 = vpack.c.bf16 %v901, %v897
    %v990 = vpack.c.bf16 %v902, %v898
    %v991 = vpack.c.bf16 %v903, %v899
    %v992 = vpack.c.bf16 %v908, %v904
    %v993 = vpack.c.bf16 %v909, %v905
    %v994 = vpack.c.bf16 %v910, %v906
    %v995 = vpack.c.bf16 %v911, %v907
    %v996 = vpack.c.bf16 %v916, %v912
    %v997 = vpack.c.bf16 %v917, %v913
    %v998 = vpack.c.bf16 %v918, %v914
    %v999 = vpack.c.bf16 %v919, %v915
    %v1000 = vpack.c.bf16 %v924, %v920
    %v1001 = vpack.c.bf16 %v925, %v921
    %v1002 = vpack.c.bf16 %v926, %v922
    %v1003 = vpack.c.bf16 %v927, %v923
    %v1004 = vpack.c.bf16 %v932, %v928
    %v1005 = vpack.c.bf16 %v933, %v929
    %v1006 = vpack.c.bf16 %v934, %v930
    %v1007 = vpack.c.bf16 %v935, %v931
    %v1008 = vpack.c.bf16 %v940, %v936
    %v1009 = vpack.c.bf16 %v941, %v937
    %v1010 = vpack.c.bf16 %v942, %v938
    %v1011 = vpack.c.bf16 %v943, %v939
    %v1012 = vpack.c.bf16 %v948, %v944
    %v1013 = vpack.c.bf16 %v949, %v945
    %v1014 = vpack.c.bf16 %v950, %v946
    %v1015 = vpack.c.bf16 %v951, %v947
    %v1016 = vld [vmem:[#allocation7] sm:$0xff]
    %v1017 = vld [vmem:[#allocation7 + $0x8] sm:$0xff]
    %v1018 = vld [vmem:[#allocation7 + $0x10] sm:$0xff]
    %v1019 = vld [vmem:[#allocation7 + $0x18] sm:$0xff]
    %v1020 = vld [vmem:[#allocation7 + $0x20] sm:$0xff]
    %v1021 = vld [vmem:[#allocation7 + $0x28] sm:$0xff]
    %v1022 = vld [vmem:[#allocation7 + $0x30] sm:$0xff]
    %v1023 = vld [vmem:[#allocation7 + $0x38] sm:$0xff]
    %v1024 = vld [vmem:[#allocation7 + $0x40] sm:$0xff]
    %v1025 = vld [vmem:[#allocation7 + $0x48] sm:$0xff]
    %v1026 = vld [vmem:[#allocation7 + $0x50] sm:$0xff]
    %v1027 = vld [vmem:[#allocation7 + $0x58] sm:$0xff]
    %v1028 = vld [vmem:[#allocation7 + $0x60] sm:$0xff]
    %v1029 = vld [vmem:[#allocation7 + $0x68] sm:$0xff]
    %v1030 = vld [vmem:[#allocation7 + $0x70] sm:$0xff]
    %v1031 = vld [vmem:[#allocation7 + $0x78] sm:$0xff]
    %v1032 = vld [vmem:[#allocation7 + $0x80] sm:$0xff]
    %v1033 = vld [vmem:[#allocation7 + $0x88] sm:$0xff]
    %v1034 = vld [vmem:[#allocation7 + $0x90] sm:$0xff]
    %v1035 = vld [vmem:[#allocation7 + $0x98] sm:$0xff]
    %v1036 = vld [vmem:[#allocation7 + $0xa0] sm:$0xff]
    %v1037 = vld [vmem:[#allocation7 + $0xa8] sm:$0xff]
    %v1038 = vld [vmem:[#allocation7 + $0xb0] sm:$0xff]
    %v1039 = vld [vmem:[#allocation7 + $0xb8] sm:$0xff]
    %v1040 = vld [vmem:[#allocation7 + $0xc0] sm:$0xff]
    %v1041 = vld [vmem:[#allocation7 + $0xc8] sm:$0xff]
    %v1042 = vld [vmem:[#allocation7 + $0xd0] sm:$0xff]
    %v1043 = vld [vmem:[#allocation7 + $0xd8] sm:$0xff]
    %v1044 = vld [vmem:[#allocation7 + $0xe0] sm:$0xff]
    %v1045 = vld [vmem:[#allocation7 + $0xe8] sm:$0xff]
    %v1046 = vld [vmem:[#allocation7 + $0xf0] sm:$0xff]
    %v1047 = vld [vmem:[#allocation7 + $0xf8] sm:$0xff]
    %v1048 = vld [vmem:[#allocation7 + $0x100] sm:$0xff]
    %v1049 = vld [vmem:[#allocation7 + $0x108] sm:$0xff]
    %v1050 = vld [vmem:[#allocation7 + $0x110] sm:$0xff]
    %v1051 = vld [vmem:[#allocation7 + $0x118] sm:$0xff]
    %v1052 = vld [vmem:[#allocation7 + $0x120] sm:$0xff]
    %v1053 = vld [vmem:[#allocation7 + $0x128] sm:$0xff]
    %v1054 = vld [vmem:[#allocation7 + $0x130] sm:$0xff]
    %v1055 = vld [vmem:[#allocation7 + $0x138] sm:$0xff]
    %v1056 = vld [vmem:[#allocation7 + $0x140] sm:$0xff]
    %v1057 = vld [vmem:[#allocation7 + $0x148] sm:$0xff]
    %v1058 = vld [vmem:[#allocation7 + $0x150] sm:$0xff]
    %v1059 = vld [vmem:[#allocation7 + $0x158] sm:$0xff]
    %v1060 = vld [vmem:[#allocation7 + $0x160] sm:$0xff]
    %v1061 = vld [vmem:[#allocation7 + $0x168] sm:$0xff]
    %v1062 = vld [vmem:[#allocation7 + $0x170] sm:$0xff]
    %v1063 = vld [vmem:[#allocation7 + $0x178] sm:$0xff]
    %v1064 = vld [vmem:[#allocation7 + $0x180] sm:$0xff]
    %v1065 = vld [vmem:[#allocation7 + $0x188] sm:$0xff]
    %v1066 = vld [vmem:[#allocation7 + $0x190] sm:$0xff]
    %v1067 = vld [vmem:[#allocation7 + $0x198] sm:$0xff]
    %v1068 = vld [vmem:[#allocation7 + $0x1a0] sm:$0xff]
    %v1069 = vld [vmem:[#allocation7 + $0x1a8] sm:$0xff]
    %v1070 = vld [vmem:[#allocation7 + $0x1b0] sm:$0xff]
    %v1071 = vld [vmem:[#allocation7 + $0x1b8] sm:$0xff]
    %v1072 = vld [vmem:[#allocation7 + $0x1c0] sm:$0xff]
    %v1073 = vld [vmem:[#allocation7 + $0x1c8] sm:$0xff]
    %v1074 = vld [vmem:[#allocation7 + $0x1d0] sm:$0xff]
    %v1075 = vld [vmem:[#allocation7 + $0x1d8] sm:$0xff]
    %v1076 = vld [vmem:[#allocation7 + $0x1e0] sm:$0xff]
    %v1077 = vld [vmem:[#allocation7 + $0x1e8] sm:$0xff]
    %v1078 = vld [vmem:[#allocation7 + $0x1f0] sm:$0xff]
    %v1079 = vld [vmem:[#allocation7 + $0x1f8] sm:$0xff]
    %v1080 = vld [vmem:[#allocation7 + $0x200] sm:$0xff]
    %v1081 = vld [vmem:[#allocation7 + $0x208] sm:$0xff]
    %v1082 = vld [vmem:[#allocation7 + $0x210] sm:$0xff]
    %v1083 = vld [vmem:[#allocation7 + $0x218] sm:$0xff]
    %v1084 = vld [vmem:[#allocation7 + $0x220] sm:$0xff]
    %v1085 = vld [vmem:[#allocation7 + $0x228] sm:$0xff]
    %v1086 = vld [vmem:[#allocation7 + $0x230] sm:$0xff]
    %v1087 = vld [vmem:[#allocation7 + $0x238] sm:$0xff]
    %v1088 = vld [vmem:[#allocation7 + $0x240] sm:$0xff]
    %v1089 = vld [vmem:[#allocation7 + $0x248] sm:$0xff]
    %v1090 = vld [vmem:[#allocation7 + $0x250] sm:$0xff]
    %v1091 = vld [vmem:[#allocation7 + $0x258] sm:$0xff]
    %v1092 = vld [vmem:[#allocation7 + $0x260] sm:$0xff]
    %v1093 = vld [vmem:[#allocation7 + $0x268] sm:$0xff]
    %v1094 = vld [vmem:[#allocation7 + $0x270] sm:$0xff]
    %v1095 = vld [vmem:[#allocation7 + $0x278] sm:$0xff]
    %v1096 = vld [vmem:[#allocation7 + $0x280] sm:$0xff]
    %v1097 = vld [vmem:[#allocation7 + $0x288] sm:$0xff]
    %v1098 = vld [vmem:[#allocation7 + $0x290] sm:$0xff]
    %v1099 = vld [vmem:[#allocation7 + $0x298] sm:$0xff]
    %v1100 = vld [vmem:[#allocation7 + $0x2a0] sm:$0xff]
    %v1101 = vld [vmem:[#allocation7 + $0x2a8] sm:$0xff]
    %v1102 = vld [vmem:[#allocation7 + $0x2b0] sm:$0xff]
    %v1103 = vld [vmem:[#allocation7 + $0x2b8] sm:$0xff]
    %v1104 = vld [vmem:[#allocation7 + $0x2c0] sm:$0xff]
    %v1105 = vld [vmem:[#allocation7 + $0x2c8] sm:$0xff]
    %v1106 = vld [vmem:[#allocation7 + $0x2d0] sm:$0xff]
    %v1107 = vld [vmem:[#allocation7 + $0x2d8] sm:$0xff]
    %v1108 = vld [vmem:[#allocation7 + $0x2e0] sm:$0xff]
    %v1109 = vld [vmem:[#allocation7 + $0x2e8] sm:$0xff]
    %v1110 = vld [vmem:[#allocation7 + $0x2f0] sm:$0xff]
    %v1111 = vld [vmem:[#allocation7 + $0x2f8] sm:$0xff]
    %v1112 = vld [vmem:[#allocation7 + $0x300] sm:$0xff]
    %v1113 = vld [vmem:[#allocation7 + $0x308] sm:$0xff]
    %v1114 = vld [vmem:[#allocation7 + $0x310] sm:$0xff]
    %v1115 = vld [vmem:[#allocation7 + $0x318] sm:$0xff]
    %v1116 = vld [vmem:[#allocation7 + $0x320] sm:$0xff]
    %v1117 = vld [vmem:[#allocation7 + $0x328] sm:$0xff]
    %v1118 = vld [vmem:[#allocation7 + $0x330] sm:$0xff]
    %v1119 = vld [vmem:[#allocation7 + $0x338] sm:$0xff]
    %v1120 = vld [vmem:[#allocation7 + $0x340] sm:$0xff]
    %v1121 = vld [vmem:[#allocation7 + $0x348] sm:$0xff]
    %v1122 = vld [vmem:[#allocation7 + $0x350] sm:$0xff]
    %v1123 = vld [vmem:[#allocation7 + $0x358] sm:$0xff]
    %v1124 = vld [vmem:[#allocation7 + $0x360] sm:$0xff]
    %v1125 = vld [vmem:[#allocation7 + $0x368] sm:$0xff]
    %v1126 = vld [vmem:[#allocation7 + $0x370] sm:$0xff]
    %v1127 = vld [vmem:[#allocation7 + $0x378] sm:$0xff]
    %v1128 = vld [vmem:[#allocation7 + $0x380] sm:$0xff]
    %v1129 = vld [vmem:[#allocation7 + $0x388] sm:$0xff]
    %v1130 = vld [vmem:[#allocation7 + $0x390] sm:$0xff]
    %v1131 = vld [vmem:[#allocation7 + $0x398] sm:$0xff]
    %v1132 = vld [vmem:[#allocation7 + $0x3a0] sm:$0xff]
    %v1133 = vld [vmem:[#allocation7 + $0x3a8] sm:$0xff]
    %v1134 = vld [vmem:[#allocation7 + $0x3b0] sm:$0xff]
    %v1135 = vld [vmem:[#allocation7 + $0x3b8] sm:$0xff]
    %v1136 = vld [vmem:[#allocation7 + $0x3c0] sm:$0xff]
    %v1137 = vld [vmem:[#allocation7 + $0x3c8] sm:$0xff]
    %v1138 = vld [vmem:[#allocation7 + $0x3d0] sm:$0xff]
    %v1139 = vld [vmem:[#allocation7 + $0x3d8] sm:$0xff]
    %v1140 = vld [vmem:[#allocation7 + $0x3e0] sm:$0xff]
    %v1141 = vld [vmem:[#allocation7 + $0x3e8] sm:$0xff]
    %v1142 = vld [vmem:[#allocation7 + $0x3f0] sm:$0xff]
    %v1143 = vld [vmem:[#allocation7 + $0x3f8] sm:$0xff]
    %v1145 = vlaneseq
    %v1146 = vshrl.u32 %v1145, 7
    %v1147 = vsub.s32 0, %v1146
    %v1148 = vrot.slane %v126, %v1147
    %v1149 = vlaneseq
    %v1150 = vshrl.u32 %v1149, 7
    %v1151 = vsub.s32 1, %v1150
    %v1152 = vrot.slane %v126, %v1151
    %v1153 = vlaneseq
    %v1154 = vshrl.u32 %v1153, 7
    %v1155 = vsub.s32 2, %v1154
    %v1156 = vrot.slane %v126, %v1155
    %v1157 = vlaneseq
    %v1158 = vshrl.u32 %v1157, 7
    %v1159 = vsub.s32 3, %v1158
    %v1160 = vrot.slane %v126, %v1159
    %v1293 = vunpack.c.l.b16 %v1016
    %v1294 = vunpack.c.h.b16 %v1016
    %v1295 = vunpack.c.l.b16 %v1017
    %v1296 = vunpack.c.h.b16 %v1017
    %v1297 = vunpack.c.l.b16 %v1018
    %v1298 = vunpack.c.h.b16 %v1018
    %v1299 = vunpack.c.l.b16 %v1019
    %v1300 = vunpack.c.h.b16 %v1019
    %v1301 = vunpack.c.l.b16 %v1020
    %v1302 = vunpack.c.h.b16 %v1020
    %v1303 = vunpack.c.l.b16 %v1021
    %v1304 = vunpack.c.h.b16 %v1021
    %v1305 = vunpack.c.l.b16 %v1022
    %v1306 = vunpack.c.h.b16 %v1022
    %v1307 = vunpack.c.l.b16 %v1023
    %v1308 = vunpack.c.h.b16 %v1023
    %v1309 = vunpack.c.l.b16 %v1024
    %v1310 = vunpack.c.h.b16 %v1024
    %v1311 = vunpack.c.l.b16 %v1025
    %v1312 = vunpack.c.h.b16 %v1025
    %v1313 = vunpack.c.l.b16 %v1026
    %v1314 = vunpack.c.h.b16 %v1026
    %v1315 = vunpack.c.l.b16 %v1027
    %v1316 = vunpack.c.h.b16 %v1027
    %v1317 = vunpack.c.l.b16 %v1028
    %v1318 = vunpack.c.h.b16 %v1028
    %v1319 = vunpack.c.l.b16 %v1029
    %v1320 = vunpack.c.h.b16 %v1029
    %v1321 = vunpack.c.l.b16 %v1030
    %v1322 = vunpack.c.h.b16 %v1030
    %v1323 = vunpack.c.l.b16 %v1031
    %v1324 = vunpack.c.h.b16 %v1031
    %v1325 = vunpack.c.l.b16 %v1032
    %v1326 = vunpack.c.h.b16 %v1032
    %v1327 = vunpack.c.l.b16 %v1033
    %v1328 = vunpack.c.h.b16 %v1033
    %v1329 = vunpack.c.l.b16 %v1034
    %v1330 = vunpack.c.h.b16 %v1034
    %v1331 = vunpack.c.l.b16 %v1035
    %v1332 = vunpack.c.h.b16 %v1035
    %v1333 = vunpack.c.l.b16 %v1036
    %v1334 = vunpack.c.h.b16 %v1036
    %v1335 = vunpack.c.l.b16 %v1037
    %v1336 = vunpack.c.h.b16 %v1037
    %v1337 = vunpack.c.l.b16 %v1038
    %v1338 = vunpack.c.h.b16 %v1038
    %v1339 = vunpack.c.l.b16 %v1039
    %v1340 = vunpack.c.h.b16 %v1039
    %v1341 = vunpack.c.l.b16 %v1040
    %v1342 = vunpack.c.h.b16 %v1040
    %v1343 = vunpack.c.l.b16 %v1041
    %v1344 = vunpack.c.h.b16 %v1041
    %v1345 = vunpack.c.l.b16 %v1042
    %v1346 = vunpack.c.h.b16 %v1042
    %v1347 = vunpack.c.l.b16 %v1043
    %v1348 = vunpack.c.h.b16 %v1043
    %v1349 = vunpack.c.l.b16 %v1044
    %v1350 = vunpack.c.h.b16 %v1044
    %v1351 = vunpack.c.l.b16 %v1045
    %v1352 = vunpack.c.h.b16 %v1045
    %v1353 = vunpack.c.l.b16 %v1046
    %v1354 = vunpack.c.h.b16 %v1046
    %v1355 = vunpack.c.l.b16 %v1047
    %v1356 = vunpack.c.h.b16 %v1047
    %v1357 = vunpack.c.l.b16 %v1048
    %v1358 = vunpack.c.h.b16 %v1048
    %v1359 = vunpack.c.l.b16 %v1049
    %v1360 = vunpack.c.h.b16 %v1049
    %v1361 = vunpack.c.l.b16 %v1050
    %v1362 = vunpack.c.h.b16 %v1050
    %v1363 = vunpack.c.l.b16 %v1051
    %v1364 = vunpack.c.h.b16 %v1051
    %v1365 = vunpack.c.l.b16 %v1052
    %v1366 = vunpack.c.h.b16 %v1052
    %v1367 = vunpack.c.l.b16 %v1053
    %v1368 = vunpack.c.h.b16 %v1053
    %v1369 = vunpack.c.l.b16 %v1054
    %v1370 = vunpack.c.h.b16 %v1054
    %v1371 = vunpack.c.l.b16 %v1055
    %v1372 = vunpack.c.h.b16 %v1055
    %v1373 = vunpack.c.l.b16 %v1056
    %v1374 = vunpack.c.h.b16 %v1056
    %v1375 = vunpack.c.l.b16 %v1057
    %v1376 = vunpack.c.h.b16 %v1057
    %v1377 = vunpack.c.l.b16 %v1058
    %v1378 = vunpack.c.h.b16 %v1058
    %v1379 = vunpack.c.l.b16 %v1059
    %v1380 = vunpack.c.h.b16 %v1059
    %v1381 = vunpack.c.l.b16 %v1060
    %v1382 = vunpack.c.h.b16 %v1060
    %v1383 = vunpack.c.l.b16 %v1061
    %v1384 = vunpack.c.h.b16 %v1061
    %v1385 = vunpack.c.l.b16 %v1062
    %v1386 = vunpack.c.h.b16 %v1062
    %v1387 = vunpack.c.l.b16 %v1063
    %v1388 = vunpack.c.h.b16 %v1063
    %v1389 = vunpack.c.l.b16 %v1064
    %v1390 = vunpack.c.h.b16 %v1064
    %v1391 = vunpack.c.l.b16 %v1065
    %v1392 = vunpack.c.h.b16 %v1065
    %v1393 = vunpack.c.l.b16 %v1066
    %v1394 = vunpack.c.h.b16 %v1066
    %v1395 = vunpack.c.l.b16 %v1067
    %v1396 = vunpack.c.h.b16 %v1067
    %v1397 = vunpack.c.l.b16 %v1068
    %v1398 = vunpack.c.h.b16 %v1068
    %v1399 = vunpack.c.l.b16 %v1069
    %v1400 = vunpack.c.h.b16 %v1069
    %v1401 = vunpack.c.l.b16 %v1070
    %v1402 = vunpack.c.h.b16 %v1070
    %v1403 = vunpack.c.l.b16 %v1071
    %v1404 = vunpack.c.h.b16 %v1071
    %v1405 = vunpack.c.l.b16 %v1072
    %v1406 = vunpack.c.h.b16 %v1072
    %v1407 = vunpack.c.l.b16 %v1073
    %v1408 = vunpack.c.h.b16 %v1073
    %v1409 = vunpack.c.l.b16 %v1074
    %v1410 = vunpack.c.h.b16 %v1074
    %v1411 = vunpack.c.l.b16 %v1075
    %v1412 = vunpack.c.h.b16 %v1075
    %v1413 = vunpack.c.l.b16 %v1076
    %v1414 = vunpack.c.h.b16 %v1076
    %v1415 = vunpack.c.l.b16 %v1077
    %v1416 = vunpack.c.h.b16 %v1077
    %v1417 = vunpack.c.l.b16 %v1078
    %v1418 = vunpack.c.h.b16 %v1078
    %v1419 = vunpack.c.l.b16 %v1079
    %v1420 = vunpack.c.h.b16 %v1079
    %v1421 = vunpack.c.l.b16 %v1080
    %v1422 = vunpack.c.h.b16 %v1080
    %v1423 = vunpack.c.l.b16 %v1081
    %v1424 = vunpack.c.h.b16 %v1081
    %v1425 = vunpack.c.l.b16 %v1082
    %v1426 = vunpack.c.h.b16 %v1082
    %v1427 = vunpack.c.l.b16 %v1083
    %v1428 = vunpack.c.h.b16 %v1083
    %v1429 = vunpack.c.l.b16 %v1084
    %v1430 = vunpack.c.h.b16 %v1084
    %v1431 = vunpack.c.l.b16 %v1085
    %v1432 = vunpack.c.h.b16 %v1085
    %v1433 = vunpack.c.l.b16 %v1086
    %v1434 = vunpack.c.h.b16 %v1086
    %v1435 = vunpack.c.l.b16 %v1087
    %v1436 = vunpack.c.h.b16 %v1087
    %v1437 = vunpack.c.l.b16 %v1088
    %v1438 = vunpack.c.h.b16 %v1088
    %v1439 = vunpack.c.l.b16 %v1089
    %v1440 = vunpack.c.h.b16 %v1089
    %v1441 = vunpack.c.l.b16 %v1090
    %v1442 = vunpack.c.h.b16 %v1090
    %v1443 = vunpack.c.l.b16 %v1091
    %v1444 = vunpack.c.h.b16 %v1091
    %v1445 = vunpack.c.l.b16 %v1092
    %v1446 = vunpack.c.h.b16 %v1092
    %v1447 = vunpack.c.l.b16 %v1093
    %v1448 = vunpack.c.h.b16 %v1093
    %v1449 = vunpack.c.l.b16 %v1094
    %v1450 = vunpack.c.h.b16 %v1094
    %v1451 = vunpack.c.l.b16 %v1095
    %v1452 = vunpack.c.h.b16 %v1095
    %v1453 = vunpack.c.l.b16 %v1096
    %v1454 = vunpack.c.h.b16 %v1096
    %v1455 = vunpack.c.l.b16 %v1097
    %v1456 = vunpack.c.h.b16 %v1097
    %v1457 = vunpack.c.l.b16 %v1098
    %v1458 = vunpack.c.h.b16 %v1098
    %v1459 = vunpack.c.l.b16 %v1099
    %v1460 = vunpack.c.h.b16 %v1099
    %v1461 = vunpack.c.l.b16 %v1100
    %v1462 = vunpack.c.h.b16 %v1100
    %v1463 = vunpack.c.l.b16 %v1101
    %v1464 = vunpack.c.h.b16 %v1101
    %v1465 = vunpack.c.l.b16 %v1102
    %v1466 = vunpack.c.h.b16 %v1102
    %v1467 = vunpack.c.l.b16 %v1103
    %v1468 = vunpack.c.h.b16 %v1103
    %v1469 = vunpack.c.l.b16 %v1104
    %v1470 = vunpack.c.h.b16 %v1104
    %v1471 = vunpack.c.l.b16 %v1105
    %v1472 = vunpack.c.h.b16 %v1105
    %v1473 = vunpack.c.l.b16 %v1106
    %v1474 = vunpack.c.h.b16 %v1106
    %v1475 = vunpack.c.l.b16 %v1107
    %v1476 = vunpack.c.h.b16 %v1107
    %v1477 = vunpack.c.l.b16 %v1108
    %v1478 = vunpack.c.h.b16 %v1108
    %v1479 = vunpack.c.l.b16 %v1109
    %v1480 = vunpack.c.h.b16 %v1109
    %v1481 = vunpack.c.l.b16 %v1110
    %v1482 = vunpack.c.h.b16 %v1110
    %v1483 = vunpack.c.l.b16 %v1111
    %v1484 = vunpack.c.h.b16 %v1111
    %v1485 = vunpack.c.l.b16 %v1112
    %v1486 = vunpack.c.h.b16 %v1112
    %v1487 = vunpack.c.l.b16 %v1113
    %v1488 = vunpack.c.h.b16 %v1113
    %v1489 = vunpack.c.l.b16 %v1114
    %v1490 = vunpack.c.h.b16 %v1114
    %v1491 = vunpack.c.l.b16 %v1115
    %v1492 = vunpack.c.h.b16 %v1115
    %v1493 = vunpack.c.l.b16 %v1116
    %v1494 = vunpack.c.h.b16 %v1116
    %v1495 = vunpack.c.l.b16 %v1117
    %v1496 = vunpack.c.h.b16 %v1117
    %v1497 = vunpack.c.l.b16 %v1118
    %v1498 = vunpack.c.h.b16 %v1118
    %v1499 = vunpack.c.l.b16 %v1119
    %v1500 = vunpack.c.h.b16 %v1119
    %v1501 = vunpack.c.l.b16 %v1120
    %v1502 = vunpack.c.h.b16 %v1120
    %v1503 = vunpack.c.l.b16 %v1121
    %v1504 = vunpack.c.h.b16 %v1121
    %v1505 = vunpack.c.l.b16 %v1122
    %v1506 = vunpack.c.h.b16 %v1122
    %v1507 = vunpack.c.l.b16 %v1123
    %v1508 = vunpack.c.h.b16 %v1123
    %v1509 = vunpack.c.l.b16 %v1124
    %v1510 = vunpack.c.h.b16 %v1124
    %v1511 = vunpack.c.l.b16 %v1125
    %v1512 = vunpack.c.h.b16 %v1125
    %v1513 = vunpack.c.l.b16 %v1126
    %v1514 = vunpack.c.h.b16 %v1126
    %v1515 = vunpack.c.l.b16 %v1127
    %v1516 = vunpack.c.h.b16 %v1127
    %v1517 = vunpack.c.l.b16 %v1128
    %v1518 = vunpack.c.h.b16 %v1128
    %v1519 = vunpack.c.l.b16 %v1129
    %v1520 = vunpack.c.h.b16 %v1129
    %v1521 = vunpack.c.l.b16 %v1130
    %v1522 = vunpack.c.h.b16 %v1130
    %v1523 = vunpack.c.l.b16 %v1131
    %v1524 = vunpack.c.h.b16 %v1131
    %v1525 = vunpack.c.l.b16 %v1132
    %v1526 = vunpack.c.h.b16 %v1132
    %v1527 = vunpack.c.l.b16 %v1133
    %v1528 = vunpack.c.h.b16 %v1133
    %v1529 = vunpack.c.l.b16 %v1134
    %v1530 = vunpack.c.h.b16 %v1134
    %v1531 = vunpack.c.l.b16 %v1135
    %v1532 = vunpack.c.h.b16 %v1135
    %v1533 = vunpack.c.l.b16 %v1136
    %v1534 = vunpack.c.h.b16 %v1136
    %v1535 = vunpack.c.l.b16 %v1137
    %v1536 = vunpack.c.h.b16 %v1137
    %v1537 = vunpack.c.l.b16 %v1138
    %v1538 = vunpack.c.h.b16 %v1138
    %v1539 = vunpack.c.l.b16 %v1139
    %v1540 = vunpack.c.h.b16 %v1139
    %v1541 = vunpack.c.l.b16 %v1140
    %v1542 = vunpack.c.h.b16 %v1140
    %v1543 = vunpack.c.l.b16 %v1141
    %v1544 = vunpack.c.h.b16 %v1141
    %v1545 = vunpack.c.l.b16 %v1142
    %v1546 = vunpack.c.h.b16 %v1142
    %v1547 = vunpack.c.l.b16 %v1143
    %v1548 = vunpack.c.h.b16 %v1143
    %v1549 = vpack.c.b16 %v1297, %v1293
    %v1550 = vpack.c.b16 %v1298, %v1294
    %v1551 = vpack.c.b16 %v1299, %v1295
    %v1552 = vpack.c.b16 %v1300, %v1296
    %v1553 = vpack.c.b16 %v1305, %v1301
    %v1554 = vpack.c.b16 %v1306, %v1302
    %v1555 = vpack.c.b16 %v1307, %v1303
    %v1556 = vpack.c.b16 %v1308, %v1304
    %v1557 = vpack.c.b16 %v1313, %v1309
    %v1558 = vpack.c.b16 %v1314, %v1310
    %v1559 = vpack.c.b16 %v1315, %v1311
    %v1560 = vpack.c.b16 %v1316, %v1312
    %v1561 = vpack.c.b16 %v1321, %v1317
    %v1562 = vpack.c.b16 %v1322, %v1318
    %v1563 = vpack.c.b16 %v1323, %v1319
    %v1564 = vpack.c.b16 %v1324, %v1320
    %v1565 = vpack.c.b16 %v1329, %v1325
    %v1566 = vpack.c.b16 %v1330, %v1326
    %v1567 = vpack.c.b16 %v1331, %v1327
    %v1568 = vpack.c.b16 %v1332, %v1328
    %v1569 = vpack.c.b16 %v1337, %v1333
    %v1570 = vpack.c.b16 %v1338, %v1334
    %v1571 = vpack.c.b16 %v1339, %v1335
    %v1572 = vpack.c.b16 %v1340, %v1336
    %v1573 = vpack.c.b16 %v1345, %v1341
    %v1574 = vpack.c.b16 %v1346, %v1342
    %v1575 = vpack.c.b16 %v1347, %v1343
    %v1576 = vpack.c.b16 %v1348, %v1344
    %v1577 = vpack.c.b16 %v1353, %v1349
    %v1578 = vpack.c.b16 %v1354, %v1350
    %v1579 = vpack.c.b16 %v1355, %v1351
    %v1580 = vpack.c.b16 %v1356, %v1352
    %v1581 = vpack.c.b16 %v1361, %v1357
    %v1582 = vpack.c.b16 %v1362, %v1358
    %v1583 = vpack.c.b16 %v1363, %v1359
    %v1584 = vpack.c.b16 %v1364, %v1360
    %v1585 = vpack.c.b16 %v1369, %v1365
    %v1586 = vpack.c.b16 %v1370, %v1366
    %v1587 = vpack.c.b16 %v1371, %v1367
    %v1588 = vpack.c.b16 %v1372, %v1368
    %v1589 = vpack.c.b16 %v1377, %v1373
    %v1590 = vpack.c.b16 %v1378, %v1374
    %v1591 = vpack.c.b16 %v1379, %v1375
    %v1592 = vpack.c.b16 %v1380, %v1376
    %v1593 = vpack.c.b16 %v1385, %v1381
    %v1594 = vpack.c.b16 %v1386, %v1382
    %v1595 = vpack.c.b16 %v1387, %v1383
    %v1596 = vpack.c.b16 %v1388, %v1384
    %v1597 = vpack.c.b16 %v1393, %v1389
    %v1598 = vpack.c.b16 %v1394, %v1390
    %v1599 = vpack.c.b16 %v1395, %v1391
    %v1600 = vpack.c.b16 %v1396, %v1392
    %v1601 = vpack.c.b16 %v1401, %v1397
    %v1602 = vpack.c.b16 %v1402, %v1398
    %v1603 = vpack.c.b16 %v1403, %v1399
    %v1604 = vpack.c.b16 %v1404, %v1400
    %v1605 = vpack.c.b16 %v1409, %v1405
    %v1606 = vpack.c.b16 %v1410, %v1406
    %v1607 = vpack.c.b16 %v1411, %v1407
    %v1608 = vpack.c.b16 %v1412, %v1408
    %v1609 = vpack.c.b16 %v1417, %v1413
    %v1610 = vpack.c.b16 %v1418, %v1414
    %v1611 = vpack.c.b16 %v1419, %v1415
    %v1612 = vpack.c.b16 %v1420, %v1416
    %v1613 = vpack.c.b16 %v1425, %v1421
    %v1614 = vpack.c.b16 %v1426, %v1422
    %v1615 = vpack.c.b16 %v1427, %v1423
    %v1616 = vpack.c.b16 %v1428, %v1424
    %v1617 = vpack.c.b16 %v1433, %v1429
    %v1618 = vpack.c.b16 %v1434, %v1430
    %v1619 = vpack.c.b16 %v1435, %v1431
    %v1620 = vpack.c.b16 %v1436, %v1432
    %v1621 = vpack.c.b16 %v1441, %v1437
    %v1622 = vpack.c.b16 %v1442, %v1438
    %v1623 = vpack.c.b16 %v1443, %v1439
    %v1624 = vpack.c.b16 %v1444, %v1440
    %v1625 = vpack.c.b16 %v1449, %v1445
    %v1626 = vpack.c.b16 %v1450, %v1446
    %v1627 = vpack.c.b16 %v1451, %v1447
    %v1628 = vpack.c.b16 %v1452, %v1448
    %v1629 = vpack.c.b16 %v1457, %v1453
    %v1630 = vpack.c.b16 %v1458, %v1454
    %v1631 = vpack.c.b16 %v1459, %v1455
    %v1632 = vpack.c.b16 %v1460, %v1456
    %v1633 = vpack.c.b16 %v1465, %v1461
    %v1634 = vpack.c.b16 %v1466, %v1462
    %v1635 = vpack.c.b16 %v1467, %v1463
    %v1636 = vpack.c.b16 %v1468, %v1464
    %v1637 = vpack.c.b16 %v1473, %v1469
    %v1638 = vpack.c.b16 %v1474, %v1470
    %v1639 = vpack.c.b16 %v1475, %v1471
    %v1640 = vpack.c.b16 %v1476, %v1472
    %v1641 = vpack.c.b16 %v1481, %v1477
    %v1642 = vpack.c.b16 %v1482, %v1478
    %v1643 = vpack.c.b16 %v1483, %v1479
    %v1644 = vpack.c.b16 %v1484, %v1480
    %v1645 = vpack.c.b16 %v1489, %v1485
    %v1646 = vpack.c.b16 %v1490, %v1486
    %v1647 = vpack.c.b16 %v1491, %v1487
    %v1648 = vpack.c.b16 %v1492, %v1488
    %v1649 = vpack.c.b16 %v1497, %v1493
    %v1650 = vpack.c.b16 %v1498, %v1494
    %v1651 = vpack.c.b16 %v1499, %v1495
    %v1652 = vpack.c.b16 %v1500, %v1496
    %v1653 = vpack.c.b16 %v1505, %v1501
    %v1654 = vpack.c.b16 %v1506, %v1502
    %v1655 = vpack.c.b16 %v1507, %v1503
    %v1656 = vpack.c.b16 %v1508, %v1504
    %v1657 = vpack.c.b16 %v1513, %v1509
    %v1658 = vpack.c.b16 %v1514, %v1510
    %v1659 = vpack.c.b16 %v1515, %v1511
    %v1660 = vpack.c.b16 %v1516, %v1512
    %v1661 = vpack.c.b16 %v1521, %v1517
    %v1662 = vpack.c.b16 %v1522, %v1518
    %v1663 = vpack.c.b16 %v1523, %v1519
    %v1664 = vpack.c.b16 %v1524, %v1520
    %v1665 = vpack.c.b16 %v1529, %v1525
    %v1666 = vpack.c.b16 %v1530, %v1526
    %v1667 = vpack.c.b16 %v1531, %v1527
    %v1668 = vpack.c.b16 %v1532, %v1528
    %v1669 = vpack.c.b16 %v1537, %v1533
    %v1670 = vpack.c.b16 %v1538, %v1534
    %v1671 = vpack.c.b16 %v1539, %v1535
    %v1672 = vpack.c.b16 %v1540, %v1536
    %v1673 = vpack.c.b16 %v1545, %v1541
    %v1674 = vpack.c.b16 %v1546, %v1542
    %v1675 = vpack.c.b16 %v1547, %v1543
    %v1676 = vpack.c.b16 %v1548, %v1544
    %1805 = vmatprep.subr.bf16.mxu0 %v1550
    %1806 = vmatpush1.bf16.msra.mxu0 %v1549
    %1807 = vmatprep.subr.bf16.mxu0 %v1554
    %1808 = vmatpush1.bf16.msra.mxu0 %v1553
    %1809 = vmatprep.subr.bf16.mxu0 %v1558
    %1810 = vmatpush1.bf16.msra.mxu0 %v1557
    %1811 = vmatprep.subr.bf16.mxu0 %v1562
    %1812 = vmatpush1.bf16.msra.mxu0 %v1561
    %1813 = vmatprep.subr.bf16.mxu0 %v1566
    %1814 = vmatpush1.bf16.msra.mxu0 %v1565
    %1815 = vmatprep.subr.bf16.mxu0 %v1570
    %1816 = vmatpush1.bf16.msra.mxu0 %v1569
    %1817 = vmatprep.subr.bf16.mxu0 %v1574
    %1818 = vmatpush1.bf16.msra.mxu0 %v1573
    %1819 = vmatprep.subr.bf16.mxu0 %v1578
    %1820 = vmatpush1.bf16.msra.mxu0 %v1577
    %1821 = vmatprep.subr.bf16.mxu0 %v1582
    %1822 = vmatpush1.bf16.msra.mxu0 %v1581
    %1823 = vmatprep.subr.bf16.mxu0 %v1586
    %1824 = vmatpush1.bf16.msra.mxu0 %v1585
    %1825 = vmatprep.subr.bf16.mxu0 %v1590
    %1826 = vmatpush1.bf16.msra.mxu0 %v1589
    %1827 = vmatprep.subr.bf16.mxu0 %v1594
    %1828 = vmatpush1.bf16.msra.mxu0 %v1593
    %1829 = vmatprep.subr.bf16.mxu0 %v1598
    %1830 = vmatpush1.bf16.msra.mxu0 %v1597
    %1831 = vmatprep.subr.bf16.mxu0 %v1602
    %1832 = vmatpush1.bf16.msra.mxu0 %v1601
    %1833 = vmatprep.subr.bf16.mxu0 %v1606
    %1834 = vmatpush1.bf16.msra.mxu0 %v1605
    %1835 = vmatprep.subr.bf16.mxu0 %v1610
    %1836 = vmatpush1.bf16.msra.mxu0 %v1609
    %1837 = vmatprep.mubr.bf16.mxu0 %v953
    %1838 = vmatmul.mubr.bf16.gmra.mrb[0].mxu0 %v952
    %v1839 = vpop.f32.mrb[0].mxu0
    %v1840 = vadd.f32 %v1148, %v1839
    %v1841 = vpop.f32.mrb[0].mxu0
    %v1842 = vadd.f32 %v1152, %v1841
    %v1843 = vpop.f32.mrb[0].mxu0
    %v1844 = vadd.f32 %v1148, %v1843
    %v1845 = vpop.f32.mrb[0].mxu0
    %v1846 = vadd.f32 %v1152, %v1845
    %1847 = vmatprep.mubr.bf16.mxu0 %v957
    %1848 = vmatmul.mubr.bf16.gmra.mrb[0].mxu0 %v956
    %v1849 = vpop.f32.mrb[0].mxu0
    %v1850 = vadd.f32 %v1148, %v1849
    %v1851 = vpop.f32.mrb[0].mxu0
    %v1852 = vadd.f32 %v1152, %v1851
    %v1853 = vpop.f32.mrb[0].mxu0
    %v1854 = vadd.f32 %v1148, %v1853
    %v1855 = vpop.f32.mrb[0].mxu0
    %v1856 = vadd.f32 %v1152, %v1855
    %1857 = vmatprep.mubr.bf16.mxu0 %v961
    %1858 = vmatmul.mubr.bf16.gmra.mrb[0].mxu0 %v960
    %v1859 = vpop.f32.mrb[0].mxu0
    %v1860 = vadd.f32 %v1148, %v1859
    %v1861 = vpop.f32.mrb[0].mxu0
    %v1862 = vadd.f32 %v1152, %v1861
    %v1863 = vpop.f32.mrb[0].mxu0
    %v1864 = vadd.f32 %v1148, %v1863
    %v1865 = vpop.f32.mrb[0].mxu0
    %v1866 = vadd.f32 %v1152, %v1865
    %1867 = vmatprep.mubr.bf16.mxu0 %v965
    %1868 = vmatmul.mubr.bf16.gmra.mrb[0].mxu0 %v964
    %v1869 = vpop.f32.mrb[0].mxu0
    %v1870 = vadd.f32 %v1148, %v1869
    %v1871 = vpop.f32.mrb[0].mxu0
    %v1872 = vadd.f32 %v1152, %v1871
    %v1873 = vpop.f32.mrb[0].mxu0
    %v1874 = vadd.f32 %v1148, %v1873
    %v1875 = vpop.f32.mrb[0].mxu0
    %v1876 = vadd.f32 %v1152, %v1875
    %1877 = vmatprep.mubr.bf16.mxu0 %v969
    %1878 = vmatmul.mubr.bf16.gmra.mrb[0].mxu0 %v968
    %v1879 = vpop.f32.mrb[0].mxu0
    %v1880 = vadd.f32 %v1148, %v1879
    %v1881 = vpop.f32.mrb[0].mxu0
    %v1882 = vadd.f32 %v1152, %v1881
    %v1883 = vpop.f32.mrb[0].mxu0
    %v1884 = vadd.f32 %v1148, %v1883
    %v1885 = vpop.f32.mrb[0].mxu0
    %v1886 = vadd.f32 %v1152, %v1885
    %1887 = vmatprep.mubr.bf16.mxu0 %v973
    %1888 = vmatmul.mubr.bf16.gmra.mrb[0].mxu0 %v972
    %v1889 = vpop.f32.mrb[0].mxu0
    %v1890 = vadd.f32 %v1148, %v1889
    %v1891 = vpop.f32.mrb[0].mxu0
    %v1892 = vadd.f32 %v1152, %v1891
    %v1893 = vpop.f32.mrb[0].mxu0
    %v1894 = vadd.f32 %v1148, %v1893
    %v1895 = vpop.f32.mrb[0].mxu0
    %v1896 = vadd.f32 %v1152, %v1895
    %1897 = vmatprep.mubr.bf16.mxu0 %v977
    %1898 = vmatmul.mubr.bf16.gmra.mrb[0].mxu0 %v976
    %v1899 = vpop.f32.mrb[0].mxu0
    %v1900 = vadd.f32 %v1148, %v1899
    %v1901 = vpop.f32.mrb[0].mxu0
    %v1902 = vadd.f32 %v1152, %v1901
    %v1903 = vpop.f32.mrb[0].mxu0
    %v1904 = vadd.f32 %v1148, %v1903
    %v1905 = vpop.f32.mrb[0].mxu0
    %v1906 = vadd.f32 %v1152, %v1905
    %1907 = vmatprep.mubr.bf16.mxu0 %v981
    %1908 = vmatmul.mubr.bf16.gmra.mrb[0].mxu0 %v980
    %v1909 = vpop.f32.mrb[0].mxu0
    %v1910 = vadd.f32 %v1148, %v1909
    %v1911 = vpop.f32.mrb[0].mxu0
    %v1912 = vadd.f32 %v1152, %v1911
    %v1913 = vpop.f32.mrb[0].mxu0
    %v1914 = vadd.f32 %v1148, %v1913
    %v1915 = vpop.f32.mrb[0].mxu0
    %v1916 = vadd.f32 %v1152, %v1915
    %1917 = vmatprep.mubr.bf16.mxu0 %v985
    %1918 = vmatmul.mubr.bf16.gmra.mrb[0].mxu0 %v984
    %v1919 = vpop.f32.mrb[0].mxu0
    %v1920 = vadd.f32 %v1148, %v1919
    %v1921 = vpop.f32.mrb[0].mxu0
    %v1922 = vadd.f32 %v1152, %v1921
    %v1923 = vpop.f32.mrb[0].mxu0
    %v1924 = vadd.f32 %v1148, %v1923
    %v1925 = vpop.f32.mrb[0].mxu0
    %v1926 = vadd.f32 %v1152, %v1925
    %1927 = vmatprep.mubr.bf16.mxu0 %v989
    %1928 = vmatmul.mubr.bf16.gmra.mrb[0].mxu0 %v988
    %v1929 = vpop.f32.mrb[0].mxu0
    %v1930 = vadd.f32 %v1148, %v1929
    %v1931 = vpop.f32.mrb[0].mxu0
    %v1932 = vadd.f32 %v1152, %v1931
    %v1933 = vpop.f32.mrb[0].mxu0
    %v1934 = vadd.f32 %v1148, %v1933
    %v1935 = vpop.f32.mrb[0].mxu0
    %v1936 = vadd.f32 %v1152, %v1935
    %1937 = vmatprep.mubr.bf16.mxu0 %v993
    %1938 = vmatmul.mubr.bf16.gmra.mrb[0].mxu0 %v992
    %v1939 = vpop.f32.mrb[0].mxu0
    %v1940 = vadd.f32 %v1148, %v1939
    %v1941 = vpop.f32.mrb[0].mxu0
    %v1942 = vadd.f32 %v1152, %v1941
    %v1943 = vpop.f32.mrb[0].mxu0
    %v1944 = vadd.f32 %v1148, %v1943
    %v1945 = vpop.f32.mrb[0].mxu0
    %v1946 = vadd.f32 %v1152, %v1945
    %1947 = vmatprep.mubr.bf16.mxu0 %v997
    %1948 = vmatmul.mubr.bf16.gmra.mrb[0].mxu0 %v996
    %v1949 = vpop.f32.mrb[0].mxu0
    %v1950 = vadd.f32 %v1148, %v1949
    %v1951 = vpop.f32.mrb[0].mxu0
    %v1952 = vadd.f32 %v1152, %v1951
    %v1953 = vpop.f32.mrb[0].mxu0
    %v1954 = vadd.f32 %v1148, %v1953
    %v1955 = vpop.f32.mrb[0].mxu0
    %v1956 = vadd.f32 %v1152, %v1955
    %1957 = vmatprep.mubr.bf16.mxu0 %v1001
    %1958 = vmatmul.mubr.bf16.gmra.mrb[0].mxu0 %v1000
    %v1959 = vpop.f32.mrb[0].mxu0
    %v1960 = vadd.f32 %v1148, %v1959
    %v1961 = vpop.f32.mrb[0].mxu0
    %v1962 = vadd.f32 %v1152, %v1961
    %v1963 = vpop.f32.mrb[0].mxu0
    %v1964 = vadd.f32 %v1148, %v1963
    %v1965 = vpop.f32.mrb[0].mxu0
    %v1966 = vadd.f32 %v1152, %v1965
    %1967 = vmatprep.mubr.bf16.mxu0 %v1005
    %1968 = vmatmul.mubr.bf16.gmra.mrb[0].mxu0 %v1004
    %v1969 = vpop.f32.mrb[0].mxu0
    %v1970 = vadd.f32 %v1148, %v1969
    %v1971 = vpop.f32.mrb[0].mxu0
    %v1972 = vadd.f32 %v1152, %v1971
    %v1973 = vpop.f32.mrb[0].mxu0
    %v1974 = vadd.f32 %v1148, %v1973
    %v1975 = vpop.f32.mrb[0].mxu0
    %v1976 = vadd.f32 %v1152, %v1975
    %1977 = vmatprep.mubr.bf16.mxu0 %v1009
    %1978 = vmatmul.mubr.bf16.gmra.mrb[0].mxu0 %v1008
    %v1979 = vpop.f32.mrb[0].mxu0
    %v1980 = vadd.f32 %v1148, %v1979
    %v1981 = vpop.f32.mrb[0].mxu0
    %v1982 = vadd.f32 %v1152, %v1981
    %v1983 = vpop.f32.mrb[0].mxu0
    %v1984 = vadd.f32 %v1148, %v1983
    %v1985 = vpop.f32.mrb[0].mxu0
    %v1986 = vadd.f32 %v1152, %v1985
    %1987 = vmatprep.mubr.bf16.mxu0 %v1013
    %1988 = vmatmul.mubr.bf16.gmra.mrb[0].mxu0 %v1012
    %v1989 = vpop.f32.mrb[0].mxu0
    %v1990 = vadd.f32 %v1148, %v1989
    %v1991 = vpop.f32.mrb[0].mxu0
    %v1992 = vadd.f32 %v1152, %v1991
    %v1993 = vpop.f32.mrb[0].mxu0
    %v1994 = vadd.f32 %v1148, %v1993
    %v1995 = vpop.f32.mrb[0].mxu0
    %v1996 = vadd.f32 %v1152, %v1995
    %1997 = vdwg.mxu0
    %1998 = vmatprep.subr.bf16.mxu0 %v1614
    %1999 = vmatpush1.bf16.msra.mxu0 %v1613
    %2000 = vmatprep.subr.bf16.mxu0 %v1618
    %2001 = vmatpush1.bf16.msra.mxu0 %v1617
    %2002 = vmatprep.subr.bf16.mxu0 %v1622
    %2003 = vmatpush1.bf16.msra.mxu0 %v1621
    %2004 = vmatprep.subr.bf16.mxu0 %v1626
    %2005 = vmatpush1.bf16.msra.mxu0 %v1625
    %2006 = vmatprep.subr.bf16.mxu0 %v1630
    %2007 = vmatpush1.bf16.msra.mxu0 %v1629
    %2008 = vmatprep.subr.bf16.mxu0 %v1634
    %2009 = vmatpush1.bf16.msra.mxu0 %v1633
    %2010 = vmatprep.subr.bf16.mxu0 %v1638
    %2011 = vmatpush1.bf16.msra.mxu0 %v1637
    %2012 = vmatprep.subr.bf16.mxu0 %v1642
    %2013 = vmatpush1.bf16.msra.mxu0 %v1641
    %2014 = vmatprep.subr.bf16.mxu0 %v1646
    %2015 = vmatpush1.bf16.msra.mxu0 %v1645
    %2016 = vmatprep.subr.bf16.mxu0 %v1650
    %2017 = vmatpush1.bf16.msra.mxu0 %v1649
    %2018 = vmatprep.subr.bf16.mxu0 %v1654
    %2019 = vmatpush1.bf16.msra.mxu0 %v1653
    %2020 = vmatprep.subr.bf16.mxu0 %v1658
    %2021 = vmatpush1.bf16.msra.mxu0 %v1657
    %2022 = vmatprep.subr.bf16.mxu0 %v1662
    %2023 = vmatpush1.bf16.msra.mxu0 %v1661
    %2024 = vmatprep.subr.bf16.mxu0 %v1666
    %2025 = vmatpush1.bf16.msra.mxu0 %v1665
    %2026 = vmatprep.subr.bf16.mxu0 %v1670
    %2027 = vmatpush1.bf16.msra.mxu0 %v1669
    %2028 = vmatprep.subr.bf16.mxu0 %v1674
    %2029 = vmatpush1.bf16.msra.mxu0 %v1673
    %2030 = vmatprep.mubr.bf16.mxu0 %v955
    %2031 = vmatmul.mubr.bf16.gmra.mrb[0].mxu0 %v954
    %v2032 = vpop.f32.mrb[0].mxu0
    %v2033 = vadd.f32 %v1840, %v2032
    %v2034 = vpop.f32.mrb[0].mxu0
    %v2035 = vadd.f32 %v1842, %v2034
    %v2036 = vpop.f32.mrb[0].mxu0
    %v2037 = vadd.f32 %v1844, %v2036
    %v2038 = vpop.f32.mrb[0].mxu0
    %v2039 = vadd.f32 %v1846, %v2038
    %2040 = vmatprep.mubr.bf16.mxu0 %v959
    %2041 = vmatmul.mubr.bf16.gmra.mrb[0].mxu0 %v958
    %v2042 = vpop.f32.mrb[0].mxu0
    %v2043 = vadd.f32 %v1850, %v2042
    %v2044 = vpop.f32.mrb[0].mxu0
    %v2045 = vadd.f32 %v1852, %v2044
    %v2046 = vpop.f32.mrb[0].mxu0
    %v2047 = vadd.f32 %v1854, %v2046
    %v2048 = vpop.f32.mrb[0].mxu0
    %v2049 = vadd.f32 %v1856, %v2048
    %2050 = vmatprep.mubr.bf16.mxu0 %v963
    %2051 = vmatmul.mubr.bf16.gmra.mrb[0].mxu0 %v962
    %v2052 = vpop.f32.mrb[0].mxu0
    %v2053 = vadd.f32 %v1860, %v2052
    %v2054 = vpop.f32.mrb[0].mxu0
    %v2055 = vadd.f32 %v1862, %v2054
    %v2056 = vpop.f32.mrb[0].mxu0
    %v2057 = vadd.f32 %v1864, %v2056
    %v2058 = vpop.f32.mrb[0].mxu0
    %v2059 = vadd.f32 %v1866, %v2058
    %2060 = vmatprep.mubr.bf16.mxu0 %v967
    %2061 = vmatmul.mubr.bf16.gmra.mrb[0].mxu0 %v966
    %v2062 = vpop.f32.mrb[0].mxu0
    %v2063 = vadd.f32 %v1870, %v2062
    %v2064 = vpop.f32.mrb[0].mxu0
    %v2065 = vadd.f32 %v1872, %v2064
    %v2066 = vpop.f32.mrb[0].mxu0
    %v2067 = vadd.f32 %v1874, %v2066
    %v2068 = vpop.f32.mrb[0].mxu0
    %v2069 = vadd.f32 %v1876, %v2068
    %2070 = vmatprep.mubr.bf16.mxu0 %v971
    %2071 = vmatmul.mubr.bf16.gmra.mrb[0].mxu0 %v970
    %v2072 = vpop.f32.mrb[0].mxu0
    %v2073 = vadd.f32 %v1880, %v2072
    %v2074 = vpop.f32.mrb[0].mxu0
    %v2075 = vadd.f32 %v1882, %v2074
    %v2076 = vpop.f32.mrb[0].mxu0
    %v2077 = vadd.f32 %v1884, %v2076
    %v2078 = vpop.f32.mrb[0].mxu0
    %v2079 = vadd.f32 %v1886, %v2078
    %2080 = vmatprep.mubr.bf16.mxu0 %v975
    %2081 = vmatmul.mubr.bf16.gmra.mrb[0].mxu0 %v974
    %v2082 = vpop.f32.mrb[0].mxu0
    %v2083 = vadd.f32 %v1890, %v2082
    %v2084 = vpop.f32.mrb[0].mxu0
    %v2085 = vadd.f32 %v1892, %v2084
    %v2086 = vpop.f32.mrb[0].mxu0
    %v2087 = vadd.f32 %v1894, %v2086
    %v2088 = vpop.f32.mrb[0].mxu0
    %v2089 = vadd.f32 %v1896, %v2088
    %2090 = vmatprep.mubr.bf16.mxu0 %v979
    %2091 = vmatmul.mubr.bf16.gmra.mrb[0].mxu0 %v978
    %v2092 = vpop.f32.mrb[0].mxu0
    %v2093 = vadd.f32 %v1900, %v2092
    %v2094 = vpop.f32.mrb[0].mxu0
    %v2095 = vadd.f32 %v1902, %v2094
    %v2096 = vpop.f32.mrb[0].mxu0
    %v2097 = vadd.f32 %v1904, %v2096
    %v2098 = vpop.f32.mrb[0].mxu0
    %v2099 = vadd.f32 %v1906, %v2098
    %2100 = vmatprep.mubr.bf16.mxu0 %v983
    %2101 = vmatmul.mubr.bf16.gmra.mrb[0].mxu0 %v982
    %v2102 = vpop.f32.mrb[0].mxu0
    %v2103 = vadd.f32 %v1910, %v2102
    %v2104 = vpop.f32.mrb[0].mxu0
    %v2105 = vadd.f32 %v1912, %v2104
    %v2106 = vpop.f32.mrb[0].mxu0
    %v2107 = vadd.f32 %v1914, %v2106
    %v2108 = vpop.f32.mrb[0].mxu0
    %v2109 = vadd.f32 %v1916, %v2108
    %2110 = vmatprep.mubr.bf16.mxu0 %v987
    %2111 = vmatmul.mubr.bf16.gmra.mrb[0].mxu0 %v986
    %v2112 = vpop.f32.mrb[0].mxu0
    %v2113 = vadd.f32 %v1920, %v2112
    %v2114 = vpop.f32.mrb[0].mxu0
    %v2115 = vadd.f32 %v1922, %v2114
    %v2116 = vpop.f32.mrb[0].mxu0
    %v2117 = vadd.f32 %v1924, %v2116
    %v2118 = vpop.f32.mrb[0].mxu0
    %v2119 = vadd.f32 %v1926, %v2118
    %2120 = vmatprep.mubr.bf16.mxu0 %v991
    %2121 = vmatmul.mubr.bf16.gmra.mrb[0].mxu0 %v990
    %v2122 = vpop.f32.mrb[0].mxu0
    %v2123 = vadd.f32 %v1930, %v2122
    %v2124 = vpop.f32.mrb[0].mxu0
    %v2125 = vadd.f32 %v1932, %v2124
    %v2126 = vpop.f32.mrb[0].mxu0
    %v2127 = vadd.f32 %v1934, %v2126
    %v2128 = vpop.f32.mrb[0].mxu0
    %v2129 = vadd.f32 %v1936, %v2128
    %2130 = vmatprep.mubr.bf16.mxu0 %v995
    %2131 = vmatmul.mubr.bf16.gmra.mrb[0].mxu0 %v994
    %v2132 = vpop.f32.mrb[0].mxu0
    %v2133 = vadd.f32 %v1940, %v2132
    %v2134 = vpop.f32.mrb[0].mxu0
    %v2135 = vadd.f32 %v1942, %v2134
    %v2136 = vpop.f32.mrb[0].mxu0
    %v2137 = vadd.f32 %v1944, %v2136
    %v2138 = vpop.f32.mrb[0].mxu0
    %v2139 = vadd.f32 %v1946, %v2138
    %2140 = vmatprep.mubr.bf16.mxu0 %v999
    %2141 = vmatmul.mubr.bf16.gmra.mrb[0].mxu0 %v998
    %v2142 = vpop.f32.mrb[0].mxu0
    %v2143 = vadd.f32 %v1950, %v2142
    %v2144 = vpop.f32.mrb[0].mxu0
    %v2145 = vadd.f32 %v1952, %v2144
    %v2146 = vpop.f32.mrb[0].mxu0
    %v2147 = vadd.f32 %v1954, %v2146
    %v2148 = vpop.f32.mrb[0].mxu0
    %v2149 = vadd.f32 %v1956, %v2148
    %2150 = vmatprep.mubr.bf16.mxu0 %v1003
    %2151 = vmatmul.mubr.bf16.gmra.mrb[0].mxu0 %v1002
    %v2152 = vpop.f32.mrb[0].mxu0
    %v2153 = vadd.f32 %v1960, %v2152
    %v2154 = vpop.f32.mrb[0].mxu0
    %v2155 = vadd.f32 %v1962, %v2154
    %v2156 = vpop.f32.mrb[0].mxu0
    %v2157 = vadd.f32 %v1964, %v2156
    %v2158 = vpop.f32.mrb[0].mxu0
    %v2159 = vadd.f32 %v1966, %v2158
    %2160 = vmatprep.mubr.bf16.mxu0 %v1007
    %2161 = vmatmul.mubr.bf16.gmra.mrb[0].mxu0 %v1006
    %v2162 = vpop.f32.mrb[0].mxu0
    %v2163 = vadd.f32 %v1970, %v2162
    %v2164 = vpop.f32.mrb[0].mxu0
    %v2165 = vadd.f32 %v1972, %v2164
    %v2166 = vpop.f32.mrb[0].mxu0
    %v2167 = vadd.f32 %v1974, %v2166
    %v2168 = vpop.f32.mrb[0].mxu0
    %v2169 = vadd.f32 %v1976, %v2168
    %2170 = vmatprep.mubr.bf16.mxu0 %v1011
    %2171 = vmatmul.mubr.bf16.gmra.mrb[0].mxu0 %v1010
    %v2172 = vpop.f32.mrb[0].mxu0
    %v2173 = vadd.f32 %v1980, %v2172
    %v2174 = vpop.f32.mrb[0].mxu0
    %v2175 = vadd.f32 %v1982, %v2174
    %v2176 = vpop.f32.mrb[0].mxu0
    %v2177 = vadd.f32 %v1984, %v2176
    %v2178 = vpop.f32.mrb[0].mxu0
    %v2179 = vadd.f32 %v1986, %v2178
    %2180 = vmatprep.mubr.bf16.mxu0 %v1015
    %2181 = vmatmul.mubr.bf16.gmra.mrb[0].mxu0 %v1014
    %v2182 = vpop.f32.mrb[0].mxu0
    %v2183 = vadd.f32 %v1990, %v2182
    %v2184 = vpop.f32.mrb[0].mxu0
    %v2185 = vadd.f32 %v1992, %v2184
    %v2186 = vpop.f32.mrb[0].mxu0
    %v2187 = vadd.f32 %v1994, %v2186
    %v2188 = vpop.f32.mrb[0].mxu0
    %v2189 = vadd.f32 %v1996, %v2188
    %2190 = vdwg.mxu0
    %2191 = vmatprep.subr.bf16.mxu0 %v1552
    %2192 = vmatpush1.bf16.msra.mxu0 %v1551
    %2193 = vmatprep.subr.bf16.mxu0 %v1556
    %2194 = vmatpush1.bf16.msra.mxu0 %v1555
    %2195 = vmatprep.subr.bf16.mxu0 %v1560
    %2196 = vmatpush1.bf16.msra.mxu0 %v1559
    %2197 = vmatprep.subr.bf16.mxu0 %v1564
    %2198 = vmatpush1.bf16.msra.mxu0 %v1563
    %2199 = vmatprep.subr.bf16.mxu0 %v1568
    %2200 = vmatpush1.bf16.msra.mxu0 %v1567
    %2201 = vmatprep.subr.bf16.mxu0 %v1572
    %2202 = vmatpush1.bf16.msra.mxu0 %v1571
    %2203 = vmatprep.subr.bf16.mxu0 %v1576
    %2204 = vmatpush1.bf16.msra.mxu0 %v1575
    %2205 = vmatprep.subr.bf16.mxu0 %v1580
    %2206 = vmatpush1.bf16.msra.mxu0 %v1579
    %2207 = vmatprep.subr.bf16.mxu0 %v1584
    %2208 = vmatpush1.bf16.msra.mxu0 %v1583
    %2209 = vmatprep.subr.bf16.mxu0 %v1588
    %2210 = vmatpush1.bf16.msra.mxu0 %v1587
    %2211 = vmatprep.subr.bf16.mxu0 %v1592
    %2212 = vmatpush1.bf16.msra.mxu0 %v1591
    %2213 = vmatprep.subr.bf16.mxu0 %v1596
    %2214 = vmatpush1.bf16.msra.mxu0 %v1595
    %2215 = vmatprep.subr.bf16.mxu0 %v1600
    %2216 = vmatpush1.bf16.msra.mxu0 %v1599
    %2217 = vmatprep.subr.bf16.mxu0 %v1604
    %2218 = vmatpush1.bf16.msra.mxu0 %v1603
    %2219 = vmatprep.subr.bf16.mxu0 %v1608
    %2220 = vmatpush1.bf16.msra.mxu0 %v1607
    %2221 = vmatprep.subr.bf16.mxu0 %v1612
    %2222 = vmatpush1.bf16.msra.mxu0 %v1611
    %2223 = vmatprep.mubr.bf16.mxu0 %v953
    %2224 = vmatmul.mubr.bf16.gmra.mrb[0].mxu0 %v952
    %v2225 = vpop.f32.mrb[0].mxu0
    %v2226 = vadd.f32 %v1156, %v2225
    %v2227 = vpop.f32.mrb[0].mxu0
    %v2228 = vadd.f32 %v1160, %v2227
    %v2229 = vpop.f32.mrb[0].mxu0
    %v2230 = vadd.f32 %v1156, %v2229
    %v2231 = vpop.f32.mrb[0].mxu0
    %v2232 = vadd.f32 %v1160, %v2231
    %2233 = vmatprep.mubr.bf16.mxu0 %v957
    %2234 = vmatmul.mubr.bf16.gmra.mrb[0].mxu0 %v956
    %v2235 = vpop.f32.mrb[0].mxu0
    %v2236 = vadd.f32 %v1156, %v2235
    %v2237 = vpop.f32.mrb[0].mxu0
    %v2238 = vadd.f32 %v1160, %v2237
    %v2239 = vpop.f32.mrb[0].mxu0
    %v2240 = vadd.f32 %v1156, %v2239
    %v2241 = vpop.f32.mrb[0].mxu0
    %v2242 = vadd.f32 %v1160, %v2241
    %2243 = vmatprep.mubr.bf16.mxu0 %v961
    %2244 = vmatmul.mubr.bf16.gmra.mrb[0].mxu0 %v960
    %v2245 = vpop.f32.mrb[0].mxu0
    %v2246 = vadd.f32 %v1156, %v2245
    %v2247 = vpop.f32.mrb[0].mxu0
    %v2248 = vadd.f32 %v1160, %v2247
    %v2249 = vpop.f32.mrb[0].mxu0
    %v2250 = vadd.f32 %v1156, %v2249
    %v2251 = vpop.f32.mrb[0].mxu0
    %v2252 = vadd.f32 %v1160, %v2251
    %2253 = vmatprep.mubr.bf16.mxu0 %v965
    %2254 = vmatmul.mubr.bf16.gmra.mrb[0].mxu0 %v964
    %v2255 = vpop.f32.mrb[0].mxu0
    %v2256 = vadd.f32 %v1156, %v2255
    %v2257 = vpop.f32.mrb[0].mxu0
    %v2258 = vadd.f32 %v1160, %v2257
    %v2259 = vpop.f32.mrb[0].mxu0
    %v2260 = vadd.f32 %v1156, %v2259
    %v2261 = vpop.f32.mrb[0].mxu0
    %v2262 = vadd.f32 %v1160, %v2261
    %2263 = vmatprep.mubr.bf16.mxu0 %v969
    %2264 = vmatmul.mubr.bf16.gmra.mrb[0].mxu0 %v968
    %v2265 = vpop.f32.mrb[0].mxu0
    %v2266 = vadd.f32 %v1156, %v2265
    %v2267 = vpop.f32.mrb[0].mxu0
    %v2268 = vadd.f32 %v1160, %v2267
    %v2269 = vpop.f32.mrb[0].mxu0
    %v2270 = vadd.f32 %v1156, %v2269
    %v2271 = vpop.f32.mrb[0].mxu0
    %v2272 = vadd.f32 %v1160, %v2271
    %2273 = vmatprep.mubr.bf16.mxu0 %v973
    %2274 = vmatmul.mubr.bf16.gmra.mrb[0].mxu0 %v972
    %v2275 = vpop.f32.mrb[0].mxu0
    %v2276 = vadd.f32 %v1156, %v2275
    %v2277 = vpop.f32.mrb[0].mxu0
    %v2278 = vadd.f32 %v1160, %v2277
    %v2279 = vpop.f32.mrb[0].mxu0
    %v2280 = vadd.f32 %v1156, %v2279
    %v2281 = vpop.f32.mrb[0].mxu0
    %v2282 = vadd.f32 %v1160, %v2281
    %2283 = vmatprep.mubr.bf16.mxu0 %v977
    %2284 = vmatmul.mubr.bf16.gmra.mrb[0].mxu0 %v976
    %v2285 = vpop.f32.mrb[0].mxu0
    %v2286 = vadd.f32 %v1156, %v2285
    %v2287 = vpop.f32.mrb[0].mxu0
    %v2288 = vadd.f32 %v1160, %v2287
    %v2289 = vpop.f32.mrb[0].mxu0
    %v2290 = vadd.f32 %v1156, %v2289
    %v2291 = vpop.f32.mrb[0].mxu0
    %v2292 = vadd.f32 %v1160, %v2291
    %2293 = vmatprep.mubr.bf16.mxu0 %v981
    %2294 = vmatmul.mubr.bf16.gmra.mrb[0].mxu0 %v980
    %v2295 = vpop.f32.mrb[0].mxu0
    %v2296 = vadd.f32 %v1156, %v2295
    %v2297 = vpop.f32.mrb[0].mxu0
    %v2298 = vadd.f32 %v1160, %v2297
    %v2299 = vpop.f32.mrb[0].mxu0
    %v2300 = vadd.f32 %v1156, %v2299
    %v2301 = vpop.f32.mrb[0].mxu0
    %v2302 = vadd.f32 %v1160, %v2301
    %2303 = vmatprep.mubr.bf16.mxu0 %v985
    %2304 = vmatmul.mubr.bf16.gmra.mrb[0].mxu0 %v984
    %v2305 = vpop.f32.mrb[0].mxu0
    %v2306 = vadd.f32 %v1156, %v2305
    %v2307 = vpop.f32.mrb[0].mxu0
    %v2308 = vadd.f32 %v1160, %v2307
    %v2309 = vpop.f32.mrb[0].mxu0
    %v2310 = vadd.f32 %v1156, %v2309
    %v2311 = vpop.f32.mrb[0].mxu0
    %v2312 = vadd.f32 %v1160, %v2311
    %2313 = vmatprep.mubr.bf16.mxu0 %v989
    %2314 = vmatmul.mubr.bf16.gmra.mrb[0].mxu0 %v988
    %v2315 = vpop.f32.mrb[0].mxu0
    %v2316 = vadd.f32 %v1156, %v2315
    %v2317 = vpop.f32.mrb[0].mxu0
    %v2318 = vadd.f32 %v1160, %v2317
    %v2319 = vpop.f32.mrb[0].mxu0
    %v2320 = vadd.f32 %v1156, %v2319
    %v2321 = vpop.f32.mrb[0].mxu0
    %v2322 = vadd.f32 %v1160, %v2321
    %2323 = vmatprep.mubr.bf16.mxu0 %v993
    %2324 = vmatmul.mubr.bf16.gmra.mrb[0].mxu0 %v992
    %v2325 = vpop.f32.mrb[0].mxu0
    %v2326 = vadd.f32 %v1156, %v2325
    %v2327 = vpop.f32.mrb[0].mxu0
    %v2328 = vadd.f32 %v1160, %v2327
    %v2329 = vpop.f32.mrb[0].mxu0
    %v2330 = vadd.f32 %v1156, %v2329
    %v2331 = vpop.f32.mrb[0].mxu0
    %v2332 = vadd.f32 %v1160, %v2331
    %2333 = vmatprep.mubr.bf16.mxu0 %v997
    %2334 = vmatmul.mubr.bf16.gmra.mrb[0].mxu0 %v996
    %v2335 = vpop.f32.mrb[0].mxu0
    %v2336 = vadd.f32 %v1156, %v2335
    %v2337 = vpop.f32.mrb[0].mxu0
    %v2338 = vadd.f32 %v1160, %v2337
    %v2339 = vpop.f32.mrb[0].mxu0
    %v2340 = vadd.f32 %v1156, %v2339
    %v2341 = vpop.f32.mrb[0].mxu0
    %v2342 = vadd.f32 %v1160, %v2341
    %2343 = vmatprep.mubr.bf16.mxu0 %v1001
    %2344 = vmatmul.mubr.bf16.gmra.mrb[0].mxu0 %v1000
    %v2345 = vpop.f32.mrb[0].mxu0
    %v2346 = vadd.f32 %v1156, %v2345
    %v2347 = vpop.f32.mrb[0].mxu0
    %v2348 = vadd.f32 %v1160, %v2347
    %v2349 = vpop.f32.mrb[0].mxu0
    %v2350 = vadd.f32 %v1156, %v2349
    %v2351 = vpop.f32.mrb[0].mxu0
    %v2352 = vadd.f32 %v1160, %v2351
    %2353 = vmatprep.mubr.bf16.mxu0 %v1005
    %2354 = vmatmul.mubr.bf16.gmra.mrb[0].mxu0 %v1004
    %v2355 = vpop.f32.mrb[0].mxu0
    %v2356 = vadd.f32 %v1156, %v2355
    %v2357 = vpop.f32.mrb[0].mxu0
    %v2358 = vadd.f32 %v1160, %v2357
    %v2359 = vpop.f32.mrb[0].mxu0
    %v2360 = vadd.f32 %v1156, %v2359
    %v2361 = vpop.f32.mrb[0].mxu0
    %v2362 = vadd.f32 %v1160, %v2361
    %2363 = vmatprep.mubr.bf16.mxu0 %v1009
    %2364 = vmatmul.mubr.bf16.gmra.mrb[0].mxu0 %v1008
    %v2365 = vpop.f32.mrb[0].mxu0
    %v2366 = vadd.f32 %v1156, %v2365
    %v2367 = vpop.f32.mrb[0].mxu0
    %v2368 = vadd.f32 %v1160, %v2367
    %v2369 = vpop.f32.mrb[0].mxu0
    %v2370 = vadd.f32 %v1156, %v2369
    %v2371 = vpop.f32.mrb[0].mxu0
    %v2372 = vadd.f32 %v1160, %v2371
    %2373 = vmatprep.mubr.bf16.mxu0 %v1013
    %2374 = vmatmul.mubr.bf16.gmra.mrb[0].mxu0 %v1012
    %v2375 = vpop.f32.mrb[0].mxu0
    %v2376 = vadd.f32 %v1156, %v2375
    %v2377 = vpop.f32.mrb[0].mxu0
    %v2378 = vadd.f32 %v1160, %v2377
    %v2379 = vpop.f32.mrb[0].mxu0
    %v2380 = vadd.f32 %v1156, %v2379
    %v2381 = vpop.f32.mrb[0].mxu0
    %v2382 = vadd.f32 %v1160, %v2381
    %2383 = vdwg.mxu0
    %2384 = vmatprep.subr.bf16.mxu0 %v1616
    %2385 = vmatpush1.bf16.msra.mxu0 %v1615
    %2386 = vmatprep.subr.bf16.mxu0 %v1620
    %2387 = vmatpush1.bf16.msra.mxu0 %v1619
    %2388 = vmatprep.subr.bf16.mxu0 %v1624
    %2389 = vmatpush1.bf16.msra.mxu0 %v1623
    %2390 = vmatprep.subr.bf16.mxu0 %v1628
    %2391 = vmatpush1.bf16.msra.mxu0 %v1627
    %2392 = vmatprep.subr.bf16.mxu0 %v1632
    %2393 = vmatpush1.bf16.msra.mxu0 %v1631
    %2394 = vmatprep.subr.bf16.mxu0 %v1636
    %2395 = vmatpush1.bf16.msra.mxu0 %v1635
    %2396 = vmatprep.subr.bf16.mxu0 %v1640
    %2397 = vmatpush1.bf16.msra.mxu0 %v1639
    %2398 = vmatprep.subr.bf16.mxu0 %v1644
    %2399 = vmatpush1.bf16.msra.mxu0 %v1643
    %2400 = vmatprep.subr.bf16.mxu0 %v1648
    %2401 = vmatpush1.bf16.msra.mxu0 %v1647
    %2402 = vmatprep.subr.bf16.mxu0 %v1652
    %2403 = vmatpush1.bf16.msra.mxu0 %v1651
    %2404 = vmatprep.subr.bf16.mxu0 %v1656
    %2405 = vmatpush1.bf16.msra.mxu0 %v1655
    %2406 = vmatprep.subr.bf16.mxu0 %v1660
    %2407 = vmatpush1.bf16.msra.mxu0 %v1659
    %2408 = vmatprep.subr.bf16.mxu0 %v1664
    %2409 = vmatpush1.bf16.msra.mxu0 %v1663
    %2410 = vmatprep.subr.bf16.mxu0 %v1668
    %2411 = vmatpush1.bf16.msra.mxu0 %v1667
    %2412 = vmatprep.subr.bf16.mxu0 %v1672
    %2413 = vmatpush1.bf16.msra.mxu0 %v1671
    %2414 = vmatprep.subr.bf16.mxu0 %v1676
    %2415 = vmatpush1.bf16.msra.mxu0 %v1675
    %2416 = vmatprep.mubr.bf16.mxu0 %v955
    %2417 = vmatmul.mubr.bf16.gmra.mrb[0].mxu0 %v954
    %v2418 = vpop.f32.mrb[0].mxu0
    %v2419 = vadd.f32 %v2226, %v2418
    %v2420 = vpop.f32.mrb[0].mxu0
    %v2421 = vadd.f32 %v2228, %v2420
    %v2422 = vpop.f32.mrb[0].mxu0
    %v2423 = vadd.f32 %v2230, %v2422
    %v2424 = vpop.f32.mrb[0].mxu0
    %v2425 = vadd.f32 %v2232, %v2424
    %2426 = vmatprep.mubr.bf16.mxu0 %v959
    %2427 = vmatmul.mubr.bf16.gmra.mrb[0].mxu0 %v958
    %v2428 = vpop.f32.mrb[0].mxu0
    %v2429 = vadd.f32 %v2236, %v2428
    %v2430 = vpop.f32.mrb[0].mxu0
    %v2431 = vadd.f32 %v2238, %v2430
    %v2432 = vpop.f32.mrb[0].mxu0
    %v2433 = vadd.f32 %v2240, %v2432
    %v2434 = vpop.f32.mrb[0].mxu0
    %v2435 = vadd.f32 %v2242, %v2434
    %2436 = vmatprep.mubr.bf16.mxu0 %v963
    %2437 = vmatmul.mubr.bf16.gmra.mrb[0].mxu0 %v962
    %v2438 = vpop.f32.mrb[0].mxu0
    %v2439 = vadd.f32 %v2246, %v2438
    %v2440 = vpop.f32.mrb[0].mxu0
    %v2441 = vadd.f32 %v2248, %v2440
    %v2442 = vpop.f32.mrb[0].mxu0
    %v2443 = vadd.f32 %v2250, %v2442
    %v2444 = vpop.f32.mrb[0].mxu0
    %v2445 = vadd.f32 %v2252, %v2444
    %2446 = vmatprep.mubr.bf16.mxu0 %v967
    %2447 = vmatmul.mubr.bf16.gmra.mrb[0].mxu0 %v966
    %v2448 = vpop.f32.mrb[0].mxu0
    %v2449 = vadd.f32 %v2256, %v2448
    %v2450 = vpop.f32.mrb[0].mxu0
    %v2451 = vadd.f32 %v2258, %v2450
    %v2452 = vpop.f32.mrb[0].mxu0
    %v2453 = vadd.f32 %v2260, %v2452
    %v2454 = vpop.f32.mrb[0].mxu0
    %v2455 = vadd.f32 %v2262, %v2454
    %2456 = vmatprep.mubr.bf16.mxu0 %v971
    %2457 = vmatmul.mubr.bf16.gmra.mrb[0].mxu0 %v970
    %v2458 = vpop.f32.mrb[0].mxu0
    %v2459 = vadd.f32 %v2266, %v2458
    %v2460 = vpop.f32.mrb[0].mxu0
    %v2461 = vadd.f32 %v2268, %v2460
    %v2462 = vpop.f32.mrb[0].mxu0
    %v2463 = vadd.f32 %v2270, %v2462
    %v2464 = vpop.f32.mrb[0].mxu0
    %v2465 = vadd.f32 %v2272, %v2464
    %2466 = vmatprep.mubr.bf16.mxu0 %v975
    %2467 = vmatmul.mubr.bf16.gmra.mrb[0].mxu0 %v974
    %v2468 = vpop.f32.mrb[0].mxu0
    %v2469 = vadd.f32 %v2276, %v2468
    %v2470 = vpop.f32.mrb[0].mxu0
    %v2471 = vadd.f32 %v2278, %v2470
    %v2472 = vpop.f32.mrb[0].mxu0
    %v2473 = vadd.f32 %v2280, %v2472
    %v2474 = vpop.f32.mrb[0].mxu0
    %v2475 = vadd.f32 %v2282, %v2474
    %2476 = vmatprep.mubr.bf16.mxu0 %v979
    %2477 = vmatmul.mubr.bf16.gmra.mrb[0].mxu0 %v978
    %v2478 = vpop.f32.mrb[0].mxu0
    %v2479 = vadd.f32 %v2286, %v2478
    %v2480 = vpop.f32.mrb[0].mxu0
    %v2481 = vadd.f32 %v2288, %v2480
    %v2482 = vpop.f32.mrb[0].mxu0
    %v2483 = vadd.f32 %v2290, %v2482
    %v2484 = vpop.f32.mrb[0].mxu0
    %v2485 = vadd.f32 %v2292, %v2484
    %2486 = vmatprep.mubr.bf16.mxu0 %v983
    %2487 = vmatmul.mubr.bf16.gmra.mrb[0].mxu0 %v982
    %v2488 = vpop.f32.mrb[0].mxu0
    %v2489 = vadd.f32 %v2296, %v2488
    %v2490 = vpop.f32.mrb[0].mxu0
    %v2491 = vadd.f32 %v2298, %v2490
    %v2492 = vpop.f32.mrb[0].mxu0
    %v2493 = vadd.f32 %v2300, %v2492
    %v2494 = vpop.f32.mrb[0].mxu0
    %v2495 = vadd.f32 %v2302, %v2494
    %2496 = vmatprep.mubr.bf16.mxu0 %v987
    %2497 = vmatmul.mubr.bf16.gmra.mrb[0].mxu0 %v986
    %v2498 = vpop.f32.mrb[0].mxu0
    %v2499 = vadd.f32 %v2306, %v2498
    %v2500 = vpop.f32.mrb[0].mxu0
    %v2501 = vadd.f32 %v2308, %v2500
    %v2502 = vpop.f32.mrb[0].mxu0
    %v2503 = vadd.f32 %v2310, %v2502
    %v2504 = vpop.f32.mrb[0].mxu0
    %v2505 = vadd.f32 %v2312, %v2504
    %2506 = vmatprep.mubr.bf16.mxu0 %v991
    %2507 = vmatmul.mubr.bf16.gmra.mrb[0].mxu0 %v990
    %v2508 = vpop.f32.mrb[0].mxu0
    %v2509 = vadd.f32 %v2316, %v2508
    %v2510 = vpop.f32.mrb[0].mxu0
    %v2511 = vadd.f32 %v2318, %v2510
    %v2512 = vpop.f32.mrb[0].mxu0
    %v2513 = vadd.f32 %v2320, %v2512
    %v2514 = vpop.f32.mrb[0].mxu0
    %v2515 = vadd.f32 %v2322, %v2514
    %2516 = vmatprep.mubr.bf16.mxu0 %v995
    %2517 = vmatmul.mubr.bf16.gmra.mrb[0].mxu0 %v994
    %v2518 = vpop.f32.mrb[0].mxu0
    %v2519 = vadd.f32 %v2326, %v2518
    %v2520 = vpop.f32.mrb[0].mxu0
    %v2521 = vadd.f32 %v2328, %v2520
    %v2522 = vpop.f32.mrb[0].mxu0
    %v2523 = vadd.f32 %v2330, %v2522
    %v2524 = vpop.f32.mrb[0].mxu0
    %v2525 = vadd.f32 %v2332, %v2524
    %2526 = vmatprep.mubr.bf16.mxu0 %v999
    %2527 = vmatmul.mubr.bf16.gmra.mrb[0].mxu0 %v998
    %v2528 = vpop.f32.mrb[0].mxu0
    %v2529 = vadd.f32 %v2336, %v2528
    %v2530 = vpop.f32.mrb[0].mxu0
    %v2531 = vadd.f32 %v2338, %v2530
    %v2532 = vpop.f32.mrb[0].mxu0
    %v2533 = vadd.f32 %v2340, %v2532
    %v2534 = vpop.f32.mrb[0].mxu0
    %v2535 = vadd.f32 %v2342, %v2534
    %2536 = vmatprep.mubr.bf16.mxu0 %v1003
    %2537 = vmatmul.mubr.bf16.gmra.mrb[0].mxu0 %v1002
    %v2538 = vpop.f32.mrb[0].mxu0
    %v2539 = vadd.f32 %v2346, %v2538
    %v2540 = vpop.f32.mrb[0].mxu0
    %v2541 = vadd.f32 %v2348, %v2540
    %v2542 = vpop.f32.mrb[0].mxu0
    %v2543 = vadd.f32 %v2350, %v2542
    %v2544 = vpop.f32.mrb[0].mxu0
    %v2545 = vadd.f32 %v2352, %v2544
    %2546 = vmatprep.mubr.bf16.mxu0 %v1007
    %2547 = vmatmul.mubr.bf16.gmra.mrb[0].mxu0 %v1006
    %v2548 = vpop.f32.mrb[0].mxu0
    %v2549 = vadd.f32 %v2356, %v2548
    %v2550 = vpop.f32.mrb[0].mxu0
    %v2551 = vadd.f32 %v2358, %v2550
    %v2552 = vpop.f32.mrb[0].mxu0
    %v2553 = vadd.f32 %v2360, %v2552
    %v2554 = vpop.f32.mrb[0].mxu0
    %v2555 = vadd.f32 %v2362, %v2554
    %2556 = vmatprep.mubr.bf16.mxu0 %v1011
    %2557 = vmatmul.mubr.bf16.gmra.mrb[0].mxu0 %v1010
    %v2558 = vpop.f32.mrb[0].mxu0
    %v2559 = vadd.f32 %v2366, %v2558
    %v2560 = vpop.f32.mrb[0].mxu0
    %v2561 = vadd.f32 %v2368, %v2560
    %v2562 = vpop.f32.mrb[0].mxu0
    %v2563 = vadd.f32 %v2370, %v2562
    %v2564 = vpop.f32.mrb[0].mxu0
    %v2565 = vadd.f32 %v2372, %v2564
    %2566 = vmatprep.mubr.bf16.mxu0 %v1015
    %2567 = vmatmul.mubr.bf16.gmra.mrb[0].mxu0 %v1014
    %v2568 = vpop.f32.mrb[0].mxu0
    %v2569 = vadd.f32 %v2376, %v2568
    %v2570 = vpop.f32.mrb[0].mxu0
    %v2571 = vadd.f32 %v2378, %v2570
    %v2572 = vpop.f32.mrb[0].mxu0
    %v2573 = vadd.f32 %v2380, %v2572
    %v2574 = vpop.f32.mrb[0].mxu0
    %v2575 = vadd.f32 %v2382, %v2574
    %2576 = vdwg.mxu0
    %v2577 = vmax.f32 %v2033, 0.0
    %v2578 = vmax.f32 %v2035, 0.0
    %v2579 = vmax.f32 %v2419, 0.0
    %v2580 = vmax.f32 %v2421, 0.0
    %v2581 = vmax.f32 %v2037, 0.0
    %v2582 = vmax.f32 %v2039, 0.0
    %v2583 = vmax.f32 %v2423, 0.0
    %v2584 = vmax.f32 %v2425, 0.0
    %v2585 = vmax.f32 %v2043, 0.0
    %v2586 = vmax.f32 %v2045, 0.0
    %v2587 = vmax.f32 %v2429, 0.0
    %v2588 = vmax.f32 %v2431, 0.0
    %v2589 = vmax.f32 %v2047, 0.0
    %v2590 = vmax.f32 %v2049, 0.0
    %v2591 = vmax.f32 %v2433, 0.0
    %v2592 = vmax.f32 %v2435, 0.0
    %v2593 = vmax.f32 %v2053, 0.0
    %v2594 = vmax.f32 %v2055, 0.0
    %v2595 = vmax.f32 %v2439, 0.0
    %v2596 = vmax.f32 %v2441, 0.0
    %v2597 = vmax.f32 %v2057, 0.0
    %v2598 = vmax.f32 %v2059, 0.0
    %v2599 = vmax.f32 %v2443, 0.0
    %v2600 = vmax.f32 %v2445, 0.0
    %v2601 = vmax.f32 %v2063, 0.0
    %v2602 = vmax.f32 %v2065, 0.0
    %v2603 = vmax.f32 %v2449, 0.0
    %v2604 = vmax.f32 %v2451, 0.0
    %v2605 = vmax.f32 %v2067, 0.0
    %v2606 = vmax.f32 %v2069, 0.0
    %v2607 = vmax.f32 %v2453, 0.0
    %v2608 = vmax.f32 %v2455, 0.0
    %v2609 = vmax.f32 %v2073, 0.0
    %v2610 = vmax.f32 %v2075, 0.0
    %v2611 = vmax.f32 %v2459, 0.0
    %v2612 = vmax.f32 %v2461, 0.0
    %v2613 = vmax.f32 %v2077, 0.0
    %v2614 = vmax.f32 %v2079, 0.0
    %v2615 = vmax.f32 %v2463, 0.0
    %v2616 = vmax.f32 %v2465, 0.0
    %v2617 = vmax.f32 %v2083, 0.0
    %v2618 = vmax.f32 %v2085, 0.0
    %v2619 = vmax.f32 %v2469, 0.0
    %v2620 = vmax.f32 %v2471, 0.0
    %v2621 = vmax.f32 %v2087, 0.0
    %v2622 = vmax.f32 %v2089, 0.0
    %v2623 = vmax.f32 %v2473, 0.0
    %v2624 = vmax.f32 %v2475, 0.0
    %v2625 = vmax.f32 %v2093, 0.0
    %v2626 = vmax.f32 %v2095, 0.0
    %v2627 = vmax.f32 %v2479, 0.0
    %v2628 = vmax.f32 %v2481, 0.0
    %v2629 = vmax.f32 %v2097, 0.0
    %v2630 = vmax.f32 %v2099, 0.0
    %v2631 = vmax.f32 %v2483, 0.0
    %v2632 = vmax.f32 %v2485, 0.0
    %v2633 = vmax.f32 %v2103, 0.0
    %v2634 = vmax.f32 %v2105, 0.0
    %v2635 = vmax.f32 %v2489, 0.0
    %v2636 = vmax.f32 %v2491, 0.0
    %v2637 = vmax.f32 %v2107, 0.0
    %v2638 = vmax.f32 %v2109, 0.0
    %v2639 = vmax.f32 %v2493, 0.0
    %v2640 = vmax.f32 %v2495, 0.0
    %v2641 = vmax.f32 %v2113, 0.0
    %v2642 = vmax.f32 %v2115, 0.0
    %v2643 = vmax.f32 %v2499, 0.0
    %v2644 = vmax.f32 %v2501, 0.0
    %v2645 = vmax.f32 %v2117, 0.0
    %v2646 = vmax.f32 %v2119, 0.0
    %v2647 = vmax.f32 %v2503, 0.0
    %v2648 = vmax.f32 %v2505, 0.0
    %v2649 = vmax.f32 %v2123, 0.0
    %v2650 = vmax.f32 %v2125, 0.0
    %v2651 = vmax.f32 %v2509, 0.0
    %v2652 = vmax.f32 %v2511, 0.0
    %v2653 = vmax.f32 %v2127, 0.0
    %v2654 = vmax.f32 %v2129, 0.0
    %v2655 = vmax.f32 %v2513, 0.0
    %v2656 = vmax.f32 %v2515, 0.0
    %v2657 = vmax.f32 %v2133, 0.0
    %v2658 = vmax.f32 %v2135, 0.0
    %v2659 = vmax.f32 %v2519, 0.0
    %v2660 = vmax.f32 %v2521, 0.0
    %v2661 = vmax.f32 %v2137, 0.0
    %v2662 = vmax.f32 %v2139, 0.0
    %v2663 = vmax.f32 %v2523, 0.0
    %v2664 = vmax.f32 %v2525, 0.0
    %v2665 = vmax.f32 %v2143, 0.0
    %v2666 = vmax.f32 %v2145, 0.0
    %v2667 = vmax.f32 %v2529, 0.0
    %v2668 = vmax.f32 %v2531, 0.0
    %v2669 = vmax.f32 %v2147, 0.0
    %v2670 = vmax.f32 %v2149, 0.0
    %v2671 = vmax.f32 %v2533, 0.0
    %v2672 = vmax.f32 %v2535, 0.0
    %v2673 = vmax.f32 %v2153, 0.0
    %v2674 = vmax.f32 %v2155, 0.0
    %v2675 = vmax.f32 %v2539, 0.0
    %v2676 = vmax.f32 %v2541, 0.0
    %v2677 = vmax.f32 %v2157, 0.0
    %v2678 = vmax.f32 %v2159, 0.0
    %v2679 = vmax.f32 %v2543, 0.0
    %v2680 = vmax.f32 %v2545, 0.0
    %v2681 = vmax.f32 %v2163, 0.0
    %v2682 = vmax.f32 %v2165, 0.0
    %v2683 = vmax.f32 %v2549, 0.0
    %v2684 = vmax.f32 %v2551, 0.0
    %v2685 = vmax.f32 %v2167, 0.0
    %v2686 = vmax.f32 %v2169, 0.0
    %v2687 = vmax.f32 %v2553, 0.0
    %v2688 = vmax.f32 %v2555, 0.0
    %v2689 = vmax.f32 %v2173, 0.0
    %v2690 = vmax.f32 %v2175, 0.0
    %v2691 = vmax.f32 %v2559, 0.0
    %v2692 = vmax.f32 %v2561, 0.0
    %v2693 = vmax.f32 %v2177, 0.0
    %v2694 = vmax.f32 %v2179, 0.0
    %v2695 = vmax.f32 %v2563, 0.0
    %v2696 = vmax.f32 %v2565, 0.0
    %v2697 = vmax.f32 %v2183, 0.0
    %v2698 = vmax.f32 %v2185, 0.0
    %v2699 = vmax.f32 %v2569, 0.0
    %v2700 = vmax.f32 %v2571, 0.0
    %v2701 = vmax.f32 %v2187, 0.0
    %v2702 = vmax.f32 %v2189, 0.0
    %v2703 = vmax.f32 %v2573, 0.0
    %v2704 = vmax.f32 %v2575, 0.0
    %v2705 = vpack.c.bf16 %v2581, %v2577
    %v2706 = vpack.c.bf16 %v2582, %v2578
    %v2707 = vpack.c.bf16 %v2583, %v2579
    %v2708 = vpack.c.bf16 %v2584, %v2580
    %v2709 = vpack.c.bf16 %v2589, %v2585
    %v2710 = vpack.c.bf16 %v2590, %v2586
    %v2711 = vpack.c.bf16 %v2591, %v2587
    %v2712 = vpack.c.bf16 %v2592, %v2588
    %v2713 = vpack.c.bf16 %v2597, %v2593
    %v2714 = vpack.c.bf16 %v2598, %v2594
    %v2715 = vpack.c.bf16 %v2599, %v2595
    %v2716 = vpack.c.bf16 %v2600, %v2596
    %v2717 = vpack.c.bf16 %v2605, %v2601
    %v2718 = vpack.c.bf16 %v2606, %v2602
    %v2719 = vpack.c.bf16 %v2607, %v2603
    %v2720 = vpack.c.bf16 %v2608, %v2604
    %v2721 = vpack.c.bf16 %v2613, %v2609
    %v2722 = vpack.c.bf16 %v2614, %v2610
    %v2723 = vpack.c.bf16 %v2615, %v2611
    %v2724 = vpack.c.bf16 %v2616, %v2612
    %v2725 = vpack.c.bf16 %v2621, %v2617
    %v2726 = vpack.c.bf16 %v2622, %v2618
    %v2727 = vpack.c.bf16 %v2623, %v2619
    %v2728 = vpack.c.bf16 %v2624, %v2620
    %v2729 = vpack.c.bf16 %v2629, %v2625
    %v2730 = vpack.c.bf16 %v2630, %v2626
    %v2731 = vpack.c.bf16 %v2631, %v2627
    %v2732 = vpack.c.bf16 %v2632, %v2628
    %v2733 = vpack.c.bf16 %v2637, %v2633
    %v2734 = vpack.c.bf16 %v2638, %v2634
    %v2735 = vpack.c.bf16 %v2639, %v2635
    %v2736 = vpack.c.bf16 %v2640, %v2636
    %v2737 = vpack.c.bf16 %v2645, %v2641
    %v2738 = vpack.c.bf16 %v2646, %v2642
    %v2739 = vpack.c.bf16 %v2647, %v2643
    %v2740 = vpack.c.bf16 %v2648, %v2644
    %v2741 = vpack.c.bf16 %v2653, %v2649
    %v2742 = vpack.c.bf16 %v2654, %v2650
    %v2743 = vpack.c.bf16 %v2655, %v2651
    %v2744 = vpack.c.bf16 %v2656, %v2652
    %v2745 = vpack.c.bf16 %v2661, %v2657
    %v2746 = vpack.c.bf16 %v2662, %v2658
    %v2747 = vpack.c.bf16 %v2663, %v2659
    %v2748 = vpack.c.bf16 %v2664, %v2660
    %v2749 = vpack.c.bf16 %v2669, %v2665
    %v2750 = vpack.c.bf16 %v2670, %v2666
    %v2751 = vpack.c.bf16 %v2671, %v2667
    %v2752 = vpack.c.bf16 %v2672, %v2668
    %v2753 = vpack.c.bf16 %v2677, %v2673
    %v2754 = vpack.c.bf16 %v2678, %v2674
    %v2755 = vpack.c.bf16 %v2679, %v2675
    %v2756 = vpack.c.bf16 %v2680, %v2676
    %v2757 = vpack.c.bf16 %v2685, %v2681
    %v2758 = vpack.c.bf16 %v2686, %v2682
    %v2759 = vpack.c.bf16 %v2687, %v2683
    %v2760 = vpack.c.bf16 %v2688, %v2684
    %v2761 = vpack.c.bf16 %v2693, %v2689
    %v2762 = vpack.c.bf16 %v2694, %v2690
    %v2763 = vpack.c.bf16 %v2695, %v2691
    %v2764 = vpack.c.bf16 %v2696, %v2692
    %v2765 = vpack.c.bf16 %v2701, %v2697
    %v2766 = vpack.c.bf16 %v2702, %v2698
    %v2767 = vpack.c.bf16 %v2703, %v2699
    %v2768 = vpack.c.bf16 %v2704, %v2700
    %v2769 = vld [vmem:[#allocation8] sm:$0xff]
    %v2770 = vld [vmem:[#allocation8 + $0x8] sm:$0xff]
    %v2771 = vld [vmem:[#allocation8 + $0x10] sm:$0xff]
    %v2772 = vld [vmem:[#allocation8 + $0x18] sm:$0xff]
    %v2773 = vld [vmem:[#allocation8 + $0x20] sm:$0xff]
    %v2774 = vld [vmem:[#allocation8 + $0x28] sm:$0xff]
    %v2775 = vld [vmem:[#allocation8 + $0x30] sm:$0xff]
    %v2776 = vld [vmem:[#allocation8 + $0x38] sm:$0xff]
    %v2777 = vld [vmem:[#allocation8 + $0x40] sm:$0xff]
    %v2778 = vld [vmem:[#allocation8 + $0x48] sm:$0xff]
    %v2779 = vld [vmem:[#allocation8 + $0x50] sm:$0xff]
    %v2780 = vld [vmem:[#allocation8 + $0x58] sm:$0xff]
    %v2781 = vld [vmem:[#allocation8 + $0x60] sm:$0xff]
    %v2782 = vld [vmem:[#allocation8 + $0x68] sm:$0xff]
    %v2783 = vld [vmem:[#allocation8 + $0x70] sm:$0xff]
    %v2784 = vld [vmem:[#allocation8 + $0x78] sm:$0xff]
    %v2785 = vld [vmem:[#allocation8 + $0x80] sm:$0xff]
    %v2786 = vld [vmem:[#allocation8 + $0x88] sm:$0xff]
    %v2787 = vld [vmem:[#allocation8 + $0x90] sm:$0xff]
    %v2788 = vld [vmem:[#allocation8 + $0x98] sm:$0xff]
    %v2789 = vld [vmem:[#allocation8 + $0xa0] sm:$0xff]
    %v2790 = vld [vmem:[#allocation8 + $0xa8] sm:$0xff]
    %v2791 = vld [vmem:[#allocation8 + $0xb0] sm:$0xff]
    %v2792 = vld [vmem:[#allocation8 + $0xb8] sm:$0xff]
    %v2793 = vld [vmem:[#allocation8 + $0xc0] sm:$0xff]
    %v2794 = vld [vmem:[#allocation8 + $0xc8] sm:$0xff]
    %v2795 = vld [vmem:[#allocation8 + $0xd0] sm:$0xff]
    %v2796 = vld [vmem:[#allocation8 + $0xd8] sm:$0xff]
    %v2797 = vld [vmem:[#allocation8 + $0xe0] sm:$0xff]
    %v2798 = vld [vmem:[#allocation8 + $0xe8] sm:$0xff]
    %v2799 = vld [vmem:[#allocation8 + $0xf0] sm:$0xff]
    %v2800 = vld [vmem:[#allocation8 + $0xf8] sm:$0xff]
    %v2801 = vld [vmem:[#allocation8 + $0x100] sm:$0xff]
    %v2802 = vld [vmem:[#allocation8 + $0x108] sm:$0xff]
    %v2803 = vld [vmem:[#allocation8 + $0x110] sm:$0xff]
    %v2804 = vld [vmem:[#allocation8 + $0x118] sm:$0xff]
    %v2805 = vld [vmem:[#allocation8 + $0x120] sm:$0xff]
    %v2806 = vld [vmem:[#allocation8 + $0x128] sm:$0xff]
    %v2807 = vld [vmem:[#allocation8 + $0x130] sm:$0xff]
    %v2808 = vld [vmem:[#allocation8 + $0x138] sm:$0xff]
    %v2809 = vld [vmem:[#allocation8 + $0x140] sm:$0xff]
    %v2810 = vld [vmem:[#allocation8 + $0x148] sm:$0xff]
    %v2811 = vld [vmem:[#allocation8 + $0x150] sm:$0xff]
    %v2812 = vld [vmem:[#allocation8 + $0x158] sm:$0xff]
    %v2813 = vld [vmem:[#allocation8 + $0x160] sm:$0xff]
    %v2814 = vld [vmem:[#allocation8 + $0x168] sm:$0xff]
    %v2815 = vld [vmem:[#allocation8 + $0x170] sm:$0xff]
    %v2816 = vld [vmem:[#allocation8 + $0x178] sm:$0xff]
    %v2817 = vld [vmem:[#allocation8 + $0x180] sm:$0xff]
    %v2818 = vld [vmem:[#allocation8 + $0x188] sm:$0xff]
    %v2819 = vld [vmem:[#allocation8 + $0x190] sm:$0xff]
    %v2820 = vld [vmem:[#allocation8 + $0x198] sm:$0xff]
    %v2821 = vld [vmem:[#allocation8 + $0x1a0] sm:$0xff]
    %v2822 = vld [vmem:[#allocation8 + $0x1a8] sm:$0xff]
    %v2823 = vld [vmem:[#allocation8 + $0x1b0] sm:$0xff]
    %v2824 = vld [vmem:[#allocation8 + $0x1b8] sm:$0xff]
    %v2825 = vld [vmem:[#allocation8 + $0x1c0] sm:$0xff]
    %v2826 = vld [vmem:[#allocation8 + $0x1c8] sm:$0xff]
    %v2827 = vld [vmem:[#allocation8 + $0x1d0] sm:$0xff]
    %v2828 = vld [vmem:[#allocation8 + $0x1d8] sm:$0xff]
    %v2829 = vld [vmem:[#allocation8 + $0x1e0] sm:$0xff]
    %v2830 = vld [vmem:[#allocation8 + $0x1e8] sm:$0xff]
    %v2831 = vld [vmem:[#allocation8 + $0x1f0] sm:$0xff]
    %v2832 = vld [vmem:[#allocation8 + $0x1f8] sm:$0xff]
    %v2833 = vld [vmem:[#allocation8 + $0x200] sm:$0xff]
    %v2834 = vld [vmem:[#allocation8 + $0x208] sm:$0xff]
    %v2835 = vld [vmem:[#allocation8 + $0x210] sm:$0xff]
    %v2836 = vld [vmem:[#allocation8 + $0x218] sm:$0xff]
    %v2837 = vld [vmem:[#allocation8 + $0x220] sm:$0xff]
    %v2838 = vld [vmem:[#allocation8 + $0x228] sm:$0xff]
    %v2839 = vld [vmem:[#allocation8 + $0x230] sm:$0xff]
    %v2840 = vld [vmem:[#allocation8 + $0x238] sm:$0xff]
    %v2841 = vld [vmem:[#allocation8 + $0x240] sm:$0xff]
    %v2842 = vld [vmem:[#allocation8 + $0x248] sm:$0xff]
    %v2843 = vld [vmem:[#allocation8 + $0x250] sm:$0xff]
    %v2844 = vld [vmem:[#allocation8 + $0x258] sm:$0xff]
    %v2845 = vld [vmem:[#allocation8 + $0x260] sm:$0xff]
    %v2846 = vld [vmem:[#allocation8 + $0x268] sm:$0xff]
    %v2847 = vld [vmem:[#allocation8 + $0x270] sm:$0xff]
    %v2848 = vld [vmem:[#allocation8 + $0x278] sm:$0xff]
    %v2849 = vld [vmem:[#allocation8 + $0x280] sm:$0xff]
    %v2850 = vld [vmem:[#allocation8 + $0x288] sm:$0xff]
    %v2851 = vld [vmem:[#allocation8 + $0x290] sm:$0xff]
    %v2852 = vld [vmem:[#allocation8 + $0x298] sm:$0xff]
    %v2853 = vld [vmem:[#allocation8 + $0x2a0] sm:$0xff]
    %v2854 = vld [vmem:[#allocation8 + $0x2a8] sm:$0xff]
    %v2855 = vld [vmem:[#allocation8 + $0x2b0] sm:$0xff]
    %v2856 = vld [vmem:[#allocation8 + $0x2b8] sm:$0xff]
    %v2857 = vld [vmem:[#allocation8 + $0x2c0] sm:$0xff]
    %v2858 = vld [vmem:[#allocation8 + $0x2c8] sm:$0xff]
    %v2859 = vld [vmem:[#allocation8 + $0x2d0] sm:$0xff]
    %v2860 = vld [vmem:[#allocation8 + $0x2d8] sm:$0xff]
    %v2861 = vld [vmem:[#allocation8 + $0x2e0] sm:$0xff]
    %v2862 = vld [vmem:[#allocation8 + $0x2e8] sm:$0xff]
    %v2863 = vld [vmem:[#allocation8 + $0x2f0] sm:$0xff]
    %v2864 = vld [vmem:[#allocation8 + $0x2f8] sm:$0xff]
    %v2865 = vld [vmem:[#allocation8 + $0x300] sm:$0xff]
    %v2866 = vld [vmem:[#allocation8 + $0x308] sm:$0xff]
    %v2867 = vld [vmem:[#allocation8 + $0x310] sm:$0xff]
    %v2868 = vld [vmem:[#allocation8 + $0x318] sm:$0xff]
    %v2869 = vld [vmem:[#allocation8 + $0x320] sm:$0xff]
    %v2870 = vld [vmem:[#allocation8 + $0x328] sm:$0xff]
    %v2871 = vld [vmem:[#allocation8 + $0x330] sm:$0xff]
    %v2872 = vld [vmem:[#allocation8 + $0x338] sm:$0xff]
    %v2873 = vld [vmem:[#allocation8 + $0x340] sm:$0xff]
    %v2874 = vld [vmem:[#allocation8 + $0x348] sm:$0xff]
    %v2875 = vld [vmem:[#allocation8 + $0x350] sm:$0xff]
    %v2876 = vld [vmem:[#allocation8 + $0x358] sm:$0xff]
    %v2877 = vld [vmem:[#allocation8 + $0x360] sm:$0xff]
    %v2878 = vld [vmem:[#allocation8 + $0x368] sm:$0xff]
    %v2879 = vld [vmem:[#allocation8 + $0x370] sm:$0xff]
    %v2880 = vld [vmem:[#allocation8 + $0x378] sm:$0xff]
    %v2881 = vld [vmem:[#allocation8 + $0x380] sm:$0xff]
    %v2882 = vld [vmem:[#allocation8 + $0x388] sm:$0xff]
    %v2883 = vld [vmem:[#allocation8 + $0x390] sm:$0xff]
    %v2884 = vld [vmem:[#allocation8 + $0x398] sm:$0xff]
    %v2885 = vld [vmem:[#allocation8 + $0x3a0] sm:$0xff]
    %v2886 = vld [vmem:[#allocation8 + $0x3a8] sm:$0xff]
    %v2887 = vld [vmem:[#allocation8 + $0x3b0] sm:$0xff]
    %v2888 = vld [vmem:[#allocation8 + $0x3b8] sm:$0xff]
    %v2889 = vld [vmem:[#allocation8 + $0x3c0] sm:$0xff]
    %v2890 = vld [vmem:[#allocation8 + $0x3c8] sm:$0xff]
    %v2891 = vld [vmem:[#allocation8 + $0x3d0] sm:$0xff]
    %v2892 = vld [vmem:[#allocation8 + $0x3d8] sm:$0xff]
    %v2893 = vld [vmem:[#allocation8 + $0x3e0] sm:$0xff]
    %v2894 = vld [vmem:[#allocation8 + $0x3e8] sm:$0xff]
    %v2895 = vld [vmem:[#allocation8 + $0x3f0] sm:$0xff]
    %v2896 = vld [vmem:[#allocation8 + $0x3f8] sm:$0xff]
    %v2898 = vlaneseq
    %v2899 = vshrl.u32 %v2898, 7
    %v2900 = vsub.s32 0, %v2899
    %v2901 = vrot.slane %v127, %v2900
    %v2902 = vlaneseq
    %v2903 = vshrl.u32 %v2902, 7
    %v2904 = vsub.s32 1, %v2903
    %v2905 = vrot.slane %v127, %v2904
    %v2906 = vlaneseq
    %v2907 = vshrl.u32 %v2906, 7
    %v2908 = vsub.s32 2, %v2907
    %v2909 = vrot.slane %v127, %v2908
    %v2910 = vlaneseq
    %v2911 = vshrl.u32 %v2910, 7
    %v2912 = vsub.s32 3, %v2911
    %v2913 = vrot.slane %v127, %v2912
    %v3046 = vunpack.c.l.b16 %v2769
    %v3047 = vunpack.c.h.b16 %v2769
    %v3048 = vunpack.c.l.b16 %v2770
    %v3049 = vunpack.c.h.b16 %v2770
    %v3050 = vunpack.c.l.b16 %v2771
    %v3051 = vunpack.c.h.b16 %v2771
    %v3052 = vunpack.c.l.b16 %v2772
    %v3053 = vunpack.c.h.b16 %v2772
    %v3054 = vunpack.c.l.b16 %v2773
    %v3055 = vunpack.c.h.b16 %v2773
    %v3056 = vunpack.c.l.b16 %v2774
    %v3057 = vunpack.c.h.b16 %v2774
    %v3058 = vunpack.c.l.b16 %v2775
    %v3059 = vunpack.c.h.b16 %v2775
    %v3060 = vunpack.c.l.b16 %v2776
    %v3061 = vunpack.c.h.b16 %v2776
    %v3062 = vunpack.c.l.b16 %v2777
    %v3063 = vunpack.c.h.b16 %v2777
    %v3064 = vunpack.c.l.b16 %v2778
    %v3065 = vunpack.c.h.b16 %v2778
    %v3066 = vunpack.c.l.b16 %v2779
    %v3067 = vunpack.c.h.b16 %v2779
    %v3068 = vunpack.c.l.b16 %v2780
    %v3069 = vunpack.c.h.b16 %v2780
    %v3070 = vunpack.c.l.b16 %v2781
    %v3071 = vunpack.c.h.b16 %v2781
    %v3072 = vunpack.c.l.b16 %v2782
    %v3073 = vunpack.c.h.b16 %v2782
    %v3074 = vunpack.c.l.b16 %v2783
    %v3075 = vunpack.c.h.b16 %v2783
    %v3076 = vunpack.c.l.b16 %v2784
    %v3077 = vunpack.c.h.b16 %v2784
    %v3078 = vunpack.c.l.b16 %v2785
    %v3079 = vunpack.c.h.b16 %v2785
    %v3080 = vunpack.c.l.b16 %v2786
    %v3081 = vunpack.c.h.b16 %v2786
    %v3082 = vunpack.c.l.b16 %v2787
    %v3083 = vunpack.c.h.b16 %v2787
    %v3084 = vunpack.c.l.b16 %v2788
    %v3085 = vunpack.c.h.b16 %v2788
    %v3086 = vunpack.c.l.b16 %v2789
    %v3087 = vunpack.c.h.b16 %v2789
    %v3088 = vunpack.c.l.b16 %v2790
    %v3089 = vunpack.c.h.b16 %v2790
    %v3090 = vunpack.c.l.b16 %v2791
    %v3091 = vunpack.c.h.b16 %v2791
    %v3092 = vunpack.c.l.b16 %v2792
    %v3093 = vunpack.c.h.b16 %v2792
    %v3094 = vunpack.c.l.b16 %v2793
    %v3095 = vunpack.c.h.b16 %v2793
    %v3096 = vunpack.c.l.b16 %v2794
    %v3097 = vunpack.c.h.b16 %v2794
    %v3098 = vunpack.c.l.b16 %v2795
    %v3099 = vunpack.c.h.b16 %v2795
    %v3100 = vunpack.c.l.b16 %v2796
    %v3101 = vunpack.c.h.b16 %v2796
    %v3102 = vunpack.c.l.b16 %v2797
    %v3103 = vunpack.c.h.b16 %v2797
    %v3104 = vunpack.c.l.b16 %v2798
    %v3105 = vunpack.c.h.b16 %v2798
    %v3106 = vunpack.c.l.b16 %v2799
    %v3107 = vunpack.c.h.b16 %v2799
    %v3108 = vunpack.c.l.b16 %v2800
    %v3109 = vunpack.c.h.b16 %v2800
    %v3110 = vunpack.c.l.b16 %v2801
    %v3111 = vunpack.c.h.b16 %v2801
    %v3112 = vunpack.c.l.b16 %v2802
    %v3113 = vunpack.c.h.b16 %v2802
    %v3114 = vunpack.c.l.b16 %v2803
    %v3115 = vunpack.c.h.b16 %v2803
    %v3116 = vunpack.c.l.b16 %v2804
    %v3117 = vunpack.c.h.b16 %v2804
    %v3118 = vunpack.c.l.b16 %v2805
    %v3119 = vunpack.c.h.b16 %v2805
    %v3120 = vunpack.c.l.b16 %v2806
    %v3121 = vunpack.c.h.b16 %v2806
    %v3122 = vunpack.c.l.b16 %v2807
    %v3123 = vunpack.c.h.b16 %v2807
    %v3124 = vunpack.c.l.b16 %v2808
    %v3125 = vunpack.c.h.b16 %v2808
    %v3126 = vunpack.c.l.b16 %v2809
    %v3127 = vunpack.c.h.b16 %v2809
    %v3128 = vunpack.c.l.b16 %v2810
    %v3129 = vunpack.c.h.b16 %v2810
    %v3130 = vunpack.c.l.b16 %v2811
    %v3131 = vunpack.c.h.b16 %v2811
    %v3132 = vunpack.c.l.b16 %v2812
    %v3133 = vunpack.c.h.b16 %v2812
    %v3134 = vunpack.c.l.b16 %v2813
    %v3135 = vunpack.c.h.b16 %v2813
    %v3136 = vunpack.c.l.b16 %v2814
    %v3137 = vunpack.c.h.b16 %v2814
    %v3138 = vunpack.c.l.b16 %v2815
    %v3139 = vunpack.c.h.b16 %v2815
    %v3140 = vunpack.c.l.b16 %v2816
    %v3141 = vunpack.c.h.b16 %v2816
    %v3142 = vunpack.c.l.b16 %v2817
    %v3143 = vunpack.c.h.b16 %v2817
    %v3144 = vunpack.c.l.b16 %v2818
    %v3145 = vunpack.c.h.b16 %v2818
    %v3146 = vunpack.c.l.b16 %v2819
    %v3147 = vunpack.c.h.b16 %v2819
    %v3148 = vunpack.c.l.b16 %v2820
    %v3149 = vunpack.c.h.b16 %v2820
    %v3150 = vunpack.c.l.b16 %v2821
    %v3151 = vunpack.c.h.b16 %v2821
    %v3152 = vunpack.c.l.b16 %v2822
    %v3153 = vunpack.c.h.b16 %v2822
    %v3154 = vunpack.c.l.b16 %v2823
    %v3155 = vunpack.c.h.b16 %v2823
    %v3156 = vunpack.c.l.b16 %v2824
    %v3157 = vunpack.c.h.b16 %v2824
    %v3158 = vunpack.c.l.b16 %v2825
    %v3159 = vunpack.c.h.b16 %v2825
    %v3160 = vunpack.c.l.b16 %v2826
    %v3161 = vunpack.c.h.b16 %v2826
    %v3162 = vunpack.c.l.b16 %v2827
    %v3163 = vunpack.c.h.b16 %v2827
    %v3164 = vunpack.c.l.b16 %v2828
    %v3165 = vunpack.c.h.b16 %v2828
    %v3166 = vunpack.c.l.b16 %v2829
    %v3167 = vunpack.c.h.b16 %v2829
    %v3168 = vunpack.c.l.b16 %v2830
    %v3169 = vunpack.c.h.b16 %v2830
    %v3170 = vunpack.c.l.b16 %v2831
    %v3171 = vunpack.c.h.b16 %v2831
    %v3172 = vunpack.c.l.b16 %v2832
    %v3173 = vunpack.c.h.b16 %v2832
    %v3174 = vunpack.c.l.b16 %v2833
    %v3175 = vunpack.c.h.b16 %v2833
    %v3176 = vunpack.c.l.b16 %v2834
    %v3177 = vunpack.c.h.b16 %v2834
    %v3178 = vunpack.c.l.b16 %v2835
    %v3179 = vunpack.c.h.b16 %v2835
    %v3180 = vunpack.c.l.b16 %v2836
    %v3181 = vunpack.c.h.b16 %v2836
    %v3182 = vunpack.c.l.b16 %v2837
    %v3183 = vunpack.c.h.b16 %v2837
    %v3184 = vunpack.c.l.b16 %v2838
    %v3185 = vunpack.c.h.b16 %v2838
    %v3186 = vunpack.c.l.b16 %v2839
    %v3187 = vunpack.c.h.b16 %v2839
    %v3188 = vunpack.c.l.b16 %v2840
    %v3189 = vunpack.c.h.b16 %v2840
    %v3190 = vunpack.c.l.b16 %v2841
    %v3191 = vunpack.c.h.b16 %v2841
    %v3192 = vunpack.c.l.b16 %v2842
    %v3193 = vunpack.c.h.b16 %v2842
    %v3194 = vunpack.c.l.b16 %v2843
    %v3195 = vunpack.c.h.b16 %v2843
    %v3196 = vunpack.c.l.b16 %v2844
    %v3197 = vunpack.c.h.b16 %v2844
    %v3198 = vunpack.c.l.b16 %v2845
    %v3199 = vunpack.c.h.b16 %v2845
    %v3200 = vunpack.c.l.b16 %v2846
    %v3201 = vunpack.c.h.b16 %v2846
    %v3202 = vunpack.c.l.b16 %v2847
    %v3203 = vunpack.c.h.b16 %v2847
    %v3204 = vunpack.c.l.b16 %v2848
    %v3205 = vunpack.c.h.b16 %v2848
    %v3206 = vunpack.c.l.b16 %v2849
    %v3207 = vunpack.c.h.b16 %v2849
    %v3208 = vunpack.c.l.b16 %v2850
    %v3209 = vunpack.c.h.b16 %v2850
    %v3210 = vunpack.c.l.b16 %v2851
    %v3211 = vunpack.c.h.b16 %v2851
    %v3212 = vunpack.c.l.b16 %v2852
    %v3213 = vunpack.c.h.b16 %v2852
    %v3214 = vunpack.c.l.b16 %v2853
    %v3215 = vunpack.c.h.b16 %v2853
    %v3216 = vunpack.c.l.b16 %v2854
    %v3217 = vunpack.c.h.b16 %v2854
    %v3218 = vunpack.c.l.b16 %v2855
    %v3219 = vunpack.c.h.b16 %v2855
    %v3220 = vunpack.c.l.b16 %v2856
    %v3221 = vunpack.c.h.b16 %v2856
    %v3222 = vunpack.c.l.b16 %v2857
    %v3223 = vunpack.c.h.b16 %v2857
    %v3224 = vunpack.c.l.b16 %v2858
    %v3225 = vunpack.c.h.b16 %v2858
    %v3226 = vunpack.c.l.b16 %v2859
    %v3227 = vunpack.c.h.b16 %v2859
    %v3228 = vunpack.c.l.b16 %v2860
    %v3229 = vunpack.c.h.b16 %v2860
    %v3230 = vunpack.c.l.b16 %v2861
    %v3231 = vunpack.c.h.b16 %v2861
    %v3232 = vunpack.c.l.b16 %v2862
    %v3233 = vunpack.c.h.b16 %v2862
    %v3234 = vunpack.c.l.b16 %v2863
    %v3235 = vunpack.c.h.b16 %v2863
    %v3236 = vunpack.c.l.b16 %v2864
    %v3237 = vunpack.c.h.b16 %v2864
    %v3238 = vunpack.c.l.b16 %v2865
    %v3239 = vunpack.c.h.b16 %v2865
    %v3240 = vunpack.c.l.b16 %v2866
    %v3241 = vunpack.c.h.b16 %v2866
    %v3242 = vunpack.c.l.b16 %v2867
    %v3243 = vunpack.c.h.b16 %v2867
    %v3244 = vunpack.c.l.b16 %v2868
    %v3245 = vunpack.c.h.b16 %v2868
    %v3246 = vunpack.c.l.b16 %v2869
    %v3247 = vunpack.c.h.b16 %v2869
    %v3248 = vunpack.c.l.b16 %v2870
    %v3249 = vunpack.c.h.b16 %v2870
    %v3250 = vunpack.c.l.b16 %v2871
    %v3251 = vunpack.c.h.b16 %v2871
    %v3252 = vunpack.c.l.b16 %v2872
    %v3253 = vunpack.c.h.b16 %v2872
    %v3254 = vunpack.c.l.b16 %v2873
    %v3255 = vunpack.c.h.b16 %v2873
    %v3256 = vunpack.c.l.b16 %v2874
    %v3257 = vunpack.c.h.b16 %v2874
    %v3258 = vunpack.c.l.b16 %v2875
    %v3259 = vunpack.c.h.b16 %v2875
    %v3260 = vunpack.c.l.b16 %v2876
    %v3261 = vunpack.c.h.b16 %v2876
    %v3262 = vunpack.c.l.b16 %v2877
    %v3263 = vunpack.c.h.b16 %v2877
    %v3264 = vunpack.c.l.b16 %v2878
    %v3265 = vunpack.c.h.b16 %v2878
    %v3266 = vunpack.c.l.b16 %v2879
    %v3267 = vunpack.c.h.b16 %v2879
    %v3268 = vunpack.c.l.b16 %v2880
    %v3269 = vunpack.c.h.b16 %v2880
    %v3270 = vunpack.c.l.b16 %v2881
    %v3271 = vunpack.c.h.b16 %v2881
    %v3272 = vunpack.c.l.b16 %v2882
    %v3273 = vunpack.c.h.b16 %v2882
    %v3274 = vunpack.c.l.b16 %v2883
    %v3275 = vunpack.c.h.b16 %v2883
    %v3276 = vunpack.c.l.b16 %v2884
    %v3277 = vunpack.c.h.b16 %v2884
    %v3278 = vunpack.c.l.b16 %v2885
    %v3279 = vunpack.c.h.b16 %v2885
    %v3280 = vunpack.c.l.b16 %v2886
    %v3281 = vunpack.c.h.b16 %v2886
    %v3282 = vunpack.c.l.b16 %v2887
    %v3283 = vunpack.c.h.b16 %v2887
    %v3284 = vunpack.c.l.b16 %v2888
    %v3285 = vunpack.c.h.b16 %v2888
    %v3286 = vunpack.c.l.b16 %v2889
    %v3287 = vunpack.c.h.b16 %v2889
    %v3288 = vunpack.c.l.b16 %v2890
    %v3289 = vunpack.c.h.b16 %v2890
    %v3290 = vunpack.c.l.b16 %v2891
    %v3291 = vunpack.c.h.b16 %v2891
    %v3292 = vunpack.c.l.b16 %v2892
    %v3293 = vunpack.c.h.b16 %v2892
    %v3294 = vunpack.c.l.b16 %v2893
    %v3295 = vunpack.c.h.b16 %v2893
    %v3296 = vunpack.c.l.b16 %v2894
    %v3297 = vunpack.c.h.b16 %v2894
    %v3298 = vunpack.c.l.b16 %v2895
    %v3299 = vunpack.c.h.b16 %v2895
    %v3300 = vunpack.c.l.b16 %v2896
    %v3301 = vunpack.c.h.b16 %v2896
    %v3302 = vpack.c.b16 %v3050, %v3046
    %v3303 = vpack.c.b16 %v3051, %v3047
    %v3304 = vpack.c.b16 %v3052, %v3048
    %v3305 = vpack.c.b16 %v3053, %v3049
    %v3306 = vpack.c.b16 %v3058, %v3054
    %v3307 = vpack.c.b16 %v3059, %v3055
    %v3308 = vpack.c.b16 %v3060, %v3056
    %v3309 = vpack.c.b16 %v3061, %v3057
    %v3310 = vpack.c.b16 %v3066, %v3062
    %v3311 = vpack.c.b16 %v3067, %v3063
    %v3312 = vpack.c.b16 %v3068, %v3064
    %v3313 = vpack.c.b16 %v3069, %v3065
    %v3314 = vpack.c.b16 %v3074, %v3070
    %v3315 = vpack.c.b16 %v3075, %v3071
    %v3316 = vpack.c.b16 %v3076, %v3072
    %v3317 = vpack.c.b16 %v3077, %v3073
    %v3318 = vpack.c.b16 %v3082, %v3078
    %v3319 = vpack.c.b16 %v3083, %v3079
    %v3320 = vpack.c.b16 %v3084, %v3080
    %v3321 = vpack.c.b16 %v3085, %v3081
    %v3322 = vpack.c.b16 %v3090, %v3086
    %v3323 = vpack.c.b16 %v3091, %v3087
    %v3324 = vpack.c.b16 %v3092, %v3088
    %v3325 = vpack.c.b16 %v3093, %v3089
    %v3326 = vpack.c.b16 %v3098, %v3094
    %v3327 = vpack.c.b16 %v3099, %v3095
    %v3328 = vpack.c.b16 %v3100, %v3096
    %v3329 = vpack.c.b16 %v3101, %v3097
    %v3330 = vpack.c.b16 %v3106, %v3102
    %v3331 = vpack.c.b16 %v3107, %v3103
    %v3332 = vpack.c.b16 %v3108, %v3104
    %v3333 = vpack.c.b16 %v3109, %v3105
    %v3334 = vpack.c.b16 %v3114, %v3110
    %v3335 = vpack.c.b16 %v3115, %v3111
    %v3336 = vpack.c.b16 %v3116, %v3112
    %v3337 = vpack.c.b16 %v3117, %v3113
    %v3338 = vpack.c.b16 %v3122, %v3118
    %v3339 = vpack.c.b16 %v3123, %v3119
    %v3340 = vpack.c.b16 %v3124, %v3120
    %v3341 = vpack.c.b16 %v3125, %v3121
    %v3342 = vpack.c.b16 %v3130, %v3126
    %v3343 = vpack.c.b16 %v3131, %v3127
    %v3344 = vpack.c.b16 %v3132, %v3128
    %v3345 = vpack.c.b16 %v3133, %v3129
    %v3346 = vpack.c.b16 %v3138, %v3134
    %v3347 = vpack.c.b16 %v3139, %v3135
    %v3348 = vpack.c.b16 %v3140, %v3136
    %v3349 = vpack.c.b16 %v3141, %v3137
    %v3350 = vpack.c.b16 %v3146, %v3142
    %v3351 = vpack.c.b16 %v3147, %v3143
    %v3352 = vpack.c.b16 %v3148, %v3144
    %v3353 = vpack.c.b16 %v3149, %v3145
    %v3354 = vpack.c.b16 %v3154, %v3150
    %v3355 = vpack.c.b16 %v3155, %v3151
    %v3356 = vpack.c.b16 %v3156, %v3152
    %v3357 = vpack.c.b16 %v3157, %v3153
    %v3358 = vpack.c.b16 %v3162, %v3158
    %v3359 = vpack.c.b16 %v3163, %v3159
    %v3360 = vpack.c.b16 %v3164, %v3160
    %v3361 = vpack.c.b16 %v3165, %v3161
    %v3362 = vpack.c.b16 %v3170, %v3166
    %v3363 = vpack.c.b16 %v3171, %v3167
    %v3364 = vpack.c.b16 %v3172, %v3168
    %v3365 = vpack.c.b16 %v3173, %v3169
    %v3366 = vpack.c.b16 %v3178, %v3174
    %v3367 = vpack.c.b16 %v3179, %v3175
    %v3368 = vpack.c.b16 %v3180, %v3176
    %v3369 = vpack.c.b16 %v3181, %v3177
    %v3370 = vpack.c.b16 %v3186, %v3182
    %v3371 = vpack.c.b16 %v3187, %v3183
    %v3372 = vpack.c.b16 %v3188, %v3184
    %v3373 = vpack.c.b16 %v3189, %v3185
    %v3374 = vpack.c.b16 %v3194, %v3190
    %v3375 = vpack.c.b16 %v3195, %v3191
    %v3376 = vpack.c.b16 %v3196, %v3192
    %v3377 = vpack.c.b16 %v3197, %v3193
    %v3378 = vpack.c.b16 %v3202, %v3198
    %v3379 = vpack.c.b16 %v3203, %v3199
    %v3380 = vpack.c.b16 %v3204, %v3200
    %v3381 = vpack.c.b16 %v3205, %v3201
    %v3382 = vpack.c.b16 %v3210, %v3206
    %v3383 = vpack.c.b16 %v3211, %v3207
    %v3384 = vpack.c.b16 %v3212, %v3208
    %v3385 = vpack.c.b16 %v3213, %v3209
    %v3386 = vpack.c.b16 %v3218, %v3214
    %v3387 = vpack.c.b16 %v3219, %v3215
    %v3388 = vpack.c.b16 %v3220, %v3216
    %v3389 = vpack.c.b16 %v3221, %v3217
    %v3390 = vpack.c.b16 %v3226, %v3222
    %v3391 = vpack.c.b16 %v3227, %v3223
    %v3392 = vpack.c.b16 %v3228, %v3224
    %v3393 = vpack.c.b16 %v3229, %v3225
    %v3394 = vpack.c.b16 %v3234, %v3230
    %v3395 = vpack.c.b16 %v3235, %v3231
    %v3396 = vpack.c.b16 %v3236, %v3232
    %v3397 = vpack.c.b16 %v3237, %v3233
    %v3398 = vpack.c.b16 %v3242, %v3238
    %v3399 = vpack.c.b16 %v3243, %v3239
    %v3400 = vpack.c.b16 %v3244, %v3240
    %v3401 = vpack.c.b16 %v3245, %v3241
    %v3402 = vpack.c.b16 %v3250, %v3246
    %v3403 = vpack.c.b16 %v3251, %v3247
    %v3404 = vpack.c.b16 %v3252, %v3248
    %v3405 = vpack.c.b16 %v3253, %v3249
    %v3406 = vpack.c.b16 %v3258, %v3254
    %v3407 = vpack.c.b16 %v3259, %v3255
    %v3408 = vpack.c.b16 %v3260, %v3256
    %v3409 = vpack.c.b16 %v3261, %v3257
    %v3410 = vpack.c.b16 %v3266, %v3262
    %v3411 = vpack.c.b16 %v3267, %v3263
    %v3412 = vpack.c.b16 %v3268, %v3264
    %v3413 = vpack.c.b16 %v3269, %v3265
    %v3414 = vpack.c.b16 %v3274, %v3270
    %v3415 = vpack.c.b16 %v3275, %v3271
    %v3416 = vpack.c.b16 %v3276, %v3272
    %v3417 = vpack.c.b16 %v3277, %v3273
    %v3418 = vpack.c.b16 %v3282, %v3278
    %v3419 = vpack.c.b16 %v3283, %v3279
    %v3420 = vpack.c.b16 %v3284, %v3280
    %v3421 = vpack.c.b16 %v3285, %v3281
    %v3422 = vpack.c.b16 %v3290, %v3286
    %v3423 = vpack.c.b16 %v3291, %v3287
    %v3424 = vpack.c.b16 %v3292, %v3288
    %v3425 = vpack.c.b16 %v3293, %v3289
    %v3426 = vpack.c.b16 %v3298, %v3294
    %v3427 = vpack.c.b16 %v3299, %v3295
    %v3428 = vpack.c.b16 %v3300, %v3296
    %v3429 = vpack.c.b16 %v3301, %v3297
    %3558 = vmatprep.subr.bf16.mxu0 %v3303
    %3559 = vmatpush1.bf16.msra.mxu0 %v3302
    %3560 = vmatprep.subr.bf16.mxu0 %v3307
    %3561 = vmatpush1.bf16.msra.mxu0 %v3306
    %3562 = vmatprep.subr.bf16.mxu0 %v3311
    %3563 = vmatpush1.bf16.msra.mxu0 %v3310
    %3564 = vmatprep.subr.bf16.mxu0 %v3315
    %3565 = vmatpush1.bf16.msra.mxu0 %v3314
    %3566 = vmatprep.subr.bf16.mxu0 %v3319
    %3567 = vmatpush1.bf16.msra.mxu0 %v3318
    %3568 = vmatprep.subr.bf16.mxu0 %v3323
    %3569 = vmatpush1.bf16.msra.mxu0 %v3322
    %3570 = vmatprep.subr.bf16.mxu0 %v3327
    %3571 = vmatpush1.bf16.msra.mxu0 %v3326
    %3572 = vmatprep.subr.bf16.mxu0 %v3331
    %3573 = vmatpush1.bf16.msra.mxu0 %v3330
    %3574 = vmatprep.subr.bf16.mxu0 %v3335
    %3575 = vmatpush1.bf16.msra.mxu0 %v3334
    %3576 = vmatprep.subr.bf16.mxu0 %v3339
    %3577 = vmatpush1.bf16.msra.mxu0 %v3338
    %3578 = vmatprep.subr.bf16.mxu0 %v3343
    %3579 = vmatpush1.bf16.msra.mxu0 %v3342
    %3580 = vmatprep.subr.bf16.mxu0 %v3347
    %3581 = vmatpush1.bf16.msra.mxu0 %v3346
    %3582 = vmatprep.subr.bf16.mxu0 %v3351
    %3583 = vmatpush1.bf16.msra.mxu0 %v3350
    %3584 = vmatprep.subr.bf16.mxu0 %v3355
    %3585 = vmatpush1.bf16.msra.mxu0 %v3354
    %3586 = vmatprep.subr.bf16.mxu0 %v3359
    %3587 = vmatpush1.bf16.msra.mxu0 %v3358
    %3588 = vmatprep.subr.bf16.mxu0 %v3363
    %3589 = vmatpush1.bf16.msra.mxu0 %v3362
    %3590 = vmatprep.mubr.bf16.mxu0 %v2706
    %3591 = vmatmul.mubr.bf16.gmra.mrb[0].mxu0 %v2705
    %v3592 = vpop.f32.mrb[0].mxu0
    %v3593 = vadd.f32 %v2901, %v3592
    %v3594 = vpop.f32.mrb[0].mxu0
    %v3595 = vadd.f32 %v2905, %v3594
    %v3596 = vpop.f32.mrb[0].mxu0
    %v3597 = vadd.f32 %v2901, %v3596
    %v3598 = vpop.f32.mrb[0].mxu0
    %v3599 = vadd.f32 %v2905, %v3598
    %3600 = vmatprep.mubr.bf16.mxu0 %v2710
    %3601 = vmatmul.mubr.bf16.gmra.mrb[0].mxu0 %v2709
    %v3602 = vpop.f32.mrb[0].mxu0
    %v3603 = vadd.f32 %v2901, %v3602
    %v3604 = vpop.f32.mrb[0].mxu0
    %v3605 = vadd.f32 %v2905, %v3604
    %v3606 = vpop.f32.mrb[0].mxu0
    %v3607 = vadd.f32 %v2901, %v3606
    %v3608 = vpop.f32.mrb[0].mxu0
    %v3609 = vadd.f32 %v2905, %v3608
    %3610 = vmatprep.mubr.bf16.mxu0 %v2714
    %3611 = vmatmul.mubr.bf16.gmra.mrb[0].mxu0 %v2713
    %v3612 = vpop.f32.mrb[0].mxu0
    %v3613 = vadd.f32 %v2901, %v3612
    %v3614 = vpop.f32.mrb[0].mxu0
    %v3615 = vadd.f32 %v2905, %v3614
    %v3616 = vpop.f32.mrb[0].mxu0
    %v3617 = vadd.f32 %v2901, %v3616
    %v3618 = vpop.f32.mrb[0].mxu0
    %v3619 = vadd.f32 %v2905, %v3618
    %3620 = vmatprep.mubr.bf16.mxu0 %v2718
    %3621 = vmatmul.mubr.bf16.gmra.mrb[0].mxu0 %v2717
    %v3622 = vpop.f32.mrb[0].mxu0
    %v3623 = vadd.f32 %v2901, %v3622
    %v3624 = vpop.f32.mrb[0].mxu0
    %v3625 = vadd.f32 %v2905, %v3624
    %v3626 = vpop.f32.mrb[0].mxu0
    %v3627 = vadd.f32 %v2901, %v3626
    %v3628 = vpop.f32.mrb[0].mxu0
    %v3629 = vadd.f32 %v2905, %v3628
    %3630 = vmatprep.mubr.bf16.mxu0 %v2722
    %3631 = vmatmul.mubr.bf16.gmra.mrb[0].mxu0 %v2721
    %v3632 = vpop.f32.mrb[0].mxu0
    %v3633 = vadd.f32 %v2901, %v3632
    %v3634 = vpop.f32.mrb[0].mxu0
    %v3635 = vadd.f32 %v2905, %v3634
    %v3636 = vpop.f32.mrb[0].mxu0
    %v3637 = vadd.f32 %v2901, %v3636
    %v3638 = vpop.f32.mrb[0].mxu0
    %v3639 = vadd.f32 %v2905, %v3638
    %3640 = vmatprep.mubr.bf16.mxu0 %v2726
    %3641 = vmatmul.mubr.bf16.gmra.mrb[0].mxu0 %v2725
    %v3642 = vpop.f32.mrb[0].mxu0
    %v3643 = vadd.f32 %v2901, %v3642
    %v3644 = vpop.f32.mrb[0].mxu0
    %v3645 = vadd.f32 %v2905, %v3644
    %v3646 = vpop.f32.mrb[0].mxu0
    %v3647 = vadd.f32 %v2901, %v3646
    %v3648 = vpop.f32.mrb[0].mxu0
    %v3649 = vadd.f32 %v2905, %v3648
    %3650 = vmatprep.mubr.bf16.mxu0 %v2730
    %3651 = vmatmul.mubr.bf16.gmra.mrb[0].mxu0 %v2729
    %v3652 = vpop.f32.mrb[0].mxu0
    %v3653 = vadd.f32 %v2901, %v3652
    %v3654 = vpop.f32.mrb[0].mxu0
    %v3655 = vadd.f32 %v2905, %v3654
    %v3656 = vpop.f32.mrb[0].mxu0
    %v3657 = vadd.f32 %v2901, %v3656
    %v3658 = vpop.f32.mrb[0].mxu0
    %v3659 = vadd.f32 %v2905, %v3658
    %3660 = vmatprep.mubr.bf16.mxu0 %v2734
    %3661 = vmatmul.mubr.bf16.gmra.mrb[0].mxu0 %v2733
    %v3662 = vpop.f32.mrb[0].mxu0
    %v3663 = vadd.f32 %v2901, %v3662
    %v3664 = vpop.f32.mrb[0].mxu0
    %v3665 = vadd.f32 %v2905, %v3664
    %v3666 = vpop.f32.mrb[0].mxu0
    %v3667 = vadd.f32 %v2901, %v3666
    %v3668 = vpop.f32.mrb[0].mxu0
    %v3669 = vadd.f32 %v2905, %v3668
    %3670 = vmatprep.mubr.bf16.mxu0 %v2738
    %3671 = vmatmul.mubr.bf16.gmra.mrb[0].mxu0 %v2737
    %v3672 = vpop.f32.mrb[0].mxu0
    %v3673 = vadd.f32 %v2901, %v3672
    %v3674 = vpop.f32.mrb[0].mxu0
    %v3675 = vadd.f32 %v2905, %v3674
    %v3676 = vpop.f32.mrb[0].mxu0
    %v3677 = vadd.f32 %v2901, %v3676
    %v3678 = vpop.f32.mrb[0].mxu0
    %v3679 = vadd.f32 %v2905, %v3678
    %3680 = vmatprep.mubr.bf16.mxu0 %v2742
    %3681 = vmatmul.mubr.bf16.gmra.mrb[0].mxu0 %v2741
    %v3682 = vpop.f32.mrb[0].mxu0
    %v3683 = vadd.f32 %v2901, %v3682
    %v3684 = vpop.f32.mrb[0].mxu0
    %v3685 = vadd.f32 %v2905, %v3684
    %v3686 = vpop.f32.mrb[0].mxu0
    %v3687 = vadd.f32 %v2901, %v3686
    %v3688 = vpop.f32.mrb[0].mxu0
    %v3689 = vadd.f32 %v2905, %v3688
    %3690 = vmatprep.mubr.bf16.mxu0 %v2746
    %3691 = vmatmul.mubr.bf16.gmra.mrb[0].mxu0 %v2745
    %v3692 = vpop.f32.mrb[0].mxu0
    %v3693 = vadd.f32 %v2901, %v3692
    %v3694 = vpop.f32.mrb[0].mxu0
    %v3695 = vadd.f32 %v2905, %v3694
    %v3696 = vpop.f32.mrb[0].mxu0
    %v3697 = vadd.f32 %v2901, %v3696
    %v3698 = vpop.f32.mrb[0].mxu0
    %v3699 = vadd.f32 %v2905, %v3698
    %3700 = vmatprep.mubr.bf16.mxu0 %v2750
    %3701 = vmatmul.mubr.bf16.gmra.mrb[0].mxu0 %v2749
    %v3702 = vpop.f32.mrb[0].mxu0
    %v3703 = vadd.f32 %v2901, %v3702
    %v3704 = vpop.f32.mrb[0].mxu0
    %v3705 = vadd.f32 %v2905, %v3704
    %v3706 = vpop.f32.mrb[0].mxu0
    %v3707 = vadd.f32 %v2901, %v3706
    %v3708 = vpop.f32.mrb[0].mxu0
    %v3709 = vadd.f32 %v2905, %v3708
    %3710 = vmatprep.mubr.bf16.mxu0 %v2754
    %3711 = vmatmul.mubr.bf16.gmra.mrb[0].mxu0 %v2753
    %v3712 = vpop.f32.mrb[0].mxu0
    %v3713 = vadd.f32 %v2901, %v3712
    %v3714 = vpop.f32.mrb[0].mxu0
    %v3715 = vadd.f32 %v2905, %v3714
    %v3716 = vpop.f32.mrb[0].mxu0
    %v3717 = vadd.f32 %v2901, %v3716
    %v3718 = vpop.f32.mrb[0].mxu0
    %v3719 = vadd.f32 %v2905, %v3718
    %3720 = vmatprep.mubr.bf16.mxu0 %v2758
    %3721 = vmatmul.mubr.bf16.gmra.mrb[0].mxu0 %v2757
    %v3722 = vpop.f32.mrb[0].mxu0
    %v3723 = vadd.f32 %v2901, %v3722
    %v3724 = vpop.f32.mrb[0].mxu0
    %v3725 = vadd.f32 %v2905, %v3724
    %v3726 = vpop.f32.mrb[0].mxu0
    %v3727 = vadd.f32 %v2901, %v3726
    %v3728 = vpop.f32.mrb[0].mxu0
    %v3729 = vadd.f32 %v2905, %v3728
    %3730 = vmatprep.mubr.bf16.mxu0 %v2762
    %3731 = vmatmul.mubr.bf16.gmra.mrb[0].mxu0 %v2761
    %v3732 = vpop.f32.mrb[0].mxu0
    %v3733 = vadd.f32 %v2901, %v3732
    %v3734 = vpop.f32.mrb[0].mxu0
    %v3735 = vadd.f32 %v2905, %v3734
    %v3736 = vpop.f32.mrb[0].mxu0
    %v3737 = vadd.f32 %v2901, %v3736
    %v3738 = vpop.f32.mrb[0].mxu0
    %v3739 = vadd.f32 %v2905, %v3738
    %3740 = vmatprep.mubr.bf16.mxu0 %v2766
    %3741 = vmatmul.mubr.bf16.gmra.mrb[0].mxu0 %v2765
    %v3742 = vpop.f32.mrb[0].mxu0
    %v3743 = vadd.f32 %v2901, %v3742
    %v3744 = vpop.f32.mrb[0].mxu0
    %v3745 = vadd.f32 %v2905, %v3744
    %v3746 = vpop.f32.mrb[0].mxu0
    %v3747 = vadd.f32 %v2901, %v3746
    %v3748 = vpop.f32.mrb[0].mxu0
    %v3749 = vadd.f32 %v2905, %v3748
    %3750 = vdwg.mxu0
    %3751 = vmatprep.subr.bf16.mxu0 %v3367
    %3752 = vmatpush1.bf16.msra.mxu0 %v3366
    %3753 = vmatprep.subr.bf16.mxu0 %v3371
    %3754 = vmatpush1.bf16.msra.mxu0 %v3370
    %3755 = vmatprep.subr.bf16.mxu0 %v3375
    %3756 = vmatpush1.bf16.msra.mxu0 %v3374
    %3757 = vmatprep.subr.bf16.mxu0 %v3379
    %3758 = vmatpush1.bf16.msra.mxu0 %v3378
    %3759 = vmatprep.subr.bf16.mxu0 %v3383
    %3760 = vmatpush1.bf16.msra.mxu0 %v3382
    %3761 = vmatprep.subr.bf16.mxu0 %v3387
    %3762 = vmatpush1.bf16.msra.mxu0 %v3386
    %3763 = vmatprep.subr.bf16.mxu0 %v3391
    %3764 = vmatpush1.bf16.msra.mxu0 %v3390
    %3765 = vmatprep.subr.bf16.mxu0 %v3395
    %3766 = vmatpush1.bf16.msra.mxu0 %v3394
    %3767 = vmatprep.subr.bf16.mxu0 %v3399
    %3768 = vmatpush1.bf16.msra.mxu0 %v3398
    %3769 = vmatprep.subr.bf16.mxu0 %v3403
    %3770 = vmatpush1.bf16.msra.mxu0 %v3402
    %3771 = vmatprep.subr.bf16.mxu0 %v3407
    %3772 = vmatpush1.bf16.msra.mxu0 %v3406
    %3773 = vmatprep.subr.bf16.mxu0 %v3411
    %3774 = vmatpush1.bf16.msra.mxu0 %v3410
    %3775 = vmatprep.subr.bf16.mxu0 %v3415
    %3776 = vmatpush1.bf16.msra.mxu0 %v3414
    %3777 = vmatprep.subr.bf16.mxu0 %v3419
    %3778 = vmatpush1.bf16.msra.mxu0 %v3418
    %3779 = vmatprep.subr.bf16.mxu0 %v3423
    %3780 = vmatpush1.bf16.msra.mxu0 %v3422
    %3781 = vmatprep.subr.bf16.mxu0 %v3427
    %3782 = vmatpush1.bf16.msra.mxu0 %v3426
    %3783 = vmatprep.mubr.bf16.mxu0 %v2708
    %3784 = vmatmul.mubr.bf16.gmra.mrb[0].mxu0 %v2707
    %v3785 = vpop.f32.mrb[0].mxu0
    %v3786 = vadd.f32 %v3593, %v3785
    %v3787 = vpop.f32.mrb[0].mxu0
    %v3788 = vadd.f32 %v3595, %v3787
    %v3789 = vpop.f32.mrb[0].mxu0
    %v3790 = vadd.f32 %v3597, %v3789
    %v3791 = vpop.f32.mrb[0].mxu0
    %v3792 = vadd.f32 %v3599, %v3791
    %3793 = vmatprep.mubr.bf16.mxu0 %v2712
    %3794 = vmatmul.mubr.bf16.gmra.mrb[0].mxu0 %v2711
    %v3795 = vpop.f32.mrb[0].mxu0
    %v3796 = vadd.f32 %v3603, %v3795
    %v3797 = vpop.f32.mrb[0].mxu0
    %v3798 = vadd.f32 %v3605, %v3797
    %v3799 = vpop.f32.mrb[0].mxu0
    %v3800 = vadd.f32 %v3607, %v3799
    %v3801 = vpop.f32.mrb[0].mxu0
    %v3802 = vadd.f32 %v3609, %v3801
    %3803 = vmatprep.mubr.bf16.mxu0 %v2716
    %3804 = vmatmul.mubr.bf16.gmra.mrb[0].mxu0 %v2715
    %v3805 = vpop.f32.mrb[0].mxu0
    %v3806 = vadd.f32 %v3613, %v3805
    %v3807 = vpop.f32.mrb[0].mxu0
    %v3808 = vadd.f32 %v3615, %v3807
    %v3809 = vpop.f32.mrb[0].mxu0
    %v3810 = vadd.f32 %v3617, %v3809
    %v3811 = vpop.f32.mrb[0].mxu0
    %v3812 = vadd.f32 %v3619, %v3811
    %3813 = vmatprep.mubr.bf16.mxu0 %v2720
    %3814 = vmatmul.mubr.bf16.gmra.mrb[0].mxu0 %v2719
    %v3815 = vpop.f32.mrb[0].mxu0
    %v3816 = vadd.f32 %v3623, %v3815
    %v3817 = vpop.f32.mrb[0].mxu0
    %v3818 = vadd.f32 %v3625, %v3817
    %v3819 = vpop.f32.mrb[0].mxu0
    %v3820 = vadd.f32 %v3627, %v3819
    %v3821 = vpop.f32.mrb[0].mxu0
    %v3822 = vadd.f32 %v3629, %v3821
    %3823 = vmatprep.mubr.bf16.mxu0 %v2724
    %3824 = vmatmul.mubr.bf16.gmra.mrb[0].mxu0 %v2723
    %v3825 = vpop.f32.mrb[0].mxu0
    %v3826 = vadd.f32 %v3633, %v3825
    %v3827 = vpop.f32.mrb[0].mxu0
    %v3828 = vadd.f32 %v3635, %v3827
    %v3829 = vpop.f32.mrb[0].mxu0
    %v3830 = vadd.f32 %v3637, %v3829
    %v3831 = vpop.f32.mrb[0].mxu0
    %v3832 = vadd.f32 %v3639, %v3831
    %3833 = vmatprep.mubr.bf16.mxu0 %v2728
    %3834 = vmatmul.mubr.bf16.gmra.mrb[0].mxu0 %v2727
    %v3835 = vpop.f32.mrb[0].mxu0
    %v3836 = vadd.f32 %v3643, %v3835
    %v3837 = vpop.f32.mrb[0].mxu0
    %v3838 = vadd.f32 %v3645, %v3837
    %v3839 = vpop.f32.mrb[0].mxu0
    %v3840 = vadd.f32 %v3647, %v3839
    %v3841 = vpop.f32.mrb[0].mxu0
    %v3842 = vadd.f32 %v3649, %v3841
    %3843 = vmatprep.mubr.bf16.mxu0 %v2732
    %3844 = vmatmul.mubr.bf16.gmra.mrb[0].mxu0 %v2731
    %v3845 = vpop.f32.mrb[0].mxu0
    %v3846 = vadd.f32 %v3653, %v3845
    %v3847 = vpop.f32.mrb[0].mxu0
    %v3848 = vadd.f32 %v3655, %v3847
    %v3849 = vpop.f32.mrb[0].mxu0
    %v3850 = vadd.f32 %v3657, %v3849
    %v3851 = vpop.f32.mrb[0].mxu0
    %v3852 = vadd.f32 %v3659, %v3851
    %3853 = vmatprep.mubr.bf16.mxu0 %v2736
    %3854 = vmatmul.mubr.bf16.gmra.mrb[0].mxu0 %v2735
    %v3855 = vpop.f32.mrb[0].mxu0
    %v3856 = vadd.f32 %v3663, %v3855
    %v3857 = vpop.f32.mrb[0].mxu0
    %v3858 = vadd.f32 %v3665, %v3857
    %v3859 = vpop.f32.mrb[0].mxu0
    %v3860 = vadd.f32 %v3667, %v3859
    %v3861 = vpop.f32.mrb[0].mxu0
    %v3862 = vadd.f32 %v3669, %v3861
    %3863 = vmatprep.mubr.bf16.mxu0 %v2740
    %3864 = vmatmul.mubr.bf16.gmra.mrb[0].mxu0 %v2739
    %v3865 = vpop.f32.mrb[0].mxu0
    %v3866 = vadd.f32 %v3673, %v3865
    %v3867 = vpop.f32.mrb[0].mxu0
    %v3868 = vadd.f32 %v3675, %v3867
    %v3869 = vpop.f32.mrb[0].mxu0
    %v3870 = vadd.f32 %v3677, %v3869
    %v3871 = vpop.f32.mrb[0].mxu0
    %v3872 = vadd.f32 %v3679, %v3871
    %3873 = vmatprep.mubr.bf16.mxu0 %v2744
    %3874 = vmatmul.mubr.bf16.gmra.mrb[0].mxu0 %v2743
    %v3875 = vpop.f32.mrb[0].mxu0
    %v3876 = vadd.f32 %v3683, %v3875
    %v3877 = vpop.f32.mrb[0].mxu0
    %v3878 = vadd.f32 %v3685, %v3877
    %v3879 = vpop.f32.mrb[0].mxu0
    %v3880 = vadd.f32 %v3687, %v3879
    %v3881 = vpop.f32.mrb[0].mxu0
    %v3882 = vadd.f32 %v3689, %v3881
    %3883 = vmatprep.mubr.bf16.mxu0 %v2748
    %3884 = vmatmul.mubr.bf16.gmra.mrb[0].mxu0 %v2747
    %v3885 = vpop.f32.mrb[0].mxu0
    %v3886 = vadd.f32 %v3693, %v3885
    %v3887 = vpop.f32.mrb[0].mxu0
    %v3888 = vadd.f32 %v3695, %v3887
    %v3889 = vpop.f32.mrb[0].mxu0
    %v3890 = vadd.f32 %v3697, %v3889
    %v3891 = vpop.f32.mrb[0].mxu0
    %v3892 = vadd.f32 %v3699, %v3891
    %3893 = vmatprep.mubr.bf16.mxu0 %v2752
    %3894 = vmatmul.mubr.bf16.gmra.mrb[0].mxu0 %v2751
    %v3895 = vpop.f32.mrb[0].mxu0
    %v3896 = vadd.f32 %v3703, %v3895
    %v3897 = vpop.f32.mrb[0].mxu0
    %v3898 = vadd.f32 %v3705, %v3897
    %v3899 = vpop.f32.mrb[0].mxu0
    %v3900 = vadd.f32 %v3707, %v3899
    %v3901 = vpop.f32.mrb[0].mxu0
    %v3902 = vadd.f32 %v3709, %v3901
    %3903 = vmatprep.mubr.bf16.mxu0 %v2756
    %3904 = vmatmul.mubr.bf16.gmra.mrb[0].mxu0 %v2755
    %v3905 = vpop.f32.mrb[0].mxu0
    %v3906 = vadd.f32 %v3713, %v3905
    %v3907 = vpop.f32.mrb[0].mxu0
    %v3908 = vadd.f32 %v3715, %v3907
    %v3909 = vpop.f32.mrb[0].mxu0
    %v3910 = vadd.f32 %v3717, %v3909
    %v3911 = vpop.f32.mrb[0].mxu0
    %v3912 = vadd.f32 %v3719, %v3911
    %3913 = vmatprep.mubr.bf16.mxu0 %v2760
    %3914 = vmatmul.mubr.bf16.gmra.mrb[0].mxu0 %v2759
    %v3915 = vpop.f32.mrb[0].mxu0
    %v3916 = vadd.f32 %v3723, %v3915
    %v3917 = vpop.f32.mrb[0].mxu0
    %v3918 = vadd.f32 %v3725, %v3917
    %v3919 = vpop.f32.mrb[0].mxu0
    %v3920 = vadd.f32 %v3727, %v3919
    %v3921 = vpop.f32.mrb[0].mxu0
    %v3922 = vadd.f32 %v3729, %v3921
    %3923 = vmatprep.mubr.bf16.mxu0 %v2764
    %3924 = vmatmul.mubr.bf16.gmra.mrb[0].mxu0 %v2763
    %v3925 = vpop.f32.mrb[0].mxu0
    %v3926 = vadd.f32 %v3733, %v3925
    %v3927 = vpop.f32.mrb[0].mxu0
    %v3928 = vadd.f32 %v3735, %v3927
    %v3929 = vpop.f32.mrb[0].mxu0
    %v3930 = vadd.f32 %v3737, %v3929
    %v3931 = vpop.f32.mrb[0].mxu0
    %v3932 = vadd.f32 %v3739, %v3931
    %3933 = vmatprep.mubr.bf16.mxu0 %v2768
    %3934 = vmatmul.mubr.bf16.gmra.mrb[0].mxu0 %v2767
    %v3935 = vpop.f32.mrb[0].mxu0
    %v3936 = vadd.f32 %v3743, %v3935
    %v3937 = vpop.f32.mrb[0].mxu0
    %v3938 = vadd.f32 %v3745, %v3937
    %v3939 = vpop.f32.mrb[0].mxu0
    %v3940 = vadd.f32 %v3747, %v3939
    %v3941 = vpop.f32.mrb[0].mxu0
    %v3942 = vadd.f32 %v3749, %v3941
    %3943 = vdwg.mxu0
    %3944 = vmatprep.subr.bf16.mxu0 %v3305
    %3945 = vmatpush1.bf16.msra.mxu0 %v3304
    %3946 = vmatprep.subr.bf16.mxu0 %v3309
    %3947 = vmatpush1.bf16.msra.mxu0 %v3308
    %3948 = vmatprep.subr.bf16.mxu0 %v3313
    %3949 = vmatpush1.bf16.msra.mxu0 %v3312
    %3950 = vmatprep.subr.bf16.mxu0 %v3317
    %3951 = vmatpush1.bf16.msra.mxu0 %v3316
    %3952 = vmatprep.subr.bf16.mxu0 %v3321
    %3953 = vmatpush1.bf16.msra.mxu0 %v3320
    %3954 = vmatprep.subr.bf16.mxu0 %v3325
    %3955 = vmatpush1.bf16.msra.mxu0 %v3324
    %3956 = vmatprep.subr.bf16.mxu0 %v3329
    %3957 = vmatpush1.bf16.msra.mxu0 %v3328
    %3958 = vmatprep.subr.bf16.mxu0 %v3333
    %3959 = vmatpush1.bf16.msra.mxu0 %v3332
    %3960 = vmatprep.subr.bf16.mxu0 %v3337
    %3961 = vmatpush1.bf16.msra.mxu0 %v3336
    %3962 = vmatprep.subr.bf16.mxu0 %v3341
    %3963 = vmatpush1.bf16.msra.mxu0 %v3340
    %3964 = vmatprep.subr.bf16.mxu0 %v3345
    %3965 = vmatpush1.bf16.msra.mxu0 %v3344
    %3966 = vmatprep.subr.bf16.mxu0 %v3349
    %3967 = vmatpush1.bf16.msra.mxu0 %v3348
    %3968 = vmatprep.subr.bf16.mxu0 %v3353
    %3969 = vmatpush1.bf16.msra.mxu0 %v3352
    %3970 = vmatprep.subr.bf16.mxu0 %v3357
    %3971 = vmatpush1.bf16.msra.mxu0 %v3356
    %3972 = vmatprep.subr.bf16.mxu0 %v3361
    %3973 = vmatpush1.bf16.msra.mxu0 %v3360
    %3974 = vmatprep.subr.bf16.mxu0 %v3365
    %3975 = vmatpush1.bf16.msra.mxu0 %v3364
    %3976 = vmatprep.mubr.bf16.mxu0 %v2706
    %3977 = vmatmul.mubr.bf16.gmra.mrb[0].mxu0 %v2705
    %v3978 = vpop.f32.mrb[0].mxu0
    %v3979 = vadd.f32 %v2909, %v3978
    %v3980 = vpop.f32.mrb[0].mxu0
    %v3981 = vadd.f32 %v2913, %v3980
    %v3982 = vpop.f32.mrb[0].mxu0
    %v3983 = vadd.f32 %v2909, %v3982
    %v3984 = vpop.f32.mrb[0].mxu0
    %v3985 = vadd.f32 %v2913, %v3984
    %3986 = vmatprep.mubr.bf16.mxu0 %v2710
    %3987 = vmatmul.mubr.bf16.gmra.mrb[0].mxu0 %v2709
    %v3988 = vpop.f32.mrb[0].mxu0
    %v3989 = vadd.f32 %v2909, %v3988
    %v3990 = vpop.f32.mrb[0].mxu0
    %v3991 = vadd.f32 %v2913, %v3990
    %v3992 = vpop.f32.mrb[0].mxu0
    %v3993 = vadd.f32 %v2909, %v3992
    %v3994 = vpop.f32.mrb[0].mxu0
    %v3995 = vadd.f32 %v2913, %v3994
    %3996 = vmatprep.mubr.bf16.mxu0 %v2714
    %3997 = vmatmul.mubr.bf16.gmra.mrb[0].mxu0 %v2713
    %v3998 = vpop.f32.mrb[0].mxu0
    %v3999 = vadd.f32 %v2909, %v3998
    %v4000 = vpop.f32.mrb[0].mxu0
    %v4001 = vadd.f32 %v2913, %v4000
    %v4002 = vpop.f32.mrb[0].mxu0
    %v4003 = vadd.f32 %v2909, %v4002
    %v4004 = vpop.f32.mrb[0].mxu0
    %v4005 = vadd.f32 %v2913, %v4004
    %4006 = vmatprep.mubr.bf16.mxu0 %v2718
    %4007 = vmatmul.mubr.bf16.gmra.mrb[0].mxu0 %v2717
    %v4008 = vpop.f32.mrb[0].mxu0
    %v4009 = vadd.f32 %v2909, %v4008
    %v4010 = vpop.f32.mrb[0].mxu0
    %v4011 = vadd.f32 %v2913, %v4010
    %v4012 = vpop.f32.mrb[0].mxu0
    %v4013 = vadd.f32 %v2909, %v4012
    %v4014 = vpop.f32.mrb[0].mxu0
    %v4015 = vadd.f32 %v2913, %v4014
    %4016 = vmatprep.mubr.bf16.mxu0 %v2722
    %4017 = vmatmul.mubr.bf16.gmra.mrb[0].mxu0 %v2721
    %v4018 = vpop.f32.mrb[0].mxu0
    %v4019 = vadd.f32 %v2909, %v4018
    %v4020 = vpop.f32.mrb[0].mxu0
    %v4021 = vadd.f32 %v2913, %v4020
    %v4022 = vpop.f32.mrb[0].mxu0
    %v4023 = vadd.f32 %v2909, %v4022
    %v4024 = vpop.f32.mrb[0].mxu0
    %v4025 = vadd.f32 %v2913, %v4024
    %4026 = vmatprep.mubr.bf16.mxu0 %v2726
    %4027 = vmatmul.mubr.bf16.gmra.mrb[0].mxu0 %v2725
    %v4028 = vpop.f32.mrb[0].mxu0
    %v4029 = vadd.f32 %v2909, %v4028
    %v4030 = vpop.f32.mrb[0].mxu0
    %v4031 = vadd.f32 %v2913, %v4030
    %v4032 = vpop.f32.mrb[0].mxu0
    %v4033 = vadd.f32 %v2909, %v4032
    %v4034 = vpop.f32.mrb[0].mxu0
    %v4035 = vadd.f32 %v2913, %v4034
    %4036 = vmatprep.mubr.bf16.mxu0 %v2730
    %4037 = vmatmul.mubr.bf16.gmra.mrb[0].mxu0 %v2729
    %v4038 = vpop.f32.mrb[0].mxu0
    %v4039 = vadd.f32 %v2909, %v4038
    %v4040 = vpop.f32.mrb[0].mxu0
    %v4041 = vadd.f32 %v2913, %v4040
    %v4042 = vpop.f32.mrb[0].mxu0
    %v4043 = vadd.f32 %v2909, %v4042
    %v4044 = vpop.f32.mrb[0].mxu0
    %v4045 = vadd.f32 %v2913, %v4044
    %4046 = vmatprep.mubr.bf16.mxu0 %v2734
    %4047 = vmatmul.mubr.bf16.gmra.mrb[0].mxu0 %v2733
    %v4048 = vpop.f32.mrb[0].mxu0
    %v4049 = vadd.f32 %v2909, %v4048
    %v4050 = vpop.f32.mrb[0].mxu0
    %v4051 = vadd.f32 %v2913, %v4050
    %v4052 = vpop.f32.mrb[0].mxu0
    %v4053 = vadd.f32 %v2909, %v4052
    %v4054 = vpop.f32.mrb[0].mxu0
    %v4055 = vadd.f32 %v2913, %v4054
    %4056 = vmatprep.mubr.bf16.mxu0 %v2738
    %4057 = vmatmul.mubr.bf16.gmra.mrb[0].mxu0 %v2737
    %v4058 = vpop.f32.mrb[0].mxu0
    %v4059 = vadd.f32 %v2909, %v4058
    %v4060 = vpop.f32.mrb[0].mxu0
    %v4061 = vadd.f32 %v2913, %v4060
    %v4062 = vpop.f32.mrb[0].mxu0
    %v4063 = vadd.f32 %v2909, %v4062
    %v4064 = vpop.f32.mrb[0].mxu0
    %v4065 = vadd.f32 %v2913, %v4064
    %4066 = vmatprep.mubr.bf16.mxu0 %v2742
    %4067 = vmatmul.mubr.bf16.gmra.mrb[0].mxu0 %v2741
    %v4068 = vpop.f32.mrb[0].mxu0
    %v4069 = vadd.f32 %v2909, %v4068
    %v4070 = vpop.f32.mrb[0].mxu0
    %v4071 = vadd.f32 %v2913, %v4070
    %v4072 = vpop.f32.mrb[0].mxu0
    %v4073 = vadd.f32 %v2909, %v4072
    %v4074 = vpop.f32.mrb[0].mxu0
    %v4075 = vadd.f32 %v2913, %v4074
    %4076 = vmatprep.mubr.bf16.mxu0 %v2746
    %4077 = vmatmul.mubr.bf16.gmra.mrb[0].mxu0 %v2745
    %v4078 = vpop.f32.mrb[0].mxu0
    %v4079 = vadd.f32 %v2909, %v4078
    %v4080 = vpop.f32.mrb[0].mxu0
    %v4081 = vadd.f32 %v2913, %v4080
    %v4082 = vpop.f32.mrb[0].mxu0
    %v4083 = vadd.f32 %v2909, %v4082
    %v4084 = vpop.f32.mrb[0].mxu0
    %v4085 = vadd.f32 %v2913, %v4084
    %4086 = vmatprep.mubr.bf16.mxu0 %v2750
    %4087 = vmatmul.mubr.bf16.gmra.mrb[0].mxu0 %v2749
    %v4088 = vpop.f32.mrb[0].mxu0
    %v4089 = vadd.f32 %v2909, %v4088
    %v4090 = vpop.f32.mrb[0].mxu0
    %v4091 = vadd.f32 %v2913, %v4090
    %v4092 = vpop.f32.mrb[0].mxu0
    %v4093 = vadd.f32 %v2909, %v4092
    %v4094 = vpop.f32.mrb[0].mxu0
    %v4095 = vadd.f32 %v2913, %v4094
    %4096 = vmatprep.mubr.bf16.mxu0 %v2754
    %4097 = vmatmul.mubr.bf16.gmra.mrb[0].mxu0 %v2753
    %v4098 = vpop.f32.mrb[0].mxu0
    %v4099 = vadd.f32 %v2909, %v4098
    %v4100 = vpop.f32.mrb[0].mxu0
    %v4101 = vadd.f32 %v2913, %v4100
    %v4102 = vpop.f32.mrb[0].mxu0
    %v4103 = vadd.f32 %v2909, %v4102
    %v4104 = vpop.f32.mrb[0].mxu0
    %v4105 = vadd.f32 %v2913, %v4104
    %4106 = vmatprep.mubr.bf16.mxu0 %v2758
    %4107 = vmatmul.mubr.bf16.gmra.mrb[0].mxu0 %v2757
    %v4108 = vpop.f32.mrb[0].mxu0
    %v4109 = vadd.f32 %v2909, %v4108
    %v4110 = vpop.f32.mrb[0].mxu0
    %v4111 = vadd.f32 %v2913, %v4110
    %v4112 = vpop.f32.mrb[0].mxu0
    %v4113 = vadd.f32 %v2909, %v4112
    %v4114 = vpop.f32.mrb[0].mxu0
    %v4115 = vadd.f32 %v2913, %v4114
    %4116 = vmatprep.mubr.bf16.mxu0 %v2762
    %4117 = vmatmul.mubr.bf16.gmra.mrb[0].mxu0 %v2761
    %v4118 = vpop.f32.mrb[0].mxu0
    %v4119 = vadd.f32 %v2909, %v4118
    %v4120 = vpop.f32.mrb[0].mxu0
    %v4121 = vadd.f32 %v2913, %v4120
    %v4122 = vpop.f32.mrb[0].mxu0
    %v4123 = vadd.f32 %v2909, %v4122
    %v4124 = vpop.f32.mrb[0].mxu0
    %v4125 = vadd.f32 %v2913, %v4124
    %4126 = vmatprep.mubr.bf16.mxu0 %v2766
    %4127 = vmatmul.mubr.bf16.gmra.mrb[0].mxu0 %v2765
    %v4128 = vpop.f32.mrb[0].mxu0
    %v4129 = vadd.f32 %v2909, %v4128
    %v4130 = vpop.f32.mrb[0].mxu0
    %v4131 = vadd.f32 %v2913, %v4130
    %v4132 = vpop.f32.mrb[0].mxu0
    %v4133 = vadd.f32 %v2909, %v4132
    %v4134 = vpop.f32.mrb[0].mxu0
    %v4135 = vadd.f32 %v2913, %v4134
    %4136 = vdwg.mxu0
    %4137 = vmatprep.subr.bf16.mxu0 %v3369
    %4138 = vmatpush1.bf16.msra.mxu0 %v3368
    %4139 = vmatprep.subr.bf16.mxu0 %v3373
    %4140 = vmatpush1.bf16.msra.mxu0 %v3372
    %4141 = vmatprep.subr.bf16.mxu0 %v3377
    %4142 = vmatpush1.bf16.msra.mxu0 %v3376
    %4143 = vmatprep.subr.bf16.mxu0 %v3381
    %4144 = vmatpush1.bf16.msra.mxu0 %v3380
    %4145 = vmatprep.subr.bf16.mxu0 %v3385
    %4146 = vmatpush1.bf16.msra.mxu0 %v3384
    %4147 = vmatprep.subr.bf16.mxu0 %v3389
    %4148 = vmatpush1.bf16.msra.mxu0 %v3388
    %4149 = vmatprep.subr.bf16.mxu0 %v3393
    %4150 = vmatpush1.bf16.msra.mxu0 %v3392
    %4151 = vmatprep.subr.bf16.mxu0 %v3397
    %4152 = vmatpush1.bf16.msra.mxu0 %v3396
    %4153 = vmatprep.subr.bf16.mxu0 %v3401
    %4154 = vmatpush1.bf16.msra.mxu0 %v3400
    %4155 = vmatprep.subr.bf16.mxu0 %v3405
    %4156 = vmatpush1.bf16.msra.mxu0 %v3404
    %4157 = vmatprep.subr.bf16.mxu0 %v3409
    %4158 = vmatpush1.bf16.msra.mxu0 %v3408
    %4159 = vmatprep.subr.bf16.mxu0 %v3413
    %4160 = vmatpush1.bf16.msra.mxu0 %v3412
    %4161 = vmatprep.subr.bf16.mxu0 %v3417
    %4162 = vmatpush1.bf16.msra.mxu0 %v3416
    %4163 = vmatprep.subr.bf16.mxu0 %v3421
    %4164 = vmatpush1.bf16.msra.mxu0 %v3420
    %4165 = vmatprep.subr.bf16.mxu0 %v3425
    %4166 = vmatpush1.bf16.msra.mxu0 %v3424
    %4167 = vmatprep.subr.bf16.mxu0 %v3429
    %4168 = vmatpush1.bf16.msra.mxu0 %v3428
    %4169 = vmatprep.mubr.bf16.mxu0 %v2708
    %4170 = vmatmul.mubr.bf16.gmra.mrb[0].mxu0 %v2707
    %v4171 = vpop.f32.mrb[0].mxu0
    %v4172 = vadd.f32 %v3979, %v4171
    %v4173 = vpop.f32.mrb[0].mxu0
    %v4174 = vadd.f32 %v3981, %v4173
    %v4175 = vpop.f32.mrb[0].mxu0
    %v4176 = vadd.f32 %v3983, %v4175
    %v4177 = vpop.f32.mrb[0].mxu0
    %v4178 = vadd.f32 %v3985, %v4177
    %4179 = vmatprep.mubr.bf16.mxu0 %v2712
    %4180 = vmatmul.mubr.bf16.gmra.mrb[0].mxu0 %v2711
    %v4181 = vpop.f32.mrb[0].mxu0
    %v4182 = vadd.f32 %v3989, %v4181
    %v4183 = vpop.f32.mrb[0].mxu0
    %v4184 = vadd.f32 %v3991, %v4183
    %v4185 = vpop.f32.mrb[0].mxu0
    %v4186 = vadd.f32 %v3993, %v4185
    %v4187 = vpop.f32.mrb[0].mxu0
    %v4188 = vadd.f32 %v3995, %v4187
    %4189 = vmatprep.mubr.bf16.mxu0 %v2716
    %4190 = vmatmul.mubr.bf16.gmra.mrb[0].mxu0 %v2715
    %v4191 = vpop.f32.mrb[0].mxu0
    %v4192 = vadd.f32 %v3999, %v4191
    %v4193 = vpop.f32.mrb[0].mxu0
    %v4194 = vadd.f32 %v4001, %v4193
    %v4195 = vpop.f32.mrb[0].mxu0
    %v4196 = vadd.f32 %v4003, %v4195
    %v4197 = vpop.f32.mrb[0].mxu0
    %v4198 = vadd.f32 %v4005, %v4197
    %4199 = vmatprep.mubr.bf16.mxu0 %v2720
    %4200 = vmatmul.mubr.bf16.gmra.mrb[0].mxu0 %v2719
    %v4201 = vpop.f32.mrb[0].mxu0
    %v4202 = vadd.f32 %v4009, %v4201
    %v4203 = vpop.f32.mrb[0].mxu0
    %v4204 = vadd.f32 %v4011, %v4203
    %v4205 = vpop.f32.mrb[0].mxu0
    %v4206 = vadd.f32 %v4013, %v4205
    %v4207 = vpop.f32.mrb[0].mxu0
    %v4208 = vadd.f32 %v4015, %v4207
    %4209 = vmatprep.mubr.bf16.mxu0 %v2724
    %4210 = vmatmul.mubr.bf16.gmra.mrb[0].mxu0 %v2723
    %v4211 = vpop.f32.mrb[0].mxu0
    %v4212 = vadd.f32 %v4019, %v4211
    %v4213 = vpop.f32.mrb[0].mxu0
    %v4214 = vadd.f32 %v4021, %v4213
    %v4215 = vpop.f32.mrb[0].mxu0
    %v4216 = vadd.f32 %v4023, %v4215
    %v4217 = vpop.f32.mrb[0].mxu0
    %v4218 = vadd.f32 %v4025, %v4217
    %4219 = vmatprep.mubr.bf16.mxu0 %v2728
    %4220 = vmatmul.mubr.bf16.gmra.mrb[0].mxu0 %v2727
    %v4221 = vpop.f32.mrb[0].mxu0
    %v4222 = vadd.f32 %v4029, %v4221
    %v4223 = vpop.f32.mrb[0].mxu0
    %v4224 = vadd.f32 %v4031, %v4223
    %v4225 = vpop.f32.mrb[0].mxu0
    %v4226 = vadd.f32 %v4033, %v4225
    %v4227 = vpop.f32.mrb[0].mxu0
    %v4228 = vadd.f32 %v4035, %v4227
    %4229 = vmatprep.mubr.bf16.mxu0 %v2732
    %4230 = vmatmul.mubr.bf16.gmra.mrb[0].mxu0 %v2731
    %v4231 = vpop.f32.mrb[0].mxu0
    %v4232 = vadd.f32 %v4039, %v4231
    %v4233 = vpop.f32.mrb[0].mxu0
    %v4234 = vadd.f32 %v4041, %v4233
    %v4235 = vpop.f32.mrb[0].mxu0
    %v4236 = vadd.f32 %v4043, %v4235
    %v4237 = vpop.f32.mrb[0].mxu0
    %v4238 = vadd.f32 %v4045, %v4237
    %4239 = vmatprep.mubr.bf16.mxu0 %v2736
    %4240 = vmatmul.mubr.bf16.gmra.mrb[0].mxu0 %v2735
    %v4241 = vpop.f32.mrb[0].mxu0
    %v4242 = vadd.f32 %v4049, %v4241
    %v4243 = vpop.f32.mrb[0].mxu0
    %v4244 = vadd.f32 %v4051, %v4243
    %v4245 = vpop.f32.mrb[0].mxu0
    %v4246 = vadd.f32 %v4053, %v4245
    %v4247 = vpop.f32.mrb[0].mxu0
    %v4248 = vadd.f32 %v4055, %v4247
    %4249 = vmatprep.mubr.bf16.mxu0 %v2740
    %4250 = vmatmul.mubr.bf16.gmra.mrb[0].mxu0 %v2739
    %v4251 = vpop.f32.mrb[0].mxu0
    %v4252 = vadd.f32 %v4059, %v4251
    %v4253 = vpop.f32.mrb[0].mxu0
    %v4254 = vadd.f32 %v4061, %v4253
    %v4255 = vpop.f32.mrb[0].mxu0
    %v4256 = vadd.f32 %v4063, %v4255
    %v4257 = vpop.f32.mrb[0].mxu0
    %v4258 = vadd.f32 %v4065, %v4257
    %4259 = vmatprep.mubr.bf16.mxu0 %v2744
    %4260 = vmatmul.mubr.bf16.gmra.mrb[0].mxu0 %v2743
    %v4261 = vpop.f32.mrb[0].mxu0
    %v4262 = vadd.f32 %v4069, %v4261
    %v4263 = vpop.f32.mrb[0].mxu0
    %v4264 = vadd.f32 %v4071, %v4263
    %v4265 = vpop.f32.mrb[0].mxu0
    %v4266 = vadd.f32 %v4073, %v4265
    %v4267 = vpop.f32.mrb[0].mxu0
    %v4268 = vadd.f32 %v4075, %v4267
    %4269 = vmatprep.mubr.bf16.mxu0 %v2748
    %4270 = vmatmul.mubr.bf16.gmra.mrb[0].mxu0 %v2747
    %v4271 = vpop.f32.mrb[0].mxu0
    %v4272 = vadd.f32 %v4079, %v4271
    %v4273 = vpop.f32.mrb[0].mxu0
    %v4274 = vadd.f32 %v4081, %v4273
    %v4275 = vpop.f32.mrb[0].mxu0
    %v4276 = vadd.f32 %v4083, %v4275
    %v4277 = vpop.f32.mrb[0].mxu0
    %v4278 = vadd.f32 %v4085, %v4277
    %4279 = vmatprep.mubr.bf16.mxu0 %v2752
    %4280 = vmatmul.mubr.bf16.gmra.mrb[0].mxu0 %v2751
    %v4281 = vpop.f32.mrb[0].mxu0
    %v4282 = vadd.f32 %v4089, %v4281
    %v4283 = vpop.f32.mrb[0].mxu0
    %v4284 = vadd.f32 %v4091, %v4283
    %v4285 = vpop.f32.mrb[0].mxu0
    %v4286 = vadd.f32 %v4093, %v4285
    %v4287 = vpop.f32.mrb[0].mxu0
    %v4288 = vadd.f32 %v4095, %v4287
    %4289 = vmatprep.mubr.bf16.mxu0 %v2756
    %4290 = vmatmul.mubr.bf16.gmra.mrb[0].mxu0 %v2755
    %v4291 = vpop.f32.mrb[0].mxu0
    %v4292 = vadd.f32 %v4099, %v4291
    %v4293 = vpop.f32.mrb[0].mxu0
    %v4294 = vadd.f32 %v4101, %v4293
    %v4295 = vpop.f32.mrb[0].mxu0
    %v4296 = vadd.f32 %v4103, %v4295
    %v4297 = vpop.f32.mrb[0].mxu0
    %v4298 = vadd.f32 %v4105, %v4297
    %4299 = vmatprep.mubr.bf16.mxu0 %v2760
    %4300 = vmatmul.mubr.bf16.gmra.mrb[0].mxu0 %v2759
    %v4301 = vpop.f32.mrb[0].mxu0
    %v4302 = vadd.f32 %v4109, %v4301
    %v4303 = vpop.f32.mrb[0].mxu0
    %v4304 = vadd.f32 %v4111, %v4303
    %v4305 = vpop.f32.mrb[0].mxu0
    %v4306 = vadd.f32 %v4113, %v4305
    %v4307 = vpop.f32.mrb[0].mxu0
    %v4308 = vadd.f32 %v4115, %v4307
    %4309 = vmatprep.mubr.bf16.mxu0 %v2764
    %4310 = vmatmul.mubr.bf16.gmra.mrb[0].mxu0 %v2763
    %v4311 = vpop.f32.mrb[0].mxu0
    %v4312 = vadd.f32 %v4119, %v4311
    %v4313 = vpop.f32.mrb[0].mxu0
    %v4314 = vadd.f32 %v4121, %v4313
    %v4315 = vpop.f32.mrb[0].mxu0
    %v4316 = vadd.f32 %v4123, %v4315
    %v4317 = vpop.f32.mrb[0].mxu0
    %v4318 = vadd.f32 %v4125, %v4317
    %4319 = vmatprep.mubr.bf16.mxu0 %v2768
    %4320 = vmatmul.mubr.bf16.gmra.mrb[0].mxu0 %v2767
    %v4321 = vpop.f32.mrb[0].mxu0
    %v4322 = vadd.f32 %v4129, %v4321
    %v4323 = vpop.f32.mrb[0].mxu0
    %v4324 = vadd.f32 %v4131, %v4323
    %v4325 = vpop.f32.mrb[0].mxu0
    %v4326 = vadd.f32 %v4133, %v4325
    %v4327 = vpop.f32.mrb[0].mxu0
    %v4328 = vadd.f32 %v4135, %v4327
    %4329 = vdwg.mxu0
    %v4330 = vmax.f32 %v3786, 0.0
    %v4331 = vmax.f32 %v3788, 0.0
    %v4332 = vmax.f32 %v4172, 0.0
    %v4333 = vmax.f32 %v4174, 0.0
    %v4334 = vmax.f32 %v3790, 0.0
    %v4335 = vmax.f32 %v3792, 0.0
    %v4336 = vmax.f32 %v4176, 0.0
    %v4337 = vmax.f32 %v4178, 0.0
    %v4338 = vmax.f32 %v3796, 0.0
    %v4339 = vmax.f32 %v3798, 0.0
    %v4340 = vmax.f32 %v4182, 0.0
    %v4341 = vmax.f32 %v4184, 0.0
    %v4342 = vmax.f32 %v3800, 0.0
    %v4343 = vmax.f32 %v3802, 0.0
    %v4344 = vmax.f32 %v4186, 0.0
    %v4345 = vmax.f32 %v4188, 0.0
    %v4346 = vmax.f32 %v3806, 0.0
    %v4347 = vmax.f32 %v3808, 0.0
    %v4348 = vmax.f32 %v4192, 0.0
    %v4349 = vmax.f32 %v4194, 0.0
    %v4350 = vmax.f32 %v3810, 0.0
    %v4351 = vmax.f32 %v3812, 0.0
    %v4352 = vmax.f32 %v4196, 0.0
    %v4353 = vmax.f32 %v4198, 0.0
    %v4354 = vmax.f32 %v3816, 0.0
    %v4355 = vmax.f32 %v3818, 0.0
    %v4356 = vmax.f32 %v4202, 0.0
    %v4357 = vmax.f32 %v4204, 0.0
    %v4358 = vmax.f32 %v3820, 0.0
    %v4359 = vmax.f32 %v3822, 0.0
    %v4360 = vmax.f32 %v4206, 0.0
    %v4361 = vmax.f32 %v4208, 0.0
    %v4362 = vmax.f32 %v3826, 0.0
    %v4363 = vmax.f32 %v3828, 0.0
    %v4364 = vmax.f32 %v4212, 0.0
    %v4365 = vmax.f32 %v4214, 0.0
    %v4366 = vmax.f32 %v3830, 0.0
    %v4367 = vmax.f32 %v3832, 0.0
    %v4368 = vmax.f32 %v4216, 0.0
    %v4369 = vmax.f32 %v4218, 0.0
    %v4370 = vmax.f32 %v3836, 0.0
    %v4371 = vmax.f32 %v3838, 0.0
    %v4372 = vmax.f32 %v4222, 0.0
    %v4373 = vmax.f32 %v4224, 0.0
    %v4374 = vmax.f32 %v3840, 0.0
    %v4375 = vmax.f32 %v3842, 0.0
    %v4376 = vmax.f32 %v4226, 0.0
    %v4377 = vmax.f32 %v4228, 0.0
    %v4378 = vmax.f32 %v3846, 0.0
    %v4379 = vmax.f32 %v3848, 0.0
    %v4380 = vmax.f32 %v4232, 0.0
    %v4381 = vmax.f32 %v4234, 0.0
    %v4382 = vmax.f32 %v3850, 0.0
    %v4383 = vmax.f32 %v3852, 0.0
    %v4384 = vmax.f32 %v4236, 0.0
    %v4385 = vmax.f32 %v4238, 0.0
    %v4386 = vmax.f32 %v3856, 0.0
    %v4387 = vmax.f32 %v3858, 0.0
    %v4388 = vmax.f32 %v4242, 0.0
    %v4389 = vmax.f32 %v4244, 0.0
    %v4390 = vmax.f32 %v3860, 0.0
    %v4391 = vmax.f32 %v3862, 0.0
    %v4392 = vmax.f32 %v4246, 0.0
    %v4393 = vmax.f32 %v4248, 0.0
    %v4394 = vmax.f32 %v3866, 0.0
    %v4395 = vmax.f32 %v3868, 0.0
    %v4396 = vmax.f32 %v4252, 0.0
    %v4397 = vmax.f32 %v4254, 0.0
    %v4398 = vmax.f32 %v3870, 0.0
    %v4399 = vmax.f32 %v3872, 0.0
    %v4400 = vmax.f32 %v4256, 0.0
    %v4401 = vmax.f32 %v4258, 0.0
    %v4402 = vmax.f32 %v3876, 0.0
    %v4403 = vmax.f32 %v3878, 0.0
    %v4404 = vmax.f32 %v4262, 0.0
    %v4405 = vmax.f32 %v4264, 0.0
    %v4406 = vmax.f32 %v3880, 0.0
    %v4407 = vmax.f32 %v3882, 0.0
    %v4408 = vmax.f32 %v4266, 0.0
    %v4409 = vmax.f32 %v4268, 0.0
    %v4410 = vmax.f32 %v3886, 0.0
    %v4411 = vmax.f32 %v3888, 0.0
    %v4412 = vmax.f32 %v4272, 0.0
    %v4413 = vmax.f32 %v4274, 0.0
    %v4414 = vmax.f32 %v3890, 0.0
    %v4415 = vmax.f32 %v3892, 0.0
    %v4416 = vmax.f32 %v4276, 0.0
    %v4417 = vmax.f32 %v4278, 0.0
    %v4418 = vmax.f32 %v3896, 0.0
    %v4419 = vmax.f32 %v3898, 0.0
    %v4420 = vmax.f32 %v4282, 0.0
    %v4421 = vmax.f32 %v4284, 0.0
    %v4422 = vmax.f32 %v3900, 0.0
    %v4423 = vmax.f32 %v3902, 0.0
    %v4424 = vmax.f32 %v4286, 0.0
    %v4425 = vmax.f32 %v4288, 0.0
    %v4426 = vmax.f32 %v3906, 0.0
    %v4427 = vmax.f32 %v3908, 0.0
    %v4428 = vmax.f32 %v4292, 0.0
    %v4429 = vmax.f32 %v4294, 0.0
    %v4430 = vmax.f32 %v3910, 0.0
    %v4431 = vmax.f32 %v3912, 0.0
    %v4432 = vmax.f32 %v4296, 0.0
    %v4433 = vmax.f32 %v4298, 0.0
    %v4434 = vmax.f32 %v3916, 0.0
    %v4435 = vmax.f32 %v3918, 0.0
    %v4436 = vmax.f32 %v4302, 0.0
    %v4437 = vmax.f32 %v4304, 0.0
    %v4438 = vmax.f32 %v3920, 0.0
    %v4439 = vmax.f32 %v3922, 0.0
    %v4440 = vmax.f32 %v4306, 0.0
    %v4441 = vmax.f32 %v4308, 0.0
    %v4442 = vmax.f32 %v3926, 0.0
    %v4443 = vmax.f32 %v3928, 0.0
    %v4444 = vmax.f32 %v4312, 0.0
    %v4445 = vmax.f32 %v4314, 0.0
    %v4446 = vmax.f32 %v3930, 0.0
    %v4447 = vmax.f32 %v3932, 0.0
    %v4448 = vmax.f32 %v4316, 0.0
    %v4449 = vmax.f32 %v4318, 0.0
    %v4450 = vmax.f32 %v3936, 0.0
    %v4451 = vmax.f32 %v3938, 0.0
    %v4452 = vmax.f32 %v4322, 0.0
    %v4453 = vmax.f32 %v4324, 0.0
    %v4454 = vmax.f32 %v3940, 0.0
    %v4455 = vmax.f32 %v3942, 0.0
    %v4456 = vmax.f32 %v4326, 0.0
    %v4457 = vmax.f32 %v4328, 0.0
    %v4458 = vpack.c.bf16 %v4334, %v4330
    %v4459 = vpack.c.bf16 %v4335, %v4331
    %v4460 = vpack.c.bf16 %v4336, %v4332
    %v4461 = vpack.c.bf16 %v4337, %v4333
    %v4462 = vpack.c.bf16 %v4342, %v4338
    %v4463 = vpack.c.bf16 %v4343, %v4339
    %v4464 = vpack.c.bf16 %v4344, %v4340
    %v4465 = vpack.c.bf16 %v4345, %v4341
    %v4466 = vpack.c.bf16 %v4350, %v4346
    %v4467 = vpack.c.bf16 %v4351, %v4347
    %v4468 = vpack.c.bf16 %v4352, %v4348
    %v4469 = vpack.c.bf16 %v4353, %v4349
    %v4470 = vpack.c.bf16 %v4358, %v4354
    %v4471 = vpack.c.bf16 %v4359, %v4355
    %v4472 = vpack.c.bf16 %v4360, %v4356
    %v4473 = vpack.c.bf16 %v4361, %v4357
    %v4474 = vpack.c.bf16 %v4366, %v4362
    %v4475 = vpack.c.bf16 %v4367, %v4363
    %v4476 = vpack.c.bf16 %v4368, %v4364
    %v4477 = vpack.c.bf16 %v4369, %v4365
    %v4478 = vpack.c.bf16 %v4374, %v4370
    %v4479 = vpack.c.bf16 %v4375, %v4371
    %v4480 = vpack.c.bf16 %v4376, %v4372
    %v4481 = vpack.c.bf16 %v4377, %v4373
    %v4482 = vpack.c.bf16 %v4382, %v4378
    %v4483 = vpack.c.bf16 %v4383, %v4379
    %v4484 = vpack.c.bf16 %v4384, %v4380
    %v4485 = vpack.c.bf16 %v4385, %v4381
    %v4486 = vpack.c.bf16 %v4390, %v4386
    %v4487 = vpack.c.bf16 %v4391, %v4387
    %v4488 = vpack.c.bf16 %v4392, %v4388
    %v4489 = vpack.c.bf16 %v4393, %v4389
    %v4490 = vpack.c.bf16 %v4398, %v4394
    %v4491 = vpack.c.bf16 %v4399, %v4395
    %v4492 = vpack.c.bf16 %v4400, %v4396
    %v4493 = vpack.c.bf16 %v4401, %v4397
    %v4494 = vpack.c.bf16 %v4406, %v4402
    %v4495 = vpack.c.bf16 %v4407, %v4403
    %v4496 = vpack.c.bf16 %v4408, %v4404
    %v4497 = vpack.c.bf16 %v4409, %v4405
    %v4498 = vpack.c.bf16 %v4414, %v4410
    %v4499 = vpack.c.bf16 %v4415, %v4411
    %v4500 = vpack.c.bf16 %v4416, %v4412
    %v4501 = vpack.c.bf16 %v4417, %v4413
    %v4502 = vpack.c.bf16 %v4422, %v4418
    %v4503 = vpack.c.bf16 %v4423, %v4419
    %v4504 = vpack.c.bf16 %v4424, %v4420
    %v4505 = vpack.c.bf16 %v4425, %v4421
    %v4506 = vpack.c.bf16 %v4430, %v4426
    %v4507 = vpack.c.bf16 %v4431, %v4427
    %v4508 = vpack.c.bf16 %v4432, %v4428
    %v4509 = vpack.c.bf16 %v4433, %v4429
    %v4510 = vpack.c.bf16 %v4438, %v4434
    %v4511 = vpack.c.bf16 %v4439, %v4435
    %v4512 = vpack.c.bf16 %v4440, %v4436
    %v4513 = vpack.c.bf16 %v4441, %v4437
    %v4514 = vpack.c.bf16 %v4446, %v4442
    %v4515 = vpack.c.bf16 %v4447, %v4443
    %v4516 = vpack.c.bf16 %v4448, %v4444
    %v4517 = vpack.c.bf16 %v4449, %v4445
    %v4518 = vpack.c.bf16 %v4454, %v4450
    %v4519 = vpack.c.bf16 %v4455, %v4451
    %v4520 = vpack.c.bf16 %v4456, %v4452
    %v4521 = vpack.c.bf16 %v4457, %v4453
    %v4522 = vld [vmem:[#allocation10] sm:$0xf]
    %v4523 = vld [vmem:[#allocation10 + $0x4] sm:$0xf]
    %v4524 = vld [vmem:[#allocation10 + $0x8] sm:$0xf]
    %v4525 = vld [vmem:[#allocation10 + $0xc] sm:$0xf]
    %v4526 = vld [vmem:[#allocation10 + $0x10] sm:$0xf]
    %v4527 = vld [vmem:[#allocation10 + $0x14] sm:$0xf]
    %v4528 = vld [vmem:[#allocation10 + $0x18] sm:$0xf]
    %v4529 = vld [vmem:[#allocation10 + $0x1c] sm:$0xf]
    %v4530 = vld [vmem:[#allocation10 + $0x20] sm:$0xf]
    %v4531 = vld [vmem:[#allocation10 + $0x24] sm:$0xf]
    %v4532 = vld [vmem:[#allocation10 + $0x28] sm:$0xf]
    %v4533 = vld [vmem:[#allocation10 + $0x2c] sm:$0xf]
    %v4534 = vld [vmem:[#allocation10 + $0x30] sm:$0xf]
    %v4535 = vld [vmem:[#allocation10 + $0x34] sm:$0xf]
    %v4536 = vld [vmem:[#allocation10 + $0x38] sm:$0xf]
    %v4537 = vld [vmem:[#allocation10 + $0x3c] sm:$0xf]
    %v4538 = vld [vmem:[#allocation10 + $0x40] sm:$0xf]
    %v4539 = vld [vmem:[#allocation10 + $0x44] sm:$0xf]
    %v4540 = vld [vmem:[#allocation10 + $0x48] sm:$0xf]
    %v4541 = vld [vmem:[#allocation10 + $0x4c] sm:$0xf]
    %v4542 = vld [vmem:[#allocation10 + $0x50] sm:$0xf]
    %v4543 = vld [vmem:[#allocation10 + $0x54] sm:$0xf]
    %v4544 = vld [vmem:[#allocation10 + $0x58] sm:$0xf]
    %v4545 = vld [vmem:[#allocation10 + $0x5c] sm:$0xf]
    %v4546 = vld [vmem:[#allocation10 + $0x60] sm:$0xf]
    %v4547 = vld [vmem:[#allocation10 + $0x64] sm:$0xf]
    %v4548 = vld [vmem:[#allocation10 + $0x68] sm:$0xf]
    %v4549 = vld [vmem:[#allocation10 + $0x6c] sm:$0xf]
    %v4550 = vld [vmem:[#allocation10 + $0x70] sm:$0xf]
    %v4551 = vld [vmem:[#allocation10 + $0x74] sm:$0xf]
    %v4552 = vld [vmem:[#allocation10 + $0x78] sm:$0xf]
    %v4553 = vld [vmem:[#allocation10 + $0x7c] sm:$0xf]
    %v4554 = vld [vmem:[#allocation10 + $0x80] sm:$0xf]
    %v4555 = vld [vmem:[#allocation10 + $0x84] sm:$0xf]
    %v4556 = vld [vmem:[#allocation10 + $0x88] sm:$0xf]
    %v4557 = vld [vmem:[#allocation10 + $0x8c] sm:$0xf]
    %v4558 = vld [vmem:[#allocation10 + $0x90] sm:$0xf]
    %v4559 = vld [vmem:[#allocation10 + $0x94] sm:$0xf]
    %v4560 = vld [vmem:[#allocation10 + $0x98] sm:$0xf]
    %v4561 = vld [vmem:[#allocation10 + $0x9c] sm:$0xf]
    %v4562 = vld [vmem:[#allocation10 + $0xa0] sm:$0xf]
    %v4563 = vld [vmem:[#allocation10 + $0xa4] sm:$0xf]
    %v4564 = vld [vmem:[#allocation10 + $0xa8] sm:$0xf]
    %v4565 = vld [vmem:[#allocation10 + $0xac] sm:$0xf]
    %v4566 = vld [vmem:[#allocation10 + $0xb0] sm:$0xf]
    %v4567 = vld [vmem:[#allocation10 + $0xb4] sm:$0xf]
    %v4568 = vld [vmem:[#allocation10 + $0xb8] sm:$0xf]
    %v4569 = vld [vmem:[#allocation10 + $0xbc] sm:$0xf]
    %v4570 = vld [vmem:[#allocation10 + $0xc0] sm:$0xf]
    %v4571 = vld [vmem:[#allocation10 + $0xc4] sm:$0xf]
    %v4572 = vld [vmem:[#allocation10 + $0xc8] sm:$0xf]
    %v4573 = vld [vmem:[#allocation10 + $0xcc] sm:$0xf]
    %v4574 = vld [vmem:[#allocation10 + $0xd0] sm:$0xf]
    %v4575 = vld [vmem:[#allocation10 + $0xd4] sm:$0xf]
    %v4576 = vld [vmem:[#allocation10 + $0xd8] sm:$0xf]
    %v4577 = vld [vmem:[#allocation10 + $0xdc] sm:$0xf]
    %v4578 = vld [vmem:[#allocation10 + $0xe0] sm:$0xf]
    %v4579 = vld [vmem:[#allocation10 + $0xe4] sm:$0xf]
    %v4580 = vld [vmem:[#allocation10 + $0xe8] sm:$0xf]
    %v4581 = vld [vmem:[#allocation10 + $0xec] sm:$0xf]
    %v4582 = vld [vmem:[#allocation10 + $0xf0] sm:$0xf]
    %v4583 = vld [vmem:[#allocation10 + $0xf4] sm:$0xf]
    %v4584 = vld [vmem:[#allocation10 + $0xf8] sm:$0xf]
    %v4585 = vld [vmem:[#allocation10 + $0xfc] sm:$0xf]
    %v4587 = vlaneseq
    %v4588 = vshrl.u32 %v4587, 7
    %v4589 = vsub.s32 0, %v4588
    %v4590 = vrot.slane %v128, %v4589
    %v4656 = vunpack.c.l.b16 %v4522
    %v4657 = vunpack.c.l.b16 %v4523
    %v4658 = vunpack.c.l.b16 %v4524
    %v4659 = vunpack.c.l.b16 %v4525
    %v4660 = vunpack.c.l.b16 %v4526
    %v4661 = vunpack.c.l.b16 %v4527
    %v4662 = vunpack.c.l.b16 %v4528
    %v4663 = vunpack.c.l.b16 %v4529
    %v4664 = vunpack.c.l.b16 %v4530
    %v4665 = vunpack.c.l.b16 %v4531
    %v4666 = vunpack.c.l.b16 %v4532
    %v4667 = vunpack.c.l.b16 %v4533
    %v4668 = vunpack.c.l.b16 %v4534
    %v4669 = vunpack.c.l.b16 %v4535
    %v4670 = vunpack.c.l.b16 %v4536
    %v4671 = vunpack.c.l.b16 %v4537
    %v4672 = vunpack.c.l.b16 %v4538
    %v4673 = vunpack.c.l.b16 %v4539
    %v4674 = vunpack.c.l.b16 %v4540
    %v4675 = vunpack.c.l.b16 %v4541
    %v4676 = vunpack.c.l.b16 %v4542
    %v4677 = vunpack.c.l.b16 %v4543
    %v4678 = vunpack.c.l.b16 %v4544
    %v4679 = vunpack.c.l.b16 %v4545
    %v4680 = vunpack.c.l.b16 %v4546
    %v4681 = vunpack.c.l.b16 %v4547
    %v4682 = vunpack.c.l.b16 %v4548
    %v4683 = vunpack.c.l.b16 %v4549
    %v4684 = vunpack.c.l.b16 %v4550
    %v4685 = vunpack.c.l.b16 %v4551
    %v4686 = vunpack.c.l.b16 %v4552
    %v4687 = vunpack.c.l.b16 %v4553
    %v4688 = vunpack.c.l.b16 %v4554
    %v4689 = vunpack.c.l.b16 %v4555
    %v4690 = vunpack.c.l.b16 %v4556
    %v4691 = vunpack.c.l.b16 %v4557
    %v4692 = vunpack.c.l.b16 %v4558
    %v4693 = vunpack.c.l.b16 %v4559
    %v4694 = vunpack.c.l.b16 %v4560
    %v4695 = vunpack.c.l.b16 %v4561
    %v4696 = vunpack.c.l.b16 %v4562
    %v4697 = vunpack.c.l.b16 %v4563
    %v4698 = vunpack.c.l.b16 %v4564
    %v4699 = vunpack.c.l.b16 %v4565
    %v4700 = vunpack.c.l.b16 %v4566
    %v4701 = vunpack.c.l.b16 %v4567
    %v4702 = vunpack.c.l.b16 %v4568
    %v4703 = vunpack.c.l.b16 %v4569
    %v4704 = vunpack.c.l.b16 %v4570
    %v4705 = vunpack.c.l.b16 %v4571
    %v4706 = vunpack.c.l.b16 %v4572
    %v4707 = vunpack.c.l.b16 %v4573
    %v4708 = vunpack.c.l.b16 %v4574
    %v4709 = vunpack.c.l.b16 %v4575
    %v4710 = vunpack.c.l.b16 %v4576
    %v4711 = vunpack.c.l.b16 %v4577
    %v4712 = vunpack.c.l.b16 %v4578
    %v4713 = vunpack.c.l.b16 %v4579
    %v4714 = vunpack.c.l.b16 %v4580
    %v4715 = vunpack.c.l.b16 %v4581
    %v4716 = vunpack.c.l.b16 %v4582
    %v4717 = vunpack.c.l.b16 %v4583
    %v4718 = vunpack.c.l.b16 %v4584
    %v4719 = vunpack.c.l.b16 %v4585
    %v4720 = vpack.c.b16 %v4657, %v4656
    %v4721 = vpack.c.b16 %v4659, %v4658
    %v4722 = vpack.c.b16 %v4661, %v4660
    %v4723 = vpack.c.b16 %v4663, %v4662
    %v4724 = vpack.c.b16 %v4665, %v4664
    %v4725 = vpack.c.b16 %v4667, %v4666
    %v4726 = vpack.c.b16 %v4669, %v4668
    %v4727 = vpack.c.b16 %v4671, %v4670
    %v4728 = vpack.c.b16 %v4673, %v4672
    %v4729 = vpack.c.b16 %v4675, %v4674
    %v4730 = vpack.c.b16 %v4677, %v4676
    %v4731 = vpack.c.b16 %v4679, %v4678
    %v4732 = vpack.c.b16 %v4681, %v4680
    %v4733 = vpack.c.b16 %v4683, %v4682
    %v4734 = vpack.c.b16 %v4685, %v4684
    %v4735 = vpack.c.b16 %v4687, %v4686
    %v4736 = vpack.c.b16 %v4689, %v4688
    %v4737 = vpack.c.b16 %v4691, %v4690
    %v4738 = vpack.c.b16 %v4693, %v4692
    %v4739 = vpack.c.b16 %v4695, %v4694
    %v4740 = vpack.c.b16 %v4697, %v4696
    %v4741 = vpack.c.b16 %v4699, %v4698
    %v4742 = vpack.c.b16 %v4701, %v4700
    %v4743 = vpack.c.b16 %v4703, %v4702
    %v4744 = vpack.c.b16 %v4705, %v4704
    %v4745 = vpack.c.b16 %v4707, %v4706
    %v4746 = vpack.c.b16 %v4709, %v4708
    %v4747 = vpack.c.b16 %v4711, %v4710
    %v4748 = vpack.c.b16 %v4713, %v4712
    %v4749 = vpack.c.b16 %v4715, %v4714
    %v4750 = vpack.c.b16 %v4717, %v4716
    %v4751 = vpack.c.b16 %v4719, %v4718
    %4784 = vmatprep.subr.bf16.mxu0 0
    %4785 = vmatpush1.bf16.msra.mxu0 %v4720
    %4786 = vmatprep.subr.bf16.mxu0 0
    %4787 = vmatpush1.bf16.msra.mxu0 %v4721
    %4788 = vmatprep.subr.bf16.mxu0 0
    %4789 = vmatpush1.bf16.msra.mxu0 %v4722
    %4790 = vmatprep.subr.bf16.mxu0 0
    %4791 = vmatpush1.bf16.msra.mxu0 %v4723
    %4792 = vmatprep.subr.bf16.mxu0 0
    %4793 = vmatpush1.bf16.msra.mxu0 %v4724
    %4794 = vmatprep.subr.bf16.mxu0 0
    %4795 = vmatpush1.bf16.msra.mxu0 %v4725
    %4796 = vmatprep.subr.bf16.mxu0 0
    %4797 = vmatpush1.bf16.msra.mxu0 %v4726
    %4798 = vmatprep.subr.bf16.mxu0 0
    %4799 = vmatpush1.bf16.msra.mxu0 %v4727
    %4800 = vmatprep.subr.bf16.mxu0 0
    %4801 = vmatpush1.bf16.msra.mxu0 %v4728
    %4802 = vmatprep.subr.bf16.mxu0 0
    %4803 = vmatpush1.bf16.msra.mxu0 %v4729
    %4804 = vmatprep.subr.bf16.mxu0 0
    %4805 = vmatpush1.bf16.msra.mxu0 %v4730
    %4806 = vmatprep.subr.bf16.mxu0 0
    %4807 = vmatpush1.bf16.msra.mxu0 %v4731
    %4808 = vmatprep.subr.bf16.mxu0 0
    %4809 = vmatpush1.bf16.msra.mxu0 %v4732
    %4810 = vmatprep.subr.bf16.mxu0 0
    %4811 = vmatpush1.bf16.msra.mxu0 %v4733
    %4812 = vmatprep.subr.bf16.mxu0 0
    %4813 = vmatpush1.bf16.msra.mxu0 %v4734
    %4814 = vmatprep.subr.bf16.mxu0 0
    %4815 = vmatpush1.bf16.msra.mxu0 %v4735
    %4816 = vmatprep.mubr.bf16.mxu0 %v4459
    %4817 = vmatmul.mubr.bf16.gmra.mrb[0].mxu0 %v4458
    %v4818 = vpop.f32.mrb[0].mxu0
    %v4819 = vadd.f32 %v4590, %v4818
    %v4820 = vpop.f32.mrb[0].mxu0
    %v4821 = vpop.f32.mrb[0].mxu0
    %v4822 = vadd.f32 %v4590, %v4821
    %v4823 = vpop.f32.mrb[0].mxu0
    %4824 = vmatprep.mubr.bf16.mxu0 %v4463
    %4825 = vmatmul.mubr.bf16.gmra.mrb[0].mxu0 %v4462
    %v4826 = vpop.f32.mrb[0].mxu0
    %v4827 = vadd.f32 %v4590, %v4826
    %v4828 = vpop.f32.mrb[0].mxu0
    %v4829 = vpop.f32.mrb[0].mxu0
    %v4830 = vadd.f32 %v4590, %v4829
    %v4831 = vpop.f32.mrb[0].mxu0
    %4832 = vmatprep.mubr.bf16.mxu0 %v4467
    %4833 = vmatmul.mubr.bf16.gmra.mrb[0].mxu0 %v4466
    %v4834 = vpop.f32.mrb[0].mxu0
    %v4835 = vadd.f32 %v4590, %v4834
    %v4836 = vpop.f32.mrb[0].mxu0
    %v4837 = vpop.f32.mrb[0].mxu0
    %v4838 = vadd.f32 %v4590, %v4837
    %v4839 = vpop.f32.mrb[0].mxu0
    %4840 = vmatprep.mubr.bf16.mxu0 %v4471
    %4841 = vmatmul.mubr.bf16.gmra.mrb[0].mxu0 %v4470
    %v4842 = vpop.f32.mrb[0].mxu0
    %v4843 = vadd.f32 %v4590, %v4842
    %v4844 = vpop.f32.mrb[0].mxu0
    %v4845 = vpop.f32.mrb[0].mxu0
    %v4846 = vadd.f32 %v4590, %v4845
    %v4847 = vpop.f32.mrb[0].mxu0
    %4848 = vmatprep.mubr.bf16.mxu0 %v4475
    %4849 = vmatmul.mubr.bf16.gmra.mrb[0].mxu0 %v4474
    %v4850 = vpop.f32.mrb[0].mxu0
    %v4851 = vadd.f32 %v4590, %v4850
    %v4852 = vpop.f32.mrb[0].mxu0
    %v4853 = vpop.f32.mrb[0].mxu0
    %v4854 = vadd.f32 %v4590, %v4853
    %v4855 = vpop.f32.mrb[0].mxu0
    %4856 = vmatprep.mubr.bf16.mxu0 %v4479
    %4857 = vmatmul.mubr.bf16.gmra.mrb[0].mxu0 %v4478
    %v4858 = vpop.f32.mrb[0].mxu0
    %v4859 = vadd.f32 %v4590, %v4858
    %v4860 = vpop.f32.mrb[0].mxu0
    %v4861 = vpop.f32.mrb[0].mxu0
    %v4862 = vadd.f32 %v4590, %v4861
    %v4863 = vpop.f32.mrb[0].mxu0
    %4864 = vmatprep.mubr.bf16.mxu0 %v4483
    %4865 = vmatmul.mubr.bf16.gmra.mrb[0].mxu0 %v4482
    %v4866 = vpop.f32.mrb[0].mxu0
    %v4867 = vadd.f32 %v4590, %v4866
    %v4868 = vpop.f32.mrb[0].mxu0
    %v4869 = vpop.f32.mrb[0].mxu0
    %v4870 = vadd.f32 %v4590, %v4869
    %v4871 = vpop.f32.mrb[0].mxu0
    %4872 = vmatprep.mubr.bf16.mxu0 %v4487
    %4873 = vmatmul.mubr.bf16.gmra.mrb[0].mxu0 %v4486
    %v4874 = vpop.f32.mrb[0].mxu0
    %v4875 = vadd.f32 %v4590, %v4874
    %v4876 = vpop.f32.mrb[0].mxu0
    %v4877 = vpop.f32.mrb[0].mxu0
    %v4878 = vadd.f32 %v4590, %v4877
    %v4879 = vpop.f32.mrb[0].mxu0
    %4880 = vmatprep.mubr.bf16.mxu0 %v4491
    %4881 = vmatmul.mubr.bf16.gmra.mrb[0].mxu0 %v4490
    %v4882 = vpop.f32.mrb[0].mxu0
    %v4883 = vadd.f32 %v4590, %v4882
    %v4884 = vpop.f32.mrb[0].mxu0
    %v4885 = vpop.f32.mrb[0].mxu0
    %v4886 = vadd.f32 %v4590, %v4885
    %v4887 = vpop.f32.mrb[0].mxu0
    %4888 = vmatprep.mubr.bf16.mxu0 %v4495
    %4889 = vmatmul.mubr.bf16.gmra.mrb[0].mxu0 %v4494
    %v4890 = vpop.f32.mrb[0].mxu0
    %v4891 = vadd.f32 %v4590, %v4890
    %v4892 = vpop.f32.mrb[0].mxu0
    %v4893 = vpop.f32.mrb[0].mxu0
    %v4894 = vadd.f32 %v4590, %v4893
    %v4895 = vpop.f32.mrb[0].mxu0
    %4896 = vmatprep.mubr.bf16.mxu0 %v4499
    %4897 = vmatmul.mubr.bf16.gmra.mrb[0].mxu0 %v4498
    %v4898 = vpop.f32.mrb[0].mxu0
    %v4899 = vadd.f32 %v4590, %v4898
    %v4900 = vpop.f32.mrb[0].mxu0
    %v4901 = vpop.f32.mrb[0].mxu0
    %v4902 = vadd.f32 %v4590, %v4901
    %v4903 = vpop.f32.mrb[0].mxu0
    %4904 = vmatprep.mubr.bf16.mxu0 %v4503
    %4905 = vmatmul.mubr.bf16.gmra.mrb[0].mxu0 %v4502
    %v4906 = vpop.f32.mrb[0].mxu0
    %v4907 = vadd.f32 %v4590, %v4906
    %v4908 = vpop.f32.mrb[0].mxu0
    %v4909 = vpop.f32.mrb[0].mxu0
    %v4910 = vadd.f32 %v4590, %v4909
    %v4911 = vpop.f32.mrb[0].mxu0
    %4912 = vmatprep.mubr.bf16.mxu0 %v4507
    %4913 = vmatmul.mubr.bf16.gmra.mrb[0].mxu0 %v4506
    %v4914 = vpop.f32.mrb[0].mxu0
    %v4915 = vadd.f32 %v4590, %v4914
    %v4916 = vpop.f32.mrb[0].mxu0
    %v4917 = vpop.f32.mrb[0].mxu0
    %v4918 = vadd.f32 %v4590, %v4917
    %v4919 = vpop.f32.mrb[0].mxu0
    %4920 = vmatprep.mubr.bf16.mxu0 %v4511
    %4921 = vmatmul.mubr.bf16.gmra.mrb[0].mxu0 %v4510
    %v4922 = vpop.f32.mrb[0].mxu0
    %v4923 = vadd.f32 %v4590, %v4922
    %v4924 = vpop.f32.mrb[0].mxu0
    %v4925 = vpop.f32.mrb[0].mxu0
    %v4926 = vadd.f32 %v4590, %v4925
    %v4927 = vpop.f32.mrb[0].mxu0
    %4928 = vmatprep.mubr.bf16.mxu0 %v4515
    %4929 = vmatmul.mubr.bf16.gmra.mrb[0].mxu0 %v4514
    %v4930 = vpop.f32.mrb[0].mxu0
    %v4931 = vadd.f32 %v4590, %v4930
    %v4932 = vpop.f32.mrb[0].mxu0
    %v4933 = vpop.f32.mrb[0].mxu0
    %v4934 = vadd.f32 %v4590, %v4933
    %v4935 = vpop.f32.mrb[0].mxu0
    %4936 = vmatprep.mubr.bf16.mxu0 %v4519
    %4937 = vmatmul.mubr.bf16.gmra.mrb[0].mxu0 %v4518
    %v4938 = vpop.f32.mrb[0].mxu0
    %v4939 = vadd.f32 %v4590, %v4938
    %v4940 = vpop.f32.mrb[0].mxu0
    %v4941 = vpop.f32.mrb[0].mxu0
    %v4942 = vadd.f32 %v4590, %v4941
    %v4943 = vpop.f32.mrb[0].mxu0
    %4944 = vdwg.mxu0
    %4945 = vmatprep.subr.bf16.mxu0 0
    %4946 = vmatpush1.bf16.msra.mxu0 %v4736
    %4947 = vmatprep.subr.bf16.mxu0 0
    %4948 = vmatpush1.bf16.msra.mxu0 %v4737
    %4949 = vmatprep.subr.bf16.mxu0 0
    %4950 = vmatpush1.bf16.msra.mxu0 %v4738
    %4951 = vmatprep.subr.bf16.mxu0 0
    %4952 = vmatpush1.bf16.msra.mxu0 %v4739
    %4953 = vmatprep.subr.bf16.mxu0 0
    %4954 = vmatpush1.bf16.msra.mxu0 %v4740
    %4955 = vmatprep.subr.bf16.mxu0 0
    %4956 = vmatpush1.bf16.msra.mxu0 %v4741
    %4957 = vmatprep.subr.bf16.mxu0 0
    %4958 = vmatpush1.bf16.msra.mxu0 %v4742
    %4959 = vmatprep.subr.bf16.mxu0 0
    %4960 = vmatpush1.bf16.msra.mxu0 %v4743
    %4961 = vmatprep.subr.bf16.mxu0 0
    %4962 = vmatpush1.bf16.msra.mxu0 %v4744
    %4963 = vmatprep.subr.bf16.mxu0 0
    %4964 = vmatpush1.bf16.msra.mxu0 %v4745
    %4965 = vmatprep.subr.bf16.mxu0 0
    %4966 = vmatpush1.bf16.msra.mxu0 %v4746
    %4967 = vmatprep.subr.bf16.mxu0 0
    %4968 = vmatpush1.bf16.msra.mxu0 %v4747
    %4969 = vmatprep.subr.bf16.mxu0 0
    %4970 = vmatpush1.bf16.msra.mxu0 %v4748
    %4971 = vmatprep.subr.bf16.mxu0 0
    %4972 = vmatpush1.bf16.msra.mxu0 %v4749
    %4973 = vmatprep.subr.bf16.mxu0 0
    %4974 = vmatpush1.bf16.msra.mxu0 %v4750
    %4975 = vmatprep.subr.bf16.mxu0 0
    %4976 = vmatpush1.bf16.msra.mxu0 %v4751
    %4977 = vmatprep.mubr.bf16.mxu0 %v4461
    %4978 = vmatmul.mubr.bf16.gmra.mrb[0].mxu0 %v4460
    %v4979 = vpop.f32.mrb[0].mxu0
    %v4980 = vadd.f32 %v4819, %v4979
    %v4981 = vpop.f32.mrb[0].mxu0
    %v4982 = vpop.f32.mrb[0].mxu0
    %v4983 = vadd.f32 %v4822, %v4982
    %v4984 = vpop.f32.mrb[0].mxu0
    %4985 = vmatprep.mubr.bf16.mxu0 %v4465
    %4986 = vmatmul.mubr.bf16.gmra.mrb[0].mxu0 %v4464
    %v4987 = vpop.f32.mrb[0].mxu0
    %v4988 = vadd.f32 %v4827, %v4987
    %v4989 = vpop.f32.mrb[0].mxu0
    %v4990 = vpop.f32.mrb[0].mxu0
    %v4991 = vadd.f32 %v4830, %v4990
    %v4992 = vpop.f32.mrb[0].mxu0
    %4993 = vmatprep.mubr.bf16.mxu0 %v4469
    %4994 = vmatmul.mubr.bf16.gmra.mrb[0].mxu0 %v4468
    %v4995 = vpop.f32.mrb[0].mxu0
    %v4996 = vadd.f32 %v4835, %v4995
    %v4997 = vpop.f32.mrb[0].mxu0
    %v4998 = vpop.f32.mrb[0].mxu0
    %v4999 = vadd.f32 %v4838, %v4998
    %v5000 = vpop.f32.mrb[0].mxu0
    %5001 = vmatprep.mubr.bf16.mxu0 %v4473
    %5002 = vmatmul.mubr.bf16.gmra.mrb[0].mxu0 %v4472
    %v5003 = vpop.f32.mrb[0].mxu0
    %v5004 = vadd.f32 %v4843, %v5003
    %v5005 = vpop.f32.mrb[0].mxu0
    %v5006 = vpop.f32.mrb[0].mxu0
    %v5007 = vadd.f32 %v4846, %v5006
    %v5008 = vpop.f32.mrb[0].mxu0
    %5009 = vmatprep.mubr.bf16.mxu0 %v4477
    %5010 = vmatmul.mubr.bf16.gmra.mrb[0].mxu0 %v4476
    %v5011 = vpop.f32.mrb[0].mxu0
    %v5012 = vadd.f32 %v4851, %v5011
    %v5013 = vpop.f32.mrb[0].mxu0
    %v5014 = vpop.f32.mrb[0].mxu0
    %v5015 = vadd.f32 %v4854, %v5014
    %v5016 = vpop.f32.mrb[0].mxu0
    %5017 = vmatprep.mubr.bf16.mxu0 %v4481
    %5018 = vmatmul.mubr.bf16.gmra.mrb[0].mxu0 %v4480
    %v5019 = vpop.f32.mrb[0].mxu0
    %v5020 = vadd.f32 %v4859, %v5019
    %v5021 = vpop.f32.mrb[0].mxu0
    %v5022 = vpop.f32.mrb[0].mxu0
    %v5023 = vadd.f32 %v4862, %v5022
    %v5024 = vpop.f32.mrb[0].mxu0
    %5025 = vmatprep.mubr.bf16.mxu0 %v4485
    %5026 = vmatmul.mubr.bf16.gmra.mrb[0].mxu0 %v4484
    %v5027 = vpop.f32.mrb[0].mxu0
    %v5028 = vadd.f32 %v4867, %v5027
    %v5029 = vpop.f32.mrb[0].mxu0
    %v5030 = vpop.f32.mrb[0].mxu0
    %v5031 = vadd.f32 %v4870, %v5030
    %v5032 = vpop.f32.mrb[0].mxu0
    %5033 = vmatprep.mubr.bf16.mxu0 %v4489
    %5034 = vmatmul.mubr.bf16.gmra.mrb[0].mxu0 %v4488
    %v5035 = vpop.f32.mrb[0].mxu0
    %v5036 = vadd.f32 %v4875, %v5035
    %v5037 = vpop.f32.mrb[0].mxu0
    %v5038 = vpop.f32.mrb[0].mxu0
    %v5039 = vadd.f32 %v4878, %v5038
    %v5040 = vpop.f32.mrb[0].mxu0
    %5041 = vmatprep.mubr.bf16.mxu0 %v4493
    %5042 = vmatmul.mubr.bf16.gmra.mrb[0].mxu0 %v4492
    %v5043 = vpop.f32.mrb[0].mxu0
    %v5044 = vadd.f32 %v4883, %v5043
    %v5045 = vpop.f32.mrb[0].mxu0
    %v5046 = vpop.f32.mrb[0].mxu0
    %v5047 = vadd.f32 %v4886, %v5046
    %v5048 = vpop.f32.mrb[0].mxu0
    %5049 = vmatprep.mubr.bf16.mxu0 %v4497
    %5050 = vmatmul.mubr.bf16.gmra.mrb[0].mxu0 %v4496
    %v5051 = vpop.f32.mrb[0].mxu0
    %v5052 = vadd.f32 %v4891, %v5051
    %v5053 = vpop.f32.mrb[0].mxu0
    %v5054 = vpop.f32.mrb[0].mxu0
    %v5055 = vadd.f32 %v4894, %v5054
    %v5056 = vpop.f32.mrb[0].mxu0
    %5057 = vmatprep.mubr.bf16.mxu0 %v4501
    %5058 = vmatmul.mubr.bf16.gmra.mrb[0].mxu0 %v4500
    %v5059 = vpop.f32.mrb[0].mxu0
    %v5060 = vadd.f32 %v4899, %v5059
    %v5061 = vpop.f32.mrb[0].mxu0
    %v5062 = vpop.f32.mrb[0].mxu0
    %v5063 = vadd.f32 %v4902, %v5062
    %v5064 = vpop.f32.mrb[0].mxu0
    %5065 = vmatprep.mubr.bf16.mxu0 %v4505
    %5066 = vmatmul.mubr.bf16.gmra.mrb[0].mxu0 %v4504
    %v5067 = vpop.f32.mrb[0].mxu0
    %v5068 = vadd.f32 %v4907, %v5067
    %v5069 = vpop.f32.mrb[0].mxu0
    %v5070 = vpop.f32.mrb[0].mxu0
    %v5071 = vadd.f32 %v4910, %v5070
    %v5072 = vpop.f32.mrb[0].mxu0
    %5073 = vmatprep.mubr.bf16.mxu0 %v4509
    %5074 = vmatmul.mubr.bf16.gmra.mrb[0].mxu0 %v4508
    %v5075 = vpop.f32.mrb[0].mxu0
    %v5076 = vadd.f32 %v4915, %v5075
    %v5077 = vpop.f32.mrb[0].mxu0
    %v5078 = vpop.f32.mrb[0].mxu0
    %v5079 = vadd.f32 %v4918, %v5078
    %v5080 = vpop.f32.mrb[0].mxu0
    %5081 = vmatprep.mubr.bf16.mxu0 %v4513
    %5082 = vmatmul.mubr.bf16.gmra.mrb[0].mxu0 %v4512
    %v5083 = vpop.f32.mrb[0].mxu0
    %v5084 = vadd.f32 %v4923, %v5083
    %v5085 = vpop.f32.mrb[0].mxu0
    %v5086 = vpop.f32.mrb[0].mxu0
    %v5087 = vadd.f32 %v4926, %v5086
    %v5088 = vpop.f32.mrb[0].mxu0
    %5089 = vmatprep.mubr.bf16.mxu0 %v4517
    %5090 = vmatmul.mubr.bf16.gmra.mrb[0].mxu0 %v4516
    %v5091 = vpop.f32.mrb[0].mxu0
    %v5092 = vadd.f32 %v4931, %v5091
    %v5093 = vpop.f32.mrb[0].mxu0
    %v5094 = vpop.f32.mrb[0].mxu0
    %v5095 = vadd.f32 %v4934, %v5094
    %v5096 = vpop.f32.mrb[0].mxu0
    %5097 = vmatprep.mubr.bf16.mxu0 %v4521
    %5098 = vmatmul.mubr.bf16.gmra.mrb[0].mxu0 %v4520
    %v5099 = vpop.f32.mrb[0].mxu0
    %v5100 = vadd.f32 %v4939, %v5099
    %v5101 = vpop.f32.mrb[0].mxu0
    %v5102 = vpop.f32.mrb[0].mxu0
    %v5103 = vadd.f32 %v4942, %v5102
    %v5104 = vpop.f32.mrb[0].mxu0
    %5105 = vdwg.mxu0
    %v5106 = vpack.c.bf16 %v4983, %v4980
    %v5107 = vpack.c.bf16 %v4991, %v4988
    %v5108 = vpack.c.bf16 %v4999, %v4996
    %v5109 = vpack.c.bf16 %v5007, %v5004
    %v5110 = vpack.c.bf16 %v5015, %v5012
    %v5111 = vpack.c.bf16 %v5023, %v5020
    %v5112 = vpack.c.bf16 %v5031, %v5028
    %v5113 = vpack.c.bf16 %v5039, %v5036
    %v5114 = vpack.c.bf16 %v5047, %v5044
    %v5115 = vpack.c.bf16 %v5055, %v5052
    %v5116 = vpack.c.bf16 %v5063, %v5060
    %v5117 = vpack.c.bf16 %v5071, %v5068
    %v5118 = vpack.c.bf16 %v5079, %v5076
    %v5119 = vpack.c.bf16 %v5087, %v5084
    %v5120 = vpack.c.bf16 %v5095, %v5092
    %v5121 = vpack.c.bf16 %v5103, %v5100
    %v5138 = vunpack.c.l.b16 %v5106
    %v5139 = vunpack.c.h.b16 %v5106
    %v5140 = vunpack.c.l.b16 %v5107
    %v5141 = vunpack.c.h.b16 %v5107
    %v5142 = vunpack.c.l.b16 %v5108
    %v5143 = vunpack.c.h.b16 %v5108
    %v5144 = vunpack.c.l.b16 %v5109
    %v5145 = vunpack.c.h.b16 %v5109
    %v5146 = vunpack.c.l.b16 %v5110
    %v5147 = vunpack.c.h.b16 %v5110
    %v5148 = vunpack.c.l.b16 %v5111
    %v5149 = vunpack.c.h.b16 %v5111
    %v5150 = vunpack.c.l.b16 %v5112
    %v5151 = vunpack.c.h.b16 %v5112
    %v5152 = vunpack.c.l.b16 %v5113
    %v5153 = vunpack.c.h.b16 %v5113
    %v5154 = vunpack.c.l.b16 %v5114
    %v5155 = vunpack.c.h.b16 %v5114
    %v5156 = vunpack.c.l.b16 %v5115
    %v5157 = vunpack.c.h.b16 %v5115
    %v5158 = vunpack.c.l.b16 %v5116
    %v5159 = vunpack.c.h.b16 %v5116
    %v5160 = vunpack.c.l.b16 %v5117
    %v5161 = vunpack.c.h.b16 %v5117
    %v5162 = vunpack.c.l.b16 %v5118
    %v5163 = vunpack.c.h.b16 %v5118
    %v5164 = vunpack.c.l.b16 %v5119
    %v5165 = vunpack.c.h.b16 %v5119
    %v5166 = vunpack.c.l.b16 %v5120
    %v5167 = vunpack.c.h.b16 %v5120
    %v5168 = vunpack.c.l.b16 %v5121
    %v5169 = vunpack.c.h.b16 %v5121
    %v5170 = vpack.c.b16 %v5138, %v5138
    %v5171 = vpack.c.b16 %v5139, %v5139
    %v5172 = vpack.c.b16 %v5140, %v5140
    %v5173 = vpack.c.b16 %v5141, %v5141
    %v5174 = vpack.c.b16 %v5142, %v5142
    %v5175 = vpack.c.b16 %v5143, %v5143
    %v5176 = vpack.c.b16 %v5144, %v5144
    %v5177 = vpack.c.b16 %v5145, %v5145
    %v5178 = vpack.c.b16 %v5146, %v5146
    %v5179 = vpack.c.b16 %v5147, %v5147
    %v5180 = vpack.c.b16 %v5148, %v5148
    %v5181 = vpack.c.b16 %v5149, %v5149
    %v5182 = vpack.c.b16 %v5150, %v5150
    %v5183 = vpack.c.b16 %v5151, %v5151
    %v5184 = vpack.c.b16 %v5152, %v5152
    %v5185 = vpack.c.b16 %v5153, %v5153
    %v5186 = vpack.c.b16 %v5154, %v5154
    %v5187 = vpack.c.b16 %v5155, %v5155
    %v5188 = vpack.c.b16 %v5156, %v5156
    %v5189 = vpack.c.b16 %v5157, %v5157
    %v5190 = vpack.c.b16 %v5158, %v5158
    %v5191 = vpack.c.b16 %v5159, %v5159
    %v5192 = vpack.c.b16 %v5160, %v5160
    %v5193 = vpack.c.b16 %v5161, %v5161
    %v5194 = vpack.c.b16 %v5162, %v5162
    %v5195 = vpack.c.b16 %v5163, %v5163
    %v5196 = vpack.c.b16 %v5164, %v5164
    %v5197 = vpack.c.b16 %v5165, %v5165
    %v5198 = vpack.c.b16 %v5166, %v5166
    %v5199 = vpack.c.b16 %v5167, %v5167
    %v5200 = vpack.c.b16 %v5168, %v5168
    %v5201 = vpack.c.b16 %v5169, %v5169
    %5234 = vst [vmem:[#allocation11] sm:$0xf] %v5170
    %5235 = vst [vmem:[#allocation11 + $0x4] sm:$0xf] %v5171
    %5236 = vst [vmem:[#allocation11 + $0x8] sm:$0xf] %v5172
    %5237 = vst [vmem:[#allocation11 + $0xc] sm:$0xf] %v5173
    %5238 = vst [vmem:[#allocation11 + $0x10] sm:$0xf] %v5174
    %5239 = vst [vmem:[#allocation11 + $0x14] sm:$0xf] %v5175
    %5240 = vst [vmem:[#allocation11 + $0x18] sm:$0xf] %v5176
    %5241 = vst [vmem:[#allocation11 + $0x1c] sm:$0xf] %v5177
    %5242 = vst [vmem:[#allocation11 + $0x20] sm:$0xf] %v5178
    %5243 = vst [vmem:[#allocation11 + $0x24] sm:$0xf] %v5179
    %5244 = vst [vmem:[#allocation11 + $0x28] sm:$0xf] %v5180
    %5245 = vst [vmem:[#allocation11 + $0x2c] sm:$0xf] %v5181
    %5246 = vst [vmem:[#allocation11 + $0x30] sm:$0xf] %v5182
    %5247 = vst [vmem:[#allocation11 + $0x34] sm:$0xf] %v5183
    %5248 = vst [vmem:[#allocation11 + $0x38] sm:$0xf] %v5184
    %5249 = vst [vmem:[#allocation11 + $0x3c] sm:$0xf] %v5185
    %5250 = vst [vmem:[#allocation11 + $0x40] sm:$0xf] %v5186
    %5251 = vst [vmem:[#allocation11 + $0x44] sm:$0xf] %v5187
    %5252 = vst [vmem:[#allocation11 + $0x48] sm:$0xf] %v5188
    %5253 = vst [vmem:[#allocation11 + $0x4c] sm:$0xf] %v5189
    %5254 = vst [vmem:[#allocation11 + $0x50] sm:$0xf] %v5190
    %5255 = vst [vmem:[#allocation11 + $0x54] sm:$0xf] %v5191
    %5256 = vst [vmem:[#allocation11 + $0x58] sm:$0xf] %v5192
    %5257 = vst [vmem:[#allocation11 + $0x5c] sm:$0xf] %v5193
    %5258 = vst [vmem:[#allocation11 + $0x60] sm:$0xf] %v5194
    %5259 = vst [vmem:[#allocation11 + $0x64] sm:$0xf] %v5195
    %5260 = vst [vmem:[#allocation11 + $0x68] sm:$0xf] %v5196
    %5261 = vst [vmem:[#allocation11 + $0x6c] sm:$0xf] %v5197
    %5262 = vst [vmem:[#allocation11 + $0x70] sm:$0xf] %v5198
    %5263 = vst [vmem:[#allocation11 + $0x74] sm:$0xf] %v5199
    %5264 = vst [vmem:[#allocation11 + $0x78] sm:$0xf] %v5200
    %5265 = vst [vmem:[#allocation11 + $0x7c] sm:$0xf] %v5201
    // Predicated region
    $region46: #{tpu_custom_call.1} parent=1 // pred_check
      _
    $region47: #{tpu_custom_call.1} parent=1 // pred_check_branch
      %5267 = sbr.rel (0) target = $region49
    $region48: #{tpu_custom_call.1} parent=1 // pred_region
      %s5269 = ssub.s32 2048, 2048
      %5270 = vsyncadd [#allocation4], %s5269
      %s5271 = sshll.u32 [#allocation11], 4
      %s5272 = int_to_ptr.vmem [resolvable:$true] %s5271
      %5277 = dma.vmem_to_hbm [thread:$0]  %s5272, 2048, %s6, [#allocation4], 64, 64, 4
    $region49: #{tpu_custom_call.1} parent=1 // pred_fallthru
      _
    // Predicated region
    $region50: #{tpu_custom_call.1} parent=1 // pred_check
      _
    $region51: #{tpu_custom_call.1} parent=1 // pred_check_branch
      %5279 = sbr.rel (0) target = $region53
    $region52: #{tpu_custom_call.1} parent=1 // pred_region
      %5280 = dma.done [#allocation4], 2048
    $region53: #{tpu_custom_call.1} parent=1 // pred_fallthru
      _
    %5281 = vsyncpa [#allocation3], 1
    %5282 = vsyncpa [#allocation6], 1
    %5283 = vsyncpa [#allocation9], 1
    %5284 = vsyncpa [#allocation4], 1

// kernel: tpu_custom_call.1
$region0: #{tpu_custom_call.1}
  #allocation0 [shape = 'u32[]', space=smem, size = 0x4, offset = 0x4, fixed_abs, tag = 'smem constant byte address 0x4 - core index']
  #allocation1 [shape = 'u32[144,128]{1,0:T(1,128)}', space=vmem, size = 0x12000, scoped, tag = 'internal scratch']
  %s0 = inlined_call_operand.hbm [shape: bf16[256,128], index: 0, kind: input, shape index: {}]
  %s1 = inlined_call_operand.hbm [shape: bf16[128,512], index: 1, kind: input, shape index: {}]
  %s2 = inlined_call_operand.hbm [shape: bf16[512,512], index: 2, kind: input, shape index: {}]
  %s3 = inlined_call_operand.hbm [shape: bf16[512,512], index: 3, kind: input, shape index: {}]
  %s4 = inlined_call_operand.hbm [shape: bf16[512,128], index: 4, kind: input, shape index: {}]
  %s5 = inlined_call_operand.vmem [shape: f32[1,1664], index: 5, kind: input, shape index: {}]
  %s6 = inlined_call_operand.hbm [shape: bf16[256,128], index: 6, kind: output, shape index: {}]
  %s7 = sld [smem:[#allocation0]]
  $region54: #{tpu_custom_call.1} parent=0
    _
  %s9 = ssub.s32 1, %s7
  %s10 = scalar_select 0, %s9, %s7
  $region1: #{tpu_custom_call.1} parent=0
    #allocation2 [shape = 'u8[65536]{0}', space=vmem, size = 0x10000, scoped, tag = 'input window, operand 0, single buffered']
    #allocation3 [shape = 's32[1]{0}', space=sflag, size = 0x4, scoped, tag = 'scoped memory for tpu_custom_call.1']
    #allocation4 [shape = 's32[1]{0}', space=sflag, size = 0x4, scoped, tag = 'scoped memory for tpu_custom_call.1']
    #allocation5 [shape = 'u8[131072]{0}', space=vmem, size = 0x20000, scoped, tag = 'input window, operand 1, single buffered']
    #allocation6 [shape = 's32[1]{0}', space=sflag, size = 0x4, scoped, tag = 'scoped memory for tpu_custom_call.1']
    #allocation7 [shape = 'u8[524288]{0}', space=vmem, size = 0x80000, scoped, tag = 'input window, operand 2, single buffered']
    #allocation8 [shape = 'u8[524288]{0}', space=vmem, size = 0x80000, scoped, tag = 'input window, operand 3, single buffered']
    #allocation9 [shape = 's32[1]{0}', space=sflag, size = 0x4, scoped, tag = 'scoped memory for tpu_custom_call.1']
    #allocation10 [shape = 'u8[131072]{0}', space=vmem, size = 0x20000, scoped, tag = 'input window, operand 4, single buffered']
    #allocation11 [shape = 'u8[65536]{0}', space=vmem, size = 0x10000, scoped, tag = 'output window, operand 0, single buffered']
    %11 = vsyncpa [#allocation3], 0
    %12 = vsyncpa [#allocation6], 0
    %13 = vsyncpa [#allocation9], 0
    %14 = vsyncpa [#allocation4], 0
    // Predicated region
    $region2: #{tpu_custom_call.1} parent=1 // pred_check
      _
    $region3: #{tpu_custom_call.1} parent=1 // pred_check_branch
      %16 = sbr.rel (0) target = $region5
    $region4: #{tpu_custom_call.1} parent=1 // pred_region
      %s18 = ssub.s32 2048, 2048
      %19 = vsyncadd [#allocation3], %s18
      %s20 = sshll.u32 [#allocation2], 4
      %s21 = int_to_ptr.vmem [resolvable:$true] %s20
      %26 = dma.hbm_to_vmem [thread:$0]  %s0, 2048, %s21, [#allocation3], 64, 64, 4
    $region5: #{tpu_custom_call.1} parent=1 // pred_fallthru
      _
    // Predicated region
    $region6: #{tpu_custom_call.1} parent=1 // pred_check
      _
    $region7: #{tpu_custom_call.1} parent=1 // pred_check_branch
      %28 = sbr.rel (0) target = $region9
    $region8: #{tpu_custom_call.1} parent=1 // pred_region
      %s30 = ssub.s32 4096, 4096
      %31 = vsyncadd [#allocation6], %s30
      %s32 = sshll.u32 [#allocation5], 4
      %s33 = int_to_ptr.vmem [resolvable:$true] %s32
      %38 = dma.hbm_to_vmem [thread:$0]  %s1, 4096, %s33, [#allocation6], 256, 256, 16
    $region9: #{tpu_custom_call.1} parent=1 // pred_fallthru
      _
    // Predicated region
    $region10: #{tpu_custom_call.1} parent=1 // pred_check
      _
    $region11: #{tpu_custom_call.1} parent=1 // pred_check_branch
      %40 = sbr.rel (0) target = $region13
    $region12: #{tpu_custom_call.1} parent=1 // pred_region
      %s42 = ssub.s32 16384, 16384
      %43 = vsyncadd [#allocation6], %s42
      %s44 = sshll.u32 [#allocation7], 4
      %s45 = int_to_ptr.vmem [resolvable:$true] %s44
      %50 = dma.hbm_to_vmem [thread:$0]  %s2, 16384, %s45, [#allocation6], 256, 256, 16
    $region13: #{tpu_custom_call.1} parent=1 // pred_fallthru
      _
    // Predicated region
    $region14: #{tpu_custom_call.1} parent=1 // pred_check
      _
    $region15: #{tpu_custom_call.1} parent=1 // pred_check_branch
      %52 = sbr.rel (0) target = $region17
    $region16: #{tpu_custom_call.1} parent=1 // pred_region
      %s54 = ssub.s32 16384, 16384
      %55 = vsyncadd [#allocation9], %s54
      %s56 = sshll.u32 [#allocation8], 4
      %s57 = int_to_ptr.vmem [resolvable:$true] %s56
      %62 = dma.hbm_to_vmem [thread:$0]  %s3, 16384, %s57, [#allocation9], 256, 256, 16
    $region17: #{tpu_custom_call.1} parent=1 // pred_fallthru
      _
    // Predicated region
    $region18: #{tpu_custom_call.1} parent=1 // pred_check
      _
    $region19: #{tpu_custom_call.1} parent=1 // pred_check_branch
      %64 = sbr.rel (0) target = $region21
    $region20: #{tpu_custom_call.1} parent=1 // pred_region
      %s66 = ssub.s32 4096, 4096
      %67 = vsyncadd [#allocation9], %s66
      %s68 = sshll.u32 [#allocation10], 4
      %s69 = int_to_ptr.vmem [resolvable:$true] %s68
      %74 = dma.hbm_to_vmem [thread:$0]  %s4, 4096, %s69, [#allocation9], 64, 64, 4
    $region21: #{tpu_custom_call.1} parent=1 // pred_fallthru
      _
    // Predicated region
    $region22: #{tpu_custom_call.1} parent=1 // pred_check
      _
    $region23: #{tpu_custom_call.1} parent=1 // pred_check_branch
      %76 = sbr.rel (0) target = $region25
    $region24: #{tpu_custom_call.1} parent=1 // pred_region
      _
    $region25: #{tpu_custom_call.1} parent=1 // pred_fallthru
      _
    // Predicated region
    $region26: #{tpu_custom_call.1} parent=1 // pred_check
      _
    $region27: #{tpu_custom_call.1} parent=1 // pred_check_branch
      %78 = sbr.rel (0) target = $region29
    $region28: #{tpu_custom_call.1} parent=1 // pred_region
      %79 = dma.done [#allocation3], 2048
    $region29: #{tpu_custom_call.1} parent=1 // pred_fallthru
      _
    // Predicated region
    $region30: #{tpu_custom_call.1} parent=1 // pred_check
      _
    $region31: #{tpu_custom_call.1} parent=1 // pred_check_branch
      %81 = sbr.rel (0) target = $region33
    $region32: #{tpu_custom_call.1} parent=1 // pred_region
      %82 = dma.done [#allocation6], 4096
    $region33: #{tpu_custom_call.1} parent=1 // pred_fallthru
      _
    // Predicated region
    $region34: #{tpu_custom_call.1} parent=1 // pred_check
      _
    $region35: #{tpu_custom_call.1} parent=1 // pred_check_branch
      %84 = sbr.rel (0) target = $region37
    $region36: #{tpu_custom_call.1} parent=1 // pred_region
      %85 = dma.done [#allocation6], 16384
    $region37: #{tpu_custom_call.1} parent=1 // pred_fallthru
      _
    // Predicated region
    $region38: #{tpu_custom_call.1} parent=1 // pred_check
      _
    $region39: #{tpu_custom_call.1} parent=1 // pred_check_branch
      %87 = sbr.rel (0) target = $region41
    $region40: #{tpu_custom_call.1} parent=1 // pred_region
      %88 = dma.done [#allocation9], 16384
    $region41: #{tpu_custom_call.1} parent=1 // pred_fallthru
      _
    // Predicated region
    $region42: #{tpu_custom_call.1} parent=1 // pred_check
      _
    $region43: #{tpu_custom_call.1} parent=1 // pred_check_branch
      %90 = sbr.rel (0) target = $region45
    $region44: #{tpu_custom_call.1} parent=1 // pred_region
      %91 = dma.done [#allocation9], 4096
    $region45: #{tpu_custom_call.1} parent=1 // pred_fallthru
      _
    %v93 = vld [vmem:[#allocation2] sm:$0xf]
    %v94 = vld [vmem:[#allocation2 + $0x4] sm:$0xf]
    %v95 = vld [vmem:[#allocation2 + $0x8] sm:$0xf]
    %v96 = vld [vmem:[#allocation2 + $0xc] sm:$0xf]
    %v97 = vld [vmem:[#allocation2 + $0x10] sm:$0xf]
    %v98 = vld [vmem:[#allocation2 + $0x14] sm:$0xf]
    %v99 = vld [vmem:[#allocation2 + $0x18] sm:$0xf]
    %v100 = vld [vmem:[#allocation2 + $0x1c] sm:$0xf]
    %v101 = vld [vmem:[#allocation2 + $0x20] sm:$0xf]
    %v102 = vld [vmem:[#allocation2 + $0x24] sm:$0xf]
    %v103 = vld [vmem:[#allocation2 + $0x28] sm:$0xf]
    %v104 = vld [vmem:[#allocation2 + $0x2c] sm:$0xf]
    %v105 = vld [vmem:[#allocation2 + $0x30] sm:$0xf]
    %v106 = vld [vmem:[#allocation2 + $0x34] sm:$0xf]
    %v107 = vld [vmem:[#allocation2 + $0x38] sm:$0xf]
    %v108 = vld [vmem:[#allocation2 + $0x3c] sm:$0xf]
    %v109 = vld [vmem:[#allocation2 + $0x40] sm:$0xf]
    %v110 = vld [vmem:[#allocation2 + $0x44] sm:$0xf]
    %v111 = vld [vmem:[#allocation2 + $0x48] sm:$0xf]
    %v112 = vld [vmem:[#allocation2 + $0x4c] sm:$0xf]
    %v113 = vld [vmem:[#allocation2 + $0x50] sm:$0xf]
    %v114 = vld [vmem:[#allocation2 + $0x54] sm:$0xf]
    %v115 = vld [vmem:[#allocation2 + $0x58] sm:$0xf]
    %v116 = vld [vmem:[#allocation2 + $0x5c] sm:$0xf]
    %v117 = vld [vmem:[#allocation2 + $0x60] sm:$0xf]
    %v118 = vld [vmem:[#allocation2 + $0x64] sm:$0xf]
    %v119 = vld [vmem:[#allocation2 + $0x68] sm:$0xf]
    %v120 = vld [vmem:[#allocation2 + $0x6c] sm:$0xf]
    %v121 = vld [vmem:[#allocation2 + $0x70] sm:$0xf]
    %v122 = vld [vmem:[#allocation2 + $0x74] sm:$0xf]
    %v123 = vld [vmem:[#allocation2 + $0x78] sm:$0xf]
    %v124 = vld [vmem:[#allocation2 + $0x7c] sm:$0xf]
    %v125 = vld [vmem:[%s5] sm:$0xf]
    %v126 = vld [vmem:[%s5 + $0x4] sm:$0xf]
    %v127 = vld [vmem:[%s5 + $0x8] sm:$0xf]
    %v128 = vld [vmem:[%s5 + $0xc] sm:$0x1]
    %v129 = vld [vmem:[#allocation5] sm:$0xff]
    %v130 = vld [vmem:[#allocation5 + $0x8] sm:$0xff]
    %v131 = vld [vmem:[#allocation5 + $0x10] sm:$0xff]
    %v132 = vld [vmem:[#allocation5 + $0x18] sm:$0xff]
    %v133 = vld [vmem:[#allocation5 + $0x20] sm:$0xff]
    %v134 = vld [vmem:[#allocation5 + $0x28] sm:$0xff]
    %v135 = vld [vmem:[#allocation5 + $0x30] sm:$0xff]
    %v136 = vld [vmem:[#allocation5 + $0x38] sm:$0xff]
    %v137 = vld [vmem:[#allocation5 + $0x40] sm:$0xff]
    %v138 = vld [vmem:[#allocation5 + $0x48] sm:$0xff]
    %v139 = vld [vmem:[#allocation5 + $0x50] sm:$0xff]
    %v140 = vld [vmem:[#allocation5 + $0x58] sm:$0xff]
    %v141 = vld [vmem:[#allocation5 + $0x60] sm:$0xff]
    %v142 = vld [vmem:[#allocation5 + $0x68] sm:$0xff]
    %v143 = vld [vmem:[#allocation5 + $0x70] sm:$0xff]
    %v144 = vld [vmem:[#allocation5 + $0x78] sm:$0xff]
    %v145 = vld [vmem:[#allocation5 + $0x80] sm:$0xff]
    %v146 = vld [vmem:[#allocation5 + $0x88] sm:$0xff]
    %v147 = vld [vmem:[#allocation5 + $0x90] sm:$0xff]
    %v148 = vld [vmem:[#allocation5 + $0x98] sm:$0xff]
    %v149 = vld [vmem:[#allocation5 + $0xa0] sm:$0xff]
    %v150 = vld [vmem:[#allocation5 + $0xa8] sm:$0xff]
    %v151 = vld [vmem:[#allocation5 + $0xb0] sm:$0xff]
    %v152 = vld [vmem:[#allocation5 + $0xb8] sm:$0xff]
    %v153 = vld [vmem:[#allocation5 + $0xc0] sm:$0xff]
    %v154 = vld [vmem:[#allocation5 + $0xc8] sm:$0xff]
    %v155 = vld [vmem:[#allocation5 + $0xd0] sm:$0xff]
    %v156 = vld [vmem:[#allocation5 + $0xd8] sm:$0xff]
    %v157 = vld [vmem:[#allocation5 + $0xe0] sm:$0xff]
    %v158 = vld [vmem:[#allocation5 + $0xe8] sm:$0xff]
    %v159 = vld [vmem:[#allocation5 + $0xf0] sm:$0xff]
    %v160 = vld [vmem:[#allocation5 + $0xf8] sm:$0xff]
    %v162 = vlaneseq
    %v163 = vshrl.u32 %v162, 7
    %v164 = vsub.s32 0, %v163
    %v165 = vrot.slane %v125, %v164
    %v166 = vlaneseq
    %v167 = vshrl.u32 %v166, 7
    %v168 = vsub.s32 1, %v167
    %v169 = vrot.slane %v125, %v168
    %v170 = vlaneseq
    %v171 = vshrl.u32 %v170, 7
    %v172 = vsub.s32 2, %v171
    %v173 = vrot.slane %v125, %v172
    %v174 = vlaneseq
    %v175 = vshrl.u32 %v174, 7
    %v176 = vsub.s32 3, %v175
    %v177 = vrot.slane %v125, %v176
    %v214 = vunpack.c.l.b16 %v93
    %v215 = vunpack.c.l.b16 %v94
    %v216 = vunpack.c.l.b16 %v95
    %v217 = vunpack.c.l.b16 %v96
    %v218 = vunpack.c.l.b16 %v97
    %v219 = vunpack.c.l.b16 %v98
    %v220 = vunpack.c.l.b16 %v99
    %v221 = vunpack.c.l.b16 %v100
    %v222 = vunpack.c.l.b16 %v101
    %v223 = vunpack.c.l.b16 %v102
    %v224 = vunpack.c.l.b16 %v103
    %v225 = vunpack.c.l.b16 %v104
    %v226 = vunpack.c.l.b16 %v105
    %v227 = vunpack.c.l.b16 %v106
    %v228 = vunpack.c.l.b16 %v107
    %v229 = vunpack.c.l.b16 %v108
    %v230 = vunpack.c.l.b16 %v109
    %v231 = vunpack.c.l.b16 %v110
    %v232 = vunpack.c.l.b16 %v111
    %v233 = vunpack.c.l.b16 %v112
    %v234 = vunpack.c.l.b16 %v113
    %v235 = vunpack.c.l.b16 %v114
    %v236 = vunpack.c.l.b16 %v115
    %v237 = vunpack.c.l.b16 %v116
    %v238 = vunpack.c.l.b16 %v117
    %v239 = vunpack.c.l.b16 %v118
    %v240 = vunpack.c.l.b16 %v119
    %v241 = vunpack.c.l.b16 %v120
    %v242 = vunpack.c.l.b16 %v121
    %v243 = vunpack.c.l.b16 %v122
    %v244 = vunpack.c.l.b16 %v123
    %v245 = vunpack.c.l.b16 %v124
    %v246 = vpack.c.b16 %v215, %v214
    %v247 = vpack.c.b16 %v217, %v216
    %v248 = vpack.c.b16 %v219, %v218
    %v249 = vpack.c.b16 %v221, %v220
    %v250 = vpack.c.b16 %v223, %v222
    %v251 = vpack.c.b16 %v225, %v224
    %v252 = vpack.c.b16 %v227, %v226
    %v253 = vpack.c.b16 %v229, %v228
    %v254 = vpack.c.b16 %v231, %v230
    %v255 = vpack.c.b16 %v233, %v232
    %v256 = vpack.c.b16 %v235, %v234
    %v257 = vpack.c.b16 %v237, %v236
    %v258 = vpack.c.b16 %v239, %v238
    %v259 = vpack.c.b16 %v241, %v240
    %v260 = vpack.c.b16 %v243, %v242
    %v261 = vpack.c.b16 %v245, %v244
    %v310 = vunpack.c.l.b16 %v129
    %v311 = vunpack.c.h.b16 %v129
    %v312 = vunpack.c.l.b16 %v130
    %v313 = vunpack.c.h.b16 %v130
    %v314 = vunpack.c.l.b16 %v131
    %v315 = vunpack.c.h.b16 %v131
    %v316 = vunpack.c.l.b16 %v132
    %v317 = vunpack.c.h.b16 %v132
    %v318 = vunpack.c.l.b16 %v133
    %v319 = vunpack.c.h.b16 %v133
    %v320 = vunpack.c.l.b16 %v134
    %v321 = vunpack.c.h.b16 %v134
    %v322 = vunpack.c.l.b16 %v135
    %v323 = vunpack.c.h.b16 %v135
    %v324 = vunpack.c.l.b16 %v136
    %v325 = vunpack.c.h.b16 %v136
    %v326 = vunpack.c.l.b16 %v137
    %v327 = vunpack.c.h.b16 %v137
    %v328 = vunpack.c.l.b16 %v138
    %v329 = vunpack.c.h.b16 %v138
    %v330 = vunpack.c.l.b16 %v139
    %v331 = vunpack.c.h.b16 %v139
    %v332 = vunpack.c.l.b16 %v140
    %v333 = vunpack.c.h.b16 %v140
    %v334 = vunpack.c.l.b16 %v141
    %v335 = vunpack.c.h.b16 %v141
    %v336 = vunpack.c.l.b16 %v142
    %v337 = vunpack.c.h.b16 %v142
    %v338 = vunpack.c.l.b16 %v143
    %v339 = vunpack.c.h.b16 %v143
    %v340 = vunpack.c.l.b16 %v144
    %v341 = vunpack.c.h.b16 %v144
    %v342 = vunpack.c.l.b16 %v145
    %v343 = vunpack.c.h.b16 %v145
    %v344 = vunpack.c.l.b16 %v146
    %v345 = vunpack.c.h.b16 %v146
    %v346 = vunpack.c.l.b16 %v147
    %v347 = vunpack.c.h.b16 %v147
    %v348 = vunpack.c.l.b16 %v148
    %v349 = vunpack.c.h.b16 %v148
    %v350 = vunpack.c.l.b16 %v149
    %v351 = vunpack.c.h.b16 %v149
    %v352 = vunpack.c.l.b16 %v150
    %v353 = vunpack.c.h.b16 %v150
    %v354 = vunpack.c.l.b16 %v151
    %v355 = vunpack.c.h.b16 %v151
    %v356 = vunpack.c.l.b16 %v152
    %v357 = vunpack.c.h.b16 %v152
    %v358 = vunpack.c.l.b16 %v153
    %v359 = vunpack.c.h.b16 %v153
    %v360 = vunpack.c.l.b16 %v154
    %v361 = vunpack.c.h.b16 %v154
    %v362 = vunpack.c.l.b16 %v155
    %v363 = vunpack.c.h.b16 %v155
    %v364 = vunpack.c.l.b16 %v156
    %v365 = vunpack.c.h.b16 %v156
    %v366 = vunpack.c.l.b16 %v157
    %v367 = vunpack.c.h.b16 %v157
    %v368 = vunpack.c.l.b16 %v158
    %v369 = vunpack.c.h.b16 %v158
    %v370 = vunpack.c.l.b16 %v159
    %v371 = vunpack.c.h.b16 %v159
    %v372 = vunpack.c.l.b16 %v160
    %v373 = vunpack.c.h.b16 %v160
    %v374 = vpack.c.b16 %v314, %v310
    %v375 = vpack.c.b16 %v315, %v311
    %v376 = vpack.c.b16 %v316, %v312
    %v377 = vpack.c.b16 %v317, %v313
    %v378 = vpack.c.b16 %v322, %v318
    %v379 = vpack.c.b16 %v323, %v319
    %v380 = vpack.c.b16 %v324, %v320
    %v381 = vpack.c.b16 %v325, %v321
    %v382 = vpack.c.b16 %v330, %v326
    %v383 = vpack.c.b16 %v331, %v327
    %v384 = vpack.c.b16 %v332, %v328
    %v385 = vpack.c.b16 %v333, %v329
    %v386 = vpack.c.b16 %v338, %v334
    %v387 = vpack.c.b16 %v339, %v335
    %v388 = vpack.c.b16 %v340, %v336
    %v389 = vpack.c.b16 %v341, %v337
    %v390 = vpack.c.b16 %v346, %v342
    %v391 = vpack.c.b16 %v347, %v343
    %v392 = vpack.c.b16 %v348, %v344
    %v393 = vpack.c.b16 %v349, %v345
    %v394 = vpack.c.b16 %v354, %v350
    %v395 = vpack.c.b16 %v355, %v351
    %v396 = vpack.c.b16 %v356, %v352
    %v397 = vpack.c.b16 %v357, %v353
    %v398 = vpack.c.b16 %v362, %v358
    %v399 = vpack.c.b16 %v363, %v359
    %v400 = vpack.c.b16 %v364, %v360
    %v401 = vpack.c.b16 %v365, %v361
    %v402 = vpack.c.b16 %v370, %v366
    %v403 = vpack.c.b16 %v371, %v367
    %v404 = vpack.c.b16 %v372, %v368
    %v405 = vpack.c.b16 %v373, %v369
    %438 = vmatprep.subr.bf16.mxu0 %v375
    %439 = vmatpush1.bf16.msra.mxu0 %v374
    %440 = vmatprep.subr.bf16.mxu0 %v379
    %441 = vmatpush1.bf16.msra.mxu0 %v378
    %442 = vmatprep.subr.bf16.mxu0 %v383
    %443 = vmatpush1.bf16.msra.mxu0 %v382
    %444 = vmatprep.subr.bf16.mxu0 %v387
    %445 = vmatpush1.bf16.msra.mxu0 %v386
    %446 = vmatprep.subr.bf16.mxu0 %v391
    %447 = vmatpush1.bf16.msra.mxu0 %v390
    %448 = vmatprep.subr.bf16.mxu0 %v395
    %449 = vmatpush1.bf16.msra.mxu0 %v394
    %450 = vmatprep.subr.bf16.mxu0 %v399
    %451 = vmatpush1.bf16.msra.mxu0 %v398
    %452 = vmatprep.subr.bf16.mxu0 %v403
    %453 = vmatpush1.bf16.msra.mxu0 %v402
    %454 = vmatprep.subr.bf16.mxu0 0
    %455 = vmatpush1.bf16.msra.mxu0 0
    %456 = vmatprep.subr.bf16.mxu0 0
    %457 = vmatpush1.bf16.msra.mxu0 0
    %458 = vmatprep.subr.bf16.mxu0 0
    %459 = vmatpush1.bf16.msra.mxu0 0
    %460 = vmatprep.subr.bf16.mxu0 0
    %461 = vmatpush1.bf16.msra.mxu0 0
    %462 = vmatprep.subr.bf16.mxu0 0
    %463 = vmatpush1.bf16.msra.mxu0 0
    %464 = vmatprep.subr.bf16.mxu0 0
    %465 = vmatpush1.bf16.msra.mxu0 0
    %466 = vmatprep.subr.bf16.mxu0 0
    %467 = vmatpush1.bf16.msra.mxu0 0
    %468 = vmatprep.subr.bf16.mxu0 0
    %469 = vmatpush1.bf16.msra.mxu0 0
    %470 = vmatprep.mubr.bf16.mxu0 0
    %471 = vmatmul.mubr.bf16.gmra.mrb[0].mxu0 %v246
    %v472 = vpop.f32.mrb[0].mxu0
    %v473 = vadd.f32 %v165, %v472
    %v474 = vpop.f32.mrb[0].mxu0
    %v475 = vadd.f32 %v169, %v474
    %v476 = vpop.f32.mrb[0].mxu0
    %v477 = vadd.f32 %v165, %v476
    %v478 = vpop.f32.mrb[0].mxu0
    %v479 = vadd.f32 %v169, %v478
    %480 = vmatprep.mubr.bf16.mxu0 0
    %481 = vmatmul.mubr.bf16.gmra.mrb[0].mxu0 %v247
    %v482 = vpop.f32.mrb[0].mxu0
    %v483 = vadd.f32 %v165, %v482
    %v484 = vpop.f32.mrb[0].mxu0
    %v485 = vadd.f32 %v169, %v484
    %v486 = vpop.f32.mrb[0].mxu0
    %v487 = vadd.f32 %v165, %v486
    %v488 = vpop.f32.mrb[0].mxu0
    %v489 = vadd.f32 %v169, %v488
    %490 = vmatprep.mubr.bf16.mxu0 0
    %491 = vmatmul.mubr.bf16.gmra.mrb[0].mxu0 %v248
    %v492 = vpop.f32.mrb[0].mxu0
    %v493 = vadd.f32 %v165, %v492
    %v494 = vpop.f32.mrb[0].mxu0
    %v495 = vadd.f32 %v169, %v494
    %v496 = vpop.f32.mrb[0].mxu0
    %v497 = vadd.f32 %v165, %v496
    %v498 = vpop.f32.mrb[0].mxu0
    %v499 = vadd.f32 %v169, %v498
    %500 = vmatprep.mubr.bf16.mxu0 0
    %501 = vmatmul.mubr.bf16.gmra.mrb[0].mxu0 %v249
    %v502 = vpop.f32.mrb[0].mxu0
    %v503 = vadd.f32 %v165, %v502
    %v504 = vpop.f32.mrb[0].mxu0
    %v505 = vadd.f32 %v169, %v504
    %v506 = vpop.f32.mrb[0].mxu0
    %v507 = vadd.f32 %v165, %v506
    %v508 = vpop.f32.mrb[0].mxu0
    %v509 = vadd.f32 %v169, %v508
    %510 = vmatprep.mubr.bf16.mxu0 0
    %511 = vmatmul.mubr.bf16.gmra.mrb[0].mxu0 %v250
    %v512 = vpop.f32.mrb[0].mxu0
    %v513 = vadd.f32 %v165, %v512
    %v514 = vpop.f32.mrb[0].mxu0
    %v515 = vadd.f32 %v169, %v514
    %v516 = vpop.f32.mrb[0].mxu0
    %v517 = vadd.f32 %v165, %v516
    %v518 = vpop.f32.mrb[0].mxu0
    %v519 = vadd.f32 %v169, %v518
    %520 = vmatprep.mubr.bf16.mxu0 0
    %521 = vmatmul.mubr.bf16.gmra.mrb[0].mxu0 %v251
    %v522 = vpop.f32.mrb[0].mxu0
    %v523 = vadd.f32 %v165, %v522
    %v524 = vpop.f32.mrb[0].mxu0
    %v525 = vadd.f32 %v169, %v524
    %v526 = vpop.f32.mrb[0].mxu0
    %v527 = vadd.f32 %v165, %v526
    %v528 = vpop.f32.mrb[0].mxu0
    %v529 = vadd.f32 %v169, %v528
    %530 = vmatprep.mubr.bf16.mxu0 0
    %531 = vmatmul.mubr.bf16.gmra.mrb[0].mxu0 %v252
    %v532 = vpop.f32.mrb[0].mxu0
    %v533 = vadd.f32 %v165, %v532
    %v534 = vpop.f32.mrb[0].mxu0
    %v535 = vadd.f32 %v169, %v534
    %v536 = vpop.f32.mrb[0].mxu0
    %v537 = vadd.f32 %v165, %v536
    %v538 = vpop.f32.mrb[0].mxu0
    %v539 = vadd.f32 %v169, %v538
    %540 = vmatprep.mubr.bf16.mxu0 0
    %541 = vmatmul.mubr.bf16.gmra.mrb[0].mxu0 %v253
    %v542 = vpop.f32.mrb[0].mxu0
    %v543 = vadd.f32 %v165, %v542
    %v544 = vpop.f32.mrb[0].mxu0
    %v545 = vadd.f32 %v169, %v544
    %v546 = vpop.f32.mrb[0].mxu0
    %v547 = vadd.f32 %v165, %v546
    %v548 = vpop.f32.mrb[0].mxu0
    %v549 = vadd.f32 %v169, %v548
    %550 = vmatprep.mubr.bf16.mxu0 0
    %551 = vmatmul.mubr.bf16.gmra.mrb[0].mxu0 %v254
    %v552 = vpop.f32.mrb[0].mxu0
    %v553 = vadd.f32 %v165, %v552
    %v554 = vpop.f32.mrb[0].mxu0
    %v555 = vadd.f32 %v169, %v554
    %v556 = vpop.f32.mrb[0].mxu0
    %v557 = vadd.f32 %v165, %v556
    %v558 = vpop.f32.mrb[0].mxu0
    %v559 = vadd.f32 %v169, %v558
    %560 = vmatprep.mubr.bf16.mxu0 0
    %561 = vmatmul.mubr.bf16.gmra.mrb[0].mxu0 %v255
    %v562 = vpop.f32.mrb[0].mxu0
    %v563 = vadd.f32 %v165, %v562
    %v564 = vpop.f32.mrb[0].mxu0
    %v565 = vadd.f32 %v169, %v564
    %v566 = vpop.f32.mrb[0].mxu0
    %v567 = vadd.f32 %v165, %v566
    %v568 = vpop.f32.mrb[0].mxu0
    %v569 = vadd.f32 %v169, %v568
    %570 = vmatprep.mubr.bf16.mxu0 0
    %571 = vmatmul.mubr.bf16.gmra.mrb[0].mxu0 %v256
    %v572 = vpop.f32.mrb[0].mxu0
    %v573 = vadd.f32 %v165, %v572
    %v574 = vpop.f32.mrb[0].mxu0
    %v575 = vadd.f32 %v169, %v574
    %v576 = vpop.f32.mrb[0].mxu0
    %v577 = vadd.f32 %v165, %v576
    %v578 = vpop.f32.mrb[0].mxu0
    %v579 = vadd.f32 %v169, %v578
    %580 = vmatprep.mubr.bf16.mxu0 0
    %581 = vmatmul.mubr.bf16.gmra.mrb[0].mxu0 %v257
    %v582 = vpop.f32.mrb[0].mxu0
    %v583 = vadd.f32 %v165, %v582
    %v584 = vpop.f32.mrb[0].mxu0
    %v585 = vadd.f32 %v169, %v584
    %v586 = vpop.f32.mrb[0].mxu0
    %v587 = vadd.f32 %v165, %v586
    %v588 = vpop.f32.mrb[0].mxu0
    %v589 = vadd.f32 %v169, %v588
    %590 = vmatprep.mubr.bf16.mxu0 0
    %591 = vmatmul.mubr.bf16.gmra.mrb[0].mxu0 %v258
    %v592 = vpop.f32.mrb[0].mxu0
    %v593 = vadd.f32 %v165, %v592
    %v594 = vpop.f32.mrb[0].mxu0
    %v595 = vadd.f32 %v169, %v594
    %v596 = vpop.f32.mrb[0].mxu0
    %v597 = vadd.f32 %v165, %v596
    %v598 = vpop.f32.mrb[0].mxu0
    %v599 = vadd.f32 %v169, %v598
    %600 = vmatprep.mubr.bf16.mxu0 0
    %601 = vmatmul.mubr.bf16.gmra.mrb[0].mxu0 %v259
    %v602 = vpop.f32.mrb[0].mxu0
    %v603 = vadd.f32 %v165, %v602
    %v604 = vpop.f32.mrb[0].mxu0
    %v605 = vadd.f32 %v169, %v604
    %v606 = vpop.f32.mrb[0].mxu0
    %v607 = vadd.f32 %v165, %v606
    %v608 = vpop.f32.mrb[0].mxu0
    %v609 = vadd.f32 %v169, %v608
    %610 = vmatprep.mubr.bf16.mxu0 0
    %611 = vmatmul.mubr.bf16.gmra.mrb[0].mxu0 %v260
    %v612 = vpop.f32.mrb[0].mxu0
    %v613 = vadd.f32 %v165, %v612
    %v614 = vpop.f32.mrb[0].mxu0
    %v615 = vadd.f32 %v169, %v614
    %v616 = vpop.f32.mrb[0].mxu0
    %v617 = vadd.f32 %v165, %v616
    %v618 = vpop.f32.mrb[0].mxu0
    %v619 = vadd.f32 %v169, %v618
    %620 = vmatprep.mubr.bf16.mxu0 0
    %621 = vmatmul.mubr.bf16.gmra.mrb[0].mxu0 %v261
    %v622 = vpop.f32.mrb[0].mxu0
    %v623 = vadd.f32 %v165, %v622
    %v624 = vpop.f32.mrb[0].mxu0
    %v625 = vadd.f32 %v169, %v624
    %v626 = vpop.f32.mrb[0].mxu0
    %v627 = vadd.f32 %v165, %v626
    %v628 = vpop.f32.mrb[0].mxu0
    %v629 = vadd.f32 %v169, %v628
    %630 = vdwg.mxu0
    %631 = vmatprep.subr.bf16.mxu0 %v377
    %632 = vmatpush1.bf16.msra.mxu0 %v376
    %633 = vmatprep.subr.bf16.mxu0 %v381
    %634 = vmatpush1.bf16.msra.mxu0 %v380
    %635 = vmatprep.subr.bf16.mxu0 %v385
    %636 = vmatpush1.bf16.msra.mxu0 %v384
    %637 = vmatprep.subr.bf16.mxu0 %v389
    %638 = vmatpush1.bf16.msra.mxu0 %v388
    %639 = vmatprep.subr.bf16.mxu0 %v393
    %640 = vmatpush1.bf16.msra.mxu0 %v392
    %641 = vmatprep.subr.bf16.mxu0 %v397
    %642 = vmatpush1.bf16.msra.mxu0 %v396
    %643 = vmatprep.subr.bf16.mxu0 %v401
    %644 = vmatpush1.bf16.msra.mxu0 %v400
    %645 = vmatprep.subr.bf16.mxu0 %v405
    %646 = vmatpush1.bf16.msra.mxu0 %v404
    %647 = vmatprep.subr.bf16.mxu0 0
    %648 = vmatpush1.bf16.msra.mxu0 0
    %649 = vmatprep.subr.bf16.mxu0 0
    %650 = vmatpush1.bf16.msra.mxu0 0
    %651 = vmatprep.subr.bf16.mxu0 0
    %652 = vmatpush1.bf16.msra.mxu0 0
    %653 = vmatprep.subr.bf16.mxu0 0
    %654 = vmatpush1.bf16.msra.mxu0 0
    %655 = vmatprep.subr.bf16.mxu0 0
    %656 = vmatpush1.bf16.msra.mxu0 0
    %657 = vmatprep.subr.bf16.mxu0 0
    %658 = vmatpush1.bf16.msra.mxu0 0
    %659 = vmatprep.subr.bf16.mxu0 0
    %660 = vmatpush1.bf16.msra.mxu0 0
    %661 = vmatprep.subr.bf16.mxu0 0
    %662 = vmatpush1.bf16.msra.mxu0 0
    %663 = vmatprep.mubr.bf16.mxu0 0
    %664 = vmatmul.mubr.bf16.gmra.mrb[0].mxu0 %v246
    %v665 = vpop.f32.mrb[0].mxu0
    %v666 = vadd.f32 %v173, %v665
    %v667 = vpop.f32.mrb[0].mxu0
    %v668 = vadd.f32 %v177, %v667
    %v669 = vpop.f32.mrb[0].mxu0
    %v670 = vadd.f32 %v173, %v669
    %v671 = vpop.f32.mrb[0].mxu0
    %v672 = vadd.f32 %v177, %v671
    %673 = vmatprep.mubr.bf16.mxu0 0
    %674 = vmatmul.mubr.bf16.gmra.mrb[0].mxu0 %v247
    %v675 = vpop.f32.mrb[0].mxu0
    %v676 = vadd.f32 %v173, %v675
    %v677 = vpop.f32.mrb[0].mxu0
    %v678 = vadd.f32 %v177, %v677
    %v679 = vpop.f32.mrb[0].mxu0
    %v680 = vadd.f32 %v173, %v679
    %v681 = vpop.f32.mrb[0].mxu0
    %v682 = vadd.f32 %v177, %v681
    %683 = vmatprep.mubr.bf16.mxu0 0
    %684 = vmatmul.mubr.bf16.gmra.mrb[0].mxu0 %v248
    %v685 = vpop.f32.mrb[0].mxu0
    %v686 = vadd.f32 %v173, %v685
    %v687 = vpop.f32.mrb[0].mxu0
    %v688 = vadd.f32 %v177, %v687
    %v689 = vpop.f32.mrb[0].mxu0
    %v690 = vadd.f32 %v173, %v689
    %v691 = vpop.f32.mrb[0].mxu0
    %v692 = vadd.f32 %v177, %v691
    %693 = vmatprep.mubr.bf16.mxu0 0
    %694 = vmatmul.mubr.bf16.gmra.mrb[0].mxu0 %v249
    %v695 = vpop.f32.mrb[0].mxu0
    %v696 = vadd.f32 %v173, %v695
    %v697 = vpop.f32.mrb[0].mxu0
    %v698 = vadd.f32 %v177, %v697
    %v699 = vpop.f32.mrb[0].mxu0
    %v700 = vadd.f32 %v173, %v699
    %v701 = vpop.f32.mrb[0].mxu0
    %v702 = vadd.f32 %v177, %v701
    %703 = vmatprep.mubr.bf16.mxu0 0
    %704 = vmatmul.mubr.bf16.gmra.mrb[0].mxu0 %v250
    %v705 = vpop.f32.mrb[0].mxu0
    %v706 = vadd.f32 %v173, %v705
    %v707 = vpop.f32.mrb[0].mxu0
    %v708 = vadd.f32 %v177, %v707
    %v709 = vpop.f32.mrb[0].mxu0
    %v710 = vadd.f32 %v173, %v709
    %v711 = vpop.f32.mrb[0].mxu0
    %v712 = vadd.f32 %v177, %v711
    %713 = vmatprep.mubr.bf16.mxu0 0
    %714 = vmatmul.mubr.bf16.gmra.mrb[0].mxu0 %v251
    %v715 = vpop.f32.mrb[0].mxu0
    %v716 = vadd.f32 %v173, %v715
    %v717 = vpop.f32.mrb[0].mxu0
    %v718 = vadd.f32 %v177, %v717
    %v719 = vpop.f32.mrb[0].mxu0
    %v720 = vadd.f32 %v173, %v719
    %v721 = vpop.f32.mrb[0].mxu0
    %v722 = vadd.f32 %v177, %v721
    %723 = vmatprep.mubr.bf16.mxu0 0
    %724 = vmatmul.mubr.bf16.gmra.mrb[0].mxu0 %v252
    %v725 = vpop.f32.mrb[0].mxu0
    %v726 = vadd.f32 %v173, %v725
    %v727 = vpop.f32.mrb[0].mxu0
    %v728 = vadd.f32 %v177, %v727
    %v729 = vpop.f32.mrb[0].mxu0
    %v730 = vadd.f32 %v173, %v729
    %v731 = vpop.f32.mrb[0].mxu0
    %v732 = vadd.f32 %v177, %v731
    %733 = vmatprep.mubr.bf16.mxu0 0
    %734 = vmatmul.mubr.bf16.gmra.mrb[0].mxu0 %v253
    %v735 = vpop.f32.mrb[0].mxu0
    %v736 = vadd.f32 %v173, %v735
    %v737 = vpop.f32.mrb[0].mxu0
    %v738 = vadd.f32 %v177, %v737
    %v739 = vpop.f32.mrb[0].mxu0
    %v740 = vadd.f32 %v173, %v739
    %v741 = vpop.f32.mrb[0].mxu0
    %v742 = vadd.f32 %v177, %v741
    %743 = vmatprep.mubr.bf16.mxu0 0
    %744 = vmatmul.mubr.bf16.gmra.mrb[0].mxu0 %v254
    %v745 = vpop.f32.mrb[0].mxu0
    %v746 = vadd.f32 %v173, %v745
    %v747 = vpop.f32.mrb[0].mxu0
    %v748 = vadd.f32 %v177, %v747
    %v749 = vpop.f32.mrb[0].mxu0
    %v750 = vadd.f32 %v173, %v749
    %v751 = vpop.f32.mrb[0].mxu0
    %v752 = vadd.f32 %v177, %v751
    %753 = vmatprep.mubr.bf16.mxu0 0
    %754 = vmatmul.mubr.bf16.gmra.mrb[0].mxu0 %v255
    %v755 = vpop.f32.mrb[0].mxu0
    %v756 = vadd.f32 %v173, %v755
    %v757 = vpop.f32.mrb[0].mxu0
    %v758 = vadd.f32 %v177, %v757
    %v759 = vpop.f32.mrb[0].mxu0
    %v760 = vadd.f32 %v173, %v759
    %v761 = vpop.f32.mrb[0].mxu0
    %v762 = vadd.f32 %v177, %v761
    %763 = vmatprep.mubr.bf16.mxu0 0
    %764 = vmatmul.mubr.bf16.gmra.mrb[0].mxu0 %v256
    %v765 = vpop.f32.mrb[0].mxu0
    %v766 = vadd.f32 %v173, %v765
    %v767 = vpop.f32.mrb[0].mxu0
    %v768 = vadd.f32 %v177, %v767
    %v769 = vpop.f32.mrb[0].mxu0
    %v770 = vadd.f32 %v173, %v769
    %v771 = vpop.f32.mrb[0].mxu0
    %v772 = vadd.f32 %v177, %v771
    %773 = vmatprep.mubr.bf16.mxu0 0
    %774 = vmatmul.mubr.bf16.gmra.mrb[0].mxu0 %v257
    %v775 = vpop.f32.mrb[0].mxu0
    %v776 = vadd.f32 %v173, %v775
    %v777 = vpop.f32.mrb[0].mxu0
    %v778 = vadd.f32 %v177, %v777
    %v779 = vpop.f32.mrb[0].mxu0
    %v780 = vadd.f32 %v173, %v779
    %v781 = vpop.f32.mrb[0].mxu0
    %v782 = vadd.f32 %v177, %v781
    %783 = vmatprep.mubr.bf16.mxu0 0
    %784 = vmatmul.mubr.bf16.gmra.mrb[0].mxu0 %v258
    %v785 = vpop.f32.mrb[0].mxu0
    %v786 = vadd.f32 %v173, %v785
    %v787 = vpop.f32.mrb[0].mxu0
    %v788 = vadd.f32 %v177, %v787
    %v789 = vpop.f32.mrb[0].mxu0
    %v790 = vadd.f32 %v173, %v789
    %v791 = vpop.f32.mrb[0].mxu0
    %v792 = vadd.f32 %v177, %v791
    %793 = vmatprep.mubr.bf16.mxu0 0
    %794 = vmatmul.mubr.bf16.gmra.mrb[0].mxu0 %v259
    %v795 = vpop.f32.mrb[0].mxu0
    %v796 = vadd.f32 %v173, %v795
    %v797 = vpop.f32.mrb[0].mxu0
    %v798 = vadd.f32 %v177, %v797
    %v799 = vpop.f32.mrb[0].mxu0
    %v800 = vadd.f32 %v173, %v799
    %v801 = vpop.f32.mrb[0].mxu0
    %v802 = vadd.f32 %v177, %v801
    %803 = vmatprep.mubr.bf16.mxu0 0
    %804 = vmatmul.mubr.bf16.gmra.mrb[0].mxu0 %v260
    %v805 = vpop.f32.mrb[0].mxu0
    %v806 = vadd.f32 %v173, %v805
    %v807 = vpop.f32.mrb[0].mxu0
    %v808 = vadd.f32 %v177, %v807
    %v809 = vpop.f32.mrb[0].mxu0
    %v810 = vadd.f32 %v173, %v809
    %v811 = vpop.f32.mrb[0].mxu0
    %v812 = vadd.f32 %v177, %v811
    %813 = vmatprep.mubr.bf16.mxu0 0
    %814 = vmatmul.mubr.bf16.gmra.mrb[0].mxu0 %v261
    %v815 = vpop.f32.mrb[0].mxu0
    %v816 = vadd.f32 %v173, %v815
    %v817 = vpop.f32.mrb[0].mxu0
    %v818 = vadd.f32 %v177, %v817
    %v819 = vpop.f32.mrb[0].mxu0
    %v820 = vadd.f32 %v173, %v819
    %v821 = vpop.f32.mrb[0].mxu0
    %v822 = vadd.f32 %v177, %v821
    %823 = vdwg.mxu0
    %v824 = vmax.f32 %v473, 0.0
    %v825 = vmax.f32 %v475, 0.0
    %v826 = vmax.f32 %v666, 0.0
    %v827 = vmax.f32 %v668, 0.0
    %v828 = vmax.f32 %v477, 0.0
    %v829 = vmax.f32 %v479, 0.0
    %v830 = vmax.f32 %v670, 0.0
    %v831 = vmax.f32 %v672, 0.0
    %v832 = vmax.f32 %v483, 0.0
    %v833 = vmax.f32 %v485, 0.0
    %v834 = vmax.f32 %v676, 0.0
    %v835 = vmax.f32 %v678, 0.0
    %v836 = vmax.f32 %v487, 0.0
    %v837 = vmax.f32 %v489, 0.0
    %v838 = vmax.f32 %v680, 0.0
    %v839 = vmax.f32 %v682, 0.0
    %v840 = vmax.f32 %v493, 0.0
    %v841 = vmax.f32 %v495, 0.0
    %v842 = vmax.f32 %v686, 0.0
    %v843 = vmax.f32 %v688, 0.0
    %v844 = vmax.f32 %v497, 0.0
    %v845 = vmax.f32 %v499, 0.0
    %v846 = vmax.f32 %v690, 0.0
    %v847 = vmax.f32 %v692, 0.0
    %v848 = vmax.f32 %v503, 0.0
    %v849 = vmax.f32 %v505, 0.0
    %v850 = vmax.f32 %v696, 0.0
    %v851 = vmax.f32 %v698, 0.0
    %v852 = vmax.f32 %v507, 0.0
    %v853 = vmax.f32 %v509, 0.0
    %v854 = vmax.f32 %v700, 0.0
    %v855 = vmax.f32 %v702, 0.0
    %v856 = vmax.f32 %v513, 0.0
    %v857 = vmax.f32 %v515, 0.0
    %v858 = vmax.f32 %v706, 0.0
    %v859 = vmax.f32 %v708, 0.0
    %v860 = vmax.f32 %v517, 0.0
    %v861 = vmax.f32 %v519, 0.0
    %v862 = vmax.f32 %v710, 0.0
    %v863 = vmax.f32 %v712, 0.0
    %v864 = vmax.f32 %v523, 0.0
    %v865 = vmax.f32 %v525, 0.0
    %v866 = vmax.f32 %v716, 0.0
    %v867 = vmax.f32 %v718, 0.0
    %v868 = vmax.f32 %v527, 0.0
    %v869 = vmax.f32 %v529, 0.0
    %v870 = vmax.f32 %v720, 0.0
    %v871 = vmax.f32 %v722, 0.0
    %v872 = vmax.f32 %v533, 0.0
    %v873 = vmax.f32 %v535, 0.0
    %v874 = vmax.f32 %v726, 0.0
    %v875 = vmax.f32 %v728, 0.0
    %v876 = vmax.f32 %v537, 0.0
    %v877 = vmax.f32 %v539, 0.0
    %v878 = vmax.f32 %v730, 0.0
    %v879 = vmax.f32 %v732, 0.0
    %v880 = vmax.f32 %v543, 0.0
    %v881 = vmax.f32 %v545, 0.0
    %v882 = vmax.f32 %v736, 0.0
    %v883 = vmax.f32 %v738, 0.0
    %v884 = vmax.f32 %v547, 0.0
    %v885 = vmax.f32 %v549, 0.0
    %v886 = vmax.f32 %v740, 0.0
    %v887 = vmax.f32 %v742, 0.0
    %v888 = vmax.f32 %v553, 0.0
    %v889 = vmax.f32 %v555, 0.0
    %v890 = vmax.f32 %v746, 0.0
    %v891 = vmax.f32 %v748, 0.0
    %v892 = vmax.f32 %v557, 0.0
    %v893 = vmax.f32 %v559, 0.0
    %v894 = vmax.f32 %v750, 0.0
    %v895 = vmax.f32 %v752, 0.0
    %v896 = vmax.f32 %v563, 0.0
    %v897 = vmax.f32 %v565, 0.0
    %v898 = vmax.f32 %v756, 0.0
    %v899 = vmax.f32 %v758, 0.0
    %v900 = vmax.f32 %v567, 0.0
    %v901 = vmax.f32 %v569, 0.0
    %v902 = vmax.f32 %v760, 0.0
    %v903 = vmax.f32 %v762, 0.0
    %v904 = vmax.f32 %v573, 0.0
    %v905 = vmax.f32 %v575, 0.0
    %v906 = vmax.f32 %v766, 0.0
    %v907 = vmax.f32 %v768, 0.0
    %v908 = vmax.f32 %v577, 0.0
    %v909 = vmax.f32 %v579, 0.0
    %v910 = vmax.f32 %v770, 0.0
    %v911 = vmax.f32 %v772, 0.0
    %v912 = vmax.f32 %v583, 0.0
    %v913 = vmax.f32 %v585, 0.0
    %v914 = vmax.f32 %v776, 0.0
    %v915 = vmax.f32 %v778, 0.0
    %v916 = vmax.f32 %v587, 0.0
    %v917 = vmax.f32 %v589, 0.0
    %v918 = vmax.f32 %v780, 0.0
    %v919 = vmax.f32 %v782, 0.0
    %v920 = vmax.f32 %v593, 0.0
    %v921 = vmax.f32 %v595, 0.0
    %v922 = vmax.f32 %v786, 0.0
    %v923 = vmax.f32 %v788, 0.0
    %v924 = vmax.f32 %v597, 0.0
    %v925 = vmax.f32 %v599, 0.0
    %v926 = vmax.f32 %v790, 0.0
    %v927 = vmax.f32 %v792, 0.0
    %v928 = vmax.f32 %v603, 0.0
    %v929 = vmax.f32 %v605, 0.0
    %v930 = vmax.f32 %v796, 0.0
    %v931 = vmax.f32 %v798, 0.0
    %v932 = vmax.f32 %v607, 0.0
    %v933 = vmax.f32 %v609, 0.0
    %v934 = vmax.f32 %v800, 0.0
    %v935 = vmax.f32 %v802, 0.0
    %v936 = vmax.f32 %v613, 0.0
    %v937 = vmax.f32 %v615, 0.0
    %v938 = vmax.f32 %v806, 0.0
    %v939 = vmax.f32 %v808, 0.0
    %v940 = vmax.f32 %v617, 0.0
    %v941 = vmax.f32 %v619, 0.0
    %v942 = vmax.f32 %v810, 0.0
    %v943 = vmax.f32 %v812, 0.0
    %v944 = vmax.f32 %v623, 0.0
    %v945 = vmax.f32 %v625, 0.0
    %v946 = vmax.f32 %v816, 0.0
    %v947 = vmax.f32 %v818, 0.0
    %v948 = vmax.f32 %v627, 0.0
    %v949 = vmax.f32 %v629, 0.0
    %v950 = vmax.f32 %v820, 0.0
    %v951 = vmax.f32 %v822, 0.0
    %v952 = vpack.c.bf16 %v828, %v824
    %v953 = vpack.c.bf16 %v829, %v825
    %v954 = vpack.c.bf16 %v830, %v826
    %v955 = vpack.c.bf16 %v831, %v827
    %v956 = vpack.c.bf16 %v836, %v832
    %v957 = vpack.c.bf16 %v837, %v833
    %v958 = vpack.c.bf16 %v838, %v834
    %v959 = vpack.c.bf16 %v839, %v835
    %v960 = vpack.c.bf16 %v844, %v840
    %v961 = vpack.c.bf16 %v845, %v841
    %v962 = vpack.c.bf16 %v846, %v842
    %v963 = vpack.c.bf16 %v847, %v843
    %v964 = vpack.c.bf16 %v852, %v848
    %v965 = vpack.c.bf16 %v853, %v849
    %v966 = vpack.c.bf16 %v854, %v850
    %v967 = vpack.c.bf16 %v855, %v851
    %v968 = vpack.c.bf16 %v860, %v856
    %v969 = vpack.c.bf16 %v861, %v857
    %v970 = vpack.c.bf16 %v862, %v858
    %v971 = vpack.c.bf16 %v863, %v859
    %v972 = vpack.c.bf16 %v868, %v864
    %v973 = vpack.c.bf16 %v869, %v865
    %v974 = vpack.c.bf16 %v870, %v866
    %v975 = vpack.c.bf16 %v871, %v867
    %v976 = vpack.c.bf16 %v876, %v872
    %v977 = vpack.c.bf16 %v877, %v873
    %v978 = vpack.c.bf16 %v878, %v874
    %v979 = vpack.c.bf16 %v879, %v875
    %v980 = vpack.c.bf16 %v884, %v880
    %v981 = vpack.c.bf16 %v885, %v881
    %v982 = vpack.c.bf16 %v886, %v882
    %v983 = vpack.c.bf16 %v887, %v883
    %v984 = vpack.c.bf16 %v892, %v888
    %v985 = vpack.c.bf16 %v893, %v889
    %v986 = vpack.c.bf16 %v894, %v890
    %v987 = vpack.c.bf16 %v895, %v891
    %v988 = vpack.c.bf16 %v900, %v896
    %v989 = vpack.c.bf16 %v901, %v897
    %v990 = vpack.c.bf16 %v902, %v898
    %v991 = vpack.c.bf16 %v903, %v899
    %v992 = vpack.c.bf16 %v908, %v904
    %v993 = vpack.c.bf16 %v909, %v905
    %v994 = vpack.c.bf16 %v910, %v906
    %v995 = vpack.c.bf16 %v911, %v907
    %v996 = vpack.c.bf16 %v916, %v912
    %v997 = vpack.c.bf16 %v917, %v913
    %v998 = vpack.c.bf16 %v918, %v914
    %v999 = vpack.c.bf16 %v919, %v915
    %v1000 = vpack.c.bf16 %v924, %v920
    %v1001 = vpack.c.bf16 %v925, %v921
    %v1002 = vpack.c.bf16 %v926, %v922
    %v1003 = vpack.c.bf16 %v927, %v923
    %v1004 = vpack.c.bf16 %v932, %v928
    %v1005 = vpack.c.bf16 %v933, %v929
    %v1006 = vpack.c.bf16 %v934, %v930
    %v1007 = vpack.c.bf16 %v935, %v931
    %v1008 = vpack.c.bf16 %v940, %v936
    %v1009 = vpack.c.bf16 %v941, %v937
    %v1010 = vpack.c.bf16 %v942, %v938
    %v1011 = vpack.c.bf16 %v943, %v939
    %v1012 = vpack.c.bf16 %v948, %v944
    %v1013 = vpack.c.bf16 %v949, %v945
    %v1014 = vpack.c.bf16 %v950, %v946
    %v1015 = vpack.c.bf16 %v951, %v947
    %v1016 = vld [vmem:[#allocation7] sm:$0xff]
    %v1017 = vld [vmem:[#allocation7 + $0x8] sm:$0xff]
    %v1018 = vld [vmem:[#allocation7 + $0x10] sm:$0xff]
    %v1019 = vld [vmem:[#allocation7 + $0x18] sm:$0xff]
    %v1020 = vld [vmem:[#allocation7 + $0x20] sm:$0xff]
    %v1021 = vld [vmem:[#allocation7 + $0x28] sm:$0xff]
    %v1022 = vld [vmem:[#allocation7 + $0x30] sm:$0xff]
    %v1023 = vld [vmem:[#allocation7 + $0x38] sm:$0xff]
    %v1024 = vld [vmem:[#allocation7 + $0x40] sm:$0xff]
    %v1025 = vld [vmem:[#allocation7 + $0x48] sm:$0xff]
    %v1026 = vld [vmem:[#allocation7 + $0x50] sm:$0xff]
    %v1027 = vld [vmem:[#allocation7 + $0x58] sm:$0xff]
    %v1028 = vld [vmem:[#allocation7 + $0x60] sm:$0xff]
    %v1029 = vld [vmem:[#allocation7 + $0x68] sm:$0xff]
    %v1030 = vld [vmem:[#allocation7 + $0x70] sm:$0xff]
    %v1031 = vld [vmem:[#allocation7 + $0x78] sm:$0xff]
    %v1032 = vld [vmem:[#allocation7 + $0x80] sm:$0xff]
    %v1033 = vld [vmem:[#allocation7 + $0x88] sm:$0xff]
    %v1034 = vld [vmem:[#allocation7 + $0x90] sm:$0xff]
    %v1035 = vld [vmem:[#allocation7 + $0x98] sm:$0xff]
    %v1036 = vld [vmem:[#allocation7 + $0xa0] sm:$0xff]
    %v1037 = vld [vmem:[#allocation7 + $0xa8] sm:$0xff]
    %v1038 = vld [vmem:[#allocation7 + $0xb0] sm:$0xff]
    %v1039 = vld [vmem:[#allocation7 + $0xb8] sm:$0xff]
    %v1040 = vld [vmem:[#allocation7 + $0xc0] sm:$0xff]
    %v1041 = vld [vmem:[#allocation7 + $0xc8] sm:$0xff]
    %v1042 = vld [vmem:[#allocation7 + $0xd0] sm:$0xff]
    %v1043 = vld [vmem:[#allocation7 + $0xd8] sm:$0xff]
    %v1044 = vld [vmem:[#allocation7 + $0xe0] sm:$0xff]
    %v1045 = vld [vmem:[#allocation7 + $0xe8] sm:$0xff]
    %v1046 = vld [vmem:[#allocation7 + $0xf0] sm:$0xff]
    %v1047 = vld [vmem:[#allocation7 + $0xf8] sm:$0xff]
    %v1048 = vld [vmem:[#allocation7 + $0x100] sm:$0xff]
    %v1049 = vld [vmem:[#allocation7 + $0x108] sm:$0xff]
    %v1050 = vld [vmem:[#allocation7 + $0x110] sm:$0xff]
    %v1051 = vld [vmem:[#allocation7 + $0x118] sm:$0xff]
    %v1052 = vld [vmem:[#allocation7 + $0x120] sm:$0xff]
    %v1053 = vld [vmem:[#allocation7 + $0x128] sm:$0xff]
    %v1054 = vld [vmem:[#allocation7 + $0x130] sm:$0xff]
    %v1055 = vld [vmem:[#allocation7 + $0x138] sm:$0xff]
    %v1056 = vld [vmem:[#allocation7 + $0x140] sm:$0xff]
    %v1057 = vld [vmem:[#allocation7 + $0x148] sm:$0xff]
    %v1058 = vld [vmem:[#allocation7 + $0x150] sm:$0xff]
    %v1059 = vld [vmem:[#allocation7 + $0x158] sm:$0xff]
    %v1060 = vld [vmem:[#allocation7 + $0x160] sm:$0xff]
    %v1061 = vld [vmem:[#allocation7 + $0x168] sm:$0xff]
    %v1062 = vld [vmem:[#allocation7 + $0x170] sm:$0xff]
    %v1063 = vld [vmem:[#allocation7 + $0x178] sm:$0xff]
    %v1064 = vld [vmem:[#allocation7 + $0x180] sm:$0xff]
    %v1065 = vld [vmem:[#allocation7 + $0x188] sm:$0xff]
    %v1066 = vld [vmem:[#allocation7 + $0x190] sm:$0xff]
    %v1067 = vld [vmem:[#allocation7 + $0x198] sm:$0xff]
    %v1068 = vld [vmem:[#allocation7 + $0x1a0] sm:$0xff]
    %v1069 = vld [vmem:[#allocation7 + $0x1a8] sm:$0xff]
    %v1070 = vld [vmem:[#allocation7 + $0x1b0] sm:$0xff]
    %v1071 = vld [vmem:[#allocation7 + $0x1b8] sm:$0xff]
    %v1072 = vld [vmem:[#allocation7 + $0x1c0] sm:$0xff]
    %v1073 = vld [vmem:[#allocation7 + $0x1c8] sm:$0xff]
    %v1074 = vld [vmem:[#allocation7 + $0x1d0] sm:$0xff]
    %v1075 = vld [vmem:[#allocation7 + $0x1d8] sm:$0xff]
    %v1076 = vld [vmem:[#allocation7 + $0x1e0] sm:$0xff]
    %v1077 = vld [vmem:[#allocation7 + $0x1e8] sm:$0xff]
    %v1078 = vld [vmem:[#allocation7 + $0x1f0] sm:$0xff]
    %v1079 = vld [vmem:[#allocation7 + $0x1f8] sm:$0xff]
    %v1080 = vld [vmem:[#allocation7 + $0x200] sm:$0xff]
    %v1081 = vld [vmem:[#allocation7 + $0x208] sm:$0xff]
    %v1082 = vld [vmem:[#allocation7 + $0x210] sm:$0xff]
    %v1083 = vld [vmem:[#allocation7 + $0x218] sm:$0xff]
    %v1084 = vld [vmem:[#allocation7 + $0x220] sm:$0xff]
    %v1085 = vld [vmem:[#allocation7 + $0x228] sm:$0xff]
    %v1086 = vld [vmem:[#allocation7 + $0x230] sm:$0xff]
    %v1087 = vld [vmem:[#allocation7 + $0x238] sm:$0xff]
    %v1088 = vld [vmem:[#allocation7 + $0x240] sm:$0xff]
    %v1089 = vld [vmem:[#allocation7 + $0x248] sm:$0xff]
    %v1090 = vld [vmem:[#allocation7 + $0x250] sm:$0xff]
    %v1091 = vld [vmem:[#allocation7 + $0x258] sm:$0xff]
    %v1092 = vld [vmem:[#allocation7 + $0x260] sm:$0xff]
    %v1093 = vld [vmem:[#allocation7 + $0x268] sm:$0xff]
    %v1094 = vld [vmem:[#allocation7 + $0x270] sm:$0xff]
    %v1095 = vld [vmem:[#allocation7 + $0x278] sm:$0xff]
    %v1096 = vld [vmem:[#allocation7 + $0x280] sm:$0xff]
    %v1097 = vld [vmem:[#allocation7 + $0x288] sm:$0xff]
    %v1098 = vld [vmem:[#allocation7 + $0x290] sm:$0xff]
    %v1099 = vld [vmem:[#allocation7 + $0x298] sm:$0xff]
    %v1100 = vld [vmem:[#allocation7 + $0x2a0] sm:$0xff]
    %v1101 = vld [vmem:[#allocation7 + $0x2a8] sm:$0xff]
    %v1102 = vld [vmem:[#allocation7 + $0x2b0] sm:$0xff]
    %v1103 = vld [vmem:[#allocation7 + $0x2b8] sm:$0xff]
    %v1104 = vld [vmem:[#allocation7 + $0x2c0] sm:$0xff]
    %v1105 = vld [vmem:[#allocation7 + $0x2c8] sm:$0xff]
    %v1106 = vld [vmem:[#allocation7 + $0x2d0] sm:$0xff]
    %v1107 = vld [vmem:[#allocation7 + $0x2d8] sm:$0xff]
    %v1108 = vld [vmem:[#allocation7 + $0x2e0] sm:$0xff]
    %v1109 = vld [vmem:[#allocation7 + $0x2e8] sm:$0xff]
    %v1110 = vld [vmem:[#allocation7 + $0x2f0] sm:$0xff]
    %v1111 = vld [vmem:[#allocation7 + $0x2f8] sm:$0xff]
    %v1112 = vld [vmem:[#allocation7 + $0x300] sm:$0xff]
    %v1113 = vld [vmem:[#allocation7 + $0x308] sm:$0xff]
    %v1114 = vld [vmem:[#allocation7 + $0x310] sm:$0xff]
    %v1115 = vld [vmem:[#allocation7 + $0x318] sm:$0xff]
    %v1116 = vld [vmem:[#allocation7 + $0x320] sm:$0xff]
    %v1117 = vld [vmem:[#allocation7 + $0x328] sm:$0xff]
    %v1118 = vld [vmem:[#allocation7 + $0x330] sm:$0xff]
    %v1119 = vld [vmem:[#allocation7 + $0x338] sm:$0xff]
    %v1120 = vld [vmem:[#allocation7 + $0x340] sm:$0xff]
    %v1121 = vld [vmem:[#allocation7 + $0x348] sm:$0xff]
    %v1122 = vld [vmem:[#allocation7 + $0x350] sm:$0xff]
    %v1123 = vld [vmem:[#allocation7 + $0x358] sm:$0xff]
    %v1124 = vld [vmem:[#allocation7 + $0x360] sm:$0xff]
    %v1125 = vld [vmem:[#allocation7 + $0x368] sm:$0xff]
    %v1126 = vld [vmem:[#allocation7 + $0x370] sm:$0xff]
    %v1127 = vld [vmem:[#allocation7 + $0x378] sm:$0xff]
    %v1128 = vld [vmem:[#allocation7 + $0x380] sm:$0xff]
    %v1129 = vld [vmem:[#allocation7 + $0x388] sm:$0xff]
    %v1130 = vld [vmem:[#allocation7 + $0x390] sm:$0xff]
    %v1131 = vld [vmem:[#allocation7 + $0x398] sm:$0xff]
    %v1132 = vld [vmem:[#allocation7 + $0x3a0] sm:$0xff]
    %v1133 = vld [vmem:[#allocation7 + $0x3a8] sm:$0xff]
    %v1134 = vld [vmem:[#allocation7 + $0x3b0] sm:$0xff]
    %v1135 = vld [vmem:[#allocation7 + $0x3b8] sm:$0xff]
    %v1136 = vld [vmem:[#allocation7 + $0x3c0] sm:$0xff]
    %v1137 = vld [vmem:[#allocation7 + $0x3c8] sm:$0xff]
    %v1138 = vld [vmem:[#allocation7 + $0x3d0] sm:$0xff]
    %v1139 = vld [vmem:[#allocation7 + $0x3d8] sm:$0xff]
    %v1140 = vld [vmem:[#allocation7 + $0x3e0] sm:$0xff]
    %v1141 = vld [vmem:[#allocation7 + $0x3e8] sm:$0xff]
    %v1142 = vld [vmem:[#allocation7 + $0x3f0] sm:$0xff]
    %v1143 = vld [vmem:[#allocation7 + $0x3f8] sm:$0xff]
    %v1145 = vlaneseq
    %v1146 = vshrl.u32 %v1145, 7
    %v1147 = vsub.s32 0, %v1146
    %v1148 = vrot.slane %v126, %v1147
    %v1149 = vlaneseq
    %v1150 = vshrl.u32 %v1149, 7
    %v1151 = vsub.s32 1, %v1150
    %v1152 = vrot.slane %v126, %v1151
    %v1153 = vlaneseq
    %v1154 = vshrl.u32 %v1153, 7
    %v1155 = vsub.s32 2, %v1154
    %v1156 = vrot.slane %v126, %v1155
    %v1157 = vlaneseq
    %v1158 = vshrl.u32 %v1157, 7
    %v1159 = vsub.s32 3, %v1158
    %v1160 = vrot.slane %v126, %v1159
    %v1293 = vunpack.c.l.b16 %v1016
    %v1294 = vunpack.c.h.b16 %v1016
    %v1295 = vunpack.c.l.b16 %v1017
    %v1296 = vunpack.c.h.b16 %v1017
    %v1297 = vunpack.c.l.b16 %v1018
    %v1298 = vunpack.c.h.b16 %v1018
    %v1299 = vunpack.c.l.b16 %v1019
    %v1300 = vunpack.c.h.b16 %v1019
    %v1301 = vunpack.c.l.b16 %v1020
    %v1302 = vunpack.c.h.b16 %v1020
    %v1303 = vunpack.c.l.b16 %v1021
    %v1304 = vunpack.c.h.b16 %v1021
    %v1305 = vunpack.c.l.b16 %v1022
    %v1306 = vunpack.c.h.b16 %v1022
    %v1307 = vunpack.c.l.b16 %v1023
    %v1308 = vunpack.c.h.b16 %v1023
    %v1309 = vunpack.c.l.b16 %v1024
    %v1310 = vunpack.c.h.b16 %v1024
    %v1311 = vunpack.c.l.b16 %v1025
    %v1312 = vunpack.c.h.b16 %v1025
    %v1313 = vunpack.c.l.b16 %v1026
    %v1314 = vunpack.c.h.b16 %v1026
    %v1315 = vunpack.c.l.b16 %v1027
    %v1316 = vunpack.c.h.b16 %v1027
    %v1317 = vunpack.c.l.b16 %v1028
    %v1318 = vunpack.c.h.b16 %v1028
    %v1319 = vunpack.c.l.b16 %v1029
    %v1320 = vunpack.c.h.b16 %v1029
    %v1321 = vunpack.c.l.b16 %v1030
    %v1322 = vunpack.c.h.b16 %v1030
    %v1323 = vunpack.c.l.b16 %v1031
    %v1324 = vunpack.c.h.b16 %v1031
    %v1325 = vunpack.c.l.b16 %v1032
    %v1326 = vunpack.c.h.b16 %v1032
    %v1327 = vunpack.c.l.b16 %v1033
    %v1328 = vunpack.c.h.b16 %v1033
    %v1329 = vunpack.c.l.b16 %v1034
    %v1330 = vunpack.c.h.b16 %v1034
    %v1331 = vunpack.c.l.b16 %v1035
    %v1332 = vunpack.c.h.b16 %v1035
    %v1333 = vunpack.c.l.b16 %v1036
    %v1334 = vunpack.c.h.b16 %v1036
    %v1335 = vunpack.c.l.b16 %v1037
    %v1336 = vunpack.c.h.b16 %v1037
    %v1337 = vunpack.c.l.b16 %v1038
    %v1338 = vunpack.c.h.b16 %v1038
    %v1339 = vunpack.c.l.b16 %v1039
    %v1340 = vunpack.c.h.b16 %v1039
    %v1341 = vunpack.c.l.b16 %v1040
    %v1342 = vunpack.c.h.b16 %v1040
    %v1343 = vunpack.c.l.b16 %v1041
    %v1344 = vunpack.c.h.b16 %v1041
    %v1345 = vunpack.c.l.b16 %v1042
    %v1346 = vunpack.c.h.b16 %v1042
    %v1347 = vunpack.c.l.b16 %v1043
    %v1348 = vunpack.c.h.b16 %v1043
    %v1349 = vunpack.c.l.b16 %v1044
    %v1350 = vunpack.c.h.b16 %v1044
    %v1351 = vunpack.c.l.b16 %v1045
    %v1352 = vunpack.c.h.b16 %v1045
    %v1353 = vunpack.c.l.b16 %v1046
    %v1354 = vunpack.c.h.b16 %v1046
    %v1355 = vunpack.c.l.b16 %v1047
    %v1356 = vunpack.c.h.b16 %v1047
    %v1357 = vunpack.c.l.b16 %v1048
    %v1358 = vunpack.c.h.b16 %v1048
    %v1359 = vunpack.c.l.b16 %v1049
    %v1360 = vunpack.c.h.b16 %v1049
    %v1361 = vunpack.c.l.b16 %v1050
    %v1362 = vunpack.c.h.b16 %v1050
    %v1363 = vunpack.c.l.b16 %v1051
    %v1364 = vunpack.c.h.b16 %v1051
    %v1365 = vunpack.c.l.b16 %v1052
    %v1366 = vunpack.c.h.b16 %v1052
    %v1367 = vunpack.c.l.b16 %v1053
    %v1368 = vunpack.c.h.b16 %v1053
    %v1369 = vunpack.c.l.b16 %v1054
    %v1370 = vunpack.c.h.b16 %v1054
    %v1371 = vunpack.c.l.b16 %v1055
    %v1372 = vunpack.c.h.b16 %v1055
    %v1373 = vunpack.c.l.b16 %v1056
    %v1374 = vunpack.c.h.b16 %v1056
    %v1375 = vunpack.c.l.b16 %v1057
    %v1376 = vunpack.c.h.b16 %v1057
    %v1377 = vunpack.c.l.b16 %v1058
    %v1378 = vunpack.c.h.b16 %v1058
    %v1379 = vunpack.c.l.b16 %v1059
    %v1380 = vunpack.c.h.b16 %v1059
    %v1381 = vunpack.c.l.b16 %v1060
    %v1382 = vunpack.c.h.b16 %v1060
    %v1383 = vunpack.c.l.b16 %v1061
    %v1384 = vunpack.c.h.b16 %v1061
    %v1385 = vunpack.c.l.b16 %v1062
    %v1386 = vunpack.c.h.b16 %v1062
    %v1387 = vunpack.c.l.b16 %v1063
    %v1388 = vunpack.c.h.b16 %v1063
    %v1389 = vunpack.c.l.b16 %v1064
    %v1390 = vunpack.c.h.b16 %v1064
    %v1391 = vunpack.c.l.b16 %v1065
    %v1392 = vunpack.c.h.b16 %v1065
    %v1393 = vunpack.c.l.b16 %v1066
    %v1394 = vunpack.c.h.b16 %v1066
    %v1395 = vunpack.c.l.b16 %v1067
    %v1396 = vunpack.c.h.b16 %v1067
    %v1397 = vunpack.c.l.b16 %v1068
    %v1398 = vunpack.c.h.b16 %v1068
    %v1399 = vunpack.c.l.b16 %v1069
    %v1400 = vunpack.c.h.b16 %v1069
    %v1401 = vunpack.c.l.b16 %v1070
    %v1402 = vunpack.c.h.b16 %v1070
    %v1403 = vunpack.c.l.b16 %v1071
    %v1404 = vunpack.c.h.b16 %v1071
    %v1405 = vunpack.c.l.b16 %v1072
    %v1406 = vunpack.c.h.b16 %v1072
    %v1407 = vunpack.c.l.b16 %v1073
    %v1408 = vunpack.c.h.b16 %v1073
    %v1409 = vunpack.c.l.b16 %v1074
    %v1410 = vunpack.c.h.b16 %v1074
    %v1411 = vunpack.c.l.b16 %v1075
    %v1412 = vunpack.c.h.b16 %v1075
    %v1413 = vunpack.c.l.b16 %v1076
    %v1414 = vunpack.c.h.b16 %v1076
    %v1415 = vunpack.c.l.b16 %v1077
    %v1416 = vunpack.c.h.b16 %v1077
    %v1417 = vunpack.c.l.b16 %v1078
    %v1418 = vunpack.c.h.b16 %v1078
    %v1419 = vunpack.c.l.b16 %v1079
    %v1420 = vunpack.c.h.b16 %v1079
    %v1421 = vunpack.c.l.b16 %v1080
    %v1422 = vunpack.c.h.b16 %v1080
    %v1423 = vunpack.c.l.b16 %v1081
    %v1424 = vunpack.c.h.b16 %v1081
    %v1425 = vunpack.c.l.b16 %v1082
    %v1426 = vunpack.c.h.b16 %v1082
    %v1427 = vunpack.c.l.b16 %v1083
    %v1428 = vunpack.c.h.b16 %v1083
    %v1429 = vunpack.c.l.b16 %v1084
    %v1430 = vunpack.c.h.b16 %v1084
    %v1431 = vunpack.c.l.b16 %v1085
    %v1432 = vunpack.c.h.b16 %v1085
    %v1433 = vunpack.c.l.b16 %v1086
    %v1434 = vunpack.c.h.b16 %v1086
    %v1435 = vunpack.c.l.b16 %v1087
    %v1436 = vunpack.c.h.b16 %v1087
    %v1437 = vunpack.c.l.b16 %v1088
    %v1438 = vunpack.c.h.b16 %v1088
    %v1439 = vunpack.c.l.b16 %v1089
    %v1440 = vunpack.c.h.b16 %v1089
    %v1441 = vunpack.c.l.b16 %v1090
    %v1442 = vunpack.c.h.b16 %v1090
    %v1443 = vunpack.c.l.b16 %v1091
    %v1444 = vunpack.c.h.b16 %v1091
    %v1445 = vunpack.c.l.b16 %v1092
    %v1446 = vunpack.c.h.b16 %v1092
    %v1447 = vunpack.c.l.b16 %v1093
    %v1448 = vunpack.c.h.b16 %v1093
    %v1449 = vunpack.c.l.b16 %v1094
    %v1450 = vunpack.c.h.b16 %v1094
    %v1451 = vunpack.c.l.b16 %v1095
    %v1452 = vunpack.c.h.b16 %v1095
    %v1453 = vunpack.c.l.b16 %v1096
    %v1454 = vunpack.c.h.b16 %v1096
    %v1455 = vunpack.c.l.b16 %v1097
    %v1456 = vunpack.c.h.b16 %v1097
    %v1457 = vunpack.c.l.b16 %v1098
    %v1458 = vunpack.c.h.b16 %v1098
    %v1459 = vunpack.c.l.b16 %v1099
    %v1460 = vunpack.c.h.b16 %v1099
    %v1461 = vunpack.c.l.b16 %v1100
    %v1462 = vunpack.c.h.b16 %v1100
    %v1463 = vunpack.c.l.b16 %v1101
    %v1464 = vunpack.c.h.b16 %v1101
    %v1465 = vunpack.c.l.b16 %v1102
    %v1466 = vunpack.c.h.b16 %v1102
    %v1467 = vunpack.c.l.b16 %v1103
    %v1468 = vunpack.c.h.b16 %v1103
    %v1469 = vunpack.c.l.b16 %v1104
    %v1470 = vunpack.c.h.b16 %v1104
    %v1471 = vunpack.c.l.b16 %v1105
    %v1472 = vunpack.c.h.b16 %v1105
    %v1473 = vunpack.c.l.b16 %v1106
    %v1474 = vunpack.c.h.b16 %v1106
    %v1475 = vunpack.c.l.b16 %v1107
    %v1476 = vunpack.c.h.b16 %v1107
    %v1477 = vunpack.c.l.b16 %v1108
    %v1478 = vunpack.c.h.b16 %v1108
    %v1479 = vunpack.c.l.b16 %v1109
    %v1480 = vunpack.c.h.b16 %v1109
    %v1481 = vunpack.c.l.b16 %v1110
    %v1482 = vunpack.c.h.b16 %v1110
    %v1483 = vunpack.c.l.b16 %v1111
    %v1484 = vunpack.c.h.b16 %v1111
    %v1485 = vunpack.c.l.b16 %v1112
    %v1486 = vunpack.c.h.b16 %v1112
    %v1487 = vunpack.c.l.b16 %v1113
    %v1488 = vunpack.c.h.b16 %v1113
    %v1489 = vunpack.c.l.b16 %v1114
    %v1490 = vunpack.c.h.b16 %v1114
    %v1491 = vunpack.c.l.b16 %v1115
    %v1492 = vunpack.c.h.b16 %v1115
    %v1493 = vunpack.c.l.b16 %v1116
    %v1494 = vunpack.c.h.b16 %v1116
    %v1495 = vunpack.c.l.b16 %v1117
    %v1496 = vunpack.c.h.b16 %v1117
    %v1497 = vunpack.c.l.b16 %v1118
    %v1498 = vunpack.c.h.b16 %v1118
    %v1499 = vunpack.c.l.b16 %v1119
    %v1500 = vunpack.c.h.b16 %v1119
    %v1501 = vunpack.c.l.b16 %v1120
    %v1502 = vunpack.c.h.b16 %v1120
    %v1503 = vunpack.c.l.b16 %v1121
    %v1504 = vunpack.c.h.b16 %v1121
    %v1505 = vunpack.c.l.b16 %v1122
    %v1506 = vunpack.c.h.b16 %v1122
    %v1507 = vunpack.c.l.b16 %v1123
    %v1508 = vunpack.c.h.b16 %v1123
    %v1509 = vunpack.c.l.b16 %v1124
    %v1510 = vunpack.c.h.b16 %v1124
    %v1511 = vunpack.c.l.b16 %v1125
    %v1512 = vunpack.c.h.b16 %v1125
    %v1513 = vunpack.c.l.b16 %v1126
    %v1514 = vunpack.c.h.b16 %v1126
    %v1515 = vunpack.c.l.b16 %v1127
    %v1516 = vunpack.c.h.b16 %v1127
    %v1517 = vunpack.c.l.b16 %v1128
    %v1518 = vunpack.c.h.b16 %v1128
    %v1519 = vunpack.c.l.b16 %v1129
    %v1520 = vunpack.c.h.b16 %v1129
    %v1521 = vunpack.c.l.b16 %v1130
    %v1522 = vunpack.c.h.b16 %v1130
    %v1523 = vunpack.c.l.b16 %v1131
    %v1524 = vunpack.c.h.b16 %v1131
    %v1525 = vunpack.c.l.b16 %v1132
    %v1526 = vunpack.c.h.b16 %v1132
    %v1527 = vunpack.c.l.b16 %v1133
    %v1528 = vunpack.c.h.b16 %v1133
    %v1529 = vunpack.c.l.b16 %v1134
    %v1530 = vunpack.c.h.b16 %v1134
    %v1531 = vunpack.c.l.b16 %v1135
    %v1532 = vunpack.c.h.b16 %v1135
    %v1533 = vunpack.c.l.b16 %v1136
    %v1534 = vunpack.c.h.b16 %v1136
    %v1535 = vunpack.c.l.b16 %v1137
    %v1536 = vunpack.c.h.b16 %v1137
    %v1537 = vunpack.c.l.b16 %v1138
    %v1538 = vunpack.c.h.b16 %v1138
    %v1539 = vunpack.c.l.b16 %v1139
    %v1540 = vunpack.c.h.b16 %v1139
    %v1541 = vunpack.c.l.b16 %v1140
    %v1542 = vunpack.c.h.b16 %v1140
    %v1543 = vunpack.c.l.b16 %v1141
    %v1544 = vunpack.c.h.b16 %v1141
    %v1545 = vunpack.c.l.b16 %v1142
    %v1546 = vunpack.c.h.b16 %v1142
    %v1547 = vunpack.c.l.b16 %v1143
    %v1548 = vunpack.c.h.b16 %v1143
    %v1549 = vpack.c.b16 %v1297, %v1293
    %v1550 = vpack.c.b16 %v1298, %v1294
    %v1551 = vpack.c.b16 %v1299, %v1295
    %v1552 = vpack.c.b16 %v1300, %v1296
    %v1553 = vpack.c.b16 %v1305, %v1301
    %v1554 = vpack.c.b16 %v1306, %v1302
    %v1555 = vpack.c.b16 %v1307, %v1303
    %v1556 = vpack.c.b16 %v1308, %v1304
    %v1557 = vpack.c.b16 %v1313, %v1309
    %v1558 = vpack.c.b16 %v1314, %v1310
    %v1559 = vpack.c.b16 %v1315, %v1311
    %v1560 = vpack.c.b16 %v1316, %v1312
    %v1561 = vpack.c.b16 %v1321, %v1317
    %v1562 = vpack.c.b16 %v1322, %v1318
    %v1563 = vpack.c.b16 %v1323, %v1319
    %v1564 = vpack.c.b16 %v1324, %v1320
    %v1565 = vpack.c.b16 %v1329, %v1325
    %v1566 = vpack.c.b16 %v1330, %v1326
    %v1567 = vpack.c.b16 %v1331, %v1327
    %v1568 = vpack.c.b16 %v1332, %v1328
    %v1569 = vpack.c.b16 %v1337, %v1333
    %v1570 = vpack.c.b16 %v1338, %v1334
    %v1571 = vpack.c.b16 %v1339, %v1335
    %v1572 = vpack.c.b16 %v1340, %v1336
    %v1573 = vpack.c.b16 %v1345, %v1341
    %v1574 = vpack.c.b16 %v1346, %v1342
    %v1575 = vpack.c.b16 %v1347, %v1343
    %v1576 = vpack.c.b16 %v1348, %v1344
    %v1577 = vpack.c.b16 %v1353, %v1349
    %v1578 = vpack.c.b16 %v1354, %v1350
    %v1579 = vpack.c.b16 %v1355, %v1351
    %v1580 = vpack.c.b16 %v1356, %v1352
    %v1581 = vpack.c.b16 %v1361, %v1357
    %v1582 = vpack.c.b16 %v1362, %v1358
    %v1583 = vpack.c.b16 %v1363, %v1359
    %v1584 = vpack.c.b16 %v1364, %v1360
    %v1585 = vpack.c.b16 %v1369, %v1365
    %v1586 = vpack.c.b16 %v1370, %v1366
    %v1587 = vpack.c.b16 %v1371, %v1367
    %v1588 = vpack.c.b16 %v1372, %v1368
    %v1589 = vpack.c.b16 %v1377, %v1373
    %v1590 = vpack.c.b16 %v1378, %v1374
    %v1591 = vpack.c.b16 %v1379, %v1375
    %v1592 = vpack.c.b16 %v1380, %v1376
    %v1593 = vpack.c.b16 %v1385, %v1381
    %v1594 = vpack.c.b16 %v1386, %v1382
    %v1595 = vpack.c.b16 %v1387, %v1383
    %v1596 = vpack.c.b16 %v1388, %v1384
    %v1597 = vpack.c.b16 %v1393, %v1389
    %v1598 = vpack.c.b16 %v1394, %v1390
    %v1599 = vpack.c.b16 %v1395, %v1391
    %v1600 = vpack.c.b16 %v1396, %v1392
    %v1601 = vpack.c.b16 %v1401, %v1397
    %v1602 = vpack.c.b16 %v1402, %v1398
    %v1603 = vpack.c.b16 %v1403, %v1399
    %v1604 = vpack.c.b16 %v1404, %v1400
    %v1605 = vpack.c.b16 %v1409, %v1405
    %v1606 = vpack.c.b16 %v1410, %v1406
    %v1607 = vpack.c.b16 %v1411, %v1407
    %v1608 = vpack.c.b16 %v1412, %v1408
    %v1609 = vpack.c.b16 %v1417, %v1413
    %v1610 = vpack.c.b16 %v1418, %v1414
    %v1611 = vpack.c.b16 %v1419, %v1415
    %v1612 = vpack.c.b16 %v1420, %v1416
    %v1613 = vpack.c.b16 %v1425, %v1421
    %v1614 = vpack.c.b16 %v1426, %v1422
    %v1615 = vpack.c.b16 %v1427, %v1423
    %v1616 = vpack.c.b16 %v1428, %v1424
    %v1617 = vpack.c.b16 %v1433, %v1429
    %v1618 = vpack.c.b16 %v1434, %v1430
    %v1619 = vpack.c.b16 %v1435, %v1431
    %v1620 = vpack.c.b16 %v1436, %v1432
    %v1621 = vpack.c.b16 %v1441, %v1437
    %v1622 = vpack.c.b16 %v1442, %v1438
    %v1623 = vpack.c.b16 %v1443, %v1439
    %v1624 = vpack.c.b16 %v1444, %v1440
    %v1625 = vpack.c.b16 %v1449, %v1445
    %v1626 = vpack.c.b16 %v1450, %v1446
    %v1627 = vpack.c.b16 %v1451, %v1447
    %v1628 = vpack.c.b16 %v1452, %v1448
    %v1629 = vpack.c.b16 %v1457, %v1453
    %v1630 = vpack.c.b16 %v1458, %v1454
    %v1631 = vpack.c.b16 %v1459, %v1455
    %v1632 = vpack.c.b16 %v1460, %v1456
    %v1633 = vpack.c.b16 %v1465, %v1461
    %v1634 = vpack.c.b16 %v1466, %v1462
    %v1635 = vpack.c.b16 %v1467, %v1463
    %v1636 = vpack.c.b16 %v1468, %v1464
    %v1637 = vpack.c.b16 %v1473, %v1469
    %v1638 = vpack.c.b16 %v1474, %v1470
    %v1639 = vpack.c.b16 %v1475, %v1471
    %v1640 = vpack.c.b16 %v1476, %v1472
    %v1641 = vpack.c.b16 %v1481, %v1477
    %v1642 = vpack.c.b16 %v1482, %v1478
    %v1643 = vpack.c.b16 %v1483, %v1479
    %v1644 = vpack.c.b16 %v1484, %v1480
    %v1645 = vpack.c.b16 %v1489, %v1485
    %v1646 = vpack.c.b16 %v1490, %v1486
    %v1647 = vpack.c.b16 %v1491, %v1487
    %v1648 = vpack.c.b16 %v1492, %v1488
    %v1649 = vpack.c.b16 %v1497, %v1493
    %v1650 = vpack.c.b16 %v1498, %v1494
    %v1651 = vpack.c.b16 %v1499, %v1495
    %v1652 = vpack.c.b16 %v1500, %v1496
    %v1653 = vpack.c.b16 %v1505, %v1501
    %v1654 = vpack.c.b16 %v1506, %v1502
    %v1655 = vpack.c.b16 %v1507, %v1503
    %v1656 = vpack.c.b16 %v1508, %v1504
    %v1657 = vpack.c.b16 %v1513, %v1509
    %v1658 = vpack.c.b16 %v1514, %v1510
    %v1659 = vpack.c.b16 %v1515, %v1511
    %v1660 = vpack.c.b16 %v1516, %v1512
    %v1661 = vpack.c.b16 %v1521, %v1517
    %v1662 = vpack.c.b16 %v1522, %v1518
    %v1663 = vpack.c.b16 %v1523, %v1519
    %v1664 = vpack.c.b16 %v1524, %v1520
    %v1665 = vpack.c.b16 %v1529, %v1525
    %v1666 = vpack.c.b16 %v1530, %v1526
    %v1667 = vpack.c.b16 %v1531, %v1527
    %v1668 = vpack.c.b16 %v1532, %v1528
    %v1669 = vpack.c.b16 %v1537, %v1533
    %v1670 = vpack.c.b16 %v1538, %v1534
    %v1671 = vpack.c.b16 %v1539, %v1535
    %v1672 = vpack.c.b16 %v1540, %v1536
    %v1673 = vpack.c.b16 %v1545, %v1541
    %v1674 = vpack.c.b16 %v1546, %v1542
    %v1675 = vpack.c.b16 %v1547, %v1543
    %v1676 = vpack.c.b16 %v1548, %v1544
    %1805 = vmatprep.subr.bf16.mxu0 %v1550
    %1806 = vmatpush1.bf16.msra.mxu0 %v1549
    %1807 = vmatprep.subr.bf16.mxu0 %v1554
    %1808 = vmatpush1.bf16.msra.mxu0 %v1553
    %1809 = vmatprep.subr.bf16.mxu0 %v1558
    %1810 = vmatpush1.bf16.msra.mxu0 %v1557
    %1811 = vmatprep.subr.bf16.mxu0 %v1562
    %1812 = vmatpush1.bf16.msra.mxu0 %v1561
    %1813 = vmatprep.subr.bf16.mxu0 %v1566
    %1814 = vmatpush1.bf16.msra.mxu0 %v1565
    %1815 = vmatprep.subr.bf16.mxu0 %v1570
    %1816 = vmatpush1.bf16.msra.mxu0 %v1569
    %1817 = vmatprep.subr.bf16.mxu0 %v1574
    %1818 = vmatpush1.bf16.msra.mxu0 %v1573
    %1819 = vmatprep.subr.bf16.mxu0 %v1578
    %1820 = vmatpush1.bf16.msra.mxu0 %v1577
    %1821 = vmatprep.subr.bf16.mxu0 %v1582
    %1822 = vmatpush1.bf16.msra.mxu0 %v1581
    %1823 = vmatprep.subr.bf16.mxu0 %v1586
    %1824 = vmatpush1.bf16.msra.mxu0 %v1585
    %1825 = vmatprep.subr.bf16.mxu0 %v1590
    %1826 = vmatpush1.bf16.msra.mxu0 %v1589
    %1827 = vmatprep.subr.bf16.mxu0 %v1594
    %1828 = vmatpush1.bf16.msra.mxu0 %v1593
    %1829 = vmatprep.subr.bf16.mxu0 %v1598
    %1830 = vmatpush1.bf16.msra.mxu0 %v1597
    %1831 = vmatprep.subr.bf16.mxu0 %v1602
    %1832 = vmatpush1.bf16.msra.mxu0 %v1601
    %1833 = vmatprep.subr.bf16.mxu0 %v1606
    %1834 = vmatpush1.bf16.msra.mxu0 %v1605
    %1835 = vmatprep.subr.bf16.mxu0 %v1610
    %1836 = vmatpush1.bf16.msra.mxu0 %v1609
    %1837 = vmatprep.mubr.bf16.mxu0 %v953
    %1838 = vmatmul.mubr.bf16.gmra.mrb[0].mxu0 %v952
    %v1839 = vpop.f32.mrb[0].mxu0
    %v1840 = vadd.f32 %v1148, %v1839
    %v1841 = vpop.f32.mrb[0].mxu0
    %v1842 = vadd.f32 %v1152, %v1841
    %v1843 = vpop.f32.mrb[0].mxu0
    %v1844 = vadd.f32 %v1148, %v1843
    %v1845 = vpop.f32.mrb[0].mxu0
    %v1846 = vadd.f32 %v1152, %v1845
    %1847 = vmatprep.mubr.bf16.mxu0 %v957
    %1848 = vmatmul.mubr.bf16.gmra.mrb[0].mxu0 %v956
    %v1849 = vpop.f32.mrb[0].mxu0
    %v1850 = vadd.f32 %v1148, %v1849
    %v1851 = vpop.f32.mrb[0].mxu0
    %v1852 = vadd.f32 %v1152, %v1851
    %v1853 = vpop.f32.mrb[0].mxu0
    %v1854 = vadd.f32 %v1148, %v1853
    %v1855 = vpop.f32.mrb[0].mxu0
    %v1856 = vadd.f32 %v1152, %v1855
    %1857 = vmatprep.mubr.bf16.mxu0 %v961
    %1858 = vmatmul.mubr.bf16.gmra.mrb[0].mxu0 %v960
    %v1859 = vpop.f32.mrb[0].mxu0
    %v1860 = vadd.f32 %v1148, %v1859
    %v1861 = vpop.f32.mrb[0].mxu0
    %v1862 = vadd.f32 %v1152, %v1861
    %v1863 = vpop.f32.mrb[0].mxu0
    %v1864 = vadd.f32 %v1148, %v1863
    %v1865 = vpop.f32.mrb[0].mxu0
    %v1866 = vadd.f32 %v1152, %v1865
    %1867 = vmatprep.mubr.bf16.mxu0 %v965
    %1868 = vmatmul.mubr.bf16.gmra.mrb[0].mxu0 %v964
    %v1869 = vpop.f32.mrb[0].mxu0
    %v1870 = vadd.f32 %v1148, %v1869
    %v1871 = vpop.f32.mrb[0].mxu0
    %v1872 = vadd.f32 %v1152, %v1871
    %v1873 = vpop.f32.mrb[0].mxu0
    %v1874 = vadd.f32 %v1148, %v1873
    %v1875 = vpop.f32.mrb[0].mxu0
    %v1876 = vadd.f32 %v1152, %v1875
    %1877 = vmatprep.mubr.bf16.mxu0 %v969
    %1878 = vmatmul.mubr.bf16.gmra.mrb[0].mxu0 %v968
    %v1879 = vpop.f32.mrb[0].mxu0
    %v1880 = vadd.f32 %v1148, %v1879
    %v1881 = vpop.f32.mrb[0].mxu0
    %v1882 = vadd.f32 %v1152, %v1881
    %v1883 = vpop.f32.mrb[0].mxu0
    %v1884 = vadd.f32 %v1148, %v1883
    %v1885 = vpop.f32.mrb[0].mxu0
    %v1886 = vadd.f32 %v1152, %v1885
    %1887 = vmatprep.mubr.bf16.mxu0 %v973
    %1888 = vmatmul.mubr.bf16.gmra.mrb[0].mxu0 %v972
    %v1889 = vpop.f32.mrb[0].mxu0
    %v1890 = vadd.f32 %v1148, %v1889
    %v1891 = vpop.f32.mrb[0].mxu0
    %v1892 = vadd.f32 %v1152, %v1891
    %v1893 = vpop.f32.mrb[0].mxu0
    %v1894 = vadd.f32 %v1148, %v1893
    %v1895 = vpop.f32.mrb[0].mxu0
    %v1896 = vadd.f32 %v1152, %v1895
    %1897 = vmatprep.mubr.bf16.mxu0 %v977
    %1898 = vmatmul.mubr.bf16.gmra.mrb[0].mxu0 %v976
    %v1899 = vpop.f32.mrb[0].mxu0
    %v1900 = vadd.f32 %v1148, %v1899
    %v1901 = vpop.f32.mrb[0].mxu0
    %v1902 = vadd.f32 %v1152, %v1901
    %v1903 = vpop.f32.mrb[0].mxu0
    %v1904 = vadd.f32 %v1148, %v1903
    %v1905 = vpop.f32.mrb[0].mxu0
    %v1906 = vadd.f32 %v1152, %v1905
    %1907 = vmatprep.mubr.bf16.mxu0 %v981
    %1908 = vmatmul.mubr.bf16.gmra.mrb[0].mxu0 %v980
    %v1909 = vpop.f32.mrb[0].mxu0
    %v1910 = vadd.f32 %v1148, %v1909
    %v1911 = vpop.f32.mrb[0].mxu0
    %v1912 = vadd.f32 %v1152, %v1911
    %v1913 = vpop.f32.mrb[0].mxu0
    %v1914 = vadd.f32 %v1148, %v1913
    %v1915 = vpop.f32.mrb[0].mxu0
    %v1916 = vadd.f32 %v1152, %v1915
    %1917 = vmatprep.mubr.bf16.mxu0 %v985
    %1918 = vmatmul.mubr.bf16.gmra.mrb[0].mxu0 %v984
    %v1919 = vpop.f32.mrb[0].mxu0
    %v1920 = vadd.f32 %v1148, %v1919
    %v1921 = vpop.f32.mrb[0].mxu0
    %v1922 = vadd.f32 %v1152, %v1921
    %v1923 = vpop.f32.mrb[0].mxu0
    %v1924 = vadd.f32 %v1148, %v1923
    %v1925 = vpop.f32.mrb[0].mxu0
    %v1926 = vadd.f32 %v1152, %v1925
    %1927 = vmatprep.mubr.bf16.mxu0 %v989
    %1928 = vmatmul.mubr.bf16.gmra.mrb[0].mxu0 %v988
    %v1929 = vpop.f32.mrb[0].mxu0
    %v1930 = vadd.f32 %v1148, %v1929
    %v1931 = vpop.f32.mrb[0].mxu0
    %v1932 = vadd.f32 %v1152, %v1931
    %v1933 = vpop.f32.mrb[0].mxu0
    %v1934 = vadd.f32 %v1148, %v1933
    %v1935 = vpop.f32.mrb[0].mxu0
    %v1936 = vadd.f32 %v1152, %v1935
    %1937 = vmatprep.mubr.bf16.mxu0 %v993
    %1938 = vmatmul.mubr.bf16.gmra.mrb[0].mxu0 %v992
    %v1939 = vpop.f32.mrb[0].mxu0
    %v1940 = vadd.f32 %v1148, %v1939
    %v1941 = vpop.f32.mrb[0].mxu0
    %v1942 = vadd.f32 %v1152, %v1941
    %v1943 = vpop.f32.mrb[0].mxu0
    %v1944 = vadd.f32 %v1148, %v1943
    %v1945 = vpop.f32.mrb[0].mxu0
    %v1946 = vadd.f32 %v1152, %v1945
    %1947 = vmatprep.mubr.bf16.mxu0 %v997
    %1948 = vmatmul.mubr.bf16.gmra.mrb[0].mxu0 %v996
    %v1949 = vpop.f32.mrb[0].mxu0
    %v1950 = vadd.f32 %v1148, %v1949
    %v1951 = vpop.f32.mrb[0].mxu0
    %v1952 = vadd.f32 %v1152, %v1951
    %v1953 = vpop.f32.mrb[0].mxu0
    %v1954 = vadd.f32 %v1148, %v1953
    %v1955 = vpop.f32.mrb[0].mxu0
    %v1956 = vadd.f32 %v1152, %v1955
    %1957 = vmatprep.mubr.bf16.mxu0 %v1001
    %1958 = vmatmul.mubr.bf16.gmra.mrb[0].mxu0 %v1000
    %v1959 = vpop.f32.mrb[0].mxu0
    %v1960 = vadd.f32 %v1148, %v1959
    %v1961 = vpop.f32.mrb[0].mxu0
    %v1962 = vadd.f32 %v1152, %v1961
    %v1963 = vpop.f32.mrb[0].mxu0
    %v1964 = vadd.f32 %v1148, %v1963
    %v1965 = vpop.f32.mrb[0].mxu0
    %v1966 = vadd.f32 %v1152, %v1965
    %1967 = vmatprep.mubr.bf16.mxu0 %v1005
    %1968 = vmatmul.mubr.bf16.gmra.mrb[0].mxu0 %v1004
    %v1969 = vpop.f32.mrb[0].mxu0
    %v1970 = vadd.f32 %v1148, %v1969
    %v1971 = vpop.f32.mrb[0].mxu0
    %v1972 = vadd.f32 %v1152, %v1971
    %v1973 = vpop.f32.mrb[0].mxu0
    %v1974 = vadd.f32 %v1148, %v1973
    %v1975 = vpop.f32.mrb[0].mxu0
    %v1976 = vadd.f32 %v1152, %v1975
    %1977 = vmatprep.mubr.bf16.mxu0 %v1009
    %1978 = vmatmul.mubr.bf16.gmra.mrb[0].mxu0 %v1008
    %v1979 = vpop.f32.mrb[0].mxu0
    %v1980 = vadd.f32 %v1148, %v1979
    %v1981 = vpop.f32.mrb[0].mxu0
    %v1982 = vadd.f32 %v1152, %v1981
    %v1983 = vpop.f32.mrb[0].mxu0
    %v1984 = vadd.f32 %v1148, %v1983
    %v1985 = vpop.f32.mrb[0].mxu0
    %v1986 = vadd.f32 %v1152, %v1985
    %1987 = vmatprep.mubr.bf16.mxu0 %v1013
    %1988 = vmatmul.mubr.bf16.gmra.mrb[0].mxu0 %v1012
    %v1989 = vpop.f32.mrb[0].mxu0
    %v1990 = vadd.f32 %v1148, %v1989
    %v1991 = vpop.f32.mrb[0].mxu0
    %v1992 = vadd.f32 %v1152, %v1991
    %v1993 = vpop.f32.mrb[0].mxu0
    %v1994 = vadd.f32 %v1148, %v1993
    %v1995 = vpop.f32.mrb[0].mxu0
    %v1996 = vadd.f32 %v1152, %v1995
    %1997 = vdwg.mxu0
    %1998 = vmatprep.subr.bf16.mxu0 %v1614
    %1999 = vmatpush1.bf16.msra.mxu0 %v1613
    %2000 = vmatprep.subr.bf16.mxu0 %v1618
    %2001 = vmatpush1.bf16.msra.mxu0 %v1617
    %2002 = vmatprep.subr.bf16.mxu0 %v1622
    %2003 = vmatpush1.bf16.msra.mxu0 %v1621
    %2004 = vmatprep.subr.bf16.mxu0 %v1626
    %2005 = vmatpush1.bf16.msra.mxu0 %v1625
    %2006 = vmatprep.subr.bf16.mxu0 %v1630
    %2007 = vmatpush1.bf16.msra.mxu0 %v1629
    %2008 = vmatprep.subr.bf16.mxu0 %v1634
    %2009 = vmatpush1.bf16.msra.mxu0 %v1633
    %2010 = vmatprep.subr.bf16.mxu0 %v1638
    %2011 = vmatpush1.bf16.msra.mxu0 %v1637
    %2012 = vmatprep.subr.bf16.mxu0 %v1642
    %2013 = vmatpush1.bf16.msra.mxu0 %v1641
    %2014 = vmatprep.subr.bf16.mxu0 %v1646
    %2015 = vmatpush1.bf16.msra.mxu0 %v1645
    %2016 = vmatprep.subr.bf16.mxu0 %v1650
    %2017 = vmatpush1.bf16.msra.mxu0 %v1649
    %2018 = vmatprep.subr.bf16.mxu0 %v1654
    %2019 = vmatpush1.bf16.msra.mxu0 %v1653
    %2020 = vmatprep.subr.bf16.mxu0 %v1658
    %2021 = vmatpush1.bf16.msra.mxu0 %v1657
    %2022 = vmatprep.subr.bf16.mxu0 %v1662
    %2023 = vmatpush1.bf16.msra.mxu0 %v1661
    %2024 = vmatprep.subr.bf16.mxu0 %v1666
    %2025 = vmatpush1.bf16.msra.mxu0 %v1665
    %2026 = vmatprep.subr.bf16.mxu0 %v1670
    %2027 = vmatpush1.bf16.msra.mxu0 %v1669
    %2028 = vmatprep.subr.bf16.mxu0 %v1674
    %2029 = vmatpush1.bf16.msra.mxu0 %v1673
    %2030 = vmatprep.mubr.bf16.mxu0 %v955
    %2031 = vmatmul.mubr.bf16.gmra.mrb[0].mxu0 %v954
    %v2032 = vpop.f32.mrb[0].mxu0
    %v2033 = vadd.f32 %v1840, %v2032
    %v2034 = vpop.f32.mrb[0].mxu0
    %v2035 = vadd.f32 %v1842, %v2034
    %v2036 = vpop.f32.mrb[0].mxu0
    %v2037 = vadd.f32 %v1844, %v2036
    %v2038 = vpop.f32.mrb[0].mxu0
    %v2039 = vadd.f32 %v1846, %v2038
    %2040 = vmatprep.mubr.bf16.mxu0 %v959
    %2041 = vmatmul.mubr.bf16.gmra.mrb[0].mxu0 %v958
    %v2042 = vpop.f32.mrb[0].mxu0
    %v2043 = vadd.f32 %v1850, %v2042
    %v2044 = vpop.f32.mrb[0].mxu0
    %v2045 = vadd.f32 %v1852, %v2044
    %v2046 = vpop.f32.mrb[0].mxu0
    %v2047 = vadd.f32 %v1854, %v2046
    %v2048 = vpop.f32.mrb[0].mxu0
    %v2049 = vadd.f32 %v1856, %v2048
    %2050 = vmatprep.mubr.bf16.mxu0 %v963
    %2051 = vmatmul.mubr.bf16.gmra.mrb[0].mxu0 %v962
    %v2052 = vpop.f32.mrb[0].mxu0
    %v2053 = vadd.f32 %v1860, %v2052
    %v2054 = vpop.f32.mrb[0].mxu0
    %v2055 = vadd.f32 %v1862, %v2054
    %v2056 = vpop.f32.mrb[0].mxu0
    %v2057 = vadd.f32 %v1864, %v2056
    %v2058 = vpop.f32.mrb[0].mxu0
    %v2059 = vadd.f32 %v1866, %v2058
    %2060 = vmatprep.mubr.bf16.mxu0 %v967
    %2061 = vmatmul.mubr.bf16.gmra.mrb[0].mxu0 %v966
    %v2062 = vpop.f32.mrb[0].mxu0
    %v2063 = vadd.f32 %v1870, %v2062
    %v2064 = vpop.f32.mrb[0].mxu0
    %v2065 = vadd.f32 %v1872, %v2064
    %v2066 = vpop.f32.mrb[0].mxu0
    %v2067 = vadd.f32 %v1874, %v2066
    %v2068 = vpop.f32.mrb[0].mxu0
    %v2069 = vadd.f32 %v1876, %v2068
    %2070 = vmatprep.mubr.bf16.mxu0 %v971
    %2071 = vmatmul.mubr.bf16.gmra.mrb[0].mxu0 %v970
    %v2072 = vpop.f32.mrb[0].mxu0
    %v2073 = vadd.f32 %v1880, %v2072
    %v2074 = vpop.f32.mrb[0].mxu0
    %v2075 = vadd.f32 %v1882, %v2074
    %v2076 = vpop.f32.mrb[0].mxu0
    %v2077 = vadd.f32 %v1884, %v2076
    %v2078 = vpop.f32.mrb[0].mxu0
    %v2079 = vadd.f32 %v1886, %v2078
    %2080 = vmatprep.mubr.bf16.mxu0 %v975
    %2081 = vmatmul.mubr.bf16.gmra.mrb[0].mxu0 %v974
    %v2082 = vpop.f32.mrb[0].mxu0
    %v2083 = vadd.f32 %v1890, %v2082
    %v2084 = vpop.f32.mrb[0].mxu0
    %v2085 = vadd.f32 %v1892, %v2084
    %v2086 = vpop.f32.mrb[0].mxu0
    %v2087 = vadd.f32 %v1894, %v2086
    %v2088 = vpop.f32.mrb[0].mxu0
    %v2089 = vadd.f32 %v1896, %v2088
    %2090 = vmatprep.mubr.bf16.mxu0 %v979
    %2091 = vmatmul.mubr.bf16.gmra.mrb[0].mxu0 %v978
    %v2092 = vpop.f32.mrb[0].mxu0
    %v2093 = vadd.f32 %v1900, %v2092
    %v2094 = vpop.f32.mrb[0].mxu0
    %v2095 = vadd.f32 %v1902, %v2094
    %v2096 = vpop.f32.mrb[0].mxu0
    %v2097 = vadd.f32 %v1904, %v2096
    %v2098 = vpop.f32.mrb[0].mxu0
    %v2099 = vadd.f32 %v1906, %v2098
    %2100 = vmatprep.mubr.bf16.mxu0 %v983
    %2101 = vmatmul.mubr.bf16.gmra.mrb[0].mxu0 %v982
    %v2102 = vpop.f32.mrb[0].mxu0
    %v2103 = vadd.f32 %v1910, %v2102
    %v2104 = vpop.f32.mrb[0].mxu0
    %v2105 = vadd.f32 %v1912, %v2104
    %v2106 = vpop.f32.mrb[0].mxu0
    %v2107 = vadd.f32 %v1914, %v2106
    %v2108 = vpop.f32.mrb[0].mxu0
    %v2109 = vadd.f32 %v1916, %v2108
    %2110 = vmatprep.mubr.bf16.mxu0 %v987
    %2111 = vmatmul.mubr.bf16.gmra.mrb[0].mxu0 %v986
    %v2112 = vpop.f32.mrb[0].mxu0
    %v2113 = vadd.f32 %v1920, %v2112
    %v2114 = vpop.f32.mrb[0].mxu0
    %v2115 = vadd.f32 %v1922, %v2114
    %v2116 = vpop.f32.mrb[0].mxu0
    %v2117 = vadd.f32 %v1924, %v2116
    %v2118 = vpop.f32.mrb[0].mxu0
    %v2119 = vadd.f32 %v1926, %v2118
    %2120 = vmatprep.mubr.bf16.mxu0 %v991
    %2121 = vmatmul.mubr.bf16.gmra.mrb[0].mxu0 %v990
    %v2122 = vpop.f32.mrb[0].mxu0
    %v2123 = vadd.f32 %v1930, %v2122
    %v2124 = vpop.f32.mrb[0].mxu0
    %v2125 = vadd.f32 %v1932, %v2124
    %v2126 = vpop.f32.mrb[0].mxu0
    %v2127 = vadd.f32 %v1934, %v2126
    %v2128 = vpop.f32.mrb[0].mxu0
    %v2129 = vadd.f32 %v1936, %v2128
    %2130 = vmatprep.mubr.bf16.mxu0 %v995
    %2131 = vmatmul.mubr.bf16.gmra.mrb[0].mxu0 %v994
    %v2132 = vpop.f32.mrb[0].mxu0
    %v2133 = vadd.f32 %v1940, %v2132
    %v2134 = vpop.f32.mrb[0].mxu0
    %v2135 = vadd.f32 %v1942, %v2134
    %v2136 = vpop.f32.mrb[0].mxu0
    %v2137 = vadd.f32 %v1944, %v2136
    %v2138 = vpop.f32.mrb[0].mxu0
    %v2139 = vadd.f32 %v1946, %v2138
    %2140 = vmatprep.mubr.bf16.mxu0 %v999
    %2141 = vmatmul.mubr.bf16.gmra.mrb[0].mxu0 %v998
    %v2142 = vpop.f32.mrb[0].mxu0
    %v2143 = vadd.f32 %v1950, %v2142
    %v2144 = vpop.f32.mrb[0].mxu0
    %v2145 = vadd.f32 %v1952, %v2144
    %v2146 = vpop.f32.mrb[0].mxu0
    %v2147 = vadd.f32 %v1954, %v2146
    %v2148 = vpop.f32.mrb[0].mxu0
    %v2149 = vadd.f32 %v1956, %v2148
    %2150 = vmatprep.mubr.bf16.mxu0 %v1003
    %2151 = vmatmul.mubr.bf16.gmra.mrb[0].mxu0 %v1002
    %v2152 = vpop.f32.mrb[0].mxu0
    %v2153 = vadd.f32 %v1960, %v2152
    %v2154 = vpop.f32.mrb[0].mxu0
    %v2155 = vadd.f32 %v1962, %v2154
    %v2156 = vpop.f32.mrb[0].mxu0
    %v2157 = vadd.f32 %v1964, %v2156
    %v2158 = vpop.f32.mrb[0].mxu0
    %v2159 = vadd.f32 %v1966, %v2158
    %2160 = vmatprep.mubr.bf16.mxu0 %v1007
    %2161 = vmatmul.mubr.bf16.gmra.mrb[0].mxu0 %v1006
    %v2162 = vpop.f32.mrb[0].mxu0
    %v2163 = vadd.f32 %v1970, %v2162
    %v2164 = vpop.f32.mrb[0].mxu0
    %v2165 = vadd.f32 %v1972, %v2164
    %v2166 = vpop.f32.mrb[0].mxu0
    %v2167 = vadd.f32 %v1974, %v2166
    %v2168 = vpop.f32.mrb[0].mxu0
    %v2169 = vadd.f32 %v1976, %v2168
    %2170 = vmatprep.mubr.bf16.mxu0 %v1011
    %2171 = vmatmul.mubr.bf16.gmra.mrb[0].mxu0 %v1010
    %v2172 = vpop.f32.mrb[0].mxu0
    %v2173 = vadd.f32 %v1980, %v2172
    %v2174 = vpop.f32.mrb[0].mxu0
    %v2175 = vadd.f32 %v1982, %v2174
    %v2176 = vpop.f32.mrb[0].mxu0
    %v2177 = vadd.f32 %v1984, %v2176
    %v2178 = vpop.f32.mrb[0].mxu0
    %v2179 = vadd.f32 %v1986, %v2178
    %2180 = vmatprep.mubr.bf16.mxu0 %v1015
    %2181 = vmatmul.mubr.bf16.gmra.mrb[0].mxu0 %v1014
    %v2182 = vpop.f32.mrb[0].mxu0
    %v2183 = vadd.f32 %v1990, %v2182
    %v2184 = vpop.f32.mrb[0].mxu0
    %v2185 = vadd.f32 %v1992, %v2184
    %v2186 = vpop.f32.mrb[0].mxu0
    %v2187 = vadd.f32 %v1994, %v2186
    %v2188 = vpop.f32.mrb[0].mxu0
    %v2189 = vadd.f32 %v1996, %v2188
    %2190 = vdwg.mxu0
    %2191 = vmatprep.subr.bf16.mxu0 %v1552
    %2192 = vmatpush1.bf16.msra.mxu0 %v1551
    %2193 = vmatprep.subr.bf16.mxu0 %v1556
    %2194 = vmatpush1.bf16.msra.mxu0 %v1555
    %2195 = vmatprep.subr.bf16.mxu0 %v1560
    %2196 = vmatpush1.bf16.msra.mxu0 %v1559
    %2197 = vmatprep.subr.bf16.mxu0 %v1564
    %2198 = vmatpush1.bf16.msra.mxu0 %v1563
    %2199 = vmatprep.subr.bf16.mxu0 %v1568
    %2200 = vmatpush1.bf16.msra.mxu0 %v1567
    %2201 = vmatprep.subr.bf16.mxu0 %v1572
    %2202 = vmatpush1.bf16.msra.mxu0 %v1571
    %2203 = vmatprep.subr.bf16.mxu0 %v1576
    %2204 = vmatpush1.bf16.msra.mxu0 %v1575
    %2205 = vmatprep.subr.bf16.mxu0 %v1580
    %2206 = vmatpush1.bf16.msra.mxu0 %v1579
    %2207 = vmatprep.subr.bf16.mxu0 %v1584
    %2208 = vmatpush1.bf16.msra.mxu0 %v1583
    %2209 = vmatprep.subr.bf16.mxu0 %v1588
    %2210 = vmatpush1.bf16.msra.mxu0 %v1587
    %2211 = vmatprep.subr.bf16.mxu0 %v1592
    %2212 = vmatpush1.bf16.msra.mxu0 %v1591
    %2213 = vmatprep.subr.bf16.mxu0 %v1596
    %2214 = vmatpush1.bf16.msra.mxu0 %v1595
    %2215 = vmatprep.subr.bf16.mxu0 %v1600
    %2216 = vmatpush1.bf16.msra.mxu0 %v1599
    %2217 = vmatprep.subr.bf16.mxu0 %v1604
    %2218 = vmatpush1.bf16.msra.mxu0 %v1603
    %2219 = vmatprep.subr.bf16.mxu0 %v1608
    %2220 = vmatpush1.bf16.msra.mxu0 %v1607
    %2221 = vmatprep.subr.bf16.mxu0 %v1612
    %2222 = vmatpush1.bf16.msra.mxu0 %v1611
    %2223 = vmatprep.mubr.bf16.mxu0 %v953
    %2224 = vmatmul.mubr.bf16.gmra.mrb[0].mxu0 %v952
    %v2225 = vpop.f32.mrb[0].mxu0
    %v2226 = vadd.f32 %v1156, %v2225
    %v2227 = vpop.f32.mrb[0].mxu0
    %v2228 = vadd.f32 %v1160, %v2227
    %v2229 = vpop.f32.mrb[0].mxu0
    %v2230 = vadd.f32 %v1156, %v2229
    %v2231 = vpop.f32.mrb[0].mxu0
    %v2232 = vadd.f32 %v1160, %v2231
    %2233 = vmatprep.mubr.bf16.mxu0 %v957
    %2234 = vmatmul.mubr.bf16.gmra.mrb[0].mxu0 %v956
    %v2235 = vpop.f32.mrb[0].mxu0
    %v2236 = vadd.f32 %v1156, %v2235
    %v2237 = vpop.f32.mrb[0].mxu0
    %v2238 = vadd.f32 %v1160, %v2237
    %v2239 = vpop.f32.mrb[0].mxu0
    %v2240 = vadd.f32 %v1156, %v2239
    %v2241 = vpop.f32.mrb[0].mxu0
    %v2242 = vadd.f32 %v1160, %v2241
    %2243 = vmatprep.mubr.bf16.mxu0 %v961
    %2244 = vmatmul.mubr.bf16.gmra.mrb[0].mxu0 %v960
    %v2245 = vpop.f32.mrb[0].mxu0
    %v2246 = vadd.f32 %v1156, %v2245
    %v2247 = vpop.f32.mrb[0].mxu0
    %v2248 = vadd.f32 %v1160, %v2247
    %v2249 = vpop.f32.mrb[0].mxu0
    %v2250 = vadd.f32 %v1156, %v2249
    %v2251 = vpop.f32.mrb[0].mxu0
    %v2252 = vadd.f32 %v1160, %v2251
    %2253 = vmatprep.mubr.bf16.mxu0 %v965
    %2254 = vmatmul.mubr.bf16.gmra.mrb[0].mxu0 %v964
    %v2255 = vpop.f32.mrb[0].mxu0
    %v2256 = vadd.f32 %v1156, %v2255
    %v2257 = vpop.f32.mrb[0].mxu0
    %v2258 = vadd.f32 %v1160, %v2257
    %v2259 = vpop.f32.mrb[0].mxu0
    %v2260 = vadd.f32 %v1156, %v2259
    %v2261 = vpop.f32.mrb[0].mxu0
    %v2262 = vadd.f32 %v1160, %v2261
    %2263 = vmatprep.mubr.bf16.mxu0 %v969
    %2264 = vmatmul.mubr.bf16.gmra.mrb[0].mxu0 %v968
    %v2265 = vpop.f32.mrb[0].mxu0
    %v2266 = vadd.f32 %v1156, %v2265
    %v2267 = vpop.f32.mrb[0].mxu0
    %v2268 = vadd.f32 %v1160, %v2267
    %v2269 = vpop.f32.mrb[0].mxu0
    %v2270 = vadd.f32 %v1156, %v2269
    %v2271 = vpop.f32.mrb[0].mxu0
    %v2272 = vadd.f32 %v1160, %v2271
    %2273 = vmatprep.mubr.bf16.mxu0 %v973
    %2274 = vmatmul.mubr.bf16.gmra.mrb[0].mxu0 %v972
    %v2275 = vpop.f32.mrb[0].mxu0
    %v2276 = vadd.f32 %v1156, %v2275
    %v2277 = vpop.f32.mrb[0].mxu0
    %v2278 = vadd.f32 %v1160, %v2277
    %v2279 = vpop.f32.mrb[0].mxu0
    %v2280 = vadd.f32 %v1156, %v2279
    %v2281 = vpop.f32.mrb[0].mxu0
    %v2282 = vadd.f32 %v1160, %v2281
    %2283 = vmatprep.mubr.bf16.mxu0 %v977
    %2284 = vmatmul.mubr.bf16.gmra.mrb[0].mxu0 %v976
    %v2285 = vpop.f32.mrb[0].mxu0
    %v2286 = vadd.f32 %v1156, %v2285
    %v2287 = vpop.f32.mrb[0].mxu0
    %v2288 = vadd.f32 %v1160, %v2287
    %v2289 = vpop.f32.mrb[0].mxu0
    %v2290 = vadd.f32 %v1156, %v2289
    %v2291 = vpop.f32.mrb[0].mxu0
    %v2292 = vadd.f32 %v1160, %v2291
    %2293 = vmatprep.mubr.bf16.mxu0 %v981
    %2294 = vmatmul.mubr.bf16.gmra.mrb[0].mxu0 %v980
    %v2295 = vpop.f32.mrb[0].mxu0
    %v2296 = vadd.f32 %v1156, %v2295
    %v2297 = vpop.f32.mrb[0].mxu0
    %v2298 = vadd.f32 %v1160, %v2297
    %v2299 = vpop.f32.mrb[0].mxu0
    %v2300 = vadd.f32 %v1156, %v2299
    %v2301 = vpop.f32.mrb[0].mxu0
    %v2302 = vadd.f32 %v1160, %v2301
    %2303 = vmatprep.mubr.bf16.mxu0 %v985
    %2304 = vmatmul.mubr.bf16.gmra.mrb[0].mxu0 %v984
    %v2305 = vpop.f32.mrb[0].mxu0
    %v2306 = vadd.f32 %v1156, %v2305
    %v2307 = vpop.f32.mrb[0].mxu0
    %v2308 = vadd.f32 %v1160, %v2307
    %v2309 = vpop.f32.mrb[0].mxu0
    %v2310 = vadd.f32 %v1156, %v2309
    %v2311 = vpop.f32.mrb[0].mxu0
    %v2312 = vadd.f32 %v1160, %v2311
    %2313 = vmatprep.mubr.bf16.mxu0 %v989
    %2314 = vmatmul.mubr.bf16.gmra.mrb[0].mxu0 %v988
    %v2315 = vpop.f32.mrb[0].mxu0
    %v2316 = vadd.f32 %v1156, %v2315
    %v2317 = vpop.f32.mrb[0].mxu0
    %v2318 = vadd.f32 %v1160, %v2317
    %v2319 = vpop.f32.mrb[0].mxu0
    %v2320 = vadd.f32 %v1156, %v2319
    %v2321 = vpop.f32.mrb[0].mxu0
    %v2322 = vadd.f32 %v1160, %v2321
    %2323 = vmatprep.mubr.bf16.mxu0 %v993
    %2324 = vmatmul.mubr.bf16.gmra.mrb[0].mxu0 %v992
    %v2325 = vpop.f32.mrb[0].mxu0
    %v2326 = vadd.f32 %v1156, %v2325
    %v2327 = vpop.f32.mrb[0].mxu0
    %v2328 = vadd.f32 %v1160, %v2327
    %v2329 = vpop.f32.mrb[0].mxu0
    %v2330 = vadd.f32 %v1156, %v2329
    %v2331 = vpop.f32.mrb[0].mxu0
    %v2332 = vadd.f32 %v1160, %v2331
    %2333 = vmatprep.mubr.bf16.mxu0 %v997
    %2334 = vmatmul.mubr.bf16.gmra.mrb[0].mxu0 %v996
    %v2335 = vpop.f32.mrb[0].mxu0
    %v2336 = vadd.f32 %v1156, %v2335
    %v2337 = vpop.f32.mrb[0].mxu0
    %v2338 = vadd.f32 %v1160, %v2337
    %v2339 = vpop.f32.mrb[0].mxu0
    %v2340 = vadd.f32 %v1156, %v2339
    %v2341 = vpop.f32.mrb[0].mxu0
    %v2342 = vadd.f32 %v1160, %v2341
    %2343 = vmatprep.mubr.bf16.mxu0 %v1001
    %2344 = vmatmul.mubr.bf16.gmra.mrb[0].mxu0 %v1000
    %v2345 = vpop.f32.mrb[0].mxu0
    %v2346 = vadd.f32 %v1156, %v2345
    %v2347 = vpop.f32.mrb[0].mxu0
    %v2348 = vadd.f32 %v1160, %v2347
    %v2349 = vpop.f32.mrb[0].mxu0
    %v2350 = vadd.f32 %v1156, %v2349
    %v2351 = vpop.f32.mrb[0].mxu0
    %v2352 = vadd.f32 %v1160, %v2351
    %2353 = vmatprep.mubr.bf16.mxu0 %v1005
    %2354 = vmatmul.mubr.bf16.gmra.mrb[0].mxu0 %v1004
    %v2355 = vpop.f32.mrb[0].mxu0
    %v2356 = vadd.f32 %v1156, %v2355
    %v2357 = vpop.f32.mrb[0].mxu0
    %v2358 = vadd.f32 %v1160, %v2357
    %v2359 = vpop.f32.mrb[0].mxu0
    %v2360 = vadd.f32 %v1156, %v2359
    %v2361 = vpop.f32.mrb[0].mxu0
    %v2362 = vadd.f32 %v1160, %v2361
    %2363 = vmatprep.mubr.bf16.mxu0 %v1009
    %2364 = vmatmul.mubr.bf16.gmra.mrb[0].mxu0 %v1008
    %v2365 = vpop.f32.mrb[0].mxu0
    %v2366 = vadd.f32 %v1156, %v2365
    %v2367 = vpop.f32.mrb[0].mxu0
    %v2368 = vadd.f32 %v1160, %v2367
    %v2369 = vpop.f32.mrb[0].mxu0
    %v2370 = vadd.f32 %v1156, %v2369
    %v2371 = vpop.f32.mrb[0].mxu0
    %v2372 = vadd.f32 %v1160, %v2371
    %2373 = vmatprep.mubr.bf16.mxu0 %v1013
    %2374 = vmatmul.mubr.bf16.gmra.mrb[0].mxu0 %v1012
    %v2375 = vpop.f32.mrb[0].mxu0
    %v2376 = vadd.f32 %v1156, %v2375
    %v2377 = vpop.f32.mrb[0].mxu0
    %v2378 = vadd.f32 %v1160, %v2377
    %v2379 = vpop.f32.mrb[0].mxu0
    %v2380 = vadd.f32 %v1156, %v2379
    %v2381 = vpop.f32.mrb[0].mxu0
    %v2382 = vadd.f32 %v1160, %v2381
    %2383 = vdwg.mxu0
    %2384 = vmatprep.subr.bf16.mxu0 %v1616
    %2385 = vmatpush1.bf16.msra.mxu0 %v1615
    %2386 = vmatprep.subr.bf16.mxu0 %v1620
    %2387 = vmatpush1.bf16.msra.mxu0 %v1619
    %2388 = vmatprep.subr.bf16.mxu0 %v1624
    %2389 = vmatpush1.bf16.msra.mxu0 %v1623
    %2390 = vmatprep.subr.bf16.mxu0 %v1628
    %2391 = vmatpush1.bf16.msra.mxu0 %v1627
    %2392 = vmatprep.subr.bf16.mxu0 %v1632
    %2393 = vmatpush1.bf16.msra.mxu0 %v1631
    %2394 = vmatprep.subr.bf16.mxu0 %v1636
    %2395 = vmatpush1.bf16.msra.mxu0 %v1635
    %2396 = vmatprep.subr.bf16.mxu0 %v1640
    %2397 = vmatpush1.bf16.msra.mxu0 %v1639
    %2398 = vmatprep.subr.bf16.mxu0 %v1644
    %2399 = vmatpush1.bf16.msra.mxu0 %v1643
    %2400 = vmatprep.subr.bf16.mxu0 %v1648
    %2401 = vmatpush1.bf16.msra.mxu0 %v1647
    %2402 = vmatprep.subr.bf16.mxu0 %v1652
    %2403 = vmatpush1.bf16.msra.mxu0 %v1651
    %2404 = vmatprep.subr.bf16.mxu0 %v1656
    %2405 = vmatpush1.bf16.msra.mxu0 %v1655
    %2406 = vmatprep.subr.bf16.mxu0 %v1660
    %2407 = vmatpush1.bf16.msra.mxu0 %v1659
    %2408 = vmatprep.subr.bf16.mxu0 %v1664
    %2409 = vmatpush1.bf16.msra.mxu0 %v1663
    %2410 = vmatprep.subr.bf16.mxu0 %v1668
    %2411 = vmatpush1.bf16.msra.mxu0 %v1667
    %2412 = vmatprep.subr.bf16.mxu0 %v1672
    %2413 = vmatpush1.bf16.msra.mxu0 %v1671
    %2414 = vmatprep.subr.bf16.mxu0 %v1676
    %2415 = vmatpush1.bf16.msra.mxu0 %v1675
    %2416 = vmatprep.mubr.bf16.mxu0 %v955
    %2417 = vmatmul.mubr.bf16.gmra.mrb[0].mxu0 %v954
    %v2418 = vpop.f32.mrb[0].mxu0
    %v2419 = vadd.f32 %v2226, %v2418
    %v2420 = vpop.f32.mrb[0].mxu0
    %v2421 = vadd.f32 %v2228, %v2420
    %v2422 = vpop.f32.mrb[0].mxu0
    %v2423 = vadd.f32 %v2230, %v2422
    %v2424 = vpop.f32.mrb[0].mxu0
    %v2425 = vadd.f32 %v2232, %v2424
    %2426 = vmatprep.mubr.bf16.mxu0 %v959
    %2427 = vmatmul.mubr.bf16.gmra.mrb[0].mxu0 %v958
    %v2428 = vpop.f32.mrb[0].mxu0
    %v2429 = vadd.f32 %v2236, %v2428
    %v2430 = vpop.f32.mrb[0].mxu0
    %v2431 = vadd.f32 %v2238, %v2430
    %v2432 = vpop.f32.mrb[0].mxu0
    %v2433 = vadd.f32 %v2240, %v2432
    %v2434 = vpop.f32.mrb[0].mxu0
    %v2435 = vadd.f32 %v2242, %v2434
    %2436 = vmatprep.mubr.bf16.mxu0 %v963
    %2437 = vmatmul.mubr.bf16.gmra.mrb[0].mxu0 %v962
    %v2438 = vpop.f32.mrb[0].mxu0
    %v2439 = vadd.f32 %v2246, %v2438
    %v2440 = vpop.f32.mrb[0].mxu0
    %v2441 = vadd.f32 %v2248, %v2440
    %v2442 = vpop.f32.mrb[0].mxu0
    %v2443 = vadd.f32 %v2250, %v2442
    %v2444 = vpop.f32.mrb[0].mxu0
    %v2445 = vadd.f32 %v2252, %v2444
    %2446 = vmatprep.mubr.bf16.mxu0 %v967
    %2447 = vmatmul.mubr.bf16.gmra.mrb[0].mxu0 %v966
    %v2448 = vpop.f32.mrb[0].mxu0
    %v2449 = vadd.f32 %v2256, %v2448
    %v2450 = vpop.f32.mrb[0].mxu0
    %v2451 = vadd.f32 %v2258, %v2450
    %v2452 = vpop.f32.mrb[0].mxu0
    %v2453 = vadd.f32 %v2260, %v2452
    %v2454 = vpop.f32.mrb[0].mxu0
    %v2455 = vadd.f32 %v2262, %v2454
    %2456 = vmatprep.mubr.bf16.mxu0 %v971
    %2457 = vmatmul.mubr.bf16.gmra.mrb[0].mxu0 %v970
    %v2458 = vpop.f32.mrb[0].mxu0
    %v2459 = vadd.f32 %v2266, %v2458
    %v2460 = vpop.f32.mrb[0].mxu0
    %v2461 = vadd.f32 %v2268, %v2460
    %v2462 = vpop.f32.mrb[0].mxu0
    %v2463 = vadd.f32 %v2270, %v2462
    %v2464 = vpop.f32.mrb[0].mxu0
    %v2465 = vadd.f32 %v2272, %v2464
    %2466 = vmatprep.mubr.bf16.mxu0 %v975
    %2467 = vmatmul.mubr.bf16.gmra.mrb[0].mxu0 %v974
    %v2468 = vpop.f32.mrb[0].mxu0
    %v2469 = vadd.f32 %v2276, %v2468
    %v2470 = vpop.f32.mrb[0].mxu0
    %v2471 = vadd.f32 %v2278, %v2470
    %v2472 = vpop.f32.mrb[0].mxu0
    %v2473 = vadd.f32 %v2280, %v2472
    %v2474 = vpop.f32.mrb[0].mxu0
    %v2475 = vadd.f32 %v2282, %v2474
    %2476 = vmatprep.mubr.bf16.mxu0 %v979
    %2477 = vmatmul.mubr.bf16.gmra.mrb[0].mxu0 %v978
    %v2478 = vpop.f32.mrb[0].mxu0
    %v2479 = vadd.f32 %v2286, %v2478
    %v2480 = vpop.f32.mrb[0].mxu0
    %v2481 = vadd.f32 %v2288, %v2480
    %v2482 = vpop.f32.mrb[0].mxu0
    %v2483 = vadd.f32 %v2290, %v2482
    %v2484 = vpop.f32.mrb[0].mxu0
    %v2485 = vadd.f32 %v2292, %v2484
    %2486 = vmatprep.mubr.bf16.mxu0 %v983
    %2487 = vmatmul.mubr.bf16.gmra.mrb[0].mxu0 %v982
    %v2488 = vpop.f32.mrb[0].mxu0
    %v2489 = vadd.f32 %v2296, %v2488
    %v2490 = vpop.f32.mrb[0].mxu0
    %v2491 = vadd.f32 %v2298, %v2490
    %v2492 = vpop.f32.mrb[0].mxu0
    %v2493 = vadd.f32 %v2300, %v2492
    %v2494 = vpop.f32.mrb[0].mxu0
    %v2495 = vadd.f32 %v2302, %v2494
    %2496 = vmatprep.mubr.bf16.mxu0 %v987
    %2497 = vmatmul.mubr.bf16.gmra.mrb[0].mxu0 %v986
    %v2498 = vpop.f32.mrb[0].mxu0
    %v2499 = vadd.f32 %v2306, %v2498
    %v2500 = vpop.f32.mrb[0].mxu0
    %v2501 = vadd.f32 %v2308, %v2500
    %v2502 = vpop.f32.mrb[0].mxu0
    %v2503 = vadd.f32 %v2310, %v2502
    %v2504 = vpop.f32.mrb[0].mxu0
    %v2505 = vadd.f32 %v2312, %v2504
    %2506 = vmatprep.mubr.bf16.mxu0 %v991
    %2507 = vmatmul.mubr.bf16.gmra.mrb[0].mxu0 %v990
    %v2508 = vpop.f32.mrb[0].mxu0
    %v2509 = vadd.f32 %v2316, %v2508
    %v2510 = vpop.f32.mrb[0].mxu0
    %v2511 = vadd.f32 %v2318, %v2510
    %v2512 = vpop.f32.mrb[0].mxu0
    %v2513 = vadd.f32 %v2320, %v2512
    %v2514 = vpop.f32.mrb[0].mxu0
    %v2515 = vadd.f32 %v2322, %v2514
    %2516 = vmatprep.mubr.bf16.mxu0 %v995
    %2517 = vmatmul.mubr.bf16.gmra.mrb[0].mxu0 %v994
    %v2518 = vpop.f32.mrb[0].mxu0
    %v2519 = vadd.f32 %v2326, %v2518
    %v2520 = vpop.f32.mrb[0].mxu0
    %v2521 = vadd.f32 %v2328, %v2520
    %v2522 = vpop.f32.mrb[0].mxu0
    %v2523 = vadd.f32 %v2330, %v2522
    %v2524 = vpop.f32.mrb[0].mxu0
    %v2525 = vadd.f32 %v2332, %v2524
    %2526 = vmatprep.mubr.bf16.mxu0 %v999
    %2527 = vmatmul.mubr.bf16.gmra.mrb[0].mxu0 %v998
    %v2528 = vpop.f32.mrb[0].mxu0
    %v2529 = vadd.f32 %v2336, %v2528
    %v2530 = vpop.f32.mrb[0].mxu0
    %v2531 = vadd.f32 %v2338, %v2530
    %v2532 = vpop.f32.mrb[0].mxu0
    %v2533 = vadd.f32 %v2340, %v2532
    %v2534 = vpop.f32.mrb[0].mxu0
    %v2535 = vadd.f32 %v2342, %v2534
    %2536 = vmatprep.mubr.bf16.mxu0 %v1003
    %2537 = vmatmul.mubr.bf16.gmra.mrb[0].mxu0 %v1002
    %v2538 = vpop.f32.mrb[0].mxu0
    %v2539 = vadd.f32 %v2346, %v2538
    %v2540 = vpop.f32.mrb[0].mxu0
    %v2541 = vadd.f32 %v2348, %v2540
    %v2542 = vpop.f32.mrb[0].mxu0
    %v2543 = vadd.f32 %v2350, %v2542
    %v2544 = vpop.f32.mrb[0].mxu0
    %v2545 = vadd.f32 %v2352, %v2544
    %2546 = vmatprep.mubr.bf16.mxu0 %v1007
    %2547 = vmatmul.mubr.bf16.gmra.mrb[0].mxu0 %v1006
    %v2548 = vpop.f32.mrb[0].mxu0
    %v2549 = vadd.f32 %v2356, %v2548
    %v2550 = vpop.f32.mrb[0].mxu0
    %v2551 = vadd.f32 %v2358, %v2550
    %v2552 = vpop.f32.mrb[0].mxu0
    %v2553 = vadd.f32 %v2360, %v2552
    %v2554 = vpop.f32.mrb[0].mxu0
    %v2555 = vadd.f32 %v2362, %v2554
    %2556 = vmatprep.mubr.bf16.mxu0 %v1011
    %2557 = vmatmul.mubr.bf16.gmra.mrb[0].mxu0 %v1010
    %v2558 = vpop.f32.mrb[0].mxu0
    %v2559 = vadd.f32 %v2366, %v2558
    %v2560 = vpop.f32.mrb[0].mxu0
    %v2561 = vadd.f32 %v2368, %v2560
    %v2562 = vpop.f32.mrb[0].mxu0
    %v2563 = vadd.f32 %v2370, %v2562
    %v2564 = vpop.f32.mrb[0].mxu0
    %v2565 = vadd.f32 %v2372, %v2564
    %2566 = vmatprep.mubr.bf16.mxu0 %v1015
    %2567 = vmatmul.mubr.bf16.gmra.mrb[0].mxu0 %v1014
    %v2568 = vpop.f32.mrb[0].mxu0
    %v2569 = vadd.f32 %v2376, %v2568
    %v2570 = vpop.f32.mrb[0].mxu0
    %v2571 = vadd.f32 %v2378, %v2570
    %v2572 = vpop.f32.mrb[0].mxu0
    %v2573 = vadd.f32 %v2380, %v2572
    %v2574 = vpop.f32.mrb[0].mxu0
    %v2575 = vadd.f32 %v2382, %v2574
    %2576 = vdwg.mxu0
    %v2577 = vmax.f32 %v2033, 0.0
    %v2578 = vmax.f32 %v2035, 0.0
    %v2579 = vmax.f32 %v2419, 0.0
    %v2580 = vmax.f32 %v2421, 0.0
    %v2581 = vmax.f32 %v2037, 0.0
    %v2582 = vmax.f32 %v2039, 0.0
    %v2583 = vmax.f32 %v2423, 0.0
    %v2584 = vmax.f32 %v2425, 0.0
    %v2585 = vmax.f32 %v2043, 0.0
    %v2586 = vmax.f32 %v2045, 0.0
    %v2587 = vmax.f32 %v2429, 0.0
    %v2588 = vmax.f32 %v2431, 0.0
    %v2589 = vmax.f32 %v2047, 0.0
    %v2590 = vmax.f32 %v2049, 0.0
    %v2591 = vmax.f32 %v2433, 0.0
    %v2592 = vmax.f32 %v2435, 0.0
    %v2593 = vmax.f32 %v2053, 0.0
    %v2594 = vmax.f32 %v2055, 0.0
    %v2595 = vmax.f32 %v2439, 0.0
    %v2596 = vmax.f32 %v2441, 0.0
    %v2597 = vmax.f32 %v2057, 0.0
    %v2598 = vmax.f32 %v2059, 0.0
    %v2599 = vmax.f32 %v2443, 0.0
    %v2600 = vmax.f32 %v2445, 0.0
    %v2601 = vmax.f32 %v2063, 0.0
    %v2602 = vmax.f32 %v2065, 0.0
    %v2603 = vmax.f32 %v2449, 0.0
    %v2604 = vmax.f32 %v2451, 0.0
    %v2605 = vmax.f32 %v2067, 0.0
    %v2606 = vmax.f32 %v2069, 0.0
    %v2607 = vmax.f32 %v2453, 0.0
    %v2608 = vmax.f32 %v2455, 0.0
    %v2609 = vmax.f32 %v2073, 0.0
    %v2610 = vmax.f32 %v2075, 0.0
    %v2611 = vmax.f32 %v2459, 0.0
    %v2612 = vmax.f32 %v2461, 0.0
    %v2613 = vmax.f32 %v2077, 0.0
    %v2614 = vmax.f32 %v2079, 0.0
    %v2615 = vmax.f32 %v2463, 0.0
    %v2616 = vmax.f32 %v2465, 0.0
    %v2617 = vmax.f32 %v2083, 0.0
    %v2618 = vmax.f32 %v2085, 0.0
    %v2619 = vmax.f32 %v2469, 0.0
    %v2620 = vmax.f32 %v2471, 0.0
    %v2621 = vmax.f32 %v2087, 0.0
    %v2622 = vmax.f32 %v2089, 0.0
    %v2623 = vmax.f32 %v2473, 0.0
    %v2624 = vmax.f32 %v2475, 0.0
    %v2625 = vmax.f32 %v2093, 0.0
    %v2626 = vmax.f32 %v2095, 0.0
    %v2627 = vmax.f32 %v2479, 0.0
    %v2628 = vmax.f32 %v2481, 0.0
    %v2629 = vmax.f32 %v2097, 0.0
    %v2630 = vmax.f32 %v2099, 0.0
    %v2631 = vmax.f32 %v2483, 0.0
    %v2632 = vmax.f32 %v2485, 0.0
    %v2633 = vmax.f32 %v2103, 0.0
    %v2634 = vmax.f32 %v2105, 0.0
    %v2635 = vmax.f32 %v2489, 0.0
    %v2636 = vmax.f32 %v2491, 0.0
    %v2637 = vmax.f32 %v2107, 0.0
    %v2638 = vmax.f32 %v2109, 0.0
    %v2639 = vmax.f32 %v2493, 0.0
    %v2640 = vmax.f32 %v2495, 0.0
    %v2641 = vmax.f32 %v2113, 0.0
    %v2642 = vmax.f32 %v2115, 0.0
    %v2643 = vmax.f32 %v2499, 0.0
    %v2644 = vmax.f32 %v2501, 0.0
    %v2645 = vmax.f32 %v2117, 0.0
    %v2646 = vmax.f32 %v2119, 0.0
    %v2647 = vmax.f32 %v2503, 0.0
    %v2648 = vmax.f32 %v2505, 0.0
    %v2649 = vmax.f32 %v2123, 0.0
    %v2650 = vmax.f32 %v2125, 0.0
    %v2651 = vmax.f32 %v2509, 0.0
    %v2652 = vmax.f32 %v2511, 0.0
    %v2653 = vmax.f32 %v2127, 0.0
    %v2654 = vmax.f32 %v2129, 0.0
    %v2655 = vmax.f32 %v2513, 0.0
    %v2656 = vmax.f32 %v2515, 0.0
    %v2657 = vmax.f32 %v2133, 0.0
    %v2658 = vmax.f32 %v2135, 0.0
    %v2659 = vmax.f32 %v2519, 0.0
    %v2660 = vmax.f32 %v2521, 0.0
    %v2661 = vmax.f32 %v2137, 0.0
    %v2662 = vmax.f32 %v2139, 0.0
    %v2663 = vmax.f32 %v2523, 0.0
    %v2664 = vmax.f32 %v2525, 0.0
    %v2665 = vmax.f32 %v2143, 0.0
    %v2666 = vmax.f32 %v2145, 0.0
    %v2667 = vmax.f32 %v2529, 0.0
    %v2668 = vmax.f32 %v2531, 0.0
    %v2669 = vmax.f32 %v2147, 0.0
    %v2670 = vmax.f32 %v2149, 0.0
    %v2671 = vmax.f32 %v2533, 0.0
    %v2672 = vmax.f32 %v2535, 0.0
    %v2673 = vmax.f32 %v2153, 0.0
    %v2674 = vmax.f32 %v2155, 0.0
    %v2675 = vmax.f32 %v2539, 0.0
    %v2676 = vmax.f32 %v2541, 0.0
    %v2677 = vmax.f32 %v2157, 0.0
    %v2678 = vmax.f32 %v2159, 0.0
    %v2679 = vmax.f32 %v2543, 0.0
    %v2680 = vmax.f32 %v2545, 0.0
    %v2681 = vmax.f32 %v2163, 0.0
    %v2682 = vmax.f32 %v2165, 0.0
    %v2683 = vmax.f32 %v2549, 0.0
    %v2684 = vmax.f32 %v2551, 0.0
    %v2685 = vmax.f32 %v2167, 0.0
    %v2686 = vmax.f32 %v2169, 0.0
    %v2687 = vmax.f32 %v2553, 0.0
    %v2688 = vmax.f32 %v2555, 0.0
    %v2689 = vmax.f32 %v2173, 0.0
    %v2690 = vmax.f32 %v2175, 0.0
    %v2691 = vmax.f32 %v2559, 0.0
    %v2692 = vmax.f32 %v2561, 0.0
    %v2693 = vmax.f32 %v2177, 0.0
    %v2694 = vmax.f32 %v2179, 0.0
    %v2695 = vmax.f32 %v2563, 0.0
    %v2696 = vmax.f32 %v2565, 0.0
    %v2697 = vmax.f32 %v2183, 0.0
    %v2698 = vmax.f32 %v2185, 0.0
    %v2699 = vmax.f32 %v2569, 0.0
    %v2700 = vmax.f32 %v2571, 0.0
    %v2701 = vmax.f32 %v2187, 0.0
    %v2702 = vmax.f32 %v2189, 0.0
    %v2703 = vmax.f32 %v2573, 0.0
    %v2704 = vmax.f32 %v2575, 0.0
    %v2705 = vpack.c.bf16 %v2581, %v2577
    %v2706 = vpack.c.bf16 %v2582, %v2578
    %v2707 = vpack.c.bf16 %v2583, %v2579
    %v2708 = vpack.c.bf16 %v2584, %v2580
    %v2709 = vpack.c.bf16 %v2589, %v2585
    %v2710 = vpack.c.bf16 %v2590, %v2586
    %v2711 = vpack.c.bf16 %v2591, %v2587
    %v2712 = vpack.c.bf16 %v2592, %v2588
    %v2713 = vpack.c.bf16 %v2597, %v2593
    %v2714 = vpack.c.bf16 %v2598, %v2594
    %v2715 = vpack.c.bf16 %v2599, %v2595
    %v2716 = vpack.c.bf16 %v2600, %v2596
    %v2717 = vpack.c.bf16 %v2605, %v2601
    %v2718 = vpack.c.bf16 %v2606, %v2602
    %v2719 = vpack.c.bf16 %v2607, %v2603
    %v2720 = vpack.c.bf16 %v2608, %v2604
    %v2721 = vpack.c.bf16 %v2613, %v2609
    %v2722 = vpack.c.bf16 %v2614, %v2610
    %v2723 = vpack.c.bf16 %v2615, %v2611
    %v2724 = vpack.c.bf16 %v2616, %v2612
    %v2725 = vpack.c.bf16 %v2621, %v2617
    %v2726 = vpack.c.bf16 %v2622, %v2618
    %v2727 = vpack.c.bf16 %v2623, %v2619
    %v2728 = vpack.c.bf16 %v2624, %v2620
    %v2729 = vpack.c.bf16 %v2629, %v2625
    %v2730 = vpack.c.bf16 %v2630, %v2626
    %v2731 = vpack.c.bf16 %v2631, %v2627
    %v2732 = vpack.c.bf16 %v2632, %v2628
    %v2733 = vpack.c.bf16 %v2637, %v2633
    %v2734 = vpack.c.bf16 %v2638, %v2634
    %v2735 = vpack.c.bf16 %v2639, %v2635
    %v2736 = vpack.c.bf16 %v2640, %v2636
    %v2737 = vpack.c.bf16 %v2645, %v2641
    %v2738 = vpack.c.bf16 %v2646, %v2642
    %v2739 = vpack.c.bf16 %v2647, %v2643
    %v2740 = vpack.c.bf16 %v2648, %v2644
    %v2741 = vpack.c.bf16 %v2653, %v2649
    %v2742 = vpack.c.bf16 %v2654, %v2650
    %v2743 = vpack.c.bf16 %v2655, %v2651
    %v2744 = vpack.c.bf16 %v2656, %v2652
    %v2745 = vpack.c.bf16 %v2661, %v2657
    %v2746 = vpack.c.bf16 %v2662, %v2658
    %v2747 = vpack.c.bf16 %v2663, %v2659
    %v2748 = vpack.c.bf16 %v2664, %v2660
    %v2749 = vpack.c.bf16 %v2669, %v2665
    %v2750 = vpack.c.bf16 %v2670, %v2666
    %v2751 = vpack.c.bf16 %v2671, %v2667
    %v2752 = vpack.c.bf16 %v2672, %v2668
    %v2753 = vpack.c.bf16 %v2677, %v2673
    %v2754 = vpack.c.bf16 %v2678, %v2674
    %v2755 = vpack.c.bf16 %v2679, %v2675
    %v2756 = vpack.c.bf16 %v2680, %v2676
    %v2757 = vpack.c.bf16 %v2685, %v2681
    %v2758 = vpack.c.bf16 %v2686, %v2682
    %v2759 = vpack.c.bf16 %v2687, %v2683
    %v2760 = vpack.c.bf16 %v2688, %v2684
    %v2761 = vpack.c.bf16 %v2693, %v2689
    %v2762 = vpack.c.bf16 %v2694, %v2690
    %v2763 = vpack.c.bf16 %v2695, %v2691
    %v2764 = vpack.c.bf16 %v2696, %v2692
    %v2765 = vpack.c.bf16 %v2701, %v2697
    %v2766 = vpack.c.bf16 %v2702, %v2698
    %v2767 = vpack.c.bf16 %v2703, %v2699
    %v2768 = vpack.c.bf16 %v2704, %v2700
    %v2769 = vld [vmem:[#allocation8] sm:$0xff]
    %v2770 = vld [vmem:[#allocation8 + $0x8] sm:$0xff]
    %v2771 = vld [vmem:[#allocation8 + $0x10] sm:$0xff]
    %v2772 = vld [vmem:[#allocation8 + $0x18] sm:$0xff]
    %v2773 = vld [vmem:[#allocation8 + $0x20] sm:$0xff]
    %v2774 = vld [vmem:[#allocation8 + $0x28] sm:$0xff]
    %v2775 = vld [vmem:[#allocation8 + $0x30] sm:$0xff]
    %v2776 = vld [vmem:[#allocation8 + $0x38] sm:$0xff]
    %v2777 = vld [vmem:[#allocation8 + $0x40] sm:$0xff]
    %v2778 = vld [vmem:[#allocation8 + $0x48] sm:$0xff]
    %v2779 = vld [vmem:[#allocation8 + $0x50] sm:$0xff]
    %v2780 = vld [vmem:[#allocation8 + $0x58] sm:$0xff]
    %v2781 = vld [vmem:[#allocation8 + $0x60] sm:$0xff]
    %v2782 = vld [vmem:[#allocation8 + $0x68] sm:$0xff]
    %v2783 = vld [vmem:[#allocation8 + $0x70] sm:$0xff]
    %v2784 = vld [vmem:[#allocation8 + $0x78] sm:$0xff]
    %v2785 = vld [vmem:[#allocation8 + $0x80] sm:$0xff]
    %v2786 = vld [vmem:[#allocation8 + $0x88] sm:$0xff]
    %v2787 = vld [vmem:[#allocation8 + $0x90] sm:$0xff]
    %v2788 = vld [vmem:[#allocation8 + $0x98] sm:$0xff]
    %v2789 = vld [vmem:[#allocation8 + $0xa0] sm:$0xff]
    %v2790 = vld [vmem:[#allocation8 + $0xa8] sm:$0xff]
    %v2791 = vld [vmem:[#allocation8 + $0xb0] sm:$0xff]
    %v2792 = vld [vmem:[#allocation8 + $0xb8] sm:$0xff]
    %v2793 = vld [vmem:[#allocation8 + $0xc0] sm:$0xff]
    %v2794 = vld [vmem:[#allocation8 + $0xc8] sm:$0xff]
    %v2795 = vld [vmem:[#allocation8 + $0xd0] sm:$0xff]
    %v2796 = vld [vmem:[#allocation8 + $0xd8] sm:$0xff]
    %v2797 = vld [vmem:[#allocation8 + $0xe0] sm:$0xff]
    %v2798 = vld [vmem:[#allocation8 + $0xe8] sm:$0xff]
    %v2799 = vld [vmem:[#allocation8 + $0xf0] sm:$0xff]
    %v2800 = vld [vmem:[#allocation8 + $0xf8] sm:$0xff]
    %v2801 = vld [vmem:[#allocation8 + $0x100] sm:$0xff]
    %v2802 = vld [vmem:[#allocation8 + $0x108] sm:$0xff]
    %v2803 = vld [vmem:[#allocation8 + $0x110] sm:$0xff]
    %v2804 = vld [vmem:[#allocation8 + $0x118] sm:$0xff]
    %v2805 = vld [vmem:[#allocation8 + $0x120] sm:$0xff]
    %v2806 = vld [vmem:[#allocation8 + $0x128] sm:$0xff]
    %v2807 = vld [vmem:[#allocation8 + $0x130] sm:$0xff]
    %v2808 = vld [vmem:[#allocation8 + $0x138] sm:$0xff]
    %v2809 = vld [vmem:[#allocation8 + $0x140] sm:$0xff]
    %v2810 = vld [vmem:[#allocation8 + $0x148] sm:$0xff]
    %v2811 = vld [vmem:[#allocation8 + $0x150] sm:$0xff]
    %v2812 = vld [vmem:[#allocation8 + $0x158] sm:$0xff]
    %v2813 = vld [vmem:[#allocation8 + $0x160] sm:$0xff]
    %v2814 = vld [vmem:[#allocation8 + $0x168] sm:$0xff]
    %v2815 = vld [vmem:[#allocation8 + $0x170] sm:$0xff]
    %v2816 = vld [vmem:[#allocation8 + $0x178] sm:$0xff]
    %v2817 = vld [vmem:[#allocation8 + $0x180] sm:$0xff]
    %v2818 = vld [vmem:[#allocation8 + $0x188] sm:$0xff]
    %v2819 = vld [vmem:[#allocation8 + $0x190] sm:$0xff]
    %v2820 = vld [vmem:[#allocation8 + $0x198] sm:$0xff]
    %v2821 = vld [vmem:[#allocation8 + $0x1a0] sm:$0xff]
    %v2822 = vld [vmem:[#allocation8 + $0x1a8] sm:$0xff]
    %v2823 = vld [vmem:[#allocation8 + $0x1b0] sm:$0xff]
    %v2824 = vld [vmem:[#allocation8 + $0x1b8] sm:$0xff]
    %v2825 = vld [vmem:[#allocation8 + $0x1c0] sm:$0xff]
    %v2826 = vld [vmem:[#allocation8 + $0x1c8] sm:$0xff]
    %v2827 = vld [vmem:[#allocation8 + $0x1d0] sm:$0xff]
    %v2828 = vld [vmem:[#allocation8 + $0x1d8] sm:$0xff]
    %v2829 = vld [vmem:[#allocation8 + $0x1e0] sm:$0xff]
    %v2830 = vld [vmem:[#allocation8 + $0x1e8] sm:$0xff]
    %v2831 = vld [vmem:[#allocation8 + $0x1f0] sm:$0xff]
    %v2832 = vld [vmem:[#allocation8 + $0x1f8] sm:$0xff]
    %v2833 = vld [vmem:[#allocation8 + $0x200] sm:$0xff]
    %v2834 = vld [vmem:[#allocation8 + $0x208] sm:$0xff]
    %v2835 = vld [vmem:[#allocation8 + $0x210] sm:$0xff]
    %v2836 = vld [vmem:[#allocation8 + $0x218] sm:$0xff]
    %v2837 = vld [vmem:[#allocation8 + $0x220] sm:$0xff]
    %v2838 = vld [vmem:[#allocation8 + $0x228] sm:$0xff]
    %v2839 = vld [vmem:[#allocation8 + $0x230] sm:$0xff]
    %v2840 = vld [vmem:[#allocation8 + $0x238] sm:$0xff]
    %v2841 = vld [vmem:[#allocation8 + $0x240] sm:$0xff]
    %v2842 = vld [vmem:[#allocation8 + $0x248] sm:$0xff]
    %v2843 = vld [vmem:[#allocation8 + $0x250] sm:$0xff]
    %v2844 = vld [vmem:[#allocation8 + $0x258] sm:$0xff]
    %v2845 = vld [vmem:[#allocation8 + $0x260] sm:$0xff]
    %v2846 = vld [vmem:[#allocation8 + $0x268] sm:$0xff]
    %v2847 = vld [vmem:[#allocation8 + $0x270] sm:$0xff]
    %v2848 = vld [vmem:[#allocation8 + $0x278] sm:$0xff]
    %v2849 = vld [vmem:[#allocation8 + $0x280] sm:$0xff]
    %v2850 = vld [vmem:[#allocation8 + $0x288] sm:$0xff]
    %v2851 = vld [vmem:[#allocation8 + $0x290] sm:$0xff]
    %v2852 = vld [vmem:[#allocation8 + $0x298] sm:$0xff]
    %v2853 = vld [vmem:[#allocation8 + $0x2a0] sm:$0xff]
    %v2854 = vld [vmem:[#allocation8 + $0x2a8] sm:$0xff]
    %v2855 = vld [vmem:[#allocation8 + $0x2b0] sm:$0xff]
    %v2856 = vld [vmem:[#allocation8 + $0x2b8] sm:$0xff]
    %v2857 = vld [vmem:[#allocation8 + $0x2c0] sm:$0xff]
    %v2858 = vld [vmem:[#allocation8 + $0x2c8] sm:$0xff]
    %v2859 = vld [vmem:[#allocation8 + $0x2d0] sm:$0xff]
    %v2860 = vld [vmem:[#allocation8 + $0x2d8] sm:$0xff]
    %v2861 = vld [vmem:[#allocation8 + $0x2e0] sm:$0xff]
    %v2862 = vld [vmem:[#allocation8 + $0x2e8] sm:$0xff]
    %v2863 = vld [vmem:[#allocation8 + $0x2f0] sm:$0xff]
    %v2864 = vld [vmem:[#allocation8 + $0x2f8] sm:$0xff]
    %v2865 = vld [vmem:[#allocation8 + $0x300] sm:$0xff]
    %v2866 = vld [vmem:[#allocation8 + $0x308] sm:$0xff]
    %v2867 = vld [vmem:[#allocation8 + $0x310] sm:$0xff]
    %v2868 = vld [vmem:[#allocation8 + $0x318] sm:$0xff]
    %v2869 = vld [vmem:[#allocation8 + $0x320] sm:$0xff]
    %v2870 = vld [vmem:[#allocation8 + $0x328] sm:$0xff]
    %v2871 = vld [vmem:[#allocation8 + $0x330] sm:$0xff]
    %v2872 = vld [vmem:[#allocation8 + $0x338] sm:$0xff]
    %v2873 = vld [vmem:[#allocation8 + $0x340] sm:$0xff]
    %v2874 = vld [vmem:[#allocation8 + $0x348] sm:$0xff]
    %v2875 = vld [vmem:[#allocation8 + $0x350] sm:$0xff]
    %v2876 = vld [vmem:[#allocation8 + $0x358] sm:$0xff]
    %v2877 = vld [vmem:[#allocation8 + $0x360] sm:$0xff]
    %v2878 = vld [vmem:[#allocation8 + $0x368] sm:$0xff]
    %v2879 = vld [vmem:[#allocation8 + $0x370] sm:$0xff]
    %v2880 = vld [vmem:[#allocation8 + $0x378] sm:$0xff]
    %v2881 = vld [vmem:[#allocation8 + $0x380] sm:$0xff]
    %v2882 = vld [vmem:[#allocation8 + $0x388] sm:$0xff]
    %v2883 = vld [vmem:[#allocation8 + $0x390] sm:$0xff]
    %v2884 = vld [vmem:[#allocation8 + $0x398] sm:$0xff]
    %v2885 = vld [vmem:[#allocation8 + $0x3a0] sm:$0xff]
    %v2886 = vld [vmem:[#allocation8 + $0x3a8] sm:$0xff]
    %v2887 = vld [vmem:[#allocation8 + $0x3b0] sm:$0xff]
    %v2888 = vld [vmem:[#allocation8 + $0x3b8] sm:$0xff]
    %v2889 = vld [vmem:[#allocation8 + $0x3c0] sm:$0xff]
    %v2890 = vld [vmem:[#allocation8 + $0x3c8] sm:$0xff]
    %v2891 = vld [vmem:[#allocation8 + $0x3d0] sm:$0xff]
    %v2892 = vld [vmem:[#allocation8 + $0x3d8] sm:$0xff]
    %v2893 = vld [vmem:[#allocation8 + $0x3e0] sm:$0xff]
    %v2894 = vld [vmem:[#allocation8 + $0x3e8] sm:$0xff]
    %v2895 = vld [vmem:[#allocation8 + $0x3f0] sm:$0xff]
    %v2896 = vld [vmem:[#allocation8 + $0x3f8] sm:$0xff]
    %v2898 = vlaneseq
    %v2899 = vshrl.u32 %v2898, 7
    %v2900 = vsub.s32 0, %v2899
    %v2901 = vrot.slane %v127, %v2900
    %v2902 = vlaneseq
    %v2903 = vshrl.u32 %v2902, 7
    %v2904 = vsub.s32 1, %v2903
    %v2905 = vrot.slane %v127, %v2904
    %v2906 = vlaneseq
    %v2907 = vshrl.u32 %v2906, 7
    %v2908 = vsub.s32 2, %v2907
    %v2909 = vrot.slane %v127, %v2908
    %v2910 = vlaneseq
    %v2911 = vshrl.u32 %v2910, 7
    %v2912 = vsub.s32 3, %v2911
    %v2913 = vrot.slane %v127, %v2912
    %v3046 = vunpack.c.l.b16 %v2769
    %v3047 = vunpack.c.h.b16 %v2769
    %v3048 = vunpack.c.l.b16 %v2770
    %v3049 = vunpack.c.h.b16 %v2770
    %v3050 = vunpack.c.l.b16 %v2771
    %v3051 = vunpack.c.h.b16 %v2771
    %v3052 = vunpack.c.l.b16 %v2772
    %v3053 = vunpack.c.h.b16 %v2772
    %v3054 = vunpack.c.l.b16 %v2773
    %v3055 = vunpack.c.h.b16 %v2773
    %v3056 = vunpack.c.l.b16 %v2774
    %v3057 = vunpack.c.h.b16 %v2774
    %v3058 = vunpack.c.l.b16 %v2775
    %v3059 = vunpack.c.h.b16 %v2775
    %v3060 = vunpack.c.l.b16 %v2776
    %v3061 = vunpack.c.h.b16 %v2776
    %v3062 = vunpack.c.l.b16 %v2777
    %v3063 = vunpack.c.h.b16 %v2777
    %v3064 = vunpack.c.l.b16 %v2778
    %v3065 = vunpack.c.h.b16 %v2778
    %v3066 = vunpack.c.l.b16 %v2779
    %v3067 = vunpack.c.h.b16 %v2779
    %v3068 = vunpack.c.l.b16 %v2780
    %v3069 = vunpack.c.h.b16 %v2780
    %v3070 = vunpack.c.l.b16 %v2781
    %v3071 = vunpack.c.h.b16 %v2781
    %v3072 = vunpack.c.l.b16 %v2782
    %v3073 = vunpack.c.h.b16 %v2782
    %v3074 = vunpack.c.l.b16 %v2783
    %v3075 = vunpack.c.h.b16 %v2783
    %v3076 = vunpack.c.l.b16 %v2784
    %v3077 = vunpack.c.h.b16 %v2784
    %v3078 = vunpack.c.l.b16 %v2785
    %v3079 = vunpack.c.h.b16 %v2785
    %v3080 = vunpack.c.l.b16 %v2786
    %v3081 = vunpack.c.h.b16 %v2786
    %v3082 = vunpack.c.l.b16 %v2787
    %v3083 = vunpack.c.h.b16 %v2787
    %v3084 = vunpack.c.l.b16 %v2788
    %v3085 = vunpack.c.h.b16 %v2788
    %v3086 = vunpack.c.l.b16 %v2789
    %v3087 = vunpack.c.h.b16 %v2789
    %v3088 = vunpack.c.l.b16 %v2790
    %v3089 = vunpack.c.h.b16 %v2790
    %v3090 = vunpack.c.l.b16 %v2791
    %v3091 = vunpack.c.h.b16 %v2791
    %v3092 = vunpack.c.l.b16 %v2792
    %v3093 = vunpack.c.h.b16 %v2792
    %v3094 = vunpack.c.l.b16 %v2793
    %v3095 = vunpack.c.h.b16 %v2793
    %v3096 = vunpack.c.l.b16 %v2794
    %v3097 = vunpack.c.h.b16 %v2794
    %v3098 = vunpack.c.l.b16 %v2795
    %v3099 = vunpack.c.h.b16 %v2795
    %v3100 = vunpack.c.l.b16 %v2796
    %v3101 = vunpack.c.h.b16 %v2796
    %v3102 = vunpack.c.l.b16 %v2797
    %v3103 = vunpack.c.h.b16 %v2797
    %v3104 = vunpack.c.l.b16 %v2798
    %v3105 = vunpack.c.h.b16 %v2798
    %v3106 = vunpack.c.l.b16 %v2799
    %v3107 = vunpack.c.h.b16 %v2799
    %v3108 = vunpack.c.l.b16 %v2800
    %v3109 = vunpack.c.h.b16 %v2800
    %v3110 = vunpack.c.l.b16 %v2801
    %v3111 = vunpack.c.h.b16 %v2801
    %v3112 = vunpack.c.l.b16 %v2802
    %v3113 = vunpack.c.h.b16 %v2802
    %v3114 = vunpack.c.l.b16 %v2803
    %v3115 = vunpack.c.h.b16 %v2803
    %v3116 = vunpack.c.l.b16 %v2804
    %v3117 = vunpack.c.h.b16 %v2804
    %v3118 = vunpack.c.l.b16 %v2805
    %v3119 = vunpack.c.h.b16 %v2805
    %v3120 = vunpack.c.l.b16 %v2806
    %v3121 = vunpack.c.h.b16 %v2806
    %v3122 = vunpack.c.l.b16 %v2807
    %v3123 = vunpack.c.h.b16 %v2807
    %v3124 = vunpack.c.l.b16 %v2808
    %v3125 = vunpack.c.h.b16 %v2808
    %v3126 = vunpack.c.l.b16 %v2809
    %v3127 = vunpack.c.h.b16 %v2809
    %v3128 = vunpack.c.l.b16 %v2810
    %v3129 = vunpack.c.h.b16 %v2810
    %v3130 = vunpack.c.l.b16 %v2811
    %v3131 = vunpack.c.h.b16 %v2811
    %v3132 = vunpack.c.l.b16 %v2812
    %v3133 = vunpack.c.h.b16 %v2812
    %v3134 = vunpack.c.l.b16 %v2813
    %v3135 = vunpack.c.h.b16 %v2813
    %v3136 = vunpack.c.l.b16 %v2814
    %v3137 = vunpack.c.h.b16 %v2814
    %v3138 = vunpack.c.l.b16 %v2815
    %v3139 = vunpack.c.h.b16 %v2815
    %v3140 = vunpack.c.l.b16 %v2816
    %v3141 = vunpack.c.h.b16 %v2816
    %v3142 = vunpack.c.l.b16 %v2817
    %v3143 = vunpack.c.h.b16 %v2817
    %v3144 = vunpack.c.l.b16 %v2818
    %v3145 = vunpack.c.h.b16 %v2818
    %v3146 = vunpack.c.l.b16 %v2819
    %v3147 = vunpack.c.h.b16 %v2819
    %v3148 = vunpack.c.l.b16 %v2820
    %v3149 = vunpack.c.h.b16 %v2820
    %v3150 = vunpack.c.l.b16 %v2821
    %v3151 = vunpack.c.h.b16 %v2821
    %v3152 = vunpack.c.l.b16 %v2822
    %v3153 = vunpack.c.h.b16 %v2822
    %v3154 = vunpack.c.l.b16 %v2823
    %v3155 = vunpack.c.h.b16 %v2823
    %v3156 = vunpack.c.l.b16 %v2824
    %v3157 = vunpack.c.h.b16 %v2824
    %v3158 = vunpack.c.l.b16 %v2825
    %v3159 = vunpack.c.h.b16 %v2825
    %v3160 = vunpack.c.l.b16 %v2826
    %v3161 = vunpack.c.h.b16 %v2826
    %v3162 = vunpack.c.l.b16 %v2827
    %v3163 = vunpack.c.h.b16 %v2827
    %v3164 = vunpack.c.l.b16 %v2828
    %v3165 = vunpack.c.h.b16 %v2828
    %v3166 = vunpack.c.l.b16 %v2829
    %v3167 = vunpack.c.h.b16 %v2829
    %v3168 = vunpack.c.l.b16 %v2830
    %v3169 = vunpack.c.h.b16 %v2830
    %v3170 = vunpack.c.l.b16 %v2831
    %v3171 = vunpack.c.h.b16 %v2831
    %v3172 = vunpack.c.l.b16 %v2832
    %v3173 = vunpack.c.h.b16 %v2832
    %v3174 = vunpack.c.l.b16 %v2833
    %v3175 = vunpack.c.h.b16 %v2833
    %v3176 = vunpack.c.l.b16 %v2834
    %v3177 = vunpack.c.h.b16 %v2834
    %v3178 = vunpack.c.l.b16 %v2835
    %v3179 = vunpack.c.h.b16 %v2835
    %v3180 = vunpack.c.l.b16 %v2836
    %v3181 = vunpack.c.h.b16 %v2836
    %v3182 = vunpack.c.l.b16 %v2837
    %v3183 = vunpack.c.h.b16 %v2837
    %v3184 = vunpack.c.l.b16 %v2838
    %v3185 = vunpack.c.h.b16 %v2838
    %v3186 = vunpack.c.l.b16 %v2839
    %v3187 = vunpack.c.h.b16 %v2839
    %v3188 = vunpack.c.l.b16 %v2840
    %v3189 = vunpack.c.h.b16 %v2840
    %v3190 = vunpack.c.l.b16 %v2841
    %v3191 = vunpack.c.h.b16 %v2841
    %v3192 = vunpack.c.l.b16 %v2842
    %v3193 = vunpack.c.h.b16 %v2842
    %v3194 = vunpack.c.l.b16 %v2843
    %v3195 = vunpack.c.h.b16 %v2843
    %v3196 = vunpack.c.l.b16 %v2844
    %v3197 = vunpack.c.h.b16 %v2844
    %v3198 = vunpack.c.l.b16 %v2845
    %v3199 = vunpack.c.h.b16 %v2845
    %v3200 = vunpack.c.l.b16 %v2846
    %v3201 = vunpack.c.h.b16 %v2846
    %v3202 = vunpack.c.l.b16 %v2847
    %v3203 = vunpack.c.h.b16 %v2847
    %v3204 = vunpack.c.l.b16 %v2848
    %v3205 = vunpack.c.h.b16 %v2848
    %v3206 = vunpack.c.l.b16 %v2849
    %v3207 = vunpack.c.h.b16 %v2849
    %v3208 = vunpack.c.l.b16 %v2850
    %v3209 = vunpack.c.h.b16 %v2850
    %v3210 = vunpack.c.l.b16 %v2851
    %v3211 = vunpack.c.h.b16 %v2851
    %v3212 = vunpack.c.l.b16 %v2852
    %v3213 = vunpack.c.h.b16 %v2852
    %v3214 = vunpack.c.l.b16 %v2853
    %v3215 = vunpack.c.h.b16 %v2853
    %v3216 = vunpack.c.l.b16 %v2854
    %v3217 = vunpack.c.h.b16 %v2854
    %v3218 = vunpack.c.l.b16 %v2855
    %v3219 = vunpack.c.h.b16 %v2855
    %v3220 = vunpack.c.l.b16 %v2856
    %v3221 = vunpack.c.h.b16 %v2856
    %v3222 = vunpack.c.l.b16 %v2857
    %v3223 = vunpack.c.h.b16 %v2857
    %v3224 = vunpack.c.l.b16 %v2858
    %v3225 = vunpack.c.h.b16 %v2858
    %v3226 = vunpack.c.l.b16 %v2859
    %v3227 = vunpack.c.h.b16 %v2859
    %v3228 = vunpack.c.l.b16 %v2860
    %v3229 = vunpack.c.h.b16 %v2860
    %v3230 = vunpack.c.l.b16 %v2861
    %v3231 = vunpack.c.h.b16 %v2861
    %v3232 = vunpack.c.l.b16 %v2862
    %v3233 = vunpack.c.h.b16 %v2862
    %v3234 = vunpack.c.l.b16 %v2863
    %v3235 = vunpack.c.h.b16 %v2863
    %v3236 = vunpack.c.l.b16 %v2864
    %v3237 = vunpack.c.h.b16 %v2864
    %v3238 = vunpack.c.l.b16 %v2865
    %v3239 = vunpack.c.h.b16 %v2865
    %v3240 = vunpack.c.l.b16 %v2866
    %v3241 = vunpack.c.h.b16 %v2866
    %v3242 = vunpack.c.l.b16 %v2867
    %v3243 = vunpack.c.h.b16 %v2867
    %v3244 = vunpack.c.l.b16 %v2868
    %v3245 = vunpack.c.h.b16 %v2868
    %v3246 = vunpack.c.l.b16 %v2869
    %v3247 = vunpack.c.h.b16 %v2869
    %v3248 = vunpack.c.l.b16 %v2870
    %v3249 = vunpack.c.h.b16 %v2870
    %v3250 = vunpack.c.l.b16 %v2871
    %v3251 = vunpack.c.h.b16 %v2871
    %v3252 = vunpack.c.l.b16 %v2872
    %v3253 = vunpack.c.h.b16 %v2872
    %v3254 = vunpack.c.l.b16 %v2873
    %v3255 = vunpack.c.h.b16 %v2873
    %v3256 = vunpack.c.l.b16 %v2874
    %v3257 = vunpack.c.h.b16 %v2874
    %v3258 = vunpack.c.l.b16 %v2875
    %v3259 = vunpack.c.h.b16 %v2875
    %v3260 = vunpack.c.l.b16 %v2876
    %v3261 = vunpack.c.h.b16 %v2876
    %v3262 = vunpack.c.l.b16 %v2877
    %v3263 = vunpack.c.h.b16 %v2877
    %v3264 = vunpack.c.l.b16 %v2878
    %v3265 = vunpack.c.h.b16 %v2878
    %v3266 = vunpack.c.l.b16 %v2879
    %v3267 = vunpack.c.h.b16 %v2879
    %v3268 = vunpack.c.l.b16 %v2880
    %v3269 = vunpack.c.h.b16 %v2880
    %v3270 = vunpack.c.l.b16 %v2881
    %v3271 = vunpack.c.h.b16 %v2881
    %v3272 = vunpack.c.l.b16 %v2882
    %v3273 = vunpack.c.h.b16 %v2882
    %v3274 = vunpack.c.l.b16 %v2883
    %v3275 = vunpack.c.h.b16 %v2883
    %v3276 = vunpack.c.l.b16 %v2884
    %v3277 = vunpack.c.h.b16 %v2884
    %v3278 = vunpack.c.l.b16 %v2885
    %v3279 = vunpack.c.h.b16 %v2885
    %v3280 = vunpack.c.l.b16 %v2886
    %v3281 = vunpack.c.h.b16 %v2886
    %v3282 = vunpack.c.l.b16 %v2887
    %v3283 = vunpack.c.h.b16 %v2887
    %v3284 = vunpack.c.l.b16 %v2888
    %v3285 = vunpack.c.h.b16 %v2888
    %v3286 = vunpack.c.l.b16 %v2889
    %v3287 = vunpack.c.h.b16 %v2889
    %v3288 = vunpack.c.l.b16 %v2890
    %v3289 = vunpack.c.h.b16 %v2890
    %v3290 = vunpack.c.l.b16 %v2891
    %v3291 = vunpack.c.h.b16 %v2891
    %v3292 = vunpack.c.l.b16 %v2892
    %v3293 = vunpack.c.h.b16 %v2892
    %v3294 = vunpack.c.l.b16 %v2893
    %v3295 = vunpack.c.h.b16 %v2893
    %v3296 = vunpack.c.l.b16 %v2894
    %v3297 = vunpack.c.h.b16 %v2894
    %v3298 = vunpack.c.l.b16 %v2895
    %v3299 = vunpack.c.h.b16 %v2895
    %v3300 = vunpack.c.l.b16 %v2896
    %v3301 = vunpack.c.h.b16 %v2896
    %v3302 = vpack.c.b16 %v3050, %v3046
    %v3303 = vpack.c.b16 %v3051, %v3047
    %v3304 = vpack.c.b16 %v3052, %v3048
    %v3305 = vpack.c.b16 %v3053, %v3049
    %v3306 = vpack.c.b16 %v3058, %v3054
    %v3307 = vpack.c.b16 %v3059, %v3055
    %v3308 = vpack.c.b16 %v3060, %v3056
    %v3309 = vpack.c.b16 %v3061, %v3057
    %v3310 = vpack.c.b16 %v3066, %v3062
    %v3311 = vpack.c.b16 %v3067, %v3063
    %v3312 = vpack.c.b16 %v3068, %v3064
    %v3313 = vpack.c.b16 %v3069, %v3065
    %v3314 = vpack.c.b16 %v3074, %v3070
    %v3315 = vpack.c.b16 %v3075, %v3071
    %v3316 = vpack.c.b16 %v3076, %v3072
    %v3317 = vpack.c.b16 %v3077, %v3073
    %v3318 = vpack.c.b16 %v3082, %v3078
    %v3319 = vpack.c.b16 %v3083, %v3079
    %v3320 = vpack.c.b16 %v3084, %v3080
    %v3321 = vpack.c.b16 %v3085, %v3081
    %v3322 = vpack.c.b16 %v3090, %v3086
    %v3323 = vpack.c.b16 %v3091, %v3087
    %v3324 = vpack.c.b16 %v3092, %v3088
    %v3325 = vpack.c.b16 %v3093, %v3089
    %v3326 = vpack.c.b16 %v3098, %v3094
    %v3327 = vpack.c.b16 %v3099, %v3095
    %v3328 = vpack.c.b16 %v3100, %v3096
    %v3329 = vpack.c.b16 %v3101, %v3097
    %v3330 = vpack.c.b16 %v3106, %v3102
    %v3331 = vpack.c.b16 %v3107, %v3103
    %v3332 = vpack.c.b16 %v3108, %v3104
    %v3333 = vpack.c.b16 %v3109, %v3105
    %v3334 = vpack.c.b16 %v3114, %v3110
    %v3335 = vpack.c.b16 %v3115, %v3111
    %v3336 = vpack.c.b16 %v3116, %v3112
    %v3337 = vpack.c.b16 %v3117, %v3113
    %v3338 = vpack.c.b16 %v3122, %v3118
    %v3339 = vpack.c.b16 %v3123, %v3119
    %v3340 = vpack.c.b16 %v3124, %v3120
    %v3341 = vpack.c.b16 %v3125, %v3121
    %v3342 = vpack.c.b16 %v3130, %v3126
    %v3343 = vpack.c.b16 %v3131, %v3127
    %v3344 = vpack.c.b16 %v3132, %v3128
    %v3345 = vpack.c.b16 %v3133, %v3129
    %v3346 = vpack.c.b16 %v3138, %v3134
    %v3347 = vpack.c.b16 %v3139, %v3135
    %v3348 = vpack.c.b16 %v3140, %v3136
    %v3349 = vpack.c.b16 %v3141, %v3137
    %v3350 = vpack.c.b16 %v3146, %v3142
    %v3351 = vpack.c.b16 %v3147, %v3143
    %v3352 = vpack.c.b16 %v3148, %v3144
    %v3353 = vpack.c.b16 %v3149, %v3145
    %v3354 = vpack.c.b16 %v3154, %v3150
    %v3355 = vpack.c.b16 %v3155, %v3151
    %v3356 = vpack.c.b16 %v3156, %v3152
    %v3357 = vpack.c.b16 %v3157, %v3153
    %v3358 = vpack.c.b16 %v3162, %v3158
    %v3359 = vpack.c.b16 %v3163, %v3159
    %v3360 = vpack.c.b16 %v3164, %v3160
    %v3361 = vpack.c.b16 %v3165, %v3161
    %v3362 = vpack.c.b16 %v3170, %v3166
    %v3363 = vpack.c.b16 %v3171, %v3167
    %v3364 = vpack.c.b16 %v3172, %v3168
    %v3365 = vpack.c.b16 %v3173, %v3169
    %v3366 = vpack.c.b16 %v3178, %v3174
    %v3367 = vpack.c.b16 %v3179, %v3175
    %v3368 = vpack.c.b16 %v3180, %v3176
    %v3369 = vpack.c.b16 %v3181, %v3177
    %v3370 = vpack.c.b16 %v3186, %v3182
    %v3371 = vpack.c.b16 %v3187, %v3183
    %v3372 = vpack.c.b16 %v3188, %v3184
    %v3373 = vpack.c.b16 %v3189, %v3185
    %v3374 = vpack.c.b16 %v3194, %v3190
    %v3375 = vpack.c.b16 %v3195, %v3191
    %v3376 = vpack.c.b16 %v3196, %v3192
    %v3377 = vpack.c.b16 %v3197, %v3193
    %v3378 = vpack.c.b16 %v3202, %v3198
    %v3379 = vpack.c.b16 %v3203, %v3199
    %v3380 = vpack.c.b16 %v3204, %v3200
    %v3381 = vpack.c.b16 %v3205, %v3201
    %v3382 = vpack.c.b16 %v3210, %v3206
    %v3383 = vpack.c.b16 %v3211, %v3207
    %v3384 = vpack.c.b16 %v3212, %v3208
    %v3385 = vpack.c.b16 %v3213, %v3209
    %v3386 = vpack.c.b16 %v3218, %v3214
    %v3387 = vpack.c.b16 %v3219, %v3215
    %v3388 = vpack.c.b16 %v3220, %v3216
    %v3389 = vpack.c.b16 %v3221, %v3217
    %v3390 = vpack.c.b16 %v3226, %v3222
    %v3391 = vpack.c.b16 %v3227, %v3223
    %v3392 = vpack.c.b16 %v3228, %v3224
    %v3393 = vpack.c.b16 %v3229, %v3225
    %v3394 = vpack.c.b16 %v3234, %v3230
    %v3395 = vpack.c.b16 %v3235, %v3231
    %v3396 = vpack.c.b16 %v3236, %v3232
    %v3397 = vpack.c.b16 %v3237, %v3233
    %v3398 = vpack.c.b16 %v3242, %v3238
    %v3399 = vpack.c.b16 %v3243, %v3239
    %v3400 = vpack.c.b16 %v3244, %v3240
    %v3401 = vpack.c.b16 %v3245, %v3241
    %v3402 = vpack.c.b16 %v3250, %v3246
    %v3403 = vpack.c.b16 %v3251, %v3247
    %v3404 = vpack.c.b16 %v3252, %v3248
    %v3405 = vpack.c.b16 %v3253, %v3249
    %v3406 = vpack.c.b16 %v3258, %v3254
    %v3407 = vpack.c.b16 %v3259, %v3255
    %v3408 = vpack.c.b16 %v3260, %v3256
    %v3409 = vpack.c.b16 %v3261, %v3257
    %v3410 = vpack.c.b16 %v3266, %v3262
    %v3411 = vpack.c.b16 %v3267, %v3263
    %v3412 = vpack.c.b16 %v3268, %v3264
    %v3413 = vpack.c.b16 %v3269, %v3265
    %v3414 = vpack.c.b16 %v3274, %v3270
    %v3415 = vpack.c.b16 %v3275, %v3271
    %v3416 = vpack.c.b16 %v3276, %v3272
    %v3417 = vpack.c.b16 %v3277, %v3273
    %v3418 = vpack.c.b16 %v3282, %v3278
    %v3419 = vpack.c.b16 %v3283, %v3279
    %v3420 = vpack.c.b16 %v3284, %v3280
    %v3421 = vpack.c.b16 %v3285, %v3281
    %v3422 = vpack.c.b16 %v3290, %v3286
    %v3423 = vpack.c.b16 %v3291, %v3287
    %v3424 = vpack.c.b16 %v3292, %v3288
    %v3425 = vpack.c.b16 %v3293, %v3289
    %v3426 = vpack.c.b16 %v3298, %v3294
    %v3427 = vpack.c.b16 %v3299, %v3295
    %v3428 = vpack.c.b16 %v3300, %v3296
    %v3429 = vpack.c.b16 %v3301, %v3297
    %3558 = vmatprep.subr.bf16.mxu0 %v3303
    %3559 = vmatpush1.bf16.msra.mxu0 %v3302
    %3560 = vmatprep.subr.bf16.mxu0 %v3307
    %3561 = vmatpush1.bf16.msra.mxu0 %v3306
    %3562 = vmatprep.subr.bf16.mxu0 %v3311
    %3563 = vmatpush1.bf16.msra.mxu0 %v3310
    %3564 = vmatprep.subr.bf16.mxu0 %v3315
    %3565 = vmatpush1.bf16.msra.mxu0 %v3314
    %3566 = vmatprep.subr.bf16.mxu0 %v3319
    %3567 = vmatpush1.bf16.msra.mxu0 %v3318
    %3568 = vmatprep.subr.bf16.mxu0 %v3323
    %3569 = vmatpush1.bf16.msra.mxu0 %v3322
    %3570 = vmatprep.subr.bf16.mxu0 %v3327
    %3571 = vmatpush1.bf16.msra.mxu0 %v3326
    %3572 = vmatprep.subr.bf16.mxu0 %v3331
    %3573 = vmatpush1.bf16.msra.mxu0 %v3330
    %3574 = vmatprep.subr.bf16.mxu0 %v3335
    %3575 = vmatpush1.bf16.msra.mxu0 %v3334
    %3576 = vmatprep.subr.bf16.mxu0 %v3339
    %3577 = vmatpush1.bf16.msra.mxu0 %v3338
    %3578 = vmatprep.subr.bf16.mxu0 %v3343
    %3579 = vmatpush1.bf16.msra.mxu0 %v3342
    %3580 = vmatprep.subr.bf16.mxu0 %v3347
    %3581 = vmatpush1.bf16.msra.mxu0 %v3346
    %3582 = vmatprep.subr.bf16.mxu0 %v3351
    %3583 = vmatpush1.bf16.msra.mxu0 %v3350
    %3584 = vmatprep.subr.bf16.mxu0 %v3355
    %3585 = vmatpush1.bf16.msra.mxu0 %v3354
    %3586 = vmatprep.subr.bf16.mxu0 %v3359
    %3587 = vmatpush1.bf16.msra.mxu0 %v3358
    %3588 = vmatprep.subr.bf16.mxu0 %v3363
    %3589 = vmatpush1.bf16.msra.mxu0 %v3362
    %3590 = vmatprep.mubr.bf16.mxu0 %v2706
    %3591 = vmatmul.mubr.bf16.gmra.mrb[0].mxu0 %v2705
    %v3592 = vpop.f32.mrb[0].mxu0
    %v3593 = vadd.f32 %v2901, %v3592
    %v3594 = vpop.f32.mrb[0].mxu0
    %v3595 = vadd.f32 %v2905, %v3594
    %v3596 = vpop.f32.mrb[0].mxu0
    %v3597 = vadd.f32 %v2901, %v3596
    %v3598 = vpop.f32.mrb[0].mxu0
    %v3599 = vadd.f32 %v2905, %v3598
    %3600 = vmatprep.mubr.bf16.mxu0 %v2710
    %3601 = vmatmul.mubr.bf16.gmra.mrb[0].mxu0 %v2709
    %v3602 = vpop.f32.mrb[0].mxu0
    %v3603 = vadd.f32 %v2901, %v3602
    %v3604 = vpop.f32.mrb[0].mxu0
    %v3605 = vadd.f32 %v2905, %v3604
    %v3606 = vpop.f32.mrb[0].mxu0
    %v3607 = vadd.f32 %v2901, %v3606
    %v3608 = vpop.f32.mrb[0].mxu0
    %v3609 = vadd.f32 %v2905, %v3608
    %3610 = vmatprep.mubr.bf16.mxu0 %v2714
    %3611 = vmatmul.mubr.bf16.gmra.mrb[0].mxu0 %v2713
    %v3612 = vpop.f32.mrb[0].mxu0
    %v3613 = vadd.f32 %v2901, %v3612
    %v3614 = vpop.f32.mrb[0].mxu0
    %v3615 = vadd.f32 %v2905, %v3614
    %v3616 = vpop.f32.mrb[0].mxu0
    %v3617 = vadd.f32 %v2901, %v3616
    %v3618 = vpop.f32.mrb[0].mxu0
    %v3619 = vadd.f32 %v2905, %v3618
    %3620 = vmatprep.mubr.bf16.mxu0 %v2718
    %3621 = vmatmul.mubr.bf16.gmra.mrb[0].mxu0 %v2717
    %v3622 = vpop.f32.mrb[0].mxu0
    %v3623 = vadd.f32 %v2901, %v3622
    %v3624 = vpop.f32.mrb[0].mxu0
    %v3625 = vadd.f32 %v2905, %v3624
    %v3626 = vpop.f32.mrb[0].mxu0
    %v3627 = vadd.f32 %v2901, %v3626
    %v3628 = vpop.f32.mrb[0].mxu0
    %v3629 = vadd.f32 %v2905, %v3628
    %3630 = vmatprep.mubr.bf16.mxu0 %v2722
    %3631 = vmatmul.mubr.bf16.gmra.mrb[0].mxu0 %v2721
    %v3632 = vpop.f32.mrb[0].mxu0
    %v3633 = vadd.f32 %v2901, %v3632
    %v3634 = vpop.f32.mrb[0].mxu0
    %v3635 = vadd.f32 %v2905, %v3634
    %v3636 = vpop.f32.mrb[0].mxu0
    %v3637 = vadd.f32 %v2901, %v3636
    %v3638 = vpop.f32.mrb[0].mxu0
    %v3639 = vadd.f32 %v2905, %v3638
    %3640 = vmatprep.mubr.bf16.mxu0 %v2726
    %3641 = vmatmul.mubr.bf16.gmra.mrb[0].mxu0 %v2725
    %v3642 = vpop.f32.mrb[0].mxu0
    %v3643 = vadd.f32 %v2901, %v3642
    %v3644 = vpop.f32.mrb[0].mxu0
    %v3645 = vadd.f32 %v2905, %v3644
    %v3646 = vpop.f32.mrb[0].mxu0
    %v3647 = vadd.f32 %v2901, %v3646
    %v3648 = vpop.f32.mrb[0].mxu0
    %v3649 = vadd.f32 %v2905, %v3648
    %3650 = vmatprep.mubr.bf16.mxu0 %v2730
    %3651 = vmatmul.mubr.bf16.gmra.mrb[0].mxu0 %v2729
    %v3652 = vpop.f32.mrb[0].mxu0
    %v3653 = vadd.f32 %v2901, %v3652
    %v3654 = vpop.f32.mrb[0].mxu0
    %v3655 = vadd.f32 %v2905, %v3654
    %v3656 = vpop.f32.mrb[0].mxu0
    %v3657 = vadd.f32 %v2901, %v3656
    %v3658 = vpop.f32.mrb[0].mxu0
    %v3659 = vadd.f32 %v2905, %v3658
    %3660 = vmatprep.mubr.bf16.mxu0 %v2734
    %3661 = vmatmul.mubr.bf16.gmra.mrb[0].mxu0 %v2733
    %v3662 = vpop.f32.mrb[0].mxu0
    %v3663 = vadd.f32 %v2901, %v3662
    %v3664 = vpop.f32.mrb[0].mxu0
    %v3665 = vadd.f32 %v2905, %v3664
    %v3666 = vpop.f32.mrb[0].mxu0
    %v3667 = vadd.f32 %v2901, %v3666
    %v3668 = vpop.f32.mrb[0].mxu0
    %v3669 = vadd.f32 %v2905, %v3668
    %3670 = vmatprep.mubr.bf16.mxu0 %v2738
    %3671 = vmatmul.mubr.bf16.gmra.mrb[0].mxu0 %v2737
    %v3672 = vpop.f32.mrb[0].mxu0
    %v3673 = vadd.f32 %v2901, %v3672
    %v3674 = vpop.f32.mrb[0].mxu0
    %v3675 = vadd.f32 %v2905, %v3674
    %v3676 = vpop.f32.mrb[0].mxu0
    %v3677 = vadd.f32 %v2901, %v3676
    %v3678 = vpop.f32.mrb[0].mxu0
    %v3679 = vadd.f32 %v2905, %v3678
    %3680 = vmatprep.mubr.bf16.mxu0 %v2742
    %3681 = vmatmul.mubr.bf16.gmra.mrb[0].mxu0 %v2741
    %v3682 = vpop.f32.mrb[0].mxu0
    %v3683 = vadd.f32 %v2901, %v3682
    %v3684 = vpop.f32.mrb[0].mxu0
    %v3685 = vadd.f32 %v2905, %v3684
    %v3686 = vpop.f32.mrb[0].mxu0
    %v3687 = vadd.f32 %v2901, %v3686
    %v3688 = vpop.f32.mrb[0].mxu0
    %v3689 = vadd.f32 %v2905, %v3688
    %3690 = vmatprep.mubr.bf16.mxu0 %v2746
    %3691 = vmatmul.mubr.bf16.gmra.mrb[0].mxu0 %v2745
    %v3692 = vpop.f32.mrb[0].mxu0
    %v3693 = vadd.f32 %v2901, %v3692
    %v3694 = vpop.f32.mrb[0].mxu0
    %v3695 = vadd.f32 %v2905, %v3694
    %v3696 = vpop.f32.mrb[0].mxu0
    %v3697 = vadd.f32 %v2901, %v3696
    %v3698 = vpop.f32.mrb[0].mxu0
    %v3699 = vadd.f32 %v2905, %v3698
    %3700 = vmatprep.mubr.bf16.mxu0 %v2750
    %3701 = vmatmul.mubr.bf16.gmra.mrb[0].mxu0 %v2749
    %v3702 = vpop.f32.mrb[0].mxu0
    %v3703 = vadd.f32 %v2901, %v3702
    %v3704 = vpop.f32.mrb[0].mxu0
    %v3705 = vadd.f32 %v2905, %v3704
    %v3706 = vpop.f32.mrb[0].mxu0
    %v3707 = vadd.f32 %v2901, %v3706
    %v3708 = vpop.f32.mrb[0].mxu0
    %v3709 = vadd.f32 %v2905, %v3708
    %3710 = vmatprep.mubr.bf16.mxu0 %v2754
    %3711 = vmatmul.mubr.bf16.gmra.mrb[0].mxu0 %v2753
    %v3712 = vpop.f32.mrb[0].mxu0
    %v3713 = vadd.f32 %v2901, %v3712
    %v3714 = vpop.f32.mrb[0].mxu0
    %v3715 = vadd.f32 %v2905, %v3714
    %v3716 = vpop.f32.mrb[0].mxu0
    %v3717 = vadd.f32 %v2901, %v3716
    %v3718 = vpop.f32.mrb[0].mxu0
    %v3719 = vadd.f32 %v2905, %v3718
    %3720 = vmatprep.mubr.bf16.mxu0 %v2758
    %3721 = vmatmul.mubr.bf16.gmra.mrb[0].mxu0 %v2757
    %v3722 = vpop.f32.mrb[0].mxu0
    %v3723 = vadd.f32 %v2901, %v3722
    %v3724 = vpop.f32.mrb[0].mxu0
    %v3725 = vadd.f32 %v2905, %v3724
    %v3726 = vpop.f32.mrb[0].mxu0
    %v3727 = vadd.f32 %v2901, %v3726
    %v3728 = vpop.f32.mrb[0].mxu0
    %v3729 = vadd.f32 %v2905, %v3728
    %3730 = vmatprep.mubr.bf16.mxu0 %v2762
    %3731 = vmatmul.mubr.bf16.gmra.mrb[0].mxu0 %v2761
    %v3732 = vpop.f32.mrb[0].mxu0
    %v3733 = vadd.f32 %v2901, %v3732
    %v3734 = vpop.f32.mrb[0].mxu0
    %v3735 = vadd.f32 %v2905, %v3734
    %v3736 = vpop.f32.mrb[0].mxu0
    %v3737 = vadd.f32 %v2901, %v3736
    %v3738 = vpop.f32.mrb[0].mxu0
    %v3739 = vadd.f32 %v2905, %v3738
    %3740 = vmatprep.mubr.bf16.mxu0 %v2766
    %3741 = vmatmul.mubr.bf16.gmra.mrb[0].mxu0 %v2765
    %v3742 = vpop.f32.mrb[0].mxu0
    %v3743 = vadd.f32 %v2901, %v3742
    %v3744 = vpop.f32.mrb[0].mxu0
    %v3745 = vadd.f32 %v2905, %v3744
    %v3746 = vpop.f32.mrb[0].mxu0
    %v3747 = vadd.f32 %v2901, %v3746
    %v3748 = vpop.f32.mrb[0].mxu0
    %v3749 = vadd.f32 %v2905, %v3748
    %3750 = vdwg.mxu0
    %3751 = vmatprep.subr.bf16.mxu0 %v3367
    %3752 = vmatpush1.bf16.msra.mxu0 %v3366
    %3753 = vmatprep.subr.bf16.mxu0 %v3371
    %3754 = vmatpush1.bf16.msra.mxu0 %v3370
    %3755 = vmatprep.subr.bf16.mxu0 %v3375
    %3756 = vmatpush1.bf16.msra.mxu0 %v3374
    %3757 = vmatprep.subr.bf16.mxu0 %v3379
    %3758 = vmatpush1.bf16.msra.mxu0 %v3378
    %3759 = vmatprep.subr.bf16.mxu0 %v3383
    %3760 = vmatpush1.bf16.msra.mxu0 %v3382
    %3761 = vmatprep.subr.bf16.mxu0 %v3387
    %3762 = vmatpush1.bf16.msra.mxu0 %v3386
    %3763 = vmatprep.subr.bf16.mxu0 %v3391
    %3764 = vmatpush1.bf16.msra.mxu0 %v3390
    %3765 = vmatprep.subr.bf16.mxu0 %v3395
    %3766 = vmatpush1.bf16.msra.mxu0 %v3394
    %3767 = vmatprep.subr.bf16.mxu0 %v3399
    %3768 = vmatpush1.bf16.msra.mxu0 %v3398
    %3769 = vmatprep.subr.bf16.mxu0 %v3403
    %3770 = vmatpush1.bf16.msra.mxu0 %v3402
    %3771 = vmatprep.subr.bf16.mxu0 %v3407
    %3772 = vmatpush1.bf16.msra.mxu0 %v3406
    %3773 = vmatprep.subr.bf16.mxu0 %v3411
    %3774 = vmatpush1.bf16.msra.mxu0 %v3410
    %3775 = vmatprep.subr.bf16.mxu0 %v3415
    %3776 = vmatpush1.bf16.msra.mxu0 %v3414
    %3777 = vmatprep.subr.bf16.mxu0 %v3419
    %3778 = vmatpush1.bf16.msra.mxu0 %v3418
    %3779 = vmatprep.subr.bf16.mxu0 %v3423
    %3780 = vmatpush1.bf16.msra.mxu0 %v3422
    %3781 = vmatprep.subr.bf16.mxu0 %v3427
    %3782 = vmatpush1.bf16.msra.mxu0 %v3426
    %3783 = vmatprep.mubr.bf16.mxu0 %v2708
    %3784 = vmatmul.mubr.bf16.gmra.mrb[0].mxu0 %v2707
    %v3785 = vpop.f32.mrb[0].mxu0
    %v3786 = vadd.f32 %v3593, %v3785
    %v3787 = vpop.f32.mrb[0].mxu0
    %v3788 = vadd.f32 %v3595, %v3787
    %v3789 = vpop.f32.mrb[0].mxu0
    %v3790 = vadd.f32 %v3597, %v3789
    %v3791 = vpop.f32.mrb[0].mxu0
    %v3792 = vadd.f32 %v3599, %v3791
    %3793 = vmatprep.mubr.bf16.mxu0 %v2712
    %3794 = vmatmul.mubr.bf16.gmra.mrb[0].mxu0 %v2711
    %v3795 = vpop.f32.mrb[0].mxu0
    %v3796 = vadd.f32 %v3603, %v3795
    %v3797 = vpop.f32.mrb[0].mxu0
    %v3798 = vadd.f32 %v3605, %v3797
    %v3799 = vpop.f32.mrb[0].mxu0
    %v3800 = vadd.f32 %v3607, %v3799
    %v3801 = vpop.f32.mrb[0].mxu0
    %v3802 = vadd.f32 %v3609, %v3801
    %3803 = vmatprep.mubr.bf16.mxu0 %v2716
    %3804 = vmatmul.mubr.bf16.gmra.mrb[0].mxu0 %v2715
    %v3805 = vpop.f32.mrb[0].mxu0
    %v3806 = vadd.f32 %v3613, %v3805
    %v3807 = vpop.f32.mrb[0].mxu0
    %v3808 = vadd.f32 %v3615, %v3807
    %v3809 = vpop.f32.mrb[0].mxu0
    %v3810 = vadd.f32 %v3617, %v3809
    %v3811 = vpop.f32.mrb[0].mxu0
    %v3812 = vadd.f32 %v3619, %v3811
    %3813 = vmatprep.mubr.bf16.mxu0 %v2720
    %3814 = vmatmul.mubr.bf16.gmra.mrb[0].mxu0 %v2719
    %v3815 = vpop.f32.mrb[0].mxu0
    %v3816 = vadd.f32 %v3623, %v3815
    %v3817 = vpop.f32.mrb[0].mxu0
    %v3818 = vadd.f32 %v3625, %v3817
    %v3819 = vpop.f32.mrb[0].mxu0
    %v3820 = vadd.f32 %v3627, %v3819
    %v3821 = vpop.f32.mrb[0].mxu0
    %v3822 = vadd.f32 %v3629, %v3821
    %3823 = vmatprep.mubr.bf16.mxu0 %v2724
    %3824 = vmatmul.mubr.bf16.gmra.mrb[0].mxu0 %v2723
    %v3825 = vpop.f32.mrb[0].mxu0
    %v3826 = vadd.f32 %v3633, %v3825
    %v3827 = vpop.f32.mrb[0].mxu0
    %v3828 = vadd.f32 %v3635, %v3827
    %v3829 = vpop.f32.mrb[0].mxu0
    %v3830 = vadd.f32 %v3637, %v3829
    %v3831 = vpop.f32.mrb[0].mxu0
    %v3832 = vadd.f32 %v3639, %v3831
    %3833 = vmatprep.mubr.bf16.mxu0 %v2728
    %3834 = vmatmul.mubr.bf16.gmra.mrb[0].mxu0 %v2727
    %v3835 = vpop.f32.mrb[0].mxu0
    %v3836 = vadd.f32 %v3643, %v3835
    %v3837 = vpop.f32.mrb[0].mxu0
    %v3838 = vadd.f32 %v3645, %v3837
    %v3839 = vpop.f32.mrb[0].mxu0
    %v3840 = vadd.f32 %v3647, %v3839
    %v3841 = vpop.f32.mrb[0].mxu0
    %v3842 = vadd.f32 %v3649, %v3841
    %3843 = vmatprep.mubr.bf16.mxu0 %v2732
    %3844 = vmatmul.mubr.bf16.gmra.mrb[0].mxu0 %v2731
    %v3845 = vpop.f32.mrb[0].mxu0
    %v3846 = vadd.f32 %v3653, %v3845
    %v3847 = vpop.f32.mrb[0].mxu0
    %v3848 = vadd.f32 %v3655, %v3847
    %v3849 = vpop.f32.mrb[0].mxu0
    %v3850 = vadd.f32 %v3657, %v3849
    %v3851 = vpop.f32.mrb[0].mxu0
    %v3852 = vadd.f32 %v3659, %v3851
    %3853 = vmatprep.mubr.bf16.mxu0 %v2736
    %3854 = vmatmul.mubr.bf16.gmra.mrb[0].mxu0 %v2735
    %v3855 = vpop.f32.mrb[0].mxu0
    %v3856 = vadd.f32 %v3663, %v3855
    %v3857 = vpop.f32.mrb[0].mxu0
    %v3858 = vadd.f32 %v3665, %v3857
    %v3859 = vpop.f32.mrb[0].mxu0
    %v3860 = vadd.f32 %v3667, %v3859
    %v3861 = vpop.f32.mrb[0].mxu0
    %v3862 = vadd.f32 %v3669, %v3861
    %3863 = vmatprep.mubr.bf16.mxu0 %v2740
    %3864 = vmatmul.mubr.bf16.gmra.mrb[0].mxu0 %v2739
    %v3865 = vpop.f32.mrb[0].mxu0
    %v3866 = vadd.f32 %v3673, %v3865
    %v3867 = vpop.f32.mrb[0].mxu0
    %v3868 = vadd.f32 %v3675, %v3867
    %v3869 = vpop.f32.mrb[0].mxu0
    %v3870 = vadd.f32 %v3677, %v3869
    %v3871 = vpop.f32.mrb[0].mxu0
    %v3872 = vadd.f32 %v3679, %v3871
    %3873 = vmatprep.mubr.bf16.mxu0 %v2744
    %3874 = vmatmul.mubr.bf16.gmra.mrb[0].mxu0 %v2743
    %v3875 = vpop.f32.mrb[0].mxu0
    %v3876 = vadd.f32 %v3683, %v3875
    %v3877 = vpop.f32.mrb[0].mxu0
    %v3878 = vadd.f32 %v3685, %v3877
    %v3879 = vpop.f32.mrb[0].mxu0
    %v3880 = vadd.f32 %v3687, %v3879
    %v3881 = vpop.f32.mrb[0].mxu0
    %v3882 = vadd.f32 %v3689, %v3881
    %3883 = vmatprep.mubr.bf16.mxu0 %v2748
    %3884 = vmatmul.mubr.bf16.gmra.mrb[0].mxu0 %v2747
    %v3885 = vpop.f32.mrb[0].mxu0
    %v3886 = vadd.f32 %v3693, %v3885
    %v3887 = vpop.f32.mrb[0].mxu0
    %v3888 = vadd.f32 %v3695, %v3887
    %v3889 = vpop.f32.mrb[0].mxu0
    %v3890 = vadd.f32 %v3697, %v3889
    %v3891 = vpop.f32.mrb[0].mxu0
    %v3892 = vadd.f32 %v3699, %v3891
    %3893 = vmatprep.mubr.bf16.mxu0 %v2752
    %3894 = vmatmul.mubr.bf16.gmra.mrb[0].mxu0 %v2751
    %v3895 = vpop.f32.mrb[0].mxu0
    %v3896 = vadd.f32 %v3703, %v3895
    %v3897 = vpop.f32.mrb[0].mxu0
    %v3898 = vadd.f32 %v3705, %v3897
    %v3899 = vpop.f32.mrb[0].mxu0
    %v3900 = vadd.f32 %v3707, %v3899
    %v3901 = vpop.f32.mrb[0].mxu0
    %v3902 = vadd.f32 %v3709, %v3901
    %3903 = vmatprep.mubr.bf16.mxu0 %v2756
    %3904 = vmatmul.mubr.bf16.gmra.mrb[0].mxu0 %v2755
    %v3905 = vpop.f32.mrb[0].mxu0
    %v3906 = vadd.f32 %v3713, %v3905
    %v3907 = vpop.f32.mrb[0].mxu0
    %v3908 = vadd.f32 %v3715, %v3907
    %v3909 = vpop.f32.mrb[0].mxu0
    %v3910 = vadd.f32 %v3717, %v3909
    %v3911 = vpop.f32.mrb[0].mxu0
    %v3912 = vadd.f32 %v3719, %v3911
    %3913 = vmatprep.mubr.bf16.mxu0 %v2760
    %3914 = vmatmul.mubr.bf16.gmra.mrb[0].mxu0 %v2759
    %v3915 = vpop.f32.mrb[0].mxu0
    %v3916 = vadd.f32 %v3723, %v3915
    %v3917 = vpop.f32.mrb[0].mxu0
    %v3918 = vadd.f32 %v3725, %v3917
    %v3919 = vpop.f32.mrb[0].mxu0
    %v3920 = vadd.f32 %v3727, %v3919
    %v3921 = vpop.f32.mrb[0].mxu0
    %v3922 = vadd.f32 %v3729, %v3921
    %3923 = vmatprep.mubr.bf16.mxu0 %v2764
    %3924 = vmatmul.mubr.bf16.gmra.mrb[0].mxu0 %v2763
    %v3925 = vpop.f32.mrb[0].mxu0
    %v3926 = vadd.f32 %v3733, %v3925
    %v3927 = vpop.f32.mrb[0].mxu0
    %v3928 = vadd.f32 %v3735, %v3927
    %v3929 = vpop.f32.mrb[0].mxu0
    %v3930 = vadd.f32 %v3737, %v3929
    %v3931 = vpop.f32.mrb[0].mxu0
    %v3932 = vadd.f32 %v3739, %v3931
    %3933 = vmatprep.mubr.bf16.mxu0 %v2768
    %3934 = vmatmul.mubr.bf16.gmra.mrb[0].mxu0 %v2767
    %v3935 = vpop.f32.mrb[0].mxu0
    %v3936 = vadd.f32 %v3743, %v3935
    %v3937 = vpop.f32.mrb[0].mxu0
    %v3938 = vadd.f32 %v3745, %v3937
    %v3939 = vpop.f32.mrb[0].mxu0
    %v3940 = vadd.f32 %v3747, %v3939
    %v3941 = vpop.f32.mrb[0].mxu0
    %v3942 = vadd.f32 %v3749, %v3941
    %3943 = vdwg.mxu0
    %3944 = vmatprep.subr.bf16.mxu0 %v3305
    %3945 = vmatpush1.bf16.msra.mxu0 %v3304
    %3946 = vmatprep.subr.bf16.mxu0 %v3309
    %3947 = vmatpush1.bf16.msra.mxu0 %v3308
    %3948 = vmatprep.subr.bf16.mxu0 %v3313
    %3949 = vmatpush1.bf16.msra.mxu0 %v3312
    %3950 = vmatprep.subr.bf16.mxu0 %v3317
    %3951 = vmatpush1.bf16.msra.mxu0 %v3316
    %3952 = vmatprep.subr.bf16.mxu0 %v3321
    %3953 = vmatpush1.bf16.msra.mxu0 %v3320
    %3954 = vmatprep.subr.bf16.mxu0 %v3325
    %3955 = vmatpush1.bf16.msra.mxu0 %v3324
    %3956 = vmatprep.subr.bf16.mxu0 %v3329
    %3957 = vmatpush1.bf16.msra.mxu0 %v3328
    %3958 = vmatprep.subr.bf16.mxu0 %v3333
    %3959 = vmatpush1.bf16.msra.mxu0 %v3332
    %3960 = vmatprep.subr.bf16.mxu0 %v3337
    %3961 = vmatpush1.bf16.msra.mxu0 %v3336
    %3962 = vmatprep.subr.bf16.mxu0 %v3341
    %3963 = vmatpush1.bf16.msra.mxu0 %v3340
    %3964 = vmatprep.subr.bf16.mxu0 %v3345
    %3965 = vmatpush1.bf16.msra.mxu0 %v3344
    %3966 = vmatprep.subr.bf16.mxu0 %v3349
    %3967 = vmatpush1.bf16.msra.mxu0 %v3348
    %3968 = vmatprep.subr.bf16.mxu0 %v3353
    %3969 = vmatpush1.bf16.msra.mxu0 %v3352
    %3970 = vmatprep.subr.bf16.mxu0 %v3357
    %3971 = vmatpush1.bf16.msra.mxu0 %v3356
    %3972 = vmatprep.subr.bf16.mxu0 %v3361
    %3973 = vmatpush1.bf16.msra.mxu0 %v3360
    %3974 = vmatprep.subr.bf16.mxu0 %v3365
    %3975 = vmatpush1.bf16.msra.mxu0 %v3364
    %3976 = vmatprep.mubr.bf16.mxu0 %v2706
    %3977 = vmatmul.mubr.bf16.gmra.mrb[0].mxu0 %v2705
    %v3978 = vpop.f32.mrb[0].mxu0
    %v3979 = vadd.f32 %v2909, %v3978
    %v3980 = vpop.f32.mrb[0].mxu0
    %v3981 = vadd.f32 %v2913, %v3980
    %v3982 = vpop.f32.mrb[0].mxu0
    %v3983 = vadd.f32 %v2909, %v3982
    %v3984 = vpop.f32.mrb[0].mxu0
    %v3985 = vadd.f32 %v2913, %v3984
    %3986 = vmatprep.mubr.bf16.mxu0 %v2710
    %3987 = vmatmul.mubr.bf16.gmra.mrb[0].mxu0 %v2709
    %v3988 = vpop.f32.mrb[0].mxu0
    %v3989 = vadd.f32 %v2909, %v3988
    %v3990 = vpop.f32.mrb[0].mxu0
    %v3991 = vadd.f32 %v2913, %v3990
    %v3992 = vpop.f32.mrb[0].mxu0
    %v3993 = vadd.f32 %v2909, %v3992
    %v3994 = vpop.f32.mrb[0].mxu0
    %v3995 = vadd.f32 %v2913, %v3994
    %3996 = vmatprep.mubr.bf16.mxu0 %v2714
    %3997 = vmatmul.mubr.bf16.gmra.mrb[0].mxu0 %v2713
    %v3998 = vpop.f32.mrb[0].mxu0
    %v3999 = vadd.f32 %v2909, %v3998
    %v4000 = vpop.f32.mrb[0].mxu0
    %v4001 = vadd.f32 %v2913, %v4000
    %v4002 = vpop.f32.mrb[0].mxu0
    %v4003 = vadd.f32 %v2909, %v4002
    %v4004 = vpop.f32.mrb[0].mxu0
    %v4005 = vadd.f32 %v2913, %v4004
    %4006 = vmatprep.mubr.bf16.mxu0 %v2718
    %4007 = vmatmul.mubr.bf16.gmra.mrb[0].mxu0 %v2717
    %v4008 = vpop.f32.mrb[0].mxu0
    %v4009 = vadd.f32 %v2909, %v4008
    %v4010 = vpop.f32.mrb[0].mxu0
    %v4011 = vadd.f32 %v2913, %v4010
    %v4012 = vpop.f32.mrb[0].mxu0
    %v4013 = vadd.f32 %v2909, %v4012
    %v4014 = vpop.f32.mrb[0].mxu0
    %v4015 = vadd.f32 %v2913, %v4014
    %4016 = vmatprep.mubr.bf16.mxu0 %v2722
    %4017 = vmatmul.mubr.bf16.gmra.mrb[0].mxu0 %v2721
    %v4018 = vpop.f32.mrb[0].mxu0
    %v4019 = vadd.f32 %v2909, %v4018
    %v4020 = vpop.f32.mrb[0].mxu0
    %v4021 = vadd.f32 %v2913, %v4020
    %v4022 = vpop.f32.mrb[0].mxu0
    %v4023 = vadd.f32 %v2909, %v4022
    %v4024 = vpop.f32.mrb[0].mxu0
    %v4025 = vadd.f32 %v2913, %v4024
    %4026 = vmatprep.mubr.bf16.mxu0 %v2726
    %4027 = vmatmul.mubr.bf16.gmra.mrb[0].mxu0 %v2725
    %v4028 = vpop.f32.mrb[0].mxu0
    %v4029 = vadd.f32 %v2909, %v4028
    %v4030 = vpop.f32.mrb[0].mxu0
    %v4031 = vadd.f32 %v2913, %v4030
    %v4032 = vpop.f32.mrb[0].mxu0
    %v4033 = vadd.f32 %v2909, %v4032
    %v4034 = vpop.f32.mrb[0].mxu0
    %v4035 = vadd.f32 %v2913, %v4034
    %4036 = vmatprep.mubr.bf16.mxu0 %v2730
    %4037 = vmatmul.mubr.bf16.gmra.mrb[0].mxu0 %v2729
    %v4038 = vpop.f32.mrb[0].mxu0
    %v4039 = vadd.f32 %v2909, %v4038
    %v4040 = vpop.f32.mrb[0].mxu0
    %v4041 = vadd.f32 %v2913, %v4040
    %v4042 = vpop.f32.mrb[0].mxu0
    %v4043 = vadd.f32 %v2909, %v4042
    %v4044 = vpop.f32.mrb[0].mxu0
    %v4045 = vadd.f32 %v2913, %v4044
    %4046 = vmatprep.mubr.bf16.mxu0 %v2734
    %4047 = vmatmul.mubr.bf16.gmra.mrb[0].mxu0 %v2733
    %v4048 = vpop.f32.mrb[0].mxu0
    %v4049 = vadd.f32 %v2909, %v4048
    %v4050 = vpop.f32.mrb[0].mxu0
    %v4051 = vadd.f32 %v2913, %v4050
    %v4052 = vpop.f32.mrb[0].mxu0
    %v4053 = vadd.f32 %v2909, %v4052
    %v4054 = vpop.f32.mrb[0].mxu0
    %v4055 = vadd.f32 %v2913, %v4054
    %4056 = vmatprep.mubr.bf16.mxu0 %v2738
    %4057 = vmatmul.mubr.bf16.gmra.mrb[0].mxu0 %v2737
    %v4058 = vpop.f32.mrb[0].mxu0
    %v4059 = vadd.f32 %v2909, %v4058
    %v4060 = vpop.f32.mrb[0].mxu0
    %v4061 = vadd.f32 %v2913, %v4060
    %v4062 = vpop.f32.mrb[0].mxu0
    %v4063 = vadd.f32 %v2909, %v4062
    %v4064 = vpop.f32.mrb[0].mxu0
    %v4065 = vadd.f32 %v2913, %v4064
    %4066 = vmatprep.mubr.bf16.mxu0 %v2742
    %4067 = vmatmul.mubr.bf16.gmra.mrb[0].mxu0 %v2741
    %v4068 = vpop.f32.mrb[0].mxu0
    %v4069 = vadd.f32 %v2909, %v4068
    %v4070 = vpop.f32.mrb[0].mxu0
    %v4071 = vadd.f32 %v2913, %v4070
    %v4072 = vpop.f32.mrb[0].mxu0
    %v4073 = vadd.f32 %v2909, %v4072
    %v4074 = vpop.f32.mrb[0].mxu0
    %v4075 = vadd.f32 %v2913, %v4074
    %4076 = vmatprep.mubr.bf16.mxu0 %v2746
    %4077 = vmatmul.mubr.bf16.gmra.mrb[0].mxu0 %v2745
    %v4078 = vpop.f32.mrb[0].mxu0
    %v4079 = vadd.f32 %v2909, %v4078
    %v4080 = vpop.f32.mrb[0].mxu0
    %v4081 = vadd.f32 %v2913, %v4080
    %v4082 = vpop.f32.mrb[0].mxu0
    %v4083 = vadd.f32 %v2909, %v4082
    %v4084 = vpop.f32.mrb[0].mxu0
    %v4085 = vadd.f32 %v2913, %v4084
    %4086 = vmatprep.mubr.bf16.mxu0 %v2750
    %4087 = vmatmul.mubr.bf16.gmra.mrb[0].mxu0 %v2749
    %v4088 = vpop.f32.mrb[0].mxu0
    %v4089 = vadd.f32 %v2909, %v4088
    %v4090 = vpop.f32.mrb[0].mxu0
    %v4091 = vadd.f32 %v2913, %v4090
    %v4092 = vpop.f32.mrb[0].mxu0
    %v4093 = vadd.f32 %v2909, %v4092
    %v4094 = vpop.f32.mrb[0].mxu0
    %v4095 = vadd.f32 %v2913, %v4094
    %4096 = vmatprep.mubr.bf16.mxu0 %v2754
    %4097 = vmatmul.mubr.bf16.gmra.mrb[0].mxu0 %v2753
    %v4098 = vpop.f32.mrb[0].mxu0
    %v4099 = vadd.f32 %v2909, %v4098
    %v4100 = vpop.f32.mrb[0].mxu0
    %v4101 = vadd.f32 %v2913, %v4100
    %v4102 = vpop.f32.mrb[0].mxu0
    %v4103 = vadd.f32 %v2909, %v4102
    %v4104 = vpop.f32.mrb[0].mxu0
    %v4105 = vadd.f32 %v2913, %v4104
    %4106 = vmatprep.mubr.bf16.mxu0 %v2758
    %4107 = vmatmul.mubr.bf16.gmra.mrb[0].mxu0 %v2757
    %v4108 = vpop.f32.mrb[0].mxu0
    %v4109 = vadd.f32 %v2909, %v4108
    %v4110 = vpop.f32.mrb[0].mxu0
    %v4111 = vadd.f32 %v2913, %v4110
    %v4112 = vpop.f32.mrb[0].mxu0
    %v4113 = vadd.f32 %v2909, %v4112
    %v4114 = vpop.f32.mrb[0].mxu0
    %v4115 = vadd.f32 %v2913, %v4114
    %4116 = vmatprep.mubr.bf16.mxu0 %v2762
    %4117 = vmatmul.mubr.bf16.gmra.mrb[0].mxu0 %v2761
    %v4118 = vpop.f32.mrb[0].mxu0
    %v4119 = vadd.f32 %v2909, %v4118
    %v4120 = vpop.f32.mrb[0].mxu0
    %v4121 = vadd.f32 %v2913, %v4120
    %v4122 = vpop.f32.mrb[0].mxu0
    %v4123 = vadd.f32 %v2909, %v4122
    %v4124 = vpop.f32.mrb[0].mxu0
    %v4125 = vadd.f32 %v2913, %v4124
    %4126 = vmatprep.mubr.bf16.mxu0 %v2766
    %4127 = vmatmul.mubr.bf16.gmra.mrb[0].mxu0 %v2765
    %v4128 = vpop.f32.mrb[0].mxu0
    %v4129 = vadd.f32 %v2909, %v4128
    %v4130 = vpop.f32.mrb[0].mxu0
    %v4131 = vadd.f32 %v2913, %v4130
    %v4132 = vpop.f32.mrb[0].mxu0
    %v4133 = vadd.f32 %v2909, %v4132
    %v4134 = vpop.f32.mrb[0].mxu0
    %v4135 = vadd.f32 %v2913, %v4134
    %4136 = vdwg.mxu0
    %4137 = vmatprep.subr.bf16.mxu0 %v3369
    %4138 = vmatpush1.bf16.msra.mxu0 %v3368
    %4139 = vmatprep.subr.bf16.mxu0 %v3373
    %4140 = vmatpush1.bf16.msra.mxu0 %v3372
    %4141 = vmatprep.subr.bf16.mxu0 %v3377
    %4142 = vmatpush1.bf16.msra.mxu0 %v3376
    %4143 = vmatprep.subr.bf16.mxu0 %v3381
    %4144 = vmatpush1.bf16.msra.mxu0 %v3380
    %4145 = vmatprep.subr.bf16.mxu0 %v3385
    %4146 = vmatpush1.bf16.msra.mxu0 %v3384
    %4147 = vmatprep.subr.bf16.mxu0 %v3389
    %4148 = vmatpush1.bf16.msra.mxu0 %v3388
    %4149 = vmatprep.subr.bf16.mxu0 %v3393
    %4150 = vmatpush1.bf16.msra.mxu0 %v3392
    %4151 = vmatprep.subr.bf16.mxu0 %v3397
    %4152 = vmatpush1.bf16.msra.mxu0 %v3396
    %4153 = vmatprep.subr.bf16.mxu0 %v3401
    %4154 = vmatpush1.bf16.msra.mxu0 %v3400
    %4155 = vmatprep.subr.bf16.mxu0 %v3405
    %4156 = vmatpush1.bf16.msra.mxu0 %v3404
    %4157 = vmatprep.subr.bf16.mxu0 %v3409
    %4158 = vmatpush1.bf16.msra.mxu0 %v3408
    %4159 = vmatprep.subr.bf16.mxu0 %v3413
    %4160 = vmatpush1.bf16.msra.mxu0 %v3412
    %4161 = vmatprep.subr.bf16.mxu0 %v3417
    %4162 = vmatpush1.bf16.msra.mxu0 %v3416
    %4163 = vmatprep.subr.bf16.mxu0 %v3421
    %4164 = vmatpush1.bf16.msra.mxu0 %v3420
    %4165 = vmatprep.subr.bf16.mxu0 %v3425
    %4166 = vmatpush1.bf16.msra.mxu0 %v3424
    %4167 = vmatprep.subr.bf16.mxu0 %v3429
    %4168 = vmatpush1.bf16.msra.mxu0 %v3428
    %4169 = vmatprep.mubr.bf16.mxu0 %v2708
    %4170 = vmatmul.mubr.bf16.gmra.mrb[0].mxu0 %v2707
    %v4171 = vpop.f32.mrb[0].mxu0
    %v4172 = vadd.f32 %v3979, %v4171
    %v4173 = vpop.f32.mrb[0].mxu0
    %v4174 = vadd.f32 %v3981, %v4173
    %v4175 = vpop.f32.mrb[0].mxu0
    %v4176 = vadd.f32 %v3983, %v4175
    %v4177 = vpop.f32.mrb[0].mxu0
    %v4178 = vadd.f32 %v3985, %v4177
    %4179 = vmatprep.mubr.bf16.mxu0 %v2712
    %4180 = vmatmul.mubr.bf16.gmra.mrb[0].mxu0 %v2711
    %v4181 = vpop.f32.mrb[0].mxu0
    %v4182 = vadd.f32 %v3989, %v4181
    %v4183 = vpop.f32.mrb[0].mxu0
    %v4184 = vadd.f32 %v3991, %v4183
    %v4185 = vpop.f32.mrb[0].mxu0
    %v4186 = vadd.f32 %v3993, %v4185
    %v4187 = vpop.f32.mrb[0].mxu0
    %v4188 = vadd.f32 %v3995, %v4187
    %4189 = vmatprep.mubr.bf16.mxu0 %v2716
    %4190 = vmatmul.mubr.bf16.gmra.mrb[0].mxu0 %v2715
    %v4191 = vpop.f32.mrb[0].mxu0
    %v4192 = vadd.f32 %v3999, %v4191
    %v4193 = vpop.f32.mrb[0].mxu0
    %v4194 = vadd.f32 %v4001, %v4193
    %v4195 = vpop.f32.mrb[0].mxu0
    %v4196 = vadd.f32 %v4003, %v4195
    %v4197 = vpop.f32.mrb[0].mxu0
    %v4198 = vadd.f32 %v4005, %v4197
    %4199 = vmatprep.mubr.bf16.mxu0 %v2720
    %4200 = vmatmul.mubr.bf16.gmra.mrb[0].mxu0 %v2719
    %v4201 = vpop.f32.mrb[0].mxu0
    %v4202 = vadd.f32 %v4009, %v4201
    %v4203 = vpop.f32.mrb[0].mxu0
    %v4204 = vadd.f32 %v4011, %v4203
    %v4205 = vpop.f32.mrb[0].mxu0
    %v4206 = vadd.f32 %v4013, %v4205
    %v4207 = vpop.f32.mrb[0].mxu0
    %v4208 = vadd.f32 %v4015, %v4207
    %4209 = vmatprep.mubr.bf16.mxu0 %v2724
    %4210 = vmatmul.mubr.bf16.gmra.mrb[0].mxu0 %v2723
    %v4211 = vpop.f32.mrb[0].mxu0
    %v4212 = vadd.f32 %v4019, %v4211
    %v4213 = vpop.f32.mrb[0].mxu0
    %v4214 = vadd.f32 %v4021, %v4213
    %v4215 = vpop.f32.mrb[0].mxu0
    %v4216 = vadd.f32 %v4023, %v4215
    %v4217 = vpop.f32.mrb[0].mxu0
    %v4218 = vadd.f32 %v4025, %v4217
    %4219 = vmatprep.mubr.bf16.mxu0 %v2728
    %4220 = vmatmul.mubr.bf16.gmra.mrb[0].mxu0 %v2727
    %v4221 = vpop.f32.mrb[0].mxu0
    %v4222 = vadd.f32 %v4029, %v4221
    %v4223 = vpop.f32.mrb[0].mxu0
    %v4224 = vadd.f32 %v4031, %v4223
    %v4225 = vpop.f32.mrb[0].mxu0
    %v4226 = vadd.f32 %v4033, %v4225
    %v4227 = vpop.f32.mrb[0].mxu0
    %v4228 = vadd.f32 %v4035, %v4227
    %4229 = vmatprep.mubr.bf16.mxu0 %v2732
    %4230 = vmatmul.mubr.bf16.gmra.mrb[0].mxu0 %v2731
    %v4231 = vpop.f32.mrb[0].mxu0
    %v4232 = vadd.f32 %v4039, %v4231
    %v4233 = vpop.f32.mrb[0].mxu0
    %v4234 = vadd.f32 %v4041, %v4233
    %v4235 = vpop.f32.mrb[0].mxu0
    %v4236 = vadd.f32 %v4043, %v4235
    %v4237 = vpop.f32.mrb[0].mxu0
    %v4238 = vadd.f32 %v4045, %v4237
    %4239 = vmatprep.mubr.bf16.mxu0 %v2736
    %4240 = vmatmul.mubr.bf16.gmra.mrb[0].mxu0 %v2735
    %v4241 = vpop.f32.mrb[0].mxu0
    %v4242 = vadd.f32 %v4049, %v4241
    %v4243 = vpop.f32.mrb[0].mxu0
    %v4244 = vadd.f32 %v4051, %v4243
    %v4245 = vpop.f32.mrb[0].mxu0
    %v4246 = vadd.f32 %v4053, %v4245
    %v4247 = vpop.f32.mrb[0].mxu0
    %v4248 = vadd.f32 %v4055, %v4247
    %4249 = vmatprep.mubr.bf16.mxu0 %v2740
    %4250 = vmatmul.mubr.bf16.gmra.mrb[0].mxu0 %v2739
    %v4251 = vpop.f32.mrb[0].mxu0
    %v4252 = vadd.f32 %v4059, %v4251
    %v4253 = vpop.f32.mrb[0].mxu0
    %v4254 = vadd.f32 %v4061, %v4253
    %v4255 = vpop.f32.mrb[0].mxu0
    %v4256 = vadd.f32 %v4063, %v4255
    %v4257 = vpop.f32.mrb[0].mxu0
    %v4258 = vadd.f32 %v4065, %v4257
    %4259 = vmatprep.mubr.bf16.mxu0 %v2744
    %4260 = vmatmul.mubr.bf16.gmra.mrb[0].mxu0 %v2743
    %v4261 = vpop.f32.mrb[0].mxu0
    %v4262 = vadd.f32 %v4069, %v4261
    %v4263 = vpop.f32.mrb[0].mxu0
    %v4264 = vadd.f32 %v4071, %v4263
    %v4265 = vpop.f32.mrb[0].mxu0
    %v4266 = vadd.f32 %v4073, %v4265
    %v4267 = vpop.f32.mrb[0].mxu0
    %v4268 = vadd.f32 %v4075, %v4267
    %4269 = vmatprep.mubr.bf16.mxu0 %v2748
    %4270 = vmatmul.mubr.bf16.gmra.mrb[0].mxu0 %v2747
    %v4271 = vpop.f32.mrb[0].mxu0
    %v4272 = vadd.f32 %v4079, %v4271
    %v4273 = vpop.f32.mrb[0].mxu0
    %v4274 = vadd.f32 %v4081, %v4273
    %v4275 = vpop.f32.mrb[0].mxu0
    %v4276 = vadd.f32 %v4083, %v4275
    %v4277 = vpop.f32.mrb[0].mxu0
    %v4278 = vadd.f32 %v4085, %v4277
    %4279 = vmatprep.mubr.bf16.mxu0 %v2752
    %4280 = vmatmul.mubr.bf16.gmra.mrb[0].mxu0 %v2751
    %v4281 = vpop.f32.mrb[0].mxu0
    %v4282 = vadd.f32 %v4089, %v4281
    %v4283 = vpop.f32.mrb[0].mxu0
    %v4284 = vadd.f32 %v4091, %v4283
    %v4285 = vpop.f32.mrb[0].mxu0
    %v4286 = vadd.f32 %v4093, %v4285
    %v4287 = vpop.f32.mrb[0].mxu0
    %v4288 = vadd.f32 %v4095, %v4287
    %4289 = vmatprep.mubr.bf16.mxu0 %v2756
    %4290 = vmatmul.mubr.bf16.gmra.mrb[0].mxu0 %v2755
    %v4291 = vpop.f32.mrb[0].mxu0
    %v4292 = vadd.f32 %v4099, %v4291
    %v4293 = vpop.f32.mrb[0].mxu0
    %v4294 = vadd.f32 %v4101, %v4293
    %v4295 = vpop.f32.mrb[0].mxu0
    %v4296 = vadd.f32 %v4103, %v4295
    %v4297 = vpop.f32.mrb[0].mxu0
    %v4298 = vadd.f32 %v4105, %v4297
    %4299 = vmatprep.mubr.bf16.mxu0 %v2760
    %4300 = vmatmul.mubr.bf16.gmra.mrb[0].mxu0 %v2759
    %v4301 = vpop.f32.mrb[0].mxu0
    %v4302 = vadd.f32 %v4109, %v4301
    %v4303 = vpop.f32.mrb[0].mxu0
    %v4304 = vadd.f32 %v4111, %v4303
    %v4305 = vpop.f32.mrb[0].mxu0
    %v4306 = vadd.f32 %v4113, %v4305
    %v4307 = vpop.f32.mrb[0].mxu0
    %v4308 = vadd.f32 %v4115, %v4307
    %4309 = vmatprep.mubr.bf16.mxu0 %v2764
    %4310 = vmatmul.mubr.bf16.gmra.mrb[0].mxu0 %v2763
    %v4311 = vpop.f32.mrb[0].mxu0
    %v4312 = vadd.f32 %v4119, %v4311
    %v4313 = vpop.f32.mrb[0].mxu0
    %v4314 = vadd.f32 %v4121, %v4313
    %v4315 = vpop.f32.mrb[0].mxu0
    %v4316 = vadd.f32 %v4123, %v4315
    %v4317 = vpop.f32.mrb[0].mxu0
    %v4318 = vadd.f32 %v4125, %v4317
    %4319 = vmatprep.mubr.bf16.mxu0 %v2768
    %4320 = vmatmul.mubr.bf16.gmra.mrb[0].mxu0 %v2767
    %v4321 = vpop.f32.mrb[0].mxu0
    %v4322 = vadd.f32 %v4129, %v4321
    %v4323 = vpop.f32.mrb[0].mxu0
    %v4324 = vadd.f32 %v4131, %v4323
    %v4325 = vpop.f32.mrb[0].mxu0
    %v4326 = vadd.f32 %v4133, %v4325
    %v4327 = vpop.f32.mrb[0].mxu0
    %v4328 = vadd.f32 %v4135, %v4327
    %4329 = vdwg.mxu0
    %v4330 = vmax.f32 %v3786, 0.0
    %v4331 = vmax.f32 %v3788, 0.0
    %v4332 = vmax.f32 %v4172, 0.0
    %v4333 = vmax.f32 %v4174, 0.0
    %v4334 = vmax.f32 %v3790, 0.0
    %v4335 = vmax.f32 %v3792, 0.0
    %v4336 = vmax.f32 %v4176, 0.0
    %v4337 = vmax.f32 %v4178, 0.0
    %v4338 = vmax.f32 %v3796, 0.0
    %v4339 = vmax.f32 %v3798, 0.0
    %v4340 = vmax.f32 %v4182, 0.0
    %v4341 = vmax.f32 %v4184, 0.0
    %v4342 = vmax.f32 %v3800, 0.0
    %v4343 = vmax.f32 %v3802, 0.0
    %v4344 = vmax.f32 %v4186, 0.0
    %v4345 = vmax.f32 %v4188, 0.0
    %v4346 = vmax.f32 %v3806, 0.0
    %v4347 = vmax.f32 %v3808, 0.0
    %v4348 = vmax.f32 %v4192, 0.0
    %v4349 = vmax.f32 %v4194, 0.0
    %v4350 = vmax.f32 %v3810, 0.0
    %v4351 = vmax.f32 %v3812, 0.0
    %v4352 = vmax.f32 %v4196, 0.0
    %v4353 = vmax.f32 %v4198, 0.0
    %v4354 = vmax.f32 %v3816, 0.0
    %v4355 = vmax.f32 %v3818, 0.0
    %v4356 = vmax.f32 %v4202, 0.0
    %v4357 = vmax.f32 %v4204, 0.0
    %v4358 = vmax.f32 %v3820, 0.0
    %v4359 = vmax.f32 %v3822, 0.0
    %v4360 = vmax.f32 %v4206, 0.0
    %v4361 = vmax.f32 %v4208, 0.0
    %v4362 = vmax.f32 %v3826, 0.0
    %v4363 = vmax.f32 %v3828, 0.0
    %v4364 = vmax.f32 %v4212, 0.0
    %v4365 = vmax.f32 %v4214, 0.0
    %v4366 = vmax.f32 %v3830, 0.0
    %v4367 = vmax.f32 %v3832, 0.0
    %v4368 = vmax.f32 %v4216, 0.0
    %v4369 = vmax.f32 %v4218, 0.0
    %v4370 = vmax.f32 %v3836, 0.0
    %v4371 = vmax.f32 %v3838, 0.0
    %v4372 = vmax.f32 %v4222, 0.0
    %v4373 = vmax.f32 %v4224, 0.0
    %v4374 = vmax.f32 %v3840, 0.0
    %v4375 = vmax.f32 %v3842, 0.0
    %v4376 = vmax.f32 %v4226, 0.0
    %v4377 = vmax.f32 %v4228, 0.0
    %v4378 = vmax.f32 %v3846, 0.0
    %v4379 = vmax.f32 %v3848, 0.0
    %v4380 = vmax.f32 %v4232, 0.0
    %v4381 = vmax.f32 %v4234, 0.0
    %v4382 = vmax.f32 %v3850, 0.0
    %v4383 = vmax.f32 %v3852, 0.0
    %v4384 = vmax.f32 %v4236, 0.0
    %v4385 = vmax.f32 %v4238, 0.0
    %v4386 = vmax.f32 %v3856, 0.0
    %v4387 = vmax.f32 %v3858, 0.0
    %v4388 = vmax.f32 %v4242, 0.0
    %v4389 = vmax.f32 %v4244, 0.0
    %v4390 = vmax.f32 %v3860, 0.0
    %v4391 = vmax.f32 %v3862, 0.0
    %v4392 = vmax.f32 %v4246, 0.0
    %v4393 = vmax.f32 %v4248, 0.0
    %v4394 = vmax.f32 %v3866, 0.0
    %v4395 = vmax.f32 %v3868, 0.0
    %v4396 = vmax.f32 %v4252, 0.0
    %v4397 = vmax.f32 %v4254, 0.0
    %v4398 = vmax.f32 %v3870, 0.0
    %v4399 = vmax.f32 %v3872, 0.0
    %v4400 = vmax.f32 %v4256, 0.0
    %v4401 = vmax.f32 %v4258, 0.0
    %v4402 = vmax.f32 %v3876, 0.0
    %v4403 = vmax.f32 %v3878, 0.0
    %v4404 = vmax.f32 %v4262, 0.0
    %v4405 = vmax.f32 %v4264, 0.0
    %v4406 = vmax.f32 %v3880, 0.0
    %v4407 = vmax.f32 %v3882, 0.0
    %v4408 = vmax.f32 %v4266, 0.0
    %v4409 = vmax.f32 %v4268, 0.0
    %v4410 = vmax.f32 %v3886, 0.0
    %v4411 = vmax.f32 %v3888, 0.0
    %v4412 = vmax.f32 %v4272, 0.0
    %v4413 = vmax.f32 %v4274, 0.0
    %v4414 = vmax.f32 %v3890, 0.0
    %v4415 = vmax.f32 %v3892, 0.0
    %v4416 = vmax.f32 %v4276, 0.0
    %v4417 = vmax.f32 %v4278, 0.0
    %v4418 = vmax.f32 %v3896, 0.0
    %v4419 = vmax.f32 %v3898, 0.0
    %v4420 = vmax.f32 %v4282, 0.0
    %v4421 = vmax.f32 %v4284, 0.0
    %v4422 = vmax.f32 %v3900, 0.0
    %v4423 = vmax.f32 %v3902, 0.0
    %v4424 = vmax.f32 %v4286, 0.0
    %v4425 = vmax.f32 %v4288, 0.0
    %v4426 = vmax.f32 %v3906, 0.0
    %v4427 = vmax.f32 %v3908, 0.0
    %v4428 = vmax.f32 %v4292, 0.0
    %v4429 = vmax.f32 %v4294, 0.0
    %v4430 = vmax.f32 %v3910, 0.0
    %v4431 = vmax.f32 %v3912, 0.0
    %v4432 = vmax.f32 %v4296, 0.0
    %v4433 = vmax.f32 %v4298, 0.0
    %v4434 = vmax.f32 %v3916, 0.0
    %v4435 = vmax.f32 %v3918, 0.0
    %v4436 = vmax.f32 %v4302, 0.0
    %v4437 = vmax.f32 %v4304, 0.0
    %v4438 = vmax.f32 %v3920, 0.0
    %v4439 = vmax.f32 %v3922, 0.0
    %v4440 = vmax.f32 %v4306, 0.0
    %v4441 = vmax.f32 %v4308, 0.0
    %v4442 = vmax.f32 %v3926, 0.0
    %v4443 = vmax.f32 %v3928, 0.0
    %v4444 = vmax.f32 %v4312, 0.0
    %v4445 = vmax.f32 %v4314, 0.0
    %v4446 = vmax.f32 %v3930, 0.0
    %v4447 = vmax.f32 %v3932, 0.0
    %v4448 = vmax.f32 %v4316, 0.0
    %v4449 = vmax.f32 %v4318, 0.0
    %v4450 = vmax.f32 %v3936, 0.0
    %v4451 = vmax.f32 %v3938, 0.0
    %v4452 = vmax.f32 %v4322, 0.0
    %v4453 = vmax.f32 %v4324, 0.0
    %v4454 = vmax.f32 %v3940, 0.0
    %v4455 = vmax.f32 %v3942, 0.0
    %v4456 = vmax.f32 %v4326, 0.0
    %v4457 = vmax.f32 %v4328, 0.0
    %v4458 = vpack.c.bf16 %v4334, %v4330
    %v4459 = vpack.c.bf16 %v4335, %v4331
    %v4460 = vpack.c.bf16 %v4336, %v4332
    %v4461 = vpack.c.bf16 %v4337, %v4333
    %v4462 = vpack.c.bf16 %v4342, %v4338
    %v4463 = vpack.c.bf16 %v4343, %v4339
    %v4464 = vpack.c.bf16 %v4344, %v4340
    %v4465 = vpack.c.bf16 %v4345, %v4341
    %v4466 = vpack.c.bf16 %v4350, %v4346
    %v4467 = vpack.c.bf16 %v4351, %v4347
    %v4468 = vpack.c.bf16 %v4352, %v4348
    %v4469 = vpack.c.bf16 %v4353, %v4349
    %v4470 = vpack.c.bf16 %v4358, %v4354
    %v4471 = vpack.c.bf16 %v4359, %v4355
    %v4472 = vpack.c.bf16 %v4360, %v4356
    %v4473 = vpack.c.bf16 %v4361, %v4357
    %v4474 = vpack.c.bf16 %v4366, %v4362
    %v4475 = vpack.c.bf16 %v4367, %v4363
    %v4476 = vpack.c.bf16 %v4368, %v4364
    %v4477 = vpack.c.bf16 %v4369, %v4365
    %v4478 = vpack.c.bf16 %v4374, %v4370
    %v4479 = vpack.c.bf16 %v4375, %v4371
    %v4480 = vpack.c.bf16 %v4376, %v4372
    %v4481 = vpack.c.bf16 %v4377, %v4373
    %v4482 = vpack.c.bf16 %v4382, %v4378
    %v4483 = vpack.c.bf16 %v4383, %v4379
    %v4484 = vpack.c.bf16 %v4384, %v4380
    %v4485 = vpack.c.bf16 %v4385, %v4381
    %v4486 = vpack.c.bf16 %v4390, %v4386
    %v4487 = vpack.c.bf16 %v4391, %v4387
    %v4488 = vpack.c.bf16 %v4392, %v4388
    %v4489 = vpack.c.bf16 %v4393, %v4389
    %v4490 = vpack.c.bf16 %v4398, %v4394
    %v4491 = vpack.c.bf16 %v4399, %v4395
    %v4492 = vpack.c.bf16 %v4400, %v4396
    %v4493 = vpack.c.bf16 %v4401, %v4397
    %v4494 = vpack.c.bf16 %v4406, %v4402
    %v4495 = vpack.c.bf16 %v4407, %v4403
    %v4496 = vpack.c.bf16 %v4408, %v4404
    %v4497 = vpack.c.bf16 %v4409, %v4405
    %v4498 = vpack.c.bf16 %v4414, %v4410
    %v4499 = vpack.c.bf16 %v4415, %v4411
    %v4500 = vpack.c.bf16 %v4416, %v4412
    %v4501 = vpack.c.bf16 %v4417, %v4413
    %v4502 = vpack.c.bf16 %v4422, %v4418
    %v4503 = vpack.c.bf16 %v4423, %v4419
    %v4504 = vpack.c.bf16 %v4424, %v4420
    %v4505 = vpack.c.bf16 %v4425, %v4421
    %v4506 = vpack.c.bf16 %v4430, %v4426
    %v4507 = vpack.c.bf16 %v4431, %v4427
    %v4508 = vpack.c.bf16 %v4432, %v4428
    %v4509 = vpack.c.bf16 %v4433, %v4429
    %v4510 = vpack.c.bf16 %v4438, %v4434
    %v4511 = vpack.c.bf16 %v4439, %v4435
    %v4512 = vpack.c.bf16 %v4440, %v4436
    %v4513 = vpack.c.bf16 %v4441, %v4437
    %v4514 = vpack.c.bf16 %v4446, %v4442
    %v4515 = vpack.c.bf16 %v4447, %v4443
    %v4516 = vpack.c.bf16 %v4448, %v4444
    %v4517 = vpack.c.bf16 %v4449, %v4445
    %v4518 = vpack.c.bf16 %v4454, %v4450
    %v4519 = vpack.c.bf16 %v4455, %v4451
    %v4520 = vpack.c.bf16 %v4456, %v4452
    %v4521 = vpack.c.bf16 %v4457, %v4453
    %v4522 = vld [vmem:[#allocation10] sm:$0xf]
    %v4523 = vld [vmem:[#allocation10 + $0x4] sm:$0xf]
    %v4524 = vld [vmem:[#allocation10 + $0x8] sm:$0xf]
    %v4525 = vld [vmem:[#allocation10 + $0xc] sm:$0xf]
    %v4526 = vld [vmem:[#allocation10 + $0x10] sm:$0xf]
    %v4527 = vld [vmem:[#allocation10 + $0x14] sm:$0xf]
    %v4528 = vld [vmem:[#allocation10 + $0x18] sm:$0xf]
    %v4529 = vld [vmem:[#allocation10 + $0x1c] sm:$0xf]
    %v4530 = vld [vmem:[#allocation10 + $0x20] sm:$0xf]
    %v4531 = vld [vmem:[#allocation10 + $0x24] sm:$0xf]
    %v4532 = vld [vmem:[#allocation10 + $0x28] sm:$0xf]
    %v4533 = vld [vmem:[#allocation10 + $0x2c] sm:$0xf]
    %v4534 = vld [vmem:[#allocation10 + $0x30] sm:$0xf]
    %v4535 = vld [vmem:[#allocation10 + $0x34] sm:$0xf]
    %v4536 = vld [vmem:[#allocation10 + $0x38] sm:$0xf]
    %v4537 = vld [vmem:[#allocation10 + $0x3c] sm:$0xf]
    %v4538 = vld [vmem:[#allocation10 + $0x40] sm:$0xf]
    %v4539 = vld [vmem:[#allocation10 + $0x44] sm:$0xf]
    %v4540 = vld [vmem:[#allocation10 + $0x48] sm:$0xf]
    %v4541 = vld [vmem:[#allocation10 + $0x4c] sm:$0xf]
    %v4542 = vld [vmem:[#allocation10 + $0x50] sm:$0xf]
    %v4543 = vld [vmem:[#allocation10 + $0x54] sm:$0xf]
    %v4544 = vld [vmem:[#allocation10 + $0x58] sm:$0xf]
    %v4545 = vld [vmem:[#allocation10 + $0x5c] sm:$0xf]
    %v4546 = vld [vmem:[#allocation10 + $0x60] sm:$0xf]
    %v4547 = vld [vmem:[#allocation10 + $0x64] sm:$0xf]
    %v4548 = vld [vmem:[#allocation10 + $0x68] sm:$0xf]
    %v4549 = vld [vmem:[#allocation10 + $0x6c] sm:$0xf]
    %v4550 = vld [vmem:[#allocation10 + $0x70] sm:$0xf]
    %v4551 = vld [vmem:[#allocation10 + $0x74] sm:$0xf]
    %v4552 = vld [vmem:[#allocation10 + $0x78] sm:$0xf]
    %v4553 = vld [vmem:[#allocation10 + $0x7c] sm:$0xf]
    %v4554 = vld [vmem:[#allocation10 + $0x80] sm:$0xf]
    %v4555 = vld [vmem:[#allocation10 + $0x84] sm:$0xf]
    %v4556 = vld [vmem:[#allocation10 + $0x88] sm:$0xf]
    %v4557 = vld [vmem:[#allocation10 + $0x8c] sm:$0xf]
    %v4558 = vld [vmem:[#allocation10 + $0x90] sm:$0xf]
    %v4559 = vld [vmem:[#allocation10 + $0x94] sm:$0xf]
    %v4560 = vld [vmem:[#allocation10 + $0x98] sm:$0xf]
    %v4561 = vld [vmem:[#allocation10 + $0x9c] sm:$0xf]
    %v4562 = vld [vmem:[#allocation10 + $0xa0] sm:$0xf]
    %v4563 = vld [vmem:[#allocation10 + $0xa4] sm:$0xf]
    %v4564 = vld [vmem:[#allocation10 + $0xa8] sm:$0xf]
    %v4565 = vld [vmem:[#allocation10 + $0xac] sm:$0xf]
    %v4566 = vld [vmem:[#allocation10 + $0xb0] sm:$0xf]
    %v4567 = vld [vmem:[#allocation10 + $0xb4] sm:$0xf]
    %v4568 = vld [vmem:[#allocation10 + $0xb8] sm:$0xf]
    %v4569 = vld [vmem:[#allocation10 + $0xbc] sm:$0xf]
    %v4570 = vld [vmem:[#allocation10 + $0xc0] sm:$0xf]
    %v4571 = vld [vmem:[#allocation10 + $0xc4] sm:$0xf]
    %v4572 = vld [vmem:[#allocation10 + $0xc8] sm:$0xf]
    %v4573 = vld [vmem:[#allocation10 + $0xcc] sm:$0xf]
    %v4574 = vld [vmem:[#allocation10 + $0xd0] sm:$0xf]
    %v4575 = vld [vmem:[#allocation10 + $0xd4] sm:$0xf]
    %v4576 = vld [vmem:[#allocation10 + $0xd8] sm:$0xf]
    %v4577 = vld [vmem:[#allocation10 + $0xdc] sm:$0xf]
    %v4578 = vld [vmem:[#allocation10 + $0xe0] sm:$0xf]
    %v4579 = vld [vmem:[#allocation10 + $0xe4] sm:$0xf]
    %v4580 = vld [vmem:[#allocation10 + $0xe8] sm:$0xf]
    %v4581 = vld [vmem:[#allocation10 + $0xec] sm:$0xf]
    %v4582 = vld [vmem:[#allocation10 + $0xf0] sm:$0xf]
    %v4583 = vld [vmem:[#allocation10 + $0xf4] sm:$0xf]
    %v4584 = vld [vmem:[#allocation10 + $0xf8] sm:$0xf]
    %v4585 = vld [vmem:[#allocation10 + $0xfc] sm:$0xf]
    %v4587 = vlaneseq
    %v4588 = vshrl.u32 %v4587, 7
    %v4589 = vsub.s32 0, %v4588
    %v4590 = vrot.slane %v128, %v4589
    %v4656 = vunpack.c.l.b16 %v4522
    %v4657 = vunpack.c.l.b16 %v4523
    %v4658 = vunpack.c.l.b16 %v4524
    %v4659 = vunpack.c.l.b16 %v4525
    %v4660 = vunpack.c.l.b16 %v4526
    %v4661 = vunpack.c.l.b16 %v4527
    %v4662 = vunpack.c.l.b16 %v4528
    %v4663 = vunpack.c.l.b16 %v4529
    %v4664 = vunpack.c.l.b16 %v4530
    %v4665 = vunpack.c.l.b16 %v4531
    %v4666 = vunpack.c.l.b16 %v4532
    %v4667 = vunpack.c.l.b16 %v4533
    %v4668 = vunpack.c.l.b16 %v4534
    %v4669 = vunpack.c.l.b16 %v4535
    %v4670 = vunpack.c.l.b16 %v4536
    %v4671 = vunpack.c.l.b16 %v4537
    %v4672 = vunpack.c.l.b16 %v4538
    %v4673 = vunpack.c.l.b16 %v4539
    %v4674 = vunpack.c.l.b16 %v4540
    %v4675 = vunpack.c.l.b16 %v4541
    %v4676 = vunpack.c.l.b16 %v4542
    %v4677 = vunpack.c.l.b16 %v4543
    %v4678 = vunpack.c.l.b16 %v4544
    %v4679 = vunpack.c.l.b16 %v4545
    %v4680 = vunpack.c.l.b16 %v4546
    %v4681 = vunpack.c.l.b16 %v4547
    %v4682 = vunpack.c.l.b16 %v4548
    %v4683 = vunpack.c.l.b16 %v4549
    %v4684 = vunpack.c.l.b16 %v4550
    %v4685 = vunpack.c.l.b16 %v4551
    %v4686 = vunpack.c.l.b16 %v4552
    %v4687 = vunpack.c.l.b16 %v4553
    %v4688 = vunpack.c.l.b16 %v4554
    %v4689 = vunpack.c.l.b16 %v4555
    %v4690 = vunpack.c.l.b16 %v4556
    %v4691 = vunpack.c.l.b16 %v4557
    %v4692 = vunpack.c.l.b16 %v4558
    %v4693 = vunpack.c.l.b16 %v4559
    %v4694 = vunpack.c.l.b16 %v4560
    %v4695 = vunpack.c.l.b16 %v4561
    %v4696 = vunpack.c.l.b16 %v4562
    %v4697 = vunpack.c.l.b16 %v4563
    %v4698 = vunpack.c.l.b16 %v4564
    %v4699 = vunpack.c.l.b16 %v4565
    %v4700 = vunpack.c.l.b16 %v4566
    %v4701 = vunpack.c.l.b16 %v4567
    %v4702 = vunpack.c.l.b16 %v4568
    %v4703 = vunpack.c.l.b16 %v4569
    %v4704 = vunpack.c.l.b16 %v4570
    %v4705 = vunpack.c.l.b16 %v4571
    %v4706 = vunpack.c.l.b16 %v4572
    %v4707 = vunpack.c.l.b16 %v4573
    %v4708 = vunpack.c.l.b16 %v4574
    %v4709 = vunpack.c.l.b16 %v4575
    %v4710 = vunpack.c.l.b16 %v4576
    %v4711 = vunpack.c.l.b16 %v4577
    %v4712 = vunpack.c.l.b16 %v4578
    %v4713 = vunpack.c.l.b16 %v4579
    %v4714 = vunpack.c.l.b16 %v4580
    %v4715 = vunpack.c.l.b16 %v4581
    %v4716 = vunpack.c.l.b16 %v4582
    %v4717 = vunpack.c.l.b16 %v4583
    %v4718 = vunpack.c.l.b16 %v4584
    %v4719 = vunpack.c.l.b16 %v4585
    %v4720 = vpack.c.b16 %v4657, %v4656
    %v4721 = vpack.c.b16 %v4659, %v4658
    %v4722 = vpack.c.b16 %v4661, %v4660
    %v4723 = vpack.c.b16 %v4663, %v4662
    %v4724 = vpack.c.b16 %v4665, %v4664
    %v4725 = vpack.c.b16 %v4667, %v4666
    %v4726 = vpack.c.b16 %v4669, %v4668
    %v4727 = vpack.c.b16 %v4671, %v4670
    %v4728 = vpack.c.b16 %v4673, %v4672
    %v4729 = vpack.c.b16 %v4675, %v4674
    %v4730 = vpack.c.b16 %v4677, %v4676
    %v4731 = vpack.c.b16 %v4679, %v4678
    %v4732 = vpack.c.b16 %v4681, %v4680
    %v4733 = vpack.c.b16 %v4683, %v4682
    %v4734 = vpack.c.b16 %v4685, %v4684
    %v4735 = vpack.c.b16 %v4687, %v4686
    %v4736 = vpack.c.b16 %v4689, %v4688
    %v4737 = vpack.c.b16 %v4691, %v4690
    %v4738 = vpack.c.b16 %v4693, %v4692
    %v4739 = vpack.c.b16 %v4695, %v4694
    %v4740 = vpack.c.b16 %v4697, %v4696
    %v4741 = vpack.c.b16 %v4699, %v4698
    %v4742 = vpack.c.b16 %v4701, %v4700
    %v4743 = vpack.c.b16 %v4703, %v4702
    %v4744 = vpack.c.b16 %v4705, %v4704
    %v4745 = vpack.c.b16 %v4707, %v4706
    %v4746 = vpack.c.b16 %v4709, %v4708
    %v4747 = vpack.c.b16 %v4711, %v4710
    %v4748 = vpack.c.b16 %v4713, %v4712
    %v4749 = vpack.c.b16 %v4715, %v4714
    %v4750 = vpack.c.b16 %v4717, %v4716
    %v4751 = vpack.c.b16 %v4719, %v4718
    %4784 = vmatprep.subr.bf16.mxu0 0
    %4785 = vmatpush1.bf16.msra.mxu0 %v4720
    %4786 = vmatprep.subr.bf16.mxu0 0
    %4787 = vmatpush1.bf16.msra.mxu0 %v4721
    %4788 = vmatprep.subr.bf16.mxu0 0
    %4789 = vmatpush1.bf16.msra.mxu0 %v4722
    %4790 = vmatprep.subr.bf16.mxu0 0
    %4791 = vmatpush1.bf16.msra.mxu0 %v4723
    %4792 = vmatprep.subr.bf16.mxu0 0
    %4793 = vmatpush1.bf16.msra.mxu0 %v4724
    %4794 = vmatprep.subr.bf16.mxu0 0
    %4795 = vmatpush1.bf16.msra.mxu0 %v4725
    %4796 = vmatprep.subr.bf16.mxu0 0
    %4797 = vmatpush1.bf16.msra.mxu0 %v4726
    %4798 = vmatprep.subr.bf16.mxu0 0
    %4799 = vmatpush1.bf16.msra.mxu0 %v4727
    %4800 = vmatprep.subr.bf16.mxu0 0
    %4801 = vmatpush1.bf16.msra.mxu0 %v4728
    %4802 = vmatprep.subr.bf16.mxu0 0
    %4803 = vmatpush1.bf16.msra.mxu0 %v4729
    %4804 = vmatprep.subr.bf16.mxu0 0
    %4805 = vmatpush1.bf16.msra.mxu0 %v4730
    %4806 = vmatprep.subr.bf16.mxu0 0
    %4807 = vmatpush1.bf16.msra.mxu0 %v4731
    %4808 = vmatprep.subr.bf16.mxu0 0
    %4809 = vmatpush1.bf16.msra.mxu0 %v4732
    %4810 = vmatprep.subr.bf16.mxu0 0
    %4811 = vmatpush1.bf16.msra.mxu0 %v4733
    %4812 = vmatprep.subr.bf16.mxu0 0
    %4813 = vmatpush1.bf16.msra.mxu0 %v4734
    %4814 = vmatprep.subr.bf16.mxu0 0
    %4815 = vmatpush1.bf16.msra.mxu0 %v4735
    %4816 = vmatprep.mubr.bf16.mxu0 %v4459
    %4817 = vmatmul.mubr.bf16.gmra.mrb[0].mxu0 %v4458
    %v4818 = vpop.f32.mrb[0].mxu0
    %v4819 = vadd.f32 %v4590, %v4818
    %v4820 = vpop.f32.mrb[0].mxu0
    %v4821 = vpop.f32.mrb[0].mxu0
    %v4822 = vadd.f32 %v4590, %v4821
    %v4823 = vpop.f32.mrb[0].mxu0
    %4824 = vmatprep.mubr.bf16.mxu0 %v4463
    %4825 = vmatmul.mubr.bf16.gmra.mrb[0].mxu0 %v4462
    %v4826 = vpop.f32.mrb[0].mxu0
    %v4827 = vadd.f32 %v4590, %v4826
    %v4828 = vpop.f32.mrb[0].mxu0
    %v4829 = vpop.f32.mrb[0].mxu0
    %v4830 = vadd.f32 %v4590, %v4829
    %v4831 = vpop.f32.mrb[0].mxu0
    %4832 = vmatprep.mubr.bf16.mxu0 %v4467
    %4833 = vmatmul.mubr.bf16.gmra.mrb[0].mxu0 %v4466
    %v4834 = vpop.f32.mrb[0].mxu0
    %v4835 = vadd.f32 %v4590, %v4834
    %v4836 = vpop.f32.mrb[0].mxu0
    %v4837 = vpop.f32.mrb[0].mxu0
    %v4838 = vadd.f32 %v4590, %v4837
    %v4839 = vpop.f32.mrb[0].mxu0
    %4840 = vmatprep.mubr.bf16.mxu0 %v4471
    %4841 = vmatmul.mubr.bf16.gmra.mrb[0].mxu0 %v4470
    %v4842 = vpop.f32.mrb[0].mxu0
    %v4843 = vadd.f32 %v4590, %v4842
    %v4844 = vpop.f32.mrb[0].mxu0
    %v4845 = vpop.f32.mrb[0].mxu0
    %v4846 = vadd.f32 %v4590, %v4845
    %v4847 = vpop.f32.mrb[0].mxu0
    %4848 = vmatprep.mubr.bf16.mxu0 %v4475
    %4849 = vmatmul.mubr.bf16.gmra.mrb[0].mxu0 %v4474
    %v4850 = vpop.f32.mrb[0].mxu0
    %v4851 = vadd.f32 %v4590, %v4850
    %v4852 = vpop.f32.mrb[0].mxu0
    %v4853 = vpop.f32.mrb[0].mxu0
    %v4854 = vadd.f32 %v4590, %v4853
    %v4855 = vpop.f32.mrb[0].mxu0
    %4856 = vmatprep.mubr.bf16.mxu0 %v4479
    %4857 = vmatmul.mubr.bf16.gmra.mrb[0].mxu0 %v4478
    %v4858 = vpop.f32.mrb[0].mxu0
    %v4859 = vadd.f32 %v4590, %v4858
    %v4860 = vpop.f32.mrb[0].mxu0
    %v4861 = vpop.f32.mrb[0].mxu0
    %v4862 = vadd.f32 %v4590, %v4861
    %v4863 = vpop.f32.mrb[0].mxu0
    %4864 = vmatprep.mubr.bf16.mxu0 %v4483
    %4865 = vmatmul.mubr.bf16.gmra.mrb[0].mxu0 %v4482
    %v4866 = vpop.f32.mrb[0].mxu0
    %v4867 = vadd.f32 %v4590, %v4866
    %v4868 = vpop.f32.mrb[0].mxu0
    %v4869 = vpop.f32.mrb[0].mxu0
    %v4870 = vadd.f32 %v4590, %v4869
    %v4871 = vpop.f32.mrb[0].mxu0
    %4872 = vmatprep.mubr.bf16.mxu0 %v4487
    %4873 = vmatmul.mubr.bf16.gmra.mrb[0].mxu0 %v4486
    %v4874 = vpop.f32.mrb[0].mxu0
    %v4875 = vadd.f32 %v4590, %v4874
    %v4876 = vpop.f32.mrb[0].mxu0
    %v4877 = vpop.f32.mrb[0].mxu0
    %v4878 = vadd.f32 %v4590, %v4877
    %v4879 = vpop.f32.mrb[0].mxu0
    %4880 = vmatprep.mubr.bf16.mxu0 %v4491
    %4881 = vmatmul.mubr.bf16.gmra.mrb[0].mxu0 %v4490
    %v4882 = vpop.f32.mrb[0].mxu0
    %v4883 = vadd.f32 %v4590, %v4882
    %v4884 = vpop.f32.mrb[0].mxu0
    %v4885 = vpop.f32.mrb[0].mxu0
    %v4886 = vadd.f32 %v4590, %v4885
    %v4887 = vpop.f32.mrb[0].mxu0
    %4888 = vmatprep.mubr.bf16.mxu0 %v4495
    %4889 = vmatmul.mubr.bf16.gmra.mrb[0].mxu0 %v4494
    %v4890 = vpop.f32.mrb[0].mxu0
    %v4891 = vadd.f32 %v4590, %v4890
    %v4892 = vpop.f32.mrb[0].mxu0
    %v4893 = vpop.f32.mrb[0].mxu0
    %v4894 = vadd.f32 %v4590, %v4893
    %v4895 = vpop.f32.mrb[0].mxu0
    %4896 = vmatprep.mubr.bf16.mxu0 %v4499
    %4897 = vmatmul.mubr.bf16.gmra.mrb[0].mxu0 %v4498
    %v4898 = vpop.f32.mrb[0].mxu0
    %v4899 = vadd.f32 %v4590, %v4898
    %v4900 = vpop.f32.mrb[0].mxu0
    %v4901 = vpop.f32.mrb[0].mxu0
    %v4902 = vadd.f32 %v4590, %v4901
    %v4903 = vpop.f32.mrb[0].mxu0
    %4904 = vmatprep.mubr.bf16.mxu0 %v4503
    %4905 = vmatmul.mubr.bf16.gmra.mrb[0].mxu0 %v4502
    %v4906 = vpop.f32.mrb[0].mxu0
    %v4907 = vadd.f32 %v4590, %v4906
    %v4908 = vpop.f32.mrb[0].mxu0
    %v4909 = vpop.f32.mrb[0].mxu0
    %v4910 = vadd.f32 %v4590, %v4909
    %v4911 = vpop.f32.mrb[0].mxu0
    %4912 = vmatprep.mubr.bf16.mxu0 %v4507
    %4913 = vmatmul.mubr.bf16.gmra.mrb[0].mxu0 %v4506
    %v4914 = vpop.f32.mrb[0].mxu0
    %v4915 = vadd.f32 %v4590, %v4914
    %v4916 = vpop.f32.mrb[0].mxu0
    %v4917 = vpop.f32.mrb[0].mxu0
    %v4918 = vadd.f32 %v4590, %v4917
    %v4919 = vpop.f32.mrb[0].mxu0
    %4920 = vmatprep.mubr.bf16.mxu0 %v4511
    %4921 = vmatmul.mubr.bf16.gmra.mrb[0].mxu0 %v4510
    %v4922 = vpop.f32.mrb[0].mxu0
    %v4923 = vadd.f32 %v4590, %v4922
    %v4924 = vpop.f32.mrb[0].mxu0
    %v4925 = vpop.f32.mrb[0].mxu0
    %v4926 = vadd.f32 %v4590, %v4925
    %v4927 = vpop.f32.mrb[0].mxu0
    %4928 = vmatprep.mubr.bf16.mxu0 %v4515
    %4929 = vmatmul.mubr.bf16.gmra.mrb[0].mxu0 %v4514
    %v4930 = vpop.f32.mrb[0].mxu0
    %v4931 = vadd.f32 %v4590, %v4930
    %v4932 = vpop.f32.mrb[0].mxu0
    %v4933 = vpop.f32.mrb[0].mxu0
    %v4934 = vadd.f32 %v4590, %v4933
    %v4935 = vpop.f32.mrb[0].mxu0
    %4936 = vmatprep.mubr.bf16.mxu0 %v4519
    %4937 = vmatmul.mubr.bf16.gmra.mrb[0].mxu0 %v4518
    %v4938 = vpop.f32.mrb[0].mxu0
    %v4939 = vadd.f32 %v4590, %v4938
    %v4940 = vpop.f32.mrb[0].mxu0
    %v4941 = vpop.f32.mrb[0].mxu0
    %v4942 = vadd.f32 %v4590, %v4941
    %v4943 = vpop.f32.mrb[0].mxu0
    %4944 = vdwg.mxu0
    %4945 = vmatprep.subr.bf16.mxu0 0
    %4946 = vmatpush1.bf16.msra.mxu0 %v4736
    %4947 = vmatprep.subr.bf16.mxu0 0
    %4948 = vmatpush1.bf16.msra.mxu0 %v4737
    %4949 = vmatprep.subr.bf16.mxu0 0
    %4950 = vmatpush1.bf16.msra.mxu0 %v4738
    %4951 = vmatprep.subr.bf16.mxu0 0
    %4952 = vmatpush1.bf16.msra.mxu0 %v4739
    %4953 = vmatprep.subr.bf16.mxu0 0
    %4954 = vmatpush1.bf16.msra.mxu0 %v4740
    %4955 = vmatprep.subr.bf16.mxu0 0
    %4956 = vmatpush1.bf16.msra.mxu0 %v4741
    %4957 = vmatprep.subr.bf16.mxu0 0
    %4958 = vmatpush1.bf16.msra.mxu0 %v4742
    %4959 = vmatprep.subr.bf16.mxu0 0
    %4960 = vmatpush1.bf16.msra.mxu0 %v4743
    %4961 = vmatprep.subr.bf16.mxu0 0
    %4962 = vmatpush1.bf16.msra.mxu0 %v4744
    %4963 = vmatprep.subr.bf16.mxu0 0
    %4964 = vmatpush1.bf16.msra.mxu0 %v4745
    %4965 = vmatprep.subr.bf16.mxu0 0
    %4966 = vmatpush1.bf16.msra.mxu0 %v4746
    %4967 = vmatprep.subr.bf16.mxu0 0
    %4968 = vmatpush1.bf16.msra.mxu0 %v4747
    %4969 = vmatprep.subr.bf16.mxu0 0
    %4970 = vmatpush1.bf16.msra.mxu0 %v4748
    %4971 = vmatprep.subr.bf16.mxu0 0
    %4972 = vmatpush1.bf16.msra.mxu0 %v4749
    %4973 = vmatprep.subr.bf16.mxu0 0
    %4974 = vmatpush1.bf16.msra.mxu0 %v4750
    %4975 = vmatprep.subr.bf16.mxu0 0
    %4976 = vmatpush1.bf16.msra.mxu0 %v4751
    %4977 = vmatprep.mubr.bf16.mxu0 %v4461
    %4978 = vmatmul.mubr.bf16.gmra.mrb[0].mxu0 %v4460
    %v4979 = vpop.f32.mrb[0].mxu0
    %v4980 = vadd.f32 %v4819, %v4979
    %v4981 = vpop.f32.mrb[0].mxu0
    %v4982 = vpop.f32.mrb[0].mxu0
    %v4983 = vadd.f32 %v4822, %v4982
    %v4984 = vpop.f32.mrb[0].mxu0
    %4985 = vmatprep.mubr.bf16.mxu0 %v4465
    %4986 = vmatmul.mubr.bf16.gmra.mrb[0].mxu0 %v4464
    %v4987 = vpop.f32.mrb[0].mxu0
    %v4988 = vadd.f32 %v4827, %v4987
    %v4989 = vpop.f32.mrb[0].mxu0
    %v4990 = vpop.f32.mrb[0].mxu0
    %v4991 = vadd.f32 %v4830, %v4990
    %v4992 = vpop.f32.mrb[0].mxu0
    %4993 = vmatprep.mubr.bf16.mxu0 %v4469
    %4994 = vmatmul.mubr.bf16.gmra.mrb[0].mxu0 %v4468
    %v4995 = vpop.f32.mrb[0].mxu0
    %v4996 = vadd.f32 %v4835, %v4995
    %v4997 = vpop.f32.mrb[0].mxu0
    %v4998 = vpop.f32.mrb[0].mxu0
    %v4999 = vadd.f32 %v4838, %v4998
    %v5000 = vpop.f32.mrb[0].mxu0
    %5001 = vmatprep.mubr.bf16.mxu0 %v4473
    %5002 = vmatmul.mubr.bf16.gmra.mrb[0].mxu0 %v4472
    %v5003 = vpop.f32.mrb[0].mxu0
    %v5004 = vadd.f32 %v4843, %v5003
    %v5005 = vpop.f32.mrb[0].mxu0
    %v5006 = vpop.f32.mrb[0].mxu0
    %v5007 = vadd.f32 %v4846, %v5006
    %v5008 = vpop.f32.mrb[0].mxu0
    %5009 = vmatprep.mubr.bf16.mxu0 %v4477
    %5010 = vmatmul.mubr.bf16.gmra.mrb[0].mxu0 %v4476
    %v5011 = vpop.f32.mrb[0].mxu0
    %v5012 = vadd.f32 %v4851, %v5011
    %v5013 = vpop.f32.mrb[0].mxu0
    %v5014 = vpop.f32.mrb[0].mxu0
    %v5015 = vadd.f32 %v4854, %v5014
    %v5016 = vpop.f32.mrb[0].mxu0
    %5017 = vmatprep.mubr.bf16.mxu0 %v4481
    %5018 = vmatmul.mubr.bf16.gmra.mrb[0].mxu0 %v4480
    %v5019 = vpop.f32.mrb[0].mxu0
    %v5020 = vadd.f32 %v4859, %v5019
    %v5021 = vpop.f32.mrb[0].mxu0
    %v5022 = vpop.f32.mrb[0].mxu0
    %v5023 = vadd.f32 %v4862, %v5022
    %v5024 = vpop.f32.mrb[0].mxu0
    %5025 = vmatprep.mubr.bf16.mxu0 %v4485
    %5026 = vmatmul.mubr.bf16.gmra.mrb[0].mxu0 %v4484
    %v5027 = vpop.f32.mrb[0].mxu0
    %v5028 = vadd.f32 %v4867, %v5027
    %v5029 = vpop.f32.mrb[0].mxu0
    %v5030 = vpop.f32.mrb[0].mxu0
    %v5031 = vadd.f32 %v4870, %v5030
    %v5032 = vpop.f32.mrb[0].mxu0
    %5033 = vmatprep.mubr.bf16.mxu0 %v4489
    %5034 = vmatmul.mubr.bf16.gmra.mrb[0].mxu0 %v4488
    %v5035 = vpop.f32.mrb[0].mxu0
    %v5036 = vadd.f32 %v4875, %v5035
    %v5037 = vpop.f32.mrb[0].mxu0
    %v5038 = vpop.f32.mrb[0].mxu0
    %v5039 = vadd.f32 %v4878, %v5038
    %v5040 = vpop.f32.mrb[0].mxu0
    %5041 = vmatprep.mubr.bf16.mxu0 %v4493
    %5042 = vmatmul.mubr.bf16.gmra.mrb[0].mxu0 %v4492
    %v5043 = vpop.f32.mrb[0].mxu0
    %v5044 = vadd.f32 %v4883, %v5043
    %v5045 = vpop.f32.mrb[0].mxu0
    %v5046 = vpop.f32.mrb[0].mxu0
    %v5047 = vadd.f32 %v4886, %v5046
    %v5048 = vpop.f32.mrb[0].mxu0
    %5049 = vmatprep.mubr.bf16.mxu0 %v4497
    %5050 = vmatmul.mubr.bf16.gmra.mrb[0].mxu0 %v4496
    %v5051 = vpop.f32.mrb[0].mxu0
    %v5052 = vadd.f32 %v4891, %v5051
    %v5053 = vpop.f32.mrb[0].mxu0
    %v5054 = vpop.f32.mrb[0].mxu0
    %v5055 = vadd.f32 %v4894, %v5054
    %v5056 = vpop.f32.mrb[0].mxu0
    %5057 = vmatprep.mubr.bf16.mxu0 %v4501
    %5058 = vmatmul.mubr.bf16.gmra.mrb[0].mxu0 %v4500
    %v5059 = vpop.f32.mrb[0].mxu0
    %v5060 = vadd.f32 %v4899, %v5059
    %v5061 = vpop.f32.mrb[0].mxu0
    %v5062 = vpop.f32.mrb[0].mxu0
    %v5063 = vadd.f32 %v4902, %v5062
    %v5064 = vpop.f32.mrb[0].mxu0
    %5065 = vmatprep.mubr.bf16.mxu0 %v4505
    %5066 = vmatmul.mubr.bf16.gmra.mrb[0].mxu0 %v4504
    %v5067 = vpop.f32.mrb[0].mxu0
    %v5068 = vadd.f32 %v4907, %v5067
    %v5069 = vpop.f32.mrb[0].mxu0
    %v5070 = vpop.f32.mrb[0].mxu0
    %v5071 = vadd.f32 %v4910, %v5070
    %v5072 = vpop.f32.mrb[0].mxu0
    %5073 = vmatprep.mubr.bf16.mxu0 %v4509
    %5074 = vmatmul.mubr.bf16.gmra.mrb[0].mxu0 %v4508
    %v5075 = vpop.f32.mrb[0].mxu0
    %v5076 = vadd.f32 %v4915, %v5075
    %v5077 = vpop.f32.mrb[0].mxu0
    %v5078 = vpop.f32.mrb[0].mxu0
    %v5079 = vadd.f32 %v4918, %v5078
    %v5080 = vpop.f32.mrb[0].mxu0
    %5081 = vmatprep.mubr.bf16.mxu0 %v4513
    %5082 = vmatmul.mubr.bf16.gmra.mrb[0].mxu0 %v4512
    %v5083 = vpop.f32.mrb[0].mxu0
    %v5084 = vadd.f32 %v4923, %v5083
    %v5085 = vpop.f32.mrb[0].mxu0
    %v5086 = vpop.f32.mrb[0].mxu0
    %v5087 = vadd.f32 %v4926, %v5086
    %v5088 = vpop.f32.mrb[0].mxu0
    %5089 = vmatprep.mubr.bf16.mxu0 %v4517
    %5090 = vmatmul.mubr.bf16.gmra.mrb[0].mxu0 %v4516
    %v5091 = vpop.f32.mrb[0].mxu0
    %v5092 = vadd.f32 %v4931, %v5091
    %v5093 = vpop.f32.mrb[0].mxu0
    %v5094 = vpop.f32.mrb[0].mxu0
    %v5095 = vadd.f32 %v4934, %v5094
    %v5096 = vpop.f32.mrb[0].mxu0
    %5097 = vmatprep.mubr.bf16.mxu0 %v4521
    %5098 = vmatmul.mubr.bf16.gmra.mrb[0].mxu0 %v4520
    %v5099 = vpop.f32.mrb[0].mxu0
    %v5100 = vadd.f32 %v4939, %v5099
    %v5101 = vpop.f32.mrb[0].mxu0
    %v5102 = vpop.f32.mrb[0].mxu0
    %v5103 = vadd.f32 %v4942, %v5102
    %v5104 = vpop.f32.mrb[0].mxu0
    %5105 = vdwg.mxu0
    %v5106 = vpack.c.bf16 %v4983, %v4980
    %v5107 = vpack.c.bf16 %v4991, %v4988
    %v5108 = vpack.c.bf16 %v4999, %v4996
    %v5109 = vpack.c.bf16 %v5007, %v5004
    %v5110 = vpack.c.bf16 %v5015, %v5012
    %v5111 = vpack.c.bf16 %v5023, %v5020
    %v5112 = vpack.c.bf16 %v5031, %v5028
    %v5113 = vpack.c.bf16 %v5039, %v5036
    %v5114 = vpack.c.bf16 %v5047, %v5044
    %v5115 = vpack.c.bf16 %v5055, %v5052
    %v5116 = vpack.c.bf16 %v5063, %v5060
    %v5117 = vpack.c.bf16 %v5071, %v5068
    %v5118 = vpack.c.bf16 %v5079, %v5076
    %v5119 = vpack.c.bf16 %v5087, %v5084
    %v5120 = vpack.c.bf16 %v5095, %v5092
    %v5121 = vpack.c.bf16 %v5103, %v5100
    %v5138 = vunpack.c.l.b16 %v5106
    %v5139 = vunpack.c.h.b16 %v5106
    %v5140 = vunpack.c.l.b16 %v5107
    %v5141 = vunpack.c.h.b16 %v5107
    %v5142 = vunpack.c.l.b16 %v5108
    %v5143 = vunpack.c.h.b16 %v5108
    %v5144 = vunpack.c.l.b16 %v5109
    %v5145 = vunpack.c.h.b16 %v5109
    %v5146 = vunpack.c.l.b16 %v5110
    %v5147 = vunpack.c.h.b16 %v5110
    %v5148 = vunpack.c.l.b16 %v5111
    %v5149 = vunpack.c.h.b16 %v5111
    %v5150 = vunpack.c.l.b16 %v5112
    %v5151 = vunpack.c.h.b16 %v5112
    %v5152 = vunpack.c.l.b16 %v5113
    %v5153 = vunpack.c.h.b16 %v5113
    %v5154 = vunpack.c.l.b16 %v5114
    %v5155 = vunpack.c.h.b16 %v5114
    %v5156 = vunpack.c.l.b16 %v5115
    %v5157 = vunpack.c.h.b16 %v5115
    %v5158 = vunpack.c.l.b16 %v5116
    %v5159 = vunpack.c.h.b16 %v5116
    %v5160 = vunpack.c.l.b16 %v5117
    %v5161 = vunpack.c.h.b16 %v5117
    %v5162 = vunpack.c.l.b16 %v5118
    %v5163 = vunpack.c.h.b16 %v5118
    %v5164 = vunpack.c.l.b16 %v5119
    %v5165 = vunpack.c.h.b16 %v5119
    %v5166 = vunpack.c.l.b16 %v5120
    %v5167 = vunpack.c.h.b16 %v5120
    %v5168 = vunpack.c.l.b16 %v5121
    %v5169 = vunpack.c.h.b16 %v5121
    %v5170 = vpack.c.b16 %v5138, %v5138
    %v5171 = vpack.c.b16 %v5139, %v5139
    %v5172 = vpack.c.b16 %v5140, %v5140
    %v5173 = vpack.c.b16 %v5141, %v5141
    %v5174 = vpack.c.b16 %v5142, %v5142
    %v5175 = vpack.c.b16 %v5143, %v5143
    %v5176 = vpack.c.b16 %v5144, %v5144
    %v5177 = vpack.c.b16 %v5145, %v5145
    %v5178 = vpack.c.b16 %v5146, %v5146
    %v5179 = vpack.c.b16 %v5147, %v5147
    %v5180 = vpack.c.b16 %v5148, %v5148
    %v5181 = vpack.c.b16 %v5149, %v5149
    %v5182 = vpack.c.b16 %v5150, %v5150
    %v5183 = vpack.c.b16 %v5151, %v5151
    %v5184 = vpack.c.b16 %v5152, %v5152
    %v5185 = vpack.c.b16 %v5153, %v5153
    %v5186 = vpack.c.b16 %v5154, %v5154
    %v5187 = vpack.c.b16 %v5155, %v5155
    %v5188 = vpack.c.b16 %v5156, %v5156
    %v5189 = vpack.c.b16 %v5157, %v5157
    %v5190 = vpack.c.b16 %v5158, %v5158
    %v5191 = vpack.c.b16 %v5159, %v5159
    %v5192 = vpack.c.b16 %v5160, %v5160
    %v5193 = vpack.c.b16 %v5161, %v5161
    %v5194 = vpack.c.b16 %v5162, %v5162
    %v5195 = vpack.c.b16 %v5163, %v5163
    %v5196 = vpack.c.b16 %v5164, %v5164
    %v5197 = vpack.c.b16 %v5165, %v5165
    %v5198 = vpack.c.b16 %v5166, %v5166
    %v5199 = vpack.c.b16 %v5167, %v5167
    %v5200 = vpack.c.b16 %v5168, %v5168
    %v5201 = vpack.c.b16 %v5169, %v5169
    %5234 = vst [vmem:[#allocation11] sm:$0xf] %v5170
    %5235 = vst [vmem:[#allocation11 + $0x4] sm:$0xf] %v5171
    %5236 = vst [vmem:[#allocation11 + $0x8] sm:$0xf] %v5172
    %5237 = vst [vmem:[#allocation11 + $0xc] sm:$0xf] %v5173
    %5238 = vst [vmem:[#allocation11 + $0x10] sm:$0xf] %v5174
    %5239 = vst [vmem:[#allocation11 + $0x14] sm:$0xf] %v5175
    %5240 = vst [vmem:[#allocation11 + $0x18] sm:$0xf] %v5176
    %5241 = vst [vmem:[#allocation11 + $0x1c] sm:$0xf] %v5177
    %5242 = vst [vmem:[#allocation11 + $0x20] sm:$0xf] %v5178
    %5243 = vst [vmem:[#allocation11 + $0x24] sm:$0xf] %v5179
    %5244 = vst [vmem:[#allocation11 + $0x28] sm:$0xf] %v5180
    %5245 = vst [vmem:[#allocation11 + $0x2c] sm:$0xf] %v5181
    %5246 = vst [vmem:[#allocation11 + $0x30] sm:$0xf] %v5182
    %5247 = vst [vmem:[#allocation11 + $0x34] sm:$0xf] %v5183
    %5248 = vst [vmem:[#allocation11 + $0x38] sm:$0xf] %v5184
    %5249 = vst [vmem:[#allocation11 + $0x3c] sm:$0xf] %v5185
    %5250 = vst [vmem:[#allocation11 + $0x40] sm:$0xf] %v5186
    %5251 = vst [vmem:[#allocation11 + $0x44] sm:$0xf] %v5187
    %5252 = vst [vmem:[#allocation11 + $0x48] sm:$0xf] %v5188
    %5253 = vst [vmem:[#allocation11 + $0x4c] sm:$0xf] %v5189
    %5254 = vst [vmem:[#allocation11 + $0x50] sm:$0xf] %v5190
    %5255 = vst [vmem:[#allocation11 + $0x54] sm:$0xf] %v5191
    %5256 = vst [vmem:[#allocation11 + $0x58] sm:$0xf] %v5192
    %5257 = vst [vmem:[#allocation11 + $0x5c] sm:$0xf] %v5193
    %5258 = vst [vmem:[#allocation11 + $0x60] sm:$0xf] %v5194
    %5259 = vst [vmem:[#allocation11 + $0x64] sm:$0xf] %v5195
    %5260 = vst [vmem:[#allocation11 + $0x68] sm:$0xf] %v5196
    %5261 = vst [vmem:[#allocation11 + $0x6c] sm:$0xf] %v5197
    %5262 = vst [vmem:[#allocation11 + $0x70] sm:$0xf] %v5198
    %5263 = vst [vmem:[#allocation11 + $0x74] sm:$0xf] %v5199
    %5264 = vst [vmem:[#allocation11 + $0x78] sm:$0xf] %v5200
    %5265 = vst [vmem:[#allocation11 + $0x7c] sm:$0xf] %v5201
    // Predicated region
    $region46: #{tpu_custom_call.1} parent=1 // pred_check
      _
    $region47: #{tpu_custom_call.1} parent=1 // pred_check_branch
      %5267 = sbr.rel (0) target = $region49
    $region48: #{tpu_custom_call.1} parent=1 // pred_region
      %s5269 = ssub.s32 2048, 2048
      %5270 = vsyncadd [#allocation4], %s5269
      %s5271 = sshll.u32 [#allocation11], 4
      %s5272 = int_to_ptr.vmem [resolvable:$true] %s5271
      %5277 = dma.vmem_to_hbm [thread:$0]  %s5272, 2048, %s6, [#allocation4], 64, 64, 4
    $region49: #{tpu_custom_call.1} parent=1 // pred_fallthru
      _
    // Predicated region
    $region50: #{tpu_custom_call.1} parent=1 // pred_check
      _
    $region51: #{tpu_custom_call.1} parent=1 // pred_check_branch
      %5279 = sbr.rel (0) target = $region53
    $region52: #{tpu_custom_call.1} parent=1 // pred_region
      %5280 = dma.done [#allocation4], 2048
    $region53: #{tpu_custom_call.1} parent=1 // pred_fallthru
      _
    %5281 = vsyncpa [#allocation3], 1
    %5282 = vsyncpa [#allocation6], 1
    %5283 = vsyncpa [#allocation9], 1
    %5284 = vsyncpa [#allocation4], 1

</llo_original>
